<compile_context>
chip_gen: v7x
topology: tpu7x:2x2x1
jax: 0.10.0
libtpu: 0.0.40
codegen_flags: <defaults>
</compile_context>

<pallas_src>
import functools

import jax
import jax.numpy as jnp
from jax.experimental import pallas as pl
from jax.experimental.pallas import tpu as pltpu

DIMS = [3, 32, 64, 128, 256, 512, 128, 1]      # true layer widths of SDF
PDIMS = [8, 128, 128, 128, 256, 512, 128, 1]   # lane-dense padded widths
BN_EPS = 1e-5
N_SPLIT = 2   # per-core partial stats -> megacore-parallel batch axis on v7x


def _linear_bn_stats(h, w_bf16, *, tile_n, n_valid, scale=None, shift=None):
    """Fused layer step, tiled over the batch.

    Computes   a = relu(h * scale + shift)     (skipped when scale is None)
               z = a @ w                       (bf16 MXU, f32 accumulation)
    and accumulates per-feature sum(z) / sum(z*z) over the *valid* rows,
    split into N_SPLIT per-core partials (reduced in the wrapper).
    Returns (z_bf16, partial_sum, partial_sumsq).
    """
    n_pad, ic = h.shape
    oc = w_bf16.shape[1]
    num_tiles = n_pad // tile_n
    assert num_tiles % N_SPLIT == 0
    tiles_per_split = num_tiles // N_SPLIT
    apply_bn = scale is not None

    def kernel(*refs):
        if apply_bn:
            h_ref, w_ref, sc_ref, sh_ref, z_ref, s_ref, q_ref = refs
        else:
            h_ref, w_ref, z_ref, s_ref, q_ref = refs
        c = pl.program_id(0)
        t = pl.program_id(1)

        @pl.when(t == 0)
        def _():
            s_ref[...] = jnp.zeros_like(s_ref)
            q_ref[...] = jnp.zeros_like(q_ref)

        a = h_ref[...]
        if apply_bn:
            # BatchNorm (batch stats folded into scale/shift) + ReLU, in f32.
            a = jnp.maximum(a.astype(jnp.float32) * sc_ref[...] + sh_ref[...],
                            0.0)

        # MXU matmul: bf16 inputs, f32 accumulation.
        z = jnp.dot(a.astype(jnp.bfloat16), w_ref[...],
                    preferred_element_type=jnp.float32)

        # One-pass sum / sum-of-squares; build the padding mask only on tiles
        # that straddle (or lie past) n_valid.
        tile_start = (c * tiles_per_split + t) * tile_n
        tile_is_full = tile_start + tile_n <= n_valid

        @pl.when(tile_is_full)
        def _():
            s_ref[0] += jnp.sum(z, axis=0, keepdims=True)
            q_ref[0] += jnp.sum(z * z, axis=0, keepdims=True)

        @pl.when(jnp.logical_not(tile_is_full))
        def _():
            rows = tile_start + jax.lax.broadcasted_iota(
                jnp.int32, (tile_n, oc), 0)
            zm = jnp.where(rows < n_valid, z, 0.0)
            s_ref[0] += jnp.sum(zm, axis=0, keepdims=True)
            q_ref[0] += jnp.sum(zm * zm, axis=0, keepdims=True)

        z_ref[...] = z.astype(z_ref.dtype)   # bf16 inter-layer storage

    act_map = lambda c, t: (c * tiles_per_split + t, 0)
    res_map = lambda c, t: (0, 0)           # VMEM-resident weight / scale / shift
    stat_map = lambda c, t: (c, 0, 0)       # per-core partial stats

    in_specs = [pl.BlockSpec((tile_n, ic), act_map),
                pl.BlockSpec((ic, oc), res_map)]
    args = [h, w_bf16]
    if apply_bn:
        in_specs += [pl.BlockSpec((1, ic), res_map),
                     pl.BlockSpec((1, ic), res_map)]
        args += [scale, shift]

    flops = 2 * n_pad * ic * oc + 6 * n_pad * oc
    bytes_accessed = (n_pad * ic * 2 + ic * oc * 2 + n_pad * oc * 2
                      + 2 * N_SPLIT * oc * 4 + 2 * ic * 4)

    z, s, q = pl.pallas_call(
        kernel,
        grid=(N_SPLIT, tiles_per_split),
        in_specs=in_specs,
        out_specs=[pl.BlockSpec((tile_n, oc), act_map),
                   pl.BlockSpec((1, 1, oc), stat_map),
                   pl.BlockSpec((1, 1, oc), stat_map)],
        out_shape=[jax.ShapeDtypeStruct((n_pad, oc), jnp.bfloat16),
                   jax.ShapeDtypeStruct((N_SPLIT, 1, oc), jnp.float32),
                   jax.ShapeDtypeStruct((N_SPLIT, 1, oc), jnp.float32)],
        # Per-core partial stats: the split axis is parallel (megacore on
        # v7x), the within-core batch loop that accumulates is arbitrary.
        compiler_params=pltpu.CompilerParams(
            dimension_semantics=("parallel", "arbitrary")),
        cost_estimate=pl.CostEstimate(flops=flops, transcendentals=0,
                                      bytes_accessed=bytes_accessed),
    )(*args)
    return z, s, q


def _head(z, scale, shift, w_row_bf16, *, tile_n):
    """Final layer: relu(bn(z)) @ W7 (128 -> 1), written as a lane-dense row."""
    n_pad, ic = z.shape
    num_tiles = n_pad // tile_n

    def kernel(z_ref, sc_ref, sh_ref, w_ref, o_ref):
        h = jnp.maximum(z_ref[...].astype(jnp.float32) * sc_ref[...]
                        + sh_ref[...], 0.0)
        # (1, ic) contracted with (tile_n, ic) on the feature dim ->
        # lane-dense (1, tile_n) output block (no (tile_n, 1) masked stores).
        o_ref[...] = jax.lax.dot_general(
            w_ref[...], h.astype(jnp.bfloat16),
            dimension_numbers=(((1,), (1,)), ((), ())),
            preferred_element_type=jnp.float32)

    return pl.pallas_call(
        kernel,
        grid=(num_tiles,),
        in_specs=[pl.BlockSpec((tile_n, ic), lambda i: (i, 0)),
                  pl.BlockSpec((1, ic), lambda i: (0, 0)),
                  pl.BlockSpec((1, ic), lambda i: (0, 0)),
                  pl.BlockSpec((1, ic), lambda i: (0, 0))],
        out_specs=pl.BlockSpec((1, tile_n), lambda i: (0, i)),
        out_shape=jax.ShapeDtypeStruct((1, n_pad), jnp.float32),
        compiler_params=pltpu.CompilerParams(
            dimension_semantics=("parallel",)),   # megacore on v7x
        cost_estimate=pl.CostEstimate(
            flops=5 * n_pad * ic, transcendentals=0,
            bytes_accessed=n_pad * ic * 2 + n_pad * 4),
    )(z, scale, shift, w_row_bf16)


def _bn_scale_shift(col_sum, col_sumsq, gamma, beta, n_valid):
    """PyTorch training-mode BN (biased variance) folded into scale/shift."""
    mean = col_sum / n_valid
    var = jnp.maximum(col_sumsq / n_valid - mean * mean, 0.0)
    inv = jax.lax.rsqrt(var + BN_EPS)
    scale = gamma * inv
    shift = beta - mean * scale
    return scale, shift


def sdf_forward(sdf_q, params, *, tile_n=1024):
    ws, gs, bs = params
    n = sdf_q.shape[0]
    chunk = N_SPLIT * tile_n
    n_pad = pl.cdiv(n, chunk) * chunk

    # Pad queries: rows -> multiple of N_SPLIT*tile_n, features 3 -> 8.
    x = jnp.pad(sdf_q.astype(jnp.float32),
                ((0, n_pad - n), (0, PDIMS[0] - DIMS[0])))

    # bf16 weights, zero-padded to lane-dense shapes.  Pad output channels get
    # zero weight columns and zero gamma/beta (-> activations exactly 0), and
    # the next layer's extra input rows are zero, so the math is unchanged.
    w_bf16, g_pad, b_pad = [], [], []
    for l in range(6):
        ic, oc = DIMS[l], DIMS[l + 1]
        ic_p, oc_p = PDIMS[l], PDIMS[l + 1]
        w_bf16.append(jnp.pad(ws[l], ((0, ic_p - ic),
                                      (0, oc_p - oc))).astype(jnp.bfloat16))
        g_pad.append(jnp.pad(gs[l], ((0, 0), (0, oc_p - oc))))
        b_pad.append(jnp.pad(bs[l], ((0, 0), (0, oc_p - oc))))
    w_head = ws[6].T.astype(jnp.bfloat16)            # (1, 128)

    z, s, q = _linear_bn_stats(x, w_bf16[0], tile_n=tile_n, n_valid=n)
    scale, shift = _bn_scale_shift(s.sum(axis=0), q.sum(axis=0),
                                   g_pad[0], b_pad[0], n)
    for l in range(1, 6):
        z, s, q = _linear_bn_stats(z, w_bf16[l], tile_n=tile_n, n_valid=n,
                                   scale=scale, shift=shift)
        scale, shift = _bn_scale_shift(s.sum(axis=0), q.sum(axis=0),
                                       g_pad[l], b_pad[l], n)

    out = _head(z, scale, shift, w_head, tile_n=tile_n)   # (1, n_pad)
    return out[0, :n]                                     # .squeeze(-1)


def init_params(key):
    """Deterministic synthetic parameters (shapes match SDF.__init__)."""
    ws, gs, bs = [], [], []
    for i in range(7):
        ic, oc = DIMS[i], DIMS[i + 1]
        key, kw = jax.random.split(key)
        w = jax.random.normal(kw, (ic, oc), jnp.float32) / jnp.sqrt(
            jnp.float32(ic))
        ws.append(w)                                  # stored as (ic, oc) = W.T
        if i < 6:                                     # BN on the first 6 layers
            key, kg, kb = jax.random.split(key, 3)
            gs.append(1.0 + 0.1 * jax.random.normal(kg, (1, oc), jnp.float32))
            bs.append(0.1 * jax.random.normal(kb, (1, oc), jnp.float32))
    return ws, gs, bs


def sdf_reference(sdf_q, params):
    """Pure-JAX reference mirroring the kernel's numerics (bf16 matmul inputs,
    bf16 inter-layer storage, folded scale/shift, one-pass batch variance)."""
    ws, gs, bs = params
    h = sdf_q.astype(jnp.float32)
    for i in range(6):
        y = jnp.dot(h.astype(jnp.bfloat16), ws[i].astype(jnp.bfloat16),
                    preferred_element_type=jnp.float32)
        mean = jnp.mean(y, axis=0, keepdims=True)
        var = jnp.maximum(jnp.mean(y * y, axis=0, keepdims=True) - mean * mean,
                          0.0)
        inv = jax.lax.rsqrt(var + BN_EPS)
        scale = gs[i] * inv
        shift = bs[i] - mean * scale
        y = y.astype(jnp.bfloat16).astype(jnp.float32)   # bf16 z storage
        h = jnp.maximum(y * scale + shift, 0.0)
    y = jnp.dot(h.astype(jnp.bfloat16), ws[6].astype(jnp.bfloat16),
                preferred_element_type=jnp.float32)
    return y[:, 0]


if __name__ == "__main__":
    key = jax.random.PRNGKey(0)
    key, kx = jax.random.split(key)

    N = 400        # not a multiple of TILE_N -> exercises the padding mask
    TILE_N = 256   # small test tile; production default is 1024 (sdf_forward)
    sdf_q = jax.random.normal(kx, (N, DIMS[0]), jnp.float32)   # (N, 3)

    params = init_params(key)

    fwd = jax.jit(functools.partial(sdf_forward, tile_n=TILE_N))
    out = jax.block_until_ready(fwd(sdf_q, params))

    ref = sdf_reference(sdf_q, params)
    assert out.shape == (N,), out.shape
    # bf16 MXU numerics: two bf16 evaluations of a 7-layer MLP legitimately
    # diverge by ~0.5-2% per element, so the check uses a bf16-appropriate
    # tolerance (previous run measured max-abs divergence ~0.016).
    max_err = float(jnp.max(jnp.abs(out - ref)))
    assert jnp.allclose(out, ref, atol=5e-2, rtol=5e-2), max_err

    print("KERNEL_OK")
</pallas_src>

<mosaic_0001>
module attributes {stable_mosaic.version = 11 : i64} {
  func.func @kernel(%arg0: i32, %arg1: i32, %arg2: memref<256x8xf32, #tpu.memory_space<vmem>>, %arg3: memref<8x128xbf16, #tpu.memory_space<vmem>>, %arg4: memref<256x128xbf16, #tpu.memory_space<vmem>>, %arg5: memref<1x1x128xf32, #tpu.memory_space<vmem>>, %arg6: memref<1x1x128xf32, #tpu.memory_space<vmem>>) attributes {dimension_semantics = [#tpu.dimension_semantics<parallel>, #tpu.dimension_semantics<arbitrary>], iteration_bounds = array<i64: 2, 1>, scalar_prefetch = 0 : i64, scratch_operands = 0 : i64, tpu.core_type = #tpu.core_type<tc>, window_params = [{transform_indices = @transform_0, window_bounds = array<i64: 256, 8>}, {pipeline_mode = #tpu.pipeline_mode<synchronous>, transform_indices = @transform_1, window_bounds = array<i64: 8, 128>}, {transform_indices = @transform_2, window_bounds = array<i64: 256, 128>}, {transform_indices = @transform_3, window_bounds = array<i64: 1, 1, 128>}, {transform_indices = @transform_4, window_bounds = array<i64: 1, 1, 128>}]} {
    %c0_i32 = arith.constant 0 : i32
    %0 = arith.cmpi eq, %arg1, %c0_i32 : i32
    %1 = arith.extui %0 : i1 to i32
    %c0_i32_0 = arith.constant 0 : i32
    %2 = arith.cmpi ne, %1, %c0_i32_0 : i32
    scf.if %2 {
      %cst_9 = arith.constant 0.000000e+00 : f32
      %19 = vector.broadcast %cst_9 : f32 to vector<1x1x128xf32>
      %c0_10 = arith.constant 0 : index
      %c0_11 = arith.constant 0 : index
      %c0_12 = arith.constant 0 : index
      %20 = vector.load %arg5[%c0_10, %c0_11, %c0_12] : memref<1x1x128xf32, #tpu.memory_space<vmem>>, vector<1x1x128xf32>
      tpu.vector_store %arg5[%c0_10, %c0_11, %c0_12], %19 {strides = array<i32>} : memref<1x1x128xf32, #tpu.memory_space<vmem>>, vector<1x1x128xf32>,
      %cst_13 = arith.constant 0.000000e+00 : f32
      %21 = vector.broadcast %cst_13 : f32 to vector<1x1x128xf32>
      %c0_14 = arith.constant 0 : index
      %c0_15 = arith.constant 0 : index
      %c0_16 = arith.constant 0 : index
      %22 = vector.load %arg6[%c0_14, %c0_15, %c0_16] : memref<1x1x128xf32, #tpu.memory_space<vmem>>, vector<1x1x128xf32>
      tpu.vector_store %arg6[%c0_14, %c0_15, %c0_16], %21 {strides = array<i32>} : memref<1x1x128xf32, #tpu.memory_space<vmem>>, vector<1x1x128xf32>,
    } else {
    }
    %c0 = arith.constant 0 : index
    %c0_1 = arith.constant 0 : index
    %3 = vector.load %arg2[%c0, %c0_1] : memref<256x8xf32, #tpu.memory_space<vmem>>, vector<256x8xf32>
    %4 = arith.truncf %3 : vector<256x8xf32> to vector<256x8xbf16>
    %c0_2 = arith.constant 0 : index
    %c0_3 = arith.constant 0 : index
    %5 = vector.load %arg3[%c0_2, %c0_3] : memref<8x128xbf16, #tpu.memory_space<vmem>>, vector<8x128xbf16>
    %cst = arith.constant dense<0.000000e+00> : vector<256x128xf32>
    %6 = tpu.matmul %4, %5, %cst {dimension_numbers = #tpu.dot_dimension_numbers<[1], [0], [0], [1], [0, 0, 1, 1], [], []>} : vector<256x8xbf16>, vector<8x128xbf16>, vector<256x128xf32> -> vector<256x128xf32>
    %c1_i32 = arith.constant 1 : i32
    %7 = arith.muli %arg0, %c1_i32 : i32
    %8 = arith.addi %7, %arg1 : i32
    %c256_i32 = arith.constant 256 : i32
    %9 = arith.muli %8, %c256_i32 : i32
    %c256_i32_4 = arith.constant 256 : i32
    %10 = arith.addi %9, %c256_i32_4 : i32
    %c400_i32 = arith.constant 400 : i32
    %11 = arith.cmpi sle, %10, %c400_i32 : i32
    %12 = arith.extui %11 : i1 to i32
    %c0_i32_5 = arith.constant 0 : i32
    %13 = arith.cmpi ne, %12, %c0_i32_5 : i32
    scf.if %13 {
      %c0_9 = arith.constant 0 : index
      %c0_10 = arith.constant 0 : index
      %c0_11 = arith.constant 0 : index
      %19 = vector.load %arg5[%c0_9, %c0_10, %c0_11] : memref<1x1x128xf32, #tpu.memory_space<vmem>>, vector<1x1x128xf32>
      %20 = vector.shape_cast %19 : vector<1x1x128xf32> to vector<1x128xf32>
      %cst_12 = arith.constant dense<0.000000e+00> : vector<128xf32>
      %21 = vector.multi_reduction <add>, %6, %cst_12 [0] : vector<256x128xf32> to vector<128xf32>
      %22 = vector.shape_cast %21 : vector<128xf32> to vector<1x128xf32>
      %23 = arith.addf %20, %22 : vector<1x128xf32>
      %c0_13 = arith.constant 0 : index
      %c0_14 = arith.constant 0 : index
      %c0_15 = arith.constant 0 : index
      %24 = vector.load %arg5[%c0_13, %c0_14, %c0_15] : memref<1x1x128xf32, #tpu.memory_space<vmem>>, vector<1x1x128xf32>
      %25 = vector.shape_cast %24 : vector<1x1x128xf32> to vector<1x128xf32>
      %26 = vector.shape_cast %23 : vector<1x128xf32> to vector<1x1x128xf32>
      tpu.vector_store %arg5[%c0_13, %c0_14, %c0_15], %26 {strides = array<i32>} : memref<1x1x128xf32, #tpu.memory_space<vmem>>, vector<1x1x128xf32>,
      %c0_16 = arith.constant 0 : index
      %c0_17 = arith.constant 0 : index
      %c0_18 = arith.constant 0 : index
      %27 = vector.load %arg6[%c0_16, %c0_17, %c0_18] : memref<1x1x128xf32, #tpu.memory_space<vmem>>, vector<1x1x128xf32>
      %28 = vector.shape_cast %27 : vector<1x1x128xf32> to vector<1x128xf32>
      %29 = arith.mulf %6, %6 : vector<256x128xf32>
      %cst_19 = arith.constant dense<0.000000e+00> : vector<128xf32>
      %30 = vector.multi_reduction <add>, %29, %cst_19 [0] : vector<256x128xf32> to vector<128xf32>
      %31 = vector.shape_cast %30 : vector<128xf32> to vector<1x128xf32>
      %32 = arith.addf %28, %31 : vector<1x128xf32>
      %c0_20 = arith.constant 0 : index
      %c0_21 = arith.constant 0 : index
      %c0_22 = arith.constant 0 : index
      %33 = vector.load %arg6[%c0_20, %c0_21, %c0_22] : memref<1x1x128xf32, #tpu.memory_space<vmem>>, vector<1x1x128xf32>
      %34 = vector.shape_cast %33 : vector<1x1x128xf32> to vector<1x128xf32>
      %35 = vector.shape_cast %32 : vector<1x128xf32> to vector<1x1x128xf32>
      tpu.vector_store %arg6[%c0_20, %c0_21, %c0_22], %35 {strides = array<i32>} : memref<1x1x128xf32, #tpu.memory_space<vmem>>, vector<1x1x128xf32>,
    } else {
    }
    %true = arith.constant true
    %14 = arith.xori %11, %true : i1
    %15 = arith.extui %14 : i1 to i32
    %c0_i32_6 = arith.constant 0 : i32
    %16 = arith.cmpi ne, %15, %c0_i32_6 : i32
    scf.if %16 {
      %19 = tpu.iota {dimensions = array<i32: 0>} : vector<256x128xi32>
      %20 = vector.broadcast %9 : i32 to vector<256x128xi32>
      %21 = arith.addi %20, %19 : vector<256x128xi32>
      %c400_i32_9 = arith.constant 400 : i32
      %22 = vector.broadcast %c400_i32_9 : i32 to vector<256x128xi32>
      %23 = arith.cmpi slt, %21, %22 : vector<256x128xi32>
      %cst_10 = arith.constant 0.000000e+00 : f32
      %24 = vector.broadcast %cst_10 : f32 to vector<256x128xf32>
      %25 = arith.select %23, %6, %24 : vector<256x128xi1>, vector<256x128xf32>
      %c0_11 = arith.constant 0 : index
      %c0_12 = arith.constant 0 : index
      %c0_13 = arith.constant 0 : index
      %26 = vector.load %arg5[%c0_11, %c0_12, %c0_13] : memref<1x1x128xf32, #tpu.memory_space<vmem>>, vector<1x1x128xf32>
      %27 = vector.shape_cast %26 : vector<1x1x128xf32> to vector<1x128xf32>
      %cst_14 = arith.constant dense<0.000000e+00> : vector<128xf32>
      %28 = vector.multi_reduction <add>, %25, %cst_14 [0] : vector<256x128xf32> to vector<128xf32>
      %29 = vector.shape_cast %28 : vector<128xf32> to vector<1x128xf32>
      %30 = arith.addf %27, %29 : vector<1x128xf32>
      %c0_15 = arith.constant 0 : index
      %c0_16 = arith.constant 0 : index
      %c0_17 = arith.constant 0 : index
      %31 = vector.load %arg5[%c0_15, %c0_16, %c0_17] : memref<1x1x128xf32, #tpu.memory_space<vmem>>, vector<1x1x128xf32>
      %32 = vector.shape_cast %31 : vector<1x1x128xf32> to vector<1x128xf32>
      %33 = vector.shape_cast %30 : vector<1x128xf32> to vector<1x1x128xf32>
      tpu.vector_store %arg5[%c0_15, %c0_16, %c0_17], %33 {strides = array<i32>} : memref<1x1x128xf32, #tpu.memory_space<vmem>>, vector<1x1x128xf32>,
      %c0_18 = arith.constant 0 : index
      %c0_19 = arith.constant 0 : index
      %c0_20 = arith.constant 0 : index
      %34 = vector.load %arg6[%c0_18, %c0_19, %c0_20] : memref<1x1x128xf32, #tpu.memory_space<vmem>>, vector<1x1x128xf32>
      %35 = vector.shape_cast %34 : vector<1x1x128xf32> to vector<1x128xf32>
      %36 = arith.mulf %25, %25 : vector<256x128xf32>
      %cst_21 = arith.constant dense<0.000000e+00> : vector<128xf32>
      %37 = vector.multi_reduction <add>, %36, %cst_21 [0] : vector<256x128xf32> to vector<128xf32>
      %38 = vector.shape_cast %37 : vector<128xf32> to vector<1x128xf32>
      %39 = arith.addf %35, %38 : vector<1x128xf32>
      %c0_22 = arith.constant 0 : index
      %c0_23 = arith.constant 0 : index
      %c0_24 = arith.constant 0 : index
      %40 = vector.load %arg6[%c0_22, %c0_23, %c0_24] : memref<1x1x128xf32, #tpu.memory_space<vmem>>, vector<1x1x128xf32>
      %41 = vector.shape_cast %40 : vector<1x1x128xf32> to vector<1x128xf32>
      %42 = vector.shape_cast %39 : vector<1x128xf32> to vector<1x1x128xf32>
      tpu.vector_store %arg6[%c0_22, %c0_23, %c0_24], %42 {strides = array<i32>} : memref<1x1x128xf32, #tpu.memory_space<vmem>>, vector<1x1x128xf32>,
    } else {
    }
    %17 = arith.truncf %6 : vector<256x128xf32> to vector<256x128xbf16>
    %c0_7 = arith.constant 0 : index
    %c0_8 = arith.constant 0 : index
    %18 = vector.load %arg4[%c0_7, %c0_8] : memref<256x128xbf16, #tpu.memory_space<vmem>>, vector<256x128xbf16>
    tpu.vector_store %arg4[%c0_7, %c0_8], %17 {strides = array<i32>} : memref<256x128xbf16, #tpu.memory_space<vmem>>, vector<256x128xbf16>,
    return
  }
  func.func @transform_0(%arg0: i32, %arg1: i32) -> (i32, i32) {
    %c1_i32 = arith.constant 1 : i32
    %0 = arith.muli %arg0, %c1_i32 : i32
    %1 = arith.addi %0, %arg1 : i32
    %c0_i32 = arith.constant 0 : i32
    %c0_i32_0 = arith.constant 0 : i32
    return %1, %c0_i32 : i32, i32
  }
  func.func @transform_1(%arg0: i32, %arg1: i32) -> (i32, i32) {
    %c0_i32 = arith.constant 0 : i32
    %c0_i32_0 = arith.constant 0 : i32
    %c0_i32_1 = arith.constant 0 : i32
    return %c0_i32, %c0_i32_0 : i32, i32
  }
  func.func @transform_2(%arg0: i32, %arg1: i32) -> (i32, i32) {
    %c1_i32 = arith.constant 1 : i32
    %0 = arith.muli %arg0, %c1_i32 : i32
    %1 = arith.addi %0, %arg1 : i32
    %c0_i32 = arith.constant 0 : i32
    %c0_i32_0 = arith.constant 0 : i32
    return %1, %c0_i32 : i32, i32
  }
  func.func @transform_3(%arg0: i32, %arg1: i32) -> (i32, i32, i32) {
    %c0_i32 = arith.constant 0 : i32
    %c0_i32_0 = arith.constant 0 : i32
    %c0_i32_1 = arith.constant 0 : i32
    return %arg0, %c0_i32, %c0_i32_0 : i32, i32, i32
  }
  func.func @transform_4(%arg0: i32, %arg1: i32) -> (i32, i32, i32) {
    %c0_i32 = arith.constant 0 : i32
    %c0_i32_0 = arith.constant 0 : i32
    %c0_i32_1 = arith.constant 0 : i32
    return %arg0, %c0_i32, %c0_i32_0 : i32, i32, i32
  }
}

module attributes {stable_mosaic.version = 11 : i64} {
  func.func @kernel(%arg0: i32, %arg1: i32, %arg2: memref<256x128xbf16, #tpu.memory_space<vmem>>, %arg3: memref<128x128xbf16, #tpu.memory_space<vmem>>, %arg4: memref<1x128xf32, #tpu.memory_space<vmem>>, %arg5: memref<1x128xf32, #tpu.memory_space<vmem>>, %arg6: memref<256x128xbf16, #tpu.memory_space<vmem>>, %arg7: memref<1x1x128xf32, #tpu.memory_space<vmem>>, %arg8: memref<1x1x128xf32, #tpu.memory_space<vmem>>) attributes {dimension_semantics = [#tpu.dimension_semantics<parallel>, #tpu.dimension_semantics<arbitrary>], iteration_bounds = array<i64: 2, 1>, scalar_prefetch = 0 : i64, scratch_operands = 0 : i64, tpu.core_type = #tpu.core_type<tc>, window_params = [{transform_indices = @transform_0, window_bounds = array<i64: 256, 128>}, {pipeline_mode = #tpu.pipeline_mode<synchronous>, transform_indices = @transform_1, window_bounds = array<i64: 128, 128>}, {pipeline_mode = #tpu.pipeline_mode<synchronous>, transform_indices = @transform_2, window_bounds = array<i64: 1, 128>}, {pipeline_mode = #tpu.pipeline_mode<synchronous>, transform_indices = @transform_3, window_bounds = array<i64: 1, 128>}, {transform_indices = @transform_4, window_bounds = array<i64: 256, 128>}, {transform_indices = @transform_5, window_bounds = array<i64: 1, 1, 128>}, {transform_indices = @transform_6, window_bounds = array<i64: 1, 1, 128>}]} {
    %c0_i32 = arith.constant 0 : i32
    %0 = arith.cmpi eq, %arg1, %c0_i32 : i32
    %1 = arith.extui %0 : i1 to i32
    %c0_i32_0 = arith.constant 0 : i32
    %2 = arith.cmpi ne, %1, %c0_i32_0 : i32
    scf.if %2 {
      %cst_14 = arith.constant 0.000000e+00 : f32
      %28 = vector.broadcast %cst_14 : f32 to vector<1x1x128xf32>
      %c0_15 = arith.constant 0 : index
      %c0_16 = arith.constant 0 : index
      %c0_17 = arith.constant 0 : index
      %29 = vector.load %arg7[%c0_15, %c0_16, %c0_17] : memref<1x1x128xf32, #tpu.memory_space<vmem>>, vector<1x1x128xf32>
      tpu.vector_store %arg7[%c0_15, %c0_16, %c0_17], %28 {strides = array<i32>} : memref<1x1x128xf32, #tpu.memory_space<vmem>>, vector<1x1x128xf32>,
      %cst_18 = arith.constant 0.000000e+00 : f32
      %30 = vector.broadcast %cst_18 : f32 to vector<1x1x128xf32>
      %c0_19 = arith.constant 0 : index
      %c0_20 = arith.constant 0 : index
      %c0_21 = arith.constant 0 : index
      %31 = vector.load %arg8[%c0_19, %c0_20, %c0_21] : memref<1x1x128xf32, #tpu.memory_space<vmem>>, vector<1x1x128xf32>
      tpu.vector_store %arg8[%c0_19, %c0_20, %c0_21], %30 {strides = array<i32>} : memref<1x1x128xf32, #tpu.memory_space<vmem>>, vector<1x1x128xf32>,
    } else {
    }
    %c0 = arith.constant 0 : index
    %c0_1 = arith.constant 0 : index
    %3 = vector.load %arg2[%c0, %c0_1] : memref<256x128xbf16, #tpu.memory_space<vmem>>, vector<256x128xbf16>
    %4 = arith.extf %3 : vector<256x128xbf16> to vector<256x128xf32>
    %c0_2 = arith.constant 0 : index
    %c0_3 = arith.constant 0 : index
    %5 = vector.load %arg4[%c0_2, %c0_3] : memref<1x128xf32, #tpu.memory_space<vmem>>, vector<1x128xf32>
    %6 = vector.broadcast %5 : vector<1x128xf32> to vector<256x128xf32>
    %7 = arith.mulf %4, %6 : vector<256x128xf32>
    %c0_4 = arith.constant 0 : index
    %c0_5 = arith.constant 0 : index
    %8 = vector.load %arg5[%c0_4, %c0_5] : memref<1x128xf32, #tpu.memory_space<vmem>>, vector<1x128xf32>
    %9 = vector.broadcast %8 : vector<1x128xf32> to vector<256x128xf32>
    %10 = arith.addf %7, %9 : vector<256x128xf32>
    %cst = arith.constant 0.000000e+00 : f32
    %11 = vector.broadcast %cst : f32 to vector<256x128xf32>
    %12 = arith.maximumf %10, %11 : vector<256x128xf32>
    %13 = arith.truncf %12 : vector<256x128xf32> to vector<256x128xbf16>
    %c0_6 = arith.constant 0 : index
    %c0_7 = arith.constant 0 : index
    %14 = vector.load %arg3[%c0_6, %c0_7] : memref<128x128xbf16, #tpu.memory_space<vmem>>, vector<128x128xbf16>
    %cst_8 = arith.constant dense<0.000000e+00> : vector<256x128xf32>
    %15 = tpu.matmul %13, %14, %cst_8 {dimension_numbers = #tpu.dot_dimension_numbers<[1], [0], [0], [1], [0, 0, 1, 1], [], []>} : vector<256x128xbf16>, vector<128x128xbf16>, vector<256x128xf32> -> vector<256x128xf32>
    %c1_i32 = arith.constant 1 : i32
    %16 = arith.muli %arg0, %c1_i32 : i32
    %17 = arith.addi %16, %arg1 : i32
    %c256_i32 = arith.constant 256 : i32
    %18 = arith.muli %17, %c256_i32 : i32
    %c256_i32_9 = arith.constant 256 : i32
    %19 = arith.addi %18, %c256_i32_9 : i32
    %c400_i32 = arith.constant 400 : i32
    %20 = arith.cmpi sle, %19, %c400_i32 : i32
    %21 = arith.extui %20 : i1 to i32
    %c0_i32_10 = arith.constant 0 : i32
    %22 = arith.cmpi ne, %21, %c0_i32_10 : i32
    scf.if %22 {
      %c0_14 = arith.constant 0 : index
      %c0_15 = arith.constant 0 : index
      %c0_16 = arith.constant 0 : index
      %28 = vector.load %arg7[%c0_14, %c0_15, %c0_16] : memref<1x1x128xf32, #tpu.memory_space<vmem>>, vector<1x1x128xf32>
      %29 = vector.shape_cast %28 : vector<1x1x128xf32> to vector<1x128xf32>
      %cst_17 = arith.constant dense<0.000000e+00> : vector<128xf32>
      %30 = vector.multi_reduction <add>, %15, %cst_17 [0] : vector<256x128xf32> to vector<128xf32>
      %31 = vector.shape_cast %30 : vector<128xf32> to vector<1x128xf32>
      %32 = arith.addf %29, %31 : vector<1x128xf32>
      %c0_18 = arith.constant 0 : index
      %c0_19 = arith.constant 0 : index
      %c0_20 = arith.constant 0 : index
      %33 = vector.load %arg7[%c0_18, %c0_19, %c0_20] : memref<1x1x128xf32, #tpu.memory_space<vmem>>, vector<1x1x128xf32>
      %34 = vector.shape_cast %33 : vector<1x1x128xf32> to vector<1x128xf32>
      %35 = vector.shape_cast %32 : vector<1x128xf32> to vector<1x1x128xf32>
      tpu.vector_store %arg7[%c0_18, %c0_19, %c0_20], %35 {strides = array<i32>} : memref<1x1x128xf32, #tpu.memory_space<vmem>>, vector<1x1x128xf32>,
      %c0_21 = arith.constant 0 : index
      %c0_22 = arith.constant 0 : index
      %c0_23 = arith.constant 0 : index
      %36 = vector.load %arg8[%c0_21, %c0_22, %c0_23] : memref<1x1x128xf32, #tpu.memory_space<vmem>>, vector<1x1x128xf32>
      %37 = vector.shape_cast %36 : vector<1x1x128xf32> to vector<1x128xf32>
      %38 = arith.mulf %15, %15 : vector<256x128xf32>
      %cst_24 = arith.constant dense<0.000000e+00> : vector<128xf32>
      %39 = vector.multi_reduction <add>, %38, %cst_24 [0] : vector<256x128xf32> to vector<128xf32>
      %40 = vector.shape_cast %39 : vector<128xf32> to vector<1x128xf32>
      %41 = arith.addf %37, %40 : vector<1x128xf32>
      %c0_25 = arith.constant 0 : index
      %c0_26 = arith.constant 0 : index
      %c0_27 = arith.constant 0 : index
      %42 = vector.load %arg8[%c0_25, %c0_26, %c0_27] : memref<1x1x128xf32, #tpu.memory_space<vmem>>, vector<1x1x128xf32>
      %43 = vector.shape_cast %42 : vector<1x1x128xf32> to vector<1x128xf32>
      %44 = vector.shape_cast %41 : vector<1x128xf32> to vector<1x1x128xf32>
      tpu.vector_store %arg8[%c0_25, %c0_26, %c0_27], %44 {strides = array<i32>} : memref<1x1x128xf32, #tpu.memory_space<vmem>>, vector<1x1x128xf32>,
    } else {
    }
    %true = arith.constant true
    %23 = arith.xori %20, %true : i1
    %24 = arith.extui %23 : i1 to i32
    %c0_i32_11 = arith.constant 0 : i32
    %25 = arith.cmpi ne, %24, %c0_i32_11 : i32
    scf.if %25 {
      %28 = tpu.iota {dimensions = array<i32: 0>} : vector<256x128xi32>
      %29 = vector.broadcast %18 : i32 to vector<256x128xi32>
      %30 = arith.addi %29, %28 : vector<256x128xi32>
      %c400_i32_14 = arith.constant 400 : i32
      %31 = vector.broadcast %c400_i32_14 : i32 to vector<256x128xi32>
      %32 = arith.cmpi slt, %30, %31 : vector<256x128xi32>
      %cst_15 = arith.constant 0.000000e+00 : f32
      %33 = vector.broadcast %cst_15 : f32 to vector<256x128xf32>
      %34 = arith.select %32, %15, %33 : vector<256x128xi1>, vector<256x128xf32>
      %c0_16 = arith.constant 0 : index
      %c0_17 = arith.constant 0 : index
      %c0_18 = arith.constant 0 : index
      %35 = vector.load %arg7[%c0_16, %c0_17, %c0_18] : memref<1x1x128xf32, #tpu.memory_space<vmem>>, vector<1x1x128xf32>
      %36 = vector.shape_cast %35 : vector<1x1x128xf32> to vector<1x128xf32>
      %cst_19 = arith.constant dense<0.000000e+00> : vector<128xf32>
      %37 = vector.multi_reduction <add>, %34, %cst_19 [0] : vector<256x128xf32> to vector<128xf32>
      %38 = vector.shape_cast %37 : vector<128xf32> to vector<1x128xf32>
      %39 = arith.addf %36, %38 : vector<1x128xf32>
      %c0_20 = arith.constant 0 : index
      %c0_21 = arith.constant 0 : index
      %c0_22 = arith.constant 0 : index
      %40 = vector.load %arg7[%c0_20, %c0_21, %c0_22] : memref<1x1x128xf32, #tpu.memory_space<vmem>>, vector<1x1x128xf32>
      %41 = vector.shape_cast %40 : vector<1x1x128xf32> to vector<1x128xf32>
      %42 = vector.shape_cast %39 : vector<1x128xf32> to vector<1x1x128xf32>
      tpu.vector_store %arg7[%c0_20, %c0_21, %c0_22], %42 {strides = array<i32>} : memref<1x1x128xf32, #tpu.memory_space<vmem>>, vector<1x1x128xf32>,
      %c0_23 = arith.constant 0 : index
      %c0_24 = arith.constant 0 : index
      %c0_25 = arith.constant 0 : index
      %43 = vector.load %arg8[%c0_23, %c0_24, %c0_25] : memref<1x1x128xf32, #tpu.memory_space<vmem>>, vector<1x1x128xf32>
      %44 = vector.shape_cast %43 : vector<1x1x128xf32> to vector<1x128xf32>
      %45 = arith.mulf %34, %34 : vector<256x128xf32>
      %cst_26 = arith.constant dense<0.000000e+00> : vector<128xf32>
      %46 = vector.multi_reduction <add>, %45, %cst_26 [0] : vector<256x128xf32> to vector<128xf32>
      %47 = vector.shape_cast %46 : vector<128xf32> to vector<1x128xf32>
      %48 = arith.addf %44, %47 : vector<1x128xf32>
      %c0_27 = arith.constant 0 : index
      %c0_28 = arith.constant 0 : index
      %c0_29 = arith.constant 0 : index
      %49 = vector.load %arg8[%c0_27, %c0_28, %c0_29] : memref<1x1x128xf32, #tpu.memory_space<vmem>>, vector<1x1x128xf32>
      %50 = vector.shape_cast %49 : vector<1x1x128xf32> to vector<1x128xf32>
      %51 = vector.shape_cast %48 : vector<1x128xf32> to vector<1x1x128xf32>
      tpu.vector_store %arg8[%c0_27, %c0_28, %c0_29], %51 {strides = array<i32>} : memref<1x1x128xf32, #tpu.memory_space<vmem>>, vector<1x1x128xf32>,
    } else {
    }
    %26 = arith.truncf %15 : vector<256x128xf32> to vector<256x128xbf16>
    %c0_12 = arith.constant 0 : index
    %c0_13 = arith.constant 0 : index
    %27 = vector.load %arg6[%c0_12, %c0_13] : memref<256x128xbf16, #tpu.memory_space<vmem>>, vector<256x128xbf16>
    tpu.vector_store %arg6[%c0_12, %c0_13], %26 {strides = array<i32>} : memref<256x128xbf16, #tpu.memory_space<vmem>>, vector<256x128xbf16>,
    return
  }
  func.func @transform_0(%arg0: i32, %arg1: i32) -> (i32, i32) {
    %c1_i32 = arith.constant 1 : i32
    %0 = arith.muli %arg0, %c1_i32 : i32
    %1 = arith.addi %0, %arg1 : i32
    %c0_i32 = arith.constant 0 : i32
    %c0_i32_0 = arith.constant 0 : i32
    return %1, %c0_i32 : i32, i32
  }
  func.func @transform_1(%arg0: i32, %arg1: i32) -> (i32, i32) {
    %c0_i32 = arith.constant 0 : i32
    %c0_i32_0 = arith.constant 0 : i32
    %c0_i32_1 = arith.constant 0 : i32
    return %c0_i32, %c0_i32_0 : i32, i32
  }
  func.func @transform_2(%arg0: i32, %arg1: i32) -> (i32, i32) {
    %c0_i32 = arith.constant 0 : i32
    %c0_i32_0 = arith.constant 0 : i32
    %c0_i32_1 = arith.constant 0 : i32
    return %c0_i32, %c0_i32_0 : i32, i32
  }
  func.func @transform_3(%arg0: i32, %arg1: i32) -> (i32, i32) {
    %c0_i32 = arith.constant 0 : i32
    %c0_i32_0 = arith.constant 0 : i32
    %c0_i32_1 = arith.constant 0 : i32
    return %c0_i32, %c0_i32_0 : i32, i32
  }
  func.func @transform_4(%arg0: i32, %arg1: i32) -> (i32, i32) {
    %c1_i32 = arith.constant 1 : i32
    %0 = arith.muli %arg0, %c1_i32 : i32
    %1 = arith.addi %0, %arg1 : i32
    %c0_i32 = arith.constant 0 : i32
    %c0_i32_0 = arith.constant 0 : i32
    return %1, %c0_i32 : i32, i32
  }
  func.func @transform_5(%arg0: i32, %arg1: i32) -> (i32, i32, i32) {
    %c0_i32 = arith.constant 0 : i32
    %c0_i32_0 = arith.constant 0 : i32
    %c0_i32_1 = arith.constant 0 : i32
    return %arg0, %c0_i32, %c0_i32_0 : i32, i32, i32
  }
  func.func @transform_6(%arg0: i32, %arg1: i32) -> (i32, i32, i32) {
    %c0_i32 = arith.constant 0 : i32
    %c0_i32_0 = arith.constant 0 : i32
    %c0_i32_1 = arith.constant 0 : i32
    return %arg0, %c0_i32, %c0_i32_0 : i32, i32, i32
  }
}

module attributes {stable_mosaic.version = 11 : i64} {
  func.func @kernel(%arg0: i32, %arg1: i32, %arg2: memref<256x128xbf16, #tpu.memory_space<vmem>>, %arg3: memref<128x256xbf16, #tpu.memory_space<vmem>>, %arg4: memref<1x128xf32, #tpu.memory_space<vmem>>, %arg5: memref<1x128xf32, #tpu.memory_space<vmem>>, %arg6: memref<256x256xbf16, #tpu.memory_space<vmem>>, %arg7: memref<1x1x256xf32, #tpu.memory_space<vmem>>, %arg8: memref<1x1x256xf32, #tpu.memory_space<vmem>>) attributes {dimension_semantics = [#tpu.dimension_semantics<parallel>, #tpu.dimension_semantics<arbitrary>], iteration_bounds = array<i64: 2, 1>, scalar_prefetch = 0 : i64, scratch_operands = 0 : i64, tpu.core_type = #tpu.core_type<tc>, window_params = [{transform_indices = @transform_0, window_bounds = array<i64: 256, 128>}, {pipeline_mode = #tpu.pipeline_mode<synchronous>, transform_indices = @transform_1, window_bounds = array<i64: 128, 256>}, {pipeline_mode = #tpu.pipeline_mode<synchronous>, transform_indices = @transform_2, window_bounds = array<i64: 1, 128>}, {pipeline_mode = #tpu.pipeline_mode<synchronous>, transform_indices = @transform_3, window_bounds = array<i64: 1, 128>}, {transform_indices = @transform_4, window_bounds = array<i64: 256, 256>}, {transform_indices = @transform_5, window_bounds = array<i64: 1, 1, 256>}, {transform_indices = @transform_6, window_bounds = array<i64: 1, 1, 256>}]} {
    %c0_i32 = arith.constant 0 : i32
    %0 = arith.cmpi eq, %arg1, %c0_i32 : i32
    %1 = arith.extui %0 : i1 to i32
    %c0_i32_0 = arith.constant 0 : i32
    %2 = arith.cmpi ne, %1, %c0_i32_0 : i32
    scf.if %2 {
      %cst_14 = arith.constant 0.000000e+00 : f32
      %28 = vector.broadcast %cst_14 : f32 to vector<1x1x256xf32>
      %c0_15 = arith.constant 0 : index
      %c0_16 = arith.constant 0 : index
      %c0_17 = arith.constant 0 : index
      %29 = vector.load %arg7[%c0_15, %c0_16, %c0_17] : memref<1x1x256xf32, #tpu.memory_space<vmem>>, vector<1x1x256xf32>
      tpu.vector_store %arg7[%c0_15, %c0_16, %c0_17], %28 {strides = array<i32>} : memref<1x1x256xf32, #tpu.memory_space<vmem>>, vector<1x1x256xf32>,
      %cst_18 = arith.constant 0.000000e+00 : f32
      %30 = vector.broadcast %cst_18 : f32 to vector<1x1x256xf32>
      %c0_19 = arith.constant 0 : index
      %c0_20 = arith.constant 0 : index
      %c0_21 = arith.constant 0 : index
      %31 = vector.load %arg8[%c0_19, %c0_20, %c0_21] : memref<1x1x256xf32, #tpu.memory_space<vmem>>, vector<1x1x256xf32>
      tpu.vector_store %arg8[%c0_19, %c0_20, %c0_21], %30 {strides = array<i32>} : memref<1x1x256xf32, #tpu.memory_space<vmem>>, vector<1x1x256xf32>,
    } else {
    }
    %c0 = arith.constant 0 : index
    %c0_1 = arith.constant 0 : index
    %3 = vector.load %arg2[%c0, %c0_1] : memref<256x128xbf16, #tpu.memory_space<vmem>>, vector<256x128xbf16>
    %4 = arith.extf %3 : vector<256x128xbf16> to vector<256x128xf32>
    %c0_2 = arith.constant 0 : index
    %c0_3 = arith.constant 0 : index
    %5 = vector.load %arg4[%c0_2, %c0_3] : memref<1x128xf32, #tpu.memory_space<vmem>>, vector<1x128xf32>
    %6 = vector.broadcast %5 : vector<1x128xf32> to vector<256x128xf32>
    %7 = arith.mulf %4, %6 : vector<256x128xf32>
    %c0_4 = arith.constant 0 : index
    %c0_5 = arith.constant 0 : index
    %8 = vector.load %arg5[%c0_4, %c0_5] : memref<1x128xf32, #tpu.memory_space<vmem>>, vector<1x128xf32>
    %9 = vector.broadcast %8 : vector<1x128xf32> to vector<256x128xf32>
    %10 = arith.addf %7, %9 : vector<256x128xf32>
    %cst = arith.constant 0.000000e+00 : f32
    %11 = vector.broadcast %cst : f32 to vector<256x128xf32>
    %12 = arith.maximumf %10, %11 : vector<256x128xf32>
    %13 = arith.truncf %12 : vector<256x128xf32> to vector<256x128xbf16>
    %c0_6 = arith.constant 0 : index
    %c0_7 = arith.constant 0 : index
    %14 = vector.load %arg3[%c0_6, %c0_7] : memref<128x256xbf16, #tpu.memory_space<vmem>>, vector<128x256xbf16>
    %cst_8 = arith.constant dense<0.000000e+00> : vector<256x256xf32>
    %15 = tpu.matmul %13, %14, %cst_8 {dimension_numbers = #tpu.dot_dimension_numbers<[1], [0], [0], [1], [0, 0, 1, 1], [], []>} : vector<256x128xbf16>, vector<128x256xbf16>, vector<256x256xf32> -> vector<256x256xf32>
    %c1_i32 = arith.constant 1 : i32
    %16 = arith.muli %arg0, %c1_i32 : i32
    %17 = arith.addi %16, %arg1 : i32
    %c256_i32 = arith.constant 256 : i32
    %18 = arith.muli %17, %c256_i32 : i32
    %c256_i32_9 = arith.constant 256 : i32
    %19 = arith.addi %18, %c256_i32_9 : i32
    %c400_i32 = arith.constant 400 : i32
    %20 = arith.cmpi sle, %19, %c400_i32 : i32
    %21 = arith.extui %20 : i1 to i32
    %c0_i32_10 = arith.constant 0 : i32
    %22 = arith.cmpi ne, %21, %c0_i32_10 : i32
    scf.if %22 {
      %c0_14 = arith.constant 0 : index
      %c0_15 = arith.constant 0 : index
      %c0_16 = arith.constant 0 : index
      %28 = vector.load %arg7[%c0_14, %c0_15, %c0_16] : memref<1x1x256xf32, #tpu.memory_space<vmem>>, vector<1x1x256xf32>
      %29 = vector.shape_cast %28 : vector<1x1x256xf32> to vector<1x256xf32>
      %cst_17 = arith.constant dense<0.000000e+00> : vector<256xf32>
      %30 = vector.multi_reduction <add>, %15, %cst_17 [0] : vector<256x256xf32> to vector<256xf32>
      %31 = vector.shape_cast %30 : vector<256xf32> to vector<1x256xf32>
      %32 = arith.addf %29, %31 : vector<1x256xf32>
      %c0_18 = arith.constant 0 : index
      %c0_19 = arith.constant 0 : index
      %c0_20 = arith.constant 0 : index
      %33 = vector.load %arg7[%c0_18, %c0_19, %c0_20] : memref<1x1x256xf32, #tpu.memory_space<vmem>>, vector<1x1x256xf32>
      %34 = vector.shape_cast %33 : vector<1x1x256xf32> to vector<1x256xf32>
      %35 = vector.shape_cast %32 : vector<1x256xf32> to vector<1x1x256xf32>
      tpu.vector_store %arg7[%c0_18, %c0_19, %c0_20], %35 {strides = array<i32>} : memref<1x1x256xf32, #tpu.memory_space<vmem>>, vector<1x1x256xf32>,
      %c0_21 = arith.constant 0 : index
      %c0_22 = arith.constant 0 : index
      %c0_23 = arith.constant 0 : index
      %36 = vector.load %arg8[%c0_21, %c0_22, %c0_23] : memref<1x1x256xf32, #tpu.memory_space<vmem>>, vector<1x1x256xf32>
      %37 = vector.shape_cast %36 : vector<1x1x256xf32> to vector<1x256xf32>
      %38 = arith.mulf %15, %15 : vector<256x256xf32>
      %cst_24 = arith.constant dense<0.000000e+00> : vector<256xf32>
      %39 = vector.multi_reduction <add>, %38, %cst_24 [0] : vector<256x256xf32> to vector<256xf32>
      %40 = vector.shape_cast %39 : vector<256xf32> to vector<1x256xf32>
      %41 = arith.addf %37, %40 : vector<1x256xf32>
      %c0_25 = arith.constant 0 : index
      %c0_26 = arith.constant 0 : index
      %c0_27 = arith.constant 0 : index
      %42 = vector.load %arg8[%c0_25, %c0_26, %c0_27] : memref<1x1x256xf32, #tpu.memory_space<vmem>>, vector<1x1x256xf32>
      %43 = vector.shape_cast %42 : vector<1x1x256xf32> to vector<1x256xf32>
      %44 = vector.shape_cast %41 : vector<1x256xf32> to vector<1x1x256xf32>
      tpu.vector_store %arg8[%c0_25, %c0_26, %c0_27], %44 {strides = array<i32>} : memref<1x1x256xf32, #tpu.memory_space<vmem>>, vector<1x1x256xf32>,
    } else {
    }
    %true = arith.constant true
    %23 = arith.xori %20, %true : i1
    %24 = arith.extui %23 : i1 to i32
    %c0_i32_11 = arith.constant 0 : i32
    %25 = arith.cmpi ne, %24, %c0_i32_11 : i32
    scf.if %25 {
      %28 = tpu.iota {dimensions = array<i32: 0>} : vector<256x256xi32>
      %29 = vector.broadcast %18 : i32 to vector<256x256xi32>
      %30 = arith.addi %29, %28 : vector<256x256xi32>
      %c400_i32_14 = arith.constant 400 : i32
      %31 = vector.broadcast %c400_i32_14 : i32 to vector<256x256xi32>
      %32 = arith.cmpi slt, %30, %31 : vector<256x256xi32>
      %cst_15 = arith.constant 0.000000e+00 : f32
      %33 = vector.broadcast %cst_15 : f32 to vector<256x256xf32>
      %34 = arith.select %32, %15, %33 : vector<256x256xi1>, vector<256x256xf32>
      %c0_16 = arith.constant 0 : index
      %c0_17 = arith.constant 0 : index
      %c0_18 = arith.constant 0 : index
      %35 = vector.load %arg7[%c0_16, %c0_17, %c0_18] : memref<1x1x256xf32, #tpu.memory_space<vmem>>, vector<1x1x256xf32>
      %36 = vector.shape_cast %35 : vector<1x1x256xf32> to vector<1x256xf32>
      %cst_19 = arith.constant dense<0.000000e+00> : vector<256xf32>
      %37 = vector.multi_reduction <add>, %34, %cst_19 [0] : vector<256x256xf32> to vector<256xf32>
      %38 = vector.shape_cast %37 : vector<256xf32> to vector<1x256xf32>
      %39 = arith.addf %36, %38 : vector<1x256xf32>
      %c0_20 = arith.constant 0 : index
      %c0_21 = arith.constant 0 : index
      %c0_22 = arith.constant 0 : index
      %40 = vector.load %arg7[%c0_20, %c0_21, %c0_22] : memref<1x1x256xf32, #tpu.memory_space<vmem>>, vector<1x1x256xf32>
      %41 = vector.shape_cast %40 : vector<1x1x256xf32> to vector<1x256xf32>
      %42 = vector.shape_cast %39 : vector<1x256xf32> to vector<1x1x256xf32>
      tpu.vector_store %arg7[%c0_20, %c0_21, %c0_22], %42 {strides = array<i32>} : memref<1x1x256xf32, #tpu.memory_space<vmem>>, vector<1x1x256xf32>,
      %c0_23 = arith.constant 0 : index
      %c0_24 = arith.constant 0 : index
      %c0_25 = arith.constant 0 : index
      %43 = vector.load %arg8[%c0_23, %c0_24, %c0_25] : memref<1x1x256xf32, #tpu.memory_space<vmem>>, vector<1x1x256xf32>
      %44 = vector.shape_cast %43 : vector<1x1x256xf32> to vector<1x256xf32>
      %45 = arith.mulf %34, %34 : vector<256x256xf32>
      %cst_26 = arith.constant dense<0.000000e+00> : vector<256xf32>
      %46 = vector.multi_reduction <add>, %45, %cst_26 [0] : vector<256x256xf32> to vector<256xf32>
      %47 = vector.shape_cast %46 : vector<256xf32> to vector<1x256xf32>
      %48 = arith.addf %44, %47 : vector<1x256xf32>
      %c0_27 = arith.constant 0 : index
      %c0_28 = arith.constant 0 : index
      %c0_29 = arith.constant 0 : index
      %49 = vector.load %arg8[%c0_27, %c0_28, %c0_29] : memref<1x1x256xf32, #tpu.memory_space<vmem>>, vector<1x1x256xf32>
      %50 = vector.shape_cast %49 : vector<1x1x256xf32> to vector<1x256xf32>
      %51 = vector.shape_cast %48 : vector<1x256xf32> to vector<1x1x256xf32>
      tpu.vector_store %arg8[%c0_27, %c0_28, %c0_29], %51 {strides = array<i32>} : memref<1x1x256xf32, #tpu.memory_space<vmem>>, vector<1x1x256xf32>,
    } else {
    }
    %26 = arith.truncf %15 : vector<256x256xf32> to vector<256x256xbf16>
    %c0_12 = arith.constant 0 : index
    %c0_13 = arith.constant 0 : index
    %27 = vector.load %arg6[%c0_12, %c0_13] : memref<256x256xbf16, #tpu.memory_space<vmem>>, vector<256x256xbf16>
    tpu.vector_store %arg6[%c0_12, %c0_13], %26 {strides = array<i32>} : memref<256x256xbf16, #tpu.memory_space<vmem>>, vector<256x256xbf16>,
    return
  }
  func.func @transform_0(%arg0: i32, %arg1: i32) -> (i32, i32) {
    %c1_i32 = arith.constant 1 : i32
    %0 = arith.muli %arg0, %c1_i32 : i32
    %1 = arith.addi %0, %arg1 : i32
    %c0_i32 = arith.constant 0 : i32
    %c0_i32_0 = arith.constant 0 : i32
    return %1, %c0_i32 : i32, i32
  }
  func.func @transform_1(%arg0: i32, %arg1: i32) -> (i32, i32) {
    %c0_i32 = arith.constant 0 : i32
    %c0_i32_0 = arith.constant 0 : i32
    %c0_i32_1 = arith.constant 0 : i32
    return %c0_i32, %c0_i32_0 : i32, i32
  }
  func.func @transform_2(%arg0: i32, %arg1: i32) -> (i32, i32) {
    %c0_i32 = arith.constant 0 : i32
    %c0_i32_0 = arith.constant 0 : i32
    %c0_i32_1 = arith.constant 0 : i32
    return %c0_i32, %c0_i32_0 : i32, i32
  }
  func.func @transform_3(%arg0: i32, %arg1: i32) -> (i32, i32) {
    %c0_i32 = arith.constant 0 : i32
    %c0_i32_0 = arith.constant 0 : i32
    %c0_i32_1 = arith.constant 0 : i32
    return %c0_i32, %c0_i32_0 : i32, i32
  }
  func.func @transform_4(%arg0: i32, %arg1: i32) -> (i32, i32) {
    %c1_i32 = arith.constant 1 : i32
    %0 = arith.muli %arg0, %c1_i32 : i32
    %1 = arith.addi %0, %arg1 : i32
    %c0_i32 = arith.constant 0 : i32
    %c0_i32_0 = arith.constant 0 : i32
    return %1, %c0_i32 : i32, i32
  }
  func.func @transform_5(%arg0: i32, %arg1: i32) -> (i32, i32, i32) {
    %c0_i32 = arith.constant 0 : i32
    %c0_i32_0 = arith.constant 0 : i32
    %c0_i32_1 = arith.constant 0 : i32
    return %arg0, %c0_i32, %c0_i32_0 : i32, i32, i32
  }
  func.func @transform_6(%arg0: i32, %arg1: i32) -> (i32, i32, i32) {
    %c0_i32 = arith.constant 0 : i32
    %c0_i32_0 = arith.constant 0 : i32
    %c0_i32_1 = arith.constant 0 : i32
    return %arg0, %c0_i32, %c0_i32_0 : i32, i32, i32
  }
}

module attributes {stable_mosaic.version = 11 : i64} {
  func.func @kernel(%arg0: i32, %arg1: i32, %arg2: memref<256x256xbf16, #tpu.memory_space<vmem>>, %arg3: memref<256x512xbf16, #tpu.memory_space<vmem>>, %arg4: memref<1x256xf32, #tpu.memory_space<vmem>>, %arg5: memref<1x256xf32, #tpu.memory_space<vmem>>, %arg6: memref<256x512xbf16, #tpu.memory_space<vmem>>, %arg7: memref<1x1x512xf32, #tpu.memory_space<vmem>>, %arg8: memref<1x1x512xf32, #tpu.memory_space<vmem>>) attributes {dimension_semantics = [#tpu.dimension_semantics<parallel>, #tpu.dimension_semantics<arbitrary>], iteration_bounds = array<i64: 2, 1>, scalar_prefetch = 0 : i64, scratch_operands = 0 : i64, tpu.core_type = #tpu.core_type<tc>, window_params = [{transform_indices = @transform_0, window_bounds = array<i64: 256, 256>}, {pipeline_mode = #tpu.pipeline_mode<synchronous>, transform_indices = @transform_1, window_bounds = array<i64: 256, 512>}, {pipeline_mode = #tpu.pipeline_mode<synchronous>, transform_indices = @transform_2, window_bounds = array<i64: 1, 256>}, {pipeline_mode = #tpu.pipeline_mode<synchronous>, transform_indices = @transform_3, window_bounds = array<i64: 1, 256>}, {transform_indices = @transform_4, window_bounds = array<i64: 256, 512>}, {transform_indices = @transform_5, window_bounds = array<i64: 1, 1, 512>}, {transform_indices = @transform_6, window_bounds = array<i64: 1, 1, 512>}]} {
    %c0_i32 = arith.constant 0 : i32
    %0 = arith.cmpi eq, %arg1, %c0_i32 : i32
    %1 = arith.extui %0 : i1 to i32
    %c0_i32_0 = arith.constant 0 : i32
    %2 = arith.cmpi ne, %1, %c0_i32_0 : i32
    scf.if %2 {
      %cst_14 = arith.constant 0.000000e+00 : f32
      %28 = vector.broadcast %cst_14 : f32 to vector<1x1x512xf32>
      %c0_15 = arith.constant 0 : index
      %c0_16 = arith.constant 0 : index
      %c0_17 = arith.constant 0 : index
      %29 = vector.load %arg7[%c0_15, %c0_16, %c0_17] : memref<1x1x512xf32, #tpu.memory_space<vmem>>, vector<1x1x512xf32>
      tpu.vector_store %arg7[%c0_15, %c0_16, %c0_17], %28 {strides = array<i32>} : memref<1x1x512xf32, #tpu.memory_space<vmem>>, vector<1x1x512xf32>,
      %cst_18 = arith.constant 0.000000e+00 : f32
      %30 = vector.broadcast %cst_18 : f32 to vector<1x1x512xf32>
      %c0_19 = arith.constant 0 : index
      %c0_20 = arith.constant 0 : index
      %c0_21 = arith.constant 0 : index
      %31 = vector.load %arg8[%c0_19, %c0_20, %c0_21] : memref<1x1x512xf32, #tpu.memory_space<vmem>>, vector<1x1x512xf32>
      tpu.vector_store %arg8[%c0_19, %c0_20, %c0_21], %30 {strides = array<i32>} : memref<1x1x512xf32, #tpu.memory_space<vmem>>, vector<1x1x512xf32>,
    } else {
    }
    %c0 = arith.constant 0 : index
    %c0_1 = arith.constant 0 : index
    %3 = vector.load %arg2[%c0, %c0_1] : memref<256x256xbf16, #tpu.memory_space<vmem>>, vector<256x256xbf16>
    %4 = arith.extf %3 : vector<256x256xbf16> to vector<256x256xf32>
    %c0_2 = arith.constant 0 : index
    %c0_3 = arith.constant 0 : index
    %5 = vector.load %arg4[%c0_2, %c0_3] : memref<1x256xf32, #tpu.memory_space<vmem>>, vector<1x256xf32>
    %6 = vector.broadcast %5 : vector<1x256xf32> to vector<256x256xf32>
    %7 = arith.mulf %4, %6 : vector<256x256xf32>
    %c0_4 = arith.constant 0 : index
    %c0_5 = arith.constant 0 : index
    %8 = vector.load %arg5[%c0_4, %c0_5] : memref<1x256xf32, #tpu.memory_space<vmem>>, vector<1x256xf32>
    %9 = vector.broadcast %8 : vector<1x256xf32> to vector<256x256xf32>
    %10 = arith.addf %7, %9 : vector<256x256xf32>
    %cst = arith.constant 0.000000e+00 : f32
    %11 = vector.broadcast %cst : f32 to vector<256x256xf32>
    %12 = arith.maximumf %10, %11 : vector<256x256xf32>
    %13 = arith.truncf %12 : vector<256x256xf32> to vector<256x256xbf16>
    %c0_6 = arith.constant 0 : index
    %c0_7 = arith.constant 0 : index
    %14 = vector.load %arg3[%c0_6, %c0_7] : memref<256x512xbf16, #tpu.memory_space<vmem>>, vector<256x512xbf16>
    %cst_8 = arith.constant dense<0.000000e+00> : vector<256x512xf32>
    %15 = tpu.matmul %13, %14, %cst_8 {dimension_numbers = #tpu.dot_dimension_numbers<[1], [0], [0], [1], [0, 0, 1, 1], [], []>} : vector<256x256xbf16>, vector<256x512xbf16>, vector<256x512xf32> -> vector<256x512xf32>
    %c1_i32 = arith.constant 1 : i32
    %16 = arith.muli %arg0, %c1_i32 : i32
    %17 = arith.addi %16, %arg1 : i32
    %c256_i32 = arith.constant 256 : i32
    %18 = arith.muli %17, %c256_i32 : i32
    %c256_i32_9 = arith.constant 256 : i32
    %19 = arith.addi %18, %c256_i32_9 : i32
    %c400_i32 = arith.constant 400 : i32
    %20 = arith.cmpi sle, %19, %c400_i32 : i32
    %21 = arith.extui %20 : i1 to i32
    %c0_i32_10 = arith.constant 0 : i32
    %22 = arith.cmpi ne, %21, %c0_i32_10 : i32
    scf.if %22 {
      %c0_14 = arith.constant 0 : index
      %c0_15 = arith.constant 0 : index
      %c0_16 = arith.constant 0 : index
      %28 = vector.load %arg7[%c0_14, %c0_15, %c0_16] : memref<1x1x512xf32, #tpu.memory_space<vmem>>, vector<1x1x512xf32>
      %29 = vector.shape_cast %28 : vector<1x1x512xf32> to vector<1x512xf32>
      %cst_17 = arith.constant dense<0.000000e+00> : vector<512xf32>
      %30 = vector.multi_reduction <add>, %15, %cst_17 [0] : vector<256x512xf32> to vector<512xf32>
      %31 = vector.shape_cast %30 : vector<512xf32> to vector<1x512xf32>
      %32 = arith.addf %29, %31 : vector<1x512xf32>
      %c0_18 = arith.constant 0 : index
      %c0_19 = arith.constant 0 : index
      %c0_20 = arith.constant 0 : index
      %33 = vector.load %arg7[%c0_18, %c0_19, %c0_20] : memref<1x1x512xf32, #tpu.memory_space<vmem>>, vector<1x1x512xf32>
      %34 = vector.shape_cast %33 : vector<1x1x512xf32> to vector<1x512xf32>
      %35 = vector.shape_cast %32 : vector<1x512xf32> to vector<1x1x512xf32>
      tpu.vector_store %arg7[%c0_18, %c0_19, %c0_20], %35 {strides = array<i32>} : memref<1x1x512xf32, #tpu.memory_space<vmem>>, vector<1x1x512xf32>,
      %c0_21 = arith.constant 0 : index
      %c0_22 = arith.constant 0 : index
      %c0_23 = arith.constant 0 : index
      %36 = vector.load %arg8[%c0_21, %c0_22, %c0_23] : memref<1x1x512xf32, #tpu.memory_space<vmem>>, vector<1x1x512xf32>
      %37 = vector.shape_cast %36 : vector<1x1x512xf32> to vector<1x512xf32>
      %38 = arith.mulf %15, %15 : vector<256x512xf32>
      %cst_24 = arith.constant dense<0.000000e+00> : vector<512xf32>
      %39 = vector.multi_reduction <add>, %38, %cst_24 [0] : vector<256x512xf32> to vector<512xf32>
      %40 = vector.shape_cast %39 : vector<512xf32> to vector<1x512xf32>
      %41 = arith.addf %37, %40 : vector<1x512xf32>
      %c0_25 = arith.constant 0 : index
      %c0_26 = arith.constant 0 : index
      %c0_27 = arith.constant 0 : index
      %42 = vector.load %arg8[%c0_25, %c0_26, %c0_27] : memref<1x1x512xf32, #tpu.memory_space<vmem>>, vector<1x1x512xf32>
      %43 = vector.shape_cast %42 : vector<1x1x512xf32> to vector<1x512xf32>
      %44 = vector.shape_cast %41 : vector<1x512xf32> to vector<1x1x512xf32>
      tpu.vector_store %arg8[%c0_25, %c0_26, %c0_27], %44 {strides = array<i32>} : memref<1x1x512xf32, #tpu.memory_space<vmem>>, vector<1x1x512xf32>,
    } else {
    }
    %true = arith.constant true
    %23 = arith.xori %20, %true : i1
    %24 = arith.extui %23 : i1 to i32
    %c0_i32_11 = arith.constant 0 : i32
    %25 = arith.cmpi ne, %24, %c0_i32_11 : i32
    scf.if %25 {
      %28 = tpu.iota {dimensions = array<i32: 0>} : vector<256x512xi32>
      %29 = vector.broadcast %18 : i32 to vector<256x512xi32>
      %30 = arith.addi %29, %28 : vector<256x512xi32>
      %c400_i32_14 = arith.constant 400 : i32
      %31 = vector.broadcast %c400_i32_14 : i32 to vector<256x512xi32>
      %32 = arith.cmpi slt, %30, %31 : vector<256x512xi32>
      %cst_15 = arith.constant 0.000000e+00 : f32
      %33 = vector.broadcast %cst_15 : f32 to vector<256x512xf32>
      %34 = arith.select %32, %15, %33 : vector<256x512xi1>, vector<256x512xf32>
      %c0_16 = arith.constant 0 : index
      %c0_17 = arith.constant 0 : index
      %c0_18 = arith.constant 0 : index
      %35 = vector.load %arg7[%c0_16, %c0_17, %c0_18] : memref<1x1x512xf32, #tpu.memory_space<vmem>>, vector<1x1x512xf32>
      %36 = vector.shape_cast %35 : vector<1x1x512xf32> to vector<1x512xf32>
      %cst_19 = arith.constant dense<0.000000e+00> : vector<512xf32>
      %37 = vector.multi_reduction <add>, %34, %cst_19 [0] : vector<256x512xf32> to vector<512xf32>
      %38 = vector.shape_cast %37 : vector<512xf32> to vector<1x512xf32>
      %39 = arith.addf %36, %38 : vector<1x512xf32>
      %c0_20 = arith.constant 0 : index
      %c0_21 = arith.constant 0 : index
      %c0_22 = arith.constant 0 : index
      %40 = vector.load %arg7[%c0_20, %c0_21, %c0_22] : memref<1x1x512xf32, #tpu.memory_space<vmem>>, vector<1x1x512xf32>
      %41 = vector.shape_cast %40 : vector<1x1x512xf32> to vector<1x512xf32>
      %42 = vector.shape_cast %39 : vector<1x512xf32> to vector<1x1x512xf32>
      tpu.vector_store %arg7[%c0_20, %c0_21, %c0_22], %42 {strides = array<i32>} : memref<1x1x512xf32, #tpu.memory_space<vmem>>, vector<1x1x512xf32>,
      %c0_23 = arith.constant 0 : index
      %c0_24 = arith.constant 0 : index
      %c0_25 = arith.constant 0 : index
      %43 = vector.load %arg8[%c0_23, %c0_24, %c0_25] : memref<1x1x512xf32, #tpu.memory_space<vmem>>, vector<1x1x512xf32>
      %44 = vector.shape_cast %43 : vector<1x1x512xf32> to vector<1x512xf32>
      %45 = arith.mulf %34, %34 : vector<256x512xf32>
      %cst_26 = arith.constant dense<0.000000e+00> : vector<512xf32>
      %46 = vector.multi_reduction <add>, %45, %cst_26 [0] : vector<256x512xf32> to vector<512xf32>
      %47 = vector.shape_cast %46 : vector<512xf32> to vector<1x512xf32>
      %48 = arith.addf %44, %47 : vector<1x512xf32>
      %c0_27 = arith.constant 0 : index
      %c0_28 = arith.constant 0 : index
      %c0_29 = arith.constant 0 : index
      %49 = vector.load %arg8[%c0_27, %c0_28, %c0_29] : memref<1x1x512xf32, #tpu.memory_space<vmem>>, vector<1x1x512xf32>
      %50 = vector.shape_cast %49 : vector<1x1x512xf32> to vector<1x512xf32>
      %51 = vector.shape_cast %48 : vector<1x512xf32> to vector<1x1x512xf32>
      tpu.vector_store %arg8[%c0_27, %c0_28, %c0_29], %51 {strides = array<i32>} : memref<1x1x512xf32, #tpu.memory_space<vmem>>, vector<1x1x512xf32>,
    } else {
    }
    %26 = arith.truncf %15 : vector<256x512xf32> to vector<256x512xbf16>
    %c0_12 = arith.constant 0 : index
    %c0_13 = arith.constant 0 : index
    %27 = vector.load %arg6[%c0_12, %c0_13] : memref<256x512xbf16, #tpu.memory_space<vmem>>, vector<256x512xbf16>
    tpu.vector_store %arg6[%c0_12, %c0_13], %26 {strides = array<i32>} : memref<256x512xbf16, #tpu.memory_space<vmem>>, vector<256x512xbf16>,
    return
  }
  func.func @transform_0(%arg0: i32, %arg1: i32) -> (i32, i32) {
    %c1_i32 = arith.constant 1 : i32
    %0 = arith.muli %arg0, %c1_i32 : i32
    %1 = arith.addi %0, %arg1 : i32
    %c0_i32 = arith.constant 0 : i32
    %c0_i32_0 = arith.constant 0 : i32
    return %1, %c0_i32 : i32, i32
  }
  func.func @transform_1(%arg0: i32, %arg1: i32) -> (i32, i32) {
    %c0_i32 = arith.constant 0 : i32
    %c0_i32_0 = arith.constant 0 : i32
    %c0_i32_1 = arith.constant 0 : i32
    return %c0_i32, %c0_i32_0 : i32, i32
  }
  func.func @transform_2(%arg0: i32, %arg1: i32) -> (i32, i32) {
    %c0_i32 = arith.constant 0 : i32
    %c0_i32_0 = arith.constant 0 : i32
    %c0_i32_1 = arith.constant 0 : i32
    return %c0_i32, %c0_i32_0 : i32, i32
  }
  func.func @transform_3(%arg0: i32, %arg1: i32) -> (i32, i32) {
    %c0_i32 = arith.constant 0 : i32
    %c0_i32_0 = arith.constant 0 : i32
    %c0_i32_1 = arith.constant 0 : i32
    return %c0_i32, %c0_i32_0 : i32, i32
  }
  func.func @transform_4(%arg0: i32, %arg1: i32) -> (i32, i32) {
    %c1_i32 = arith.constant 1 : i32
    %0 = arith.muli %arg0, %c1_i32 : i32
    %1 = arith.addi %0, %arg1 : i32
    %c0_i32 = arith.constant 0 : i32
    %c0_i32_0 = arith.constant 0 : i32
    return %1, %c0_i32 : i32, i32
  }
  func.func @transform_5(%arg0: i32, %arg1: i32) -> (i32, i32, i32) {
    %c0_i32 = arith.constant 0 : i32
    %c0_i32_0 = arith.constant 0 : i32
    %c0_i32_1 = arith.constant 0 : i32
    return %arg0, %c0_i32, %c0_i32_0 : i32, i32, i32
  }
  func.func @transform_6(%arg0: i32, %arg1: i32) -> (i32, i32, i32) {
    %c0_i32 = arith.constant 0 : i32
    %c0_i32_0 = arith.constant 0 : i32
    %c0_i32_1 = arith.constant 0 : i32
    return %arg0, %c0_i32, %c0_i32_0 : i32, i32, i32
  }
}

module attributes {stable_mosaic.version = 11 : i64} {
  func.func @kernel(%arg0: i32, %arg1: i32, %arg2: memref<256x512xbf16, #tpu.memory_space<vmem>>, %arg3: memref<512x128xbf16, #tpu.memory_space<vmem>>, %arg4: memref<1x512xf32, #tpu.memory_space<vmem>>, %arg5: memref<1x512xf32, #tpu.memory_space<vmem>>, %arg6: memref<256x128xbf16, #tpu.memory_space<vmem>>, %arg7: memref<1x1x128xf32, #tpu.memory_space<vmem>>, %arg8: memref<1x1x128xf32, #tpu.memory_space<vmem>>) attributes {dimension_semantics = [#tpu.dimension_semantics<parallel>, #tpu.dimension_semantics<arbitrary>], iteration_bounds = array<i64: 2, 1>, scalar_prefetch = 0 : i64, scratch_operands = 0 : i64, tpu.core_type = #tpu.core_type<tc>, window_params = [{transform_indices = @transform_0, window_bounds = array<i64: 256, 512>}, {pipeline_mode = #tpu.pipeline_mode<synchronous>, transform_indices = @transform_1, window_bounds = array<i64: 512, 128>}, {pipeline_mode = #tpu.pipeline_mode<synchronous>, transform_indices = @transform_2, window_bounds = array<i64: 1, 512>}, {pipeline_mode = #tpu.pipeline_mode<synchronous>, transform_indices = @transform_3, window_bounds = array<i64: 1, 512>}, {transform_indices = @transform_4, window_bounds = array<i64: 256, 128>}, {transform_indices = @transform_5, window_bounds = array<i64: 1, 1, 128>}, {transform_indices = @transform_6, window_bounds = array<i64: 1, 1, 128>}]} {
    %c0_i32 = arith.constant 0 : i32
    %0 = arith.cmpi eq, %arg1, %c0_i32 : i32
    %1 = arith.extui %0 : i1 to i32
    %c0_i32_0 = arith.constant 0 : i32
    %2 = arith.cmpi ne, %1, %c0_i32_0 : i32
    scf.if %2 {
      %cst_14 = arith.constant 0.000000e+00 : f32
      %28 = vector.broadcast %cst_14 : f32 to vector<1x1x128xf32>
      %c0_15 = arith.constant 0 : index
      %c0_16 = arith.constant 0 : index
      %c0_17 = arith.constant 0 : index
      %29 = vector.load %arg7[%c0_15, %c0_16, %c0_17] : memref<1x1x128xf32, #tpu.memory_space<vmem>>, vector<1x1x128xf32>
      tpu.vector_store %arg7[%c0_15, %c0_16, %c0_17], %28 {strides = array<i32>} : memref<1x1x128xf32, #tpu.memory_space<vmem>>, vector<1x1x128xf32>,
      %cst_18 = arith.constant 0.000000e+00 : f32
      %30 = vector.broadcast %cst_18 : f32 to vector<1x1x128xf32>
      %c0_19 = arith.constant 0 : index
      %c0_20 = arith.constant 0 : index
      %c0_21 = arith.constant 0 : index
      %31 = vector.load %arg8[%c0_19, %c0_20, %c0_21] : memref<1x1x128xf32, #tpu.memory_space<vmem>>, vector<1x1x128xf32>
      tpu.vector_store %arg8[%c0_19, %c0_20, %c0_21], %30 {strides = array<i32>} : memref<1x1x128xf32, #tpu.memory_space<vmem>>, vector<1x1x128xf32>,
    } else {
    }
    %c0 = arith.constant 0 : index
    %c0_1 = arith.constant 0 : index
    %3 = vector.load %arg2[%c0, %c0_1] : memref<256x512xbf16, #tpu.memory_space<vmem>>, vector<256x512xbf16>
    %4 = arith.extf %3 : vector<256x512xbf16> to vector<256x512xf32>
    %c0_2 = arith.constant 0 : index
    %c0_3 = arith.constant 0 : index
    %5 = vector.load %arg4[%c0_2, %c0_3] : memref<1x512xf32, #tpu.memory_space<vmem>>, vector<1x512xf32>
    %6 = vector.broadcast %5 : vector<1x512xf32> to vector<256x512xf32>
    %7 = arith.mulf %4, %6 : vector<256x512xf32>
    %c0_4 = arith.constant 0 : index
    %c0_5 = arith.constant 0 : index
    %8 = vector.load %arg5[%c0_4, %c0_5] : memref<1x512xf32, #tpu.memory_space<vmem>>, vector<1x512xf32>
    %9 = vector.broadcast %8 : vector<1x512xf32> to vector<256x512xf32>
    %10 = arith.addf %7, %9 : vector<256x512xf32>
    %cst = arith.constant 0.000000e+00 : f32
    %11 = vector.broadcast %cst : f32 to vector<256x512xf32>
    %12 = arith.maximumf %10, %11 : vector<256x512xf32>
    %13 = arith.truncf %12 : vector<256x512xf32> to vector<256x512xbf16>
    %c0_6 = arith.constant 0 : index
    %c0_7 = arith.constant 0 : index
    %14 = vector.load %arg3[%c0_6, %c0_7] : memref<512x128xbf16, #tpu.memory_space<vmem>>, vector<512x128xbf16>
    %cst_8 = arith.constant dense<0.000000e+00> : vector<256x128xf32>
    %15 = tpu.matmul %13, %14, %cst_8 {dimension_numbers = #tpu.dot_dimension_numbers<[1], [0], [0], [1], [0, 0, 1, 1], [], []>} : vector<256x512xbf16>, vector<512x128xbf16>, vector<256x128xf32> -> vector<256x128xf32>
    %c1_i32 = arith.constant 1 : i32
    %16 = arith.muli %arg0, %c1_i32 : i32
    %17 = arith.addi %16, %arg1 : i32
    %c256_i32 = arith.constant 256 : i32
    %18 = arith.muli %17, %c256_i32 : i32
    %c256_i32_9 = arith.constant 256 : i32
    %19 = arith.addi %18, %c256_i32_9 : i32
    %c400_i32 = arith.constant 400 : i32
    %20 = arith.cmpi sle, %19, %c400_i32 : i32
    %21 = arith.extui %20 : i1 to i32
    %c0_i32_10 = arith.constant 0 : i32
    %22 = arith.cmpi ne, %21, %c0_i32_10 : i32
    scf.if %22 {
      %c0_14 = arith.constant 0 : index
      %c0_15 = arith.constant 0 : index
      %c0_16 = arith.constant 0 : index
      %28 = vector.load %arg7[%c0_14, %c0_15, %c0_16] : memref<1x1x128xf32, #tpu.memory_space<vmem>>, vector<1x1x128xf32>
      %29 = vector.shape_cast %28 : vector<1x1x128xf32> to vector<1x128xf32>
      %cst_17 = arith.constant dense<0.000000e+00> : vector<128xf32>
      %30 = vector.multi_reduction <add>, %15, %cst_17 [0] : vector<256x128xf32> to vector<128xf32>
      %31 = vector.shape_cast %30 : vector<128xf32> to vector<1x128xf32>
      %32 = arith.addf %29, %31 : vector<1x128xf32>
      %c0_18 = arith.constant 0 : index
      %c0_19 = arith.constant 0 : index
      %c0_20 = arith.constant 0 : index
      %33 = vector.load %arg7[%c0_18, %c0_19, %c0_20] : memref<1x1x128xf32, #tpu.memory_space<vmem>>, vector<1x1x128xf32>
      %34 = vector.shape_cast %33 : vector<1x1x128xf32> to vector<1x128xf32>
      %35 = vector.shape_cast %32 : vector<1x128xf32> to vector<1x1x128xf32>
      tpu.vector_store %arg7[%c0_18, %c0_19, %c0_20], %35 {strides = array<i32>} : memref<1x1x128xf32, #tpu.memory_space<vmem>>, vector<1x1x128xf32>,
      %c0_21 = arith.constant 0 : index
      %c0_22 = arith.constant 0 : index
      %c0_23 = arith.constant 0 : index
      %36 = vector.load %arg8[%c0_21, %c0_22, %c0_23] : memref<1x1x128xf32, #tpu.memory_space<vmem>>, vector<1x1x128xf32>
      %37 = vector.shape_cast %36 : vector<1x1x128xf32> to vector<1x128xf32>
      %38 = arith.mulf %15, %15 : vector<256x128xf32>
      %cst_24 = arith.constant dense<0.000000e+00> : vector<128xf32>
      %39 = vector.multi_reduction <add>, %38, %cst_24 [0] : vector<256x128xf32> to vector<128xf32>
      %40 = vector.shape_cast %39 : vector<128xf32> to vector<1x128xf32>
      %41 = arith.addf %37, %40 : vector<1x128xf32>
      %c0_25 = arith.constant 0 : index
      %c0_26 = arith.constant 0 : index
      %c0_27 = arith.constant 0 : index
      %42 = vector.load %arg8[%c0_25, %c0_26, %c0_27] : memref<1x1x128xf32, #tpu.memory_space<vmem>>, vector<1x1x128xf32>
      %43 = vector.shape_cast %42 : vector<1x1x128xf32> to vector<1x128xf32>
      %44 = vector.shape_cast %41 : vector<1x128xf32> to vector<1x1x128xf32>
      tpu.vector_store %arg8[%c0_25, %c0_26, %c0_27], %44 {strides = array<i32>} : memref<1x1x128xf32, #tpu.memory_space<vmem>>, vector<1x1x128xf32>,
    } else {
    }
    %true = arith.constant true
    %23 = arith.xori %20, %true : i1
    %24 = arith.extui %23 : i1 to i32
    %c0_i32_11 = arith.constant 0 : i32
    %25 = arith.cmpi ne, %24, %c0_i32_11 : i32
    scf.if %25 {
      %28 = tpu.iota {dimensions = array<i32: 0>} : vector<256x128xi32>
      %29 = vector.broadcast %18 : i32 to vector<256x128xi32>
      %30 = arith.addi %29, %28 : vector<256x128xi32>
      %c400_i32_14 = arith.constant 400 : i32
      %31 = vector.broadcast %c400_i32_14 : i32 to vector<256x128xi32>
      %32 = arith.cmpi slt, %30, %31 : vector<256x128xi32>
      %cst_15 = arith.constant 0.000000e+00 : f32
      %33 = vector.broadcast %cst_15 : f32 to vector<256x128xf32>
      %34 = arith.select %32, %15, %33 : vector<256x128xi1>, vector<256x128xf32>
      %c0_16 = arith.constant 0 : index
      %c0_17 = arith.constant 0 : index
      %c0_18 = arith.constant 0 : index
      %35 = vector.load %arg7[%c0_16, %c0_17, %c0_18] : memref<1x1x128xf32, #tpu.memory_space<vmem>>, vector<1x1x128xf32>
      %36 = vector.shape_cast %35 : vector<1x1x128xf32> to vector<1x128xf32>
      %cst_19 = arith.constant dense<0.000000e+00> : vector<128xf32>
      %37 = vector.multi_reduction <add>, %34, %cst_19 [0] : vector<256x128xf32> to vector<128xf32>
      %38 = vector.shape_cast %37 : vector<128xf32> to vector<1x128xf32>
      %39 = arith.addf %36, %38 : vector<1x128xf32>
      %c0_20 = arith.constant 0 : index
      %c0_21 = arith.constant 0 : index
      %c0_22 = arith.constant 0 : index
      %40 = vector.load %arg7[%c0_20, %c0_21, %c0_22] : memref<1x1x128xf32, #tpu.memory_space<vmem>>, vector<1x1x128xf32>
      %41 = vector.shape_cast %40 : vector<1x1x128xf32> to vector<1x128xf32>
      %42 = vector.shape_cast %39 : vector<1x128xf32> to vector<1x1x128xf32>
      tpu.vector_store %arg7[%c0_20, %c0_21, %c0_22], %42 {strides = array<i32>} : memref<1x1x128xf32, #tpu.memory_space<vmem>>, vector<1x1x128xf32>,
      %c0_23 = arith.constant 0 : index
      %c0_24 = arith.constant 0 : index
      %c0_25 = arith.constant 0 : index
      %43 = vector.load %arg8[%c0_23, %c0_24, %c0_25] : memref<1x1x128xf32, #tpu.memory_space<vmem>>, vector<1x1x128xf32>
      %44 = vector.shape_cast %43 : vector<1x1x128xf32> to vector<1x128xf32>
      %45 = arith.mulf %34, %34 : vector<256x128xf32>
      %cst_26 = arith.constant dense<0.000000e+00> : vector<128xf32>
      %46 = vector.multi_reduction <add>, %45, %cst_26 [0] : vector<256x128xf32> to vector<128xf32>
      %47 = vector.shape_cast %46 : vector<128xf32> to vector<1x128xf32>
      %48 = arith.addf %44, %47 : vector<1x128xf32>
      %c0_27 = arith.constant 0 : index
      %c0_28 = arith.constant 0 : index
      %c0_29 = arith.constant 0 : index
      %49 = vector.load %arg8[%c0_27, %c0_28, %c0_29] : memref<1x1x128xf32, #tpu.memory_space<vmem>>, vector<1x1x128xf32>
      %50 = vector.shape_cast %49 : vector<1x1x128xf32> to vector<1x128xf32>
      %51 = vector.shape_cast %48 : vector<1x128xf32> to vector<1x1x128xf32>
      tpu.vector_store %arg8[%c0_27, %c0_28, %c0_29], %51 {strides = array<i32>} : memref<1x1x128xf32, #tpu.memory_space<vmem>>, vector<1x1x128xf32>,
    } else {
    }
    %26 = arith.truncf %15 : vector<256x128xf32> to vector<256x128xbf16>
    %c0_12 = arith.constant 0 : index
    %c0_13 = arith.constant 0 : index
    %27 = vector.load %arg6[%c0_12, %c0_13] : memref<256x128xbf16, #tpu.memory_space<vmem>>, vector<256x128xbf16>
    tpu.vector_store %arg6[%c0_12, %c0_13], %26 {strides = array<i32>} : memref<256x128xbf16, #tpu.memory_space<vmem>>, vector<256x128xbf16>,
    return
  }
  func.func @transform_0(%arg0: i32, %arg1: i32) -> (i32, i32) {
    %c1_i32 = arith.constant 1 : i32
    %0 = arith.muli %arg0, %c1_i32 : i32
    %1 = arith.addi %0, %arg1 : i32
    %c0_i32 = arith.constant 0 : i32
    %c0_i32_0 = arith.constant 0 : i32
    return %1, %c0_i32 : i32, i32
  }
  func.func @transform_1(%arg0: i32, %arg1: i32) -> (i32, i32) {
    %c0_i32 = arith.constant 0 : i32
    %c0_i32_0 = arith.constant 0 : i32
    %c0_i32_1 = arith.constant 0 : i32
    return %c0_i32, %c0_i32_0 : i32, i32
  }
  func.func @transform_2(%arg0: i32, %arg1: i32) -> (i32, i32) {
    %c0_i32 = arith.constant 0 : i32
    %c0_i32_0 = arith.constant 0 : i32
    %c0_i32_1 = arith.constant 0 : i32
    return %c0_i32, %c0_i32_0 : i32, i32
  }
  func.func @transform_3(%arg0: i32, %arg1: i32) -> (i32, i32) {
    %c0_i32 = arith.constant 0 : i32
    %c0_i32_0 = arith.constant 0 : i32
    %c0_i32_1 = arith.constant 0 : i32
    return %c0_i32, %c0_i32_0 : i32, i32
  }
  func.func @transform_4(%arg0: i32, %arg1: i32) -> (i32, i32) {
    %c1_i32 = arith.constant 1 : i32
    %0 = arith.muli %arg0, %c1_i32 : i32
    %1 = arith.addi %0, %arg1 : i32
    %c0_i32 = arith.constant 0 : i32
    %c0_i32_0 = arith.constant 0 : i32
    return %1, %c0_i32 : i32, i32
  }
  func.func @transform_5(%arg0: i32, %arg1: i32) -> (i32, i32, i32) {
    %c0_i32 = arith.constant 0 : i32
    %c0_i32_0 = arith.constant 0 : i32
    %c0_i32_1 = arith.constant 0 : i32
    return %arg0, %c0_i32, %c0_i32_0 : i32, i32, i32
  }
  func.func @transform_6(%arg0: i32, %arg1: i32) -> (i32, i32, i32) {
    %c0_i32 = arith.constant 0 : i32
    %c0_i32_0 = arith.constant 0 : i32
    %c0_i32_1 = arith.constant 0 : i32
    return %arg0, %c0_i32, %c0_i32_0 : i32, i32, i32
  }
}

module attributes {stable_mosaic.version = 11 : i64} {
  func.func @kernel(%arg0: i32, %arg1: memref<256x128xbf16, #tpu.memory_space<vmem>>, %arg2: memref<1x128xf32, #tpu.memory_space<vmem>>, %arg3: memref<1x128xf32, #tpu.memory_space<vmem>>, %arg4: memref<1x128xbf16, #tpu.memory_space<vmem>>, %arg5: memref<1x256xf32, #tpu.memory_space<vmem>>) attributes {dimension_semantics = [#tpu.dimension_semantics<parallel>], iteration_bounds = array<i64: 2>, scalar_prefetch = 0 : i64, scratch_operands = 0 : i64, tpu.core_type = #tpu.core_type<tc>, window_params = [{transform_indices = @transform_0, window_bounds = array<i64: 256, 128>}, {pipeline_mode = #tpu.pipeline_mode<synchronous>, transform_indices = @transform_1, window_bounds = array<i64: 1, 128>}, {pipeline_mode = #tpu.pipeline_mode<synchronous>, transform_indices = @transform_2, window_bounds = array<i64: 1, 128>}, {pipeline_mode = #tpu.pipeline_mode<synchronous>, transform_indices = @transform_3, window_bounds = array<i64: 1, 128>}, {transform_indices = @transform_4, window_bounds = array<i64: 1, 256>}]} {
    %c0 = arith.constant 0 : index
    %c0_0 = arith.constant 0 : index
    %0 = vector.load %arg1[%c0, %c0_0] : memref<256x128xbf16, #tpu.memory_space<vmem>>, vector<256x128xbf16>
    %1 = arith.extf %0 : vector<256x128xbf16> to vector<256x128xf32>
    %c0_1 = arith.constant 0 : index
    %c0_2 = arith.constant 0 : index
    %2 = vector.load %arg2[%c0_1, %c0_2] : memref<1x128xf32, #tpu.memory_space<vmem>>, vector<1x128xf32>
    %3 = vector.broadcast %2 : vector<1x128xf32> to vector<256x128xf32>
    %4 = arith.mulf %1, %3 : vector<256x128xf32>
    %c0_3 = arith.constant 0 : index
    %c0_4 = arith.constant 0 : index
    %5 = vector.load %arg3[%c0_3, %c0_4] : memref<1x128xf32, #tpu.memory_space<vmem>>, vector<1x128xf32>
    %6 = vector.broadcast %5 : vector<1x128xf32> to vector<256x128xf32>
    %7 = arith.addf %4, %6 : vector<256x128xf32>
    %cst = arith.constant 0.000000e+00 : f32
    %8 = vector.broadcast %cst : f32 to vector<256x128xf32>
    %9 = arith.maximumf %7, %8 : vector<256x128xf32>
    %c0_5 = arith.constant 0 : index
    %c0_6 = arith.constant 0 : index
    %10 = vector.load %arg4[%c0_5, %c0_6] : memref<1x128xbf16, #tpu.memory_space<vmem>>, vector<1x128xbf16>
    %11 = arith.truncf %9 : vector<256x128xf32> to vector<256x128xbf16>
    %cst_7 = arith.constant dense<0.000000e+00> : vector<1x256xf32>
    %12 = tpu.matmul %10, %11, %cst_7 {dimension_numbers = #tpu.dot_dimension_numbers<[1], [1], [0], [0], [0, 0, 1, 0], [], []>} : vector<1x128xbf16>, vector<256x128xbf16>, vector<1x256xf32> -> vector<1x256xf32>
    %c0_8 = arith.constant 0 : index
    %c0_9 = arith.constant 0 : index
    %13 = vector.load %arg5[%c0_8, %c0_9] : memref<1x256xf32, #tpu.memory_space<vmem>>, vector<1x256xf32>
    tpu.vector_store %arg5[%c0_8, %c0_9], %12 {strides = array<i32>} : memref<1x256xf32, #tpu.memory_space<vmem>>, vector<1x256xf32>,
    return
  }
  func.func @transform_0(%arg0: i32) -> (i32, i32) {
    %c0_i32 = arith.constant 0 : i32
    %c0_i32_0 = arith.constant 0 : i32
    return %arg0, %c0_i32 : i32, i32
  }
  func.func @transform_1(%arg0: i32) -> (i32, i32) {
    %c0_i32 = arith.constant 0 : i32
    %c0_i32_0 = arith.constant 0 : i32
    %c0_i32_1 = arith.constant 0 : i32
    return %c0_i32, %c0_i32_0 : i32, i32
  }
  func.func @transform_2(%arg0: i32) -> (i32, i32) {
    %c0_i32 = arith.constant 0 : i32
    %c0_i32_0 = arith.constant 0 : i32
    %c0_i32_1 = arith.constant 0 : i32
    return %c0_i32, %c0_i32_0 : i32, i32
  }
  func.func @transform_3(%arg0: i32) -> (i32, i32) {
    %c0_i32 = arith.constant 0 : i32
    %c0_i32_0 = arith.constant 0 : i32
    %c0_i32_1 = arith.constant 0 : i32
    return %c0_i32, %c0_i32_0 : i32, i32
  }
  func.func @transform_4(%arg0: i32) -> (i32, i32) {
    %c0_i32 = arith.constant 0 : i32
    %c0_i32_0 = arith.constant 0 : i32
    return %c0_i32, %arg0 : i32, i32
  }
}

</mosaic_0001>

<llo_original>
// kernel: sdf_forward.8
$region0: #{sdf_forward.8}
  #allocation0 [shape = 'u32[]', space=smem, size = 0x4, offset = 0x4, fixed_abs, tag = 'smem constant byte address 0x4 - core index']
  #allocation1 [shape = 'u32[144,128]{1,0:T(1,128)}', space=vmem, size = 0x12000, scoped, tag = 'internal scratch']
  %s0 = inlined_call_operand.vmem [shape: bf16[512,128], index: 0, kind: input, shape index: {}]
  %s1 = inlined_call_operand.vmem [shape: bf16[128,128], index: 1, kind: input, shape index: {}]
  %s2 = inlined_call_operand.vmem [shape: f32[1,128], index: 2, kind: input, shape index: {}]
  %s3 = inlined_call_operand.vmem [shape: f32[1,128], index: 3, kind: input, shape index: {}]
  %s4 = inlined_call_operand.vmem [shape: bf16[512,128], index: 4, kind: output, shape index: {0}]
  %s5 = inlined_call_operand.vmem [shape: f32[2,1,128], index: 5, kind: output, shape index: {1}]
  %s6 = inlined_call_operand.vmem [shape: f32[2,1,128], index: 6, kind: output, shape index: {2}]
  %7 = xla_tuple %s4, %s5, %s6
  %s8 = sld [smem:[#allocation0]]
  $region77: #{sdf_forward.8} parent=0
    _
  %s10 = ssub.s32 1, %s8
  %s11 = scalar_select 0, %s10, %s8
  loop: start=0, step=1, limit=4
  $region2: #{sdf_forward.8} parent=0 // loop_pre_header
    _
  $region3: #{sdf_forward.8} parent=0 // loop_header
    %s13 = sphi 0, %s17
    %p14 = scmp.ge.s32.totalorder %s13, 4
    %s20 = sphi 0, %s32
    %s21 = sphi 0, %s28
    %s22 = sphi 0, %s20
    %s23 = sphi 0, %s21
    %s24 = sphi 0, %s22
    %s25 = sphi 0, %s23
    %s37 = sphi 0, %s39
    %s40 = sphi 0, %s37
    %s41 = sphi 0, %s40
    %s57 = sphi 0, %s41
    %s61 = sphi 0, %s61
    %s63 = sphi 0, %s61
    %s64 = sphi 0, %s63
    %s78 = sphi 0, %s64
    %s82 = sphi 0, %s82
    %s84 = sphi 0, %s82
    %s85 = sphi 0, %s84
    %s99 = sphi 0, %s85
    %s103 = sphi 0, %s103
    %s105 = sphi 0, %s103
    %s106 = sphi 0, %s105
    %s120 = sphi 0, %s106
    %s128 = sphi 0, %s130
    %s131 = sphi 0, %s128
    %s132 = sphi 0, %s131
    %s148 = sphi 0, %s132
    %s154 = sphi 0, %s156
    %s157 = sphi 0, %s154
    %s158 = sphi 0, %s157
    %s174 = sphi 0, %s158
    %s180 = sphi 0, %s182
    %s183 = sphi 0, %s180
    %s184 = sphi 0, %s183
    %s200 = sphi 0, %s184
  $region4: #{sdf_forward.8} parent=0 // loop_header_branch
    %16 = sbr.rel (%p14) target = $region8
  $region5: #{sdf_forward.8} parent=0 // loop_body
    %s18 = ssub.s32 %s13, 1
    %s19 = ssub.s32 %s13, 2
    %s26 = sadd.s32 1, %s21
    %p27 = scmp.ge.s32.totalorder %s26, 1
    %s28 = scalar_select %p27, 0, %s26
    %s29 = sadd.s32 1, %s20
    %s30 = scalar_select %p27, %s29, %s20
    %p31 = scmp.ge.s32.totalorder %s30, 2
    %s32 = scalar_select %p31, 0, %s30
    %s33 = sadd.s32 %s20, %s21
    %s34 = sadd.s32 %s32, %s28
    %s35 = ssub.s32 %s33, %s34
    %p36 = scmp.eq.s32.totalorder %s35, 0
    %s38 = sadd.s32 %s37, 1
    %s39 = scalar_select %p36, %s37, %s38
    %p42 = pneg %p36
    %p43 = scmp.eq.s32.totalorder %s13, 1
    %p44 = por %p42, %p43
    %p45 = scmp.ne.s32.totalorder %s37, %s40
    %p46 = scmp.eq.s32.totalorder %s13, 0
    %p47 = por %p45, %p46
    %p48 = scmp.ne.s32.totalorder %s37, %s40
    %p49 = scmp.eq.s32.totalorder %s18, 1
    %p50 = por %p48, %p49
    %p51 = scmp.ne.s32.totalorder %s40, %s41
    %p52 = scmp.eq.s32.totalorder %s18, 0
    %p53 = por %p51, %p52
    %p54 = scmp.ne.s32.totalorder %s40, %s41
    %p55 = scmp.eq.s32.totalorder %s19, 1
    %p56 = por %p54, %p55
    %p58 = scmp.ne.s32.totalorder %s41, %s57
    %p59 = scmp.eq.s32.totalorder %s19, 0
    %p60 = por %p58, %p59
    %s62 = sadd.s32 %s61, 1
    %p65 = scmp.eq.s32.totalorder %s13, 1
    %p66 = scmp.ne.s32.totalorder %s61, %s63
    %p67 = scmp.eq.s32.totalorder %s13, 0
    %p68 = por %p66, %p67
    %p69 = scmp.ne.s32.totalorder %s61, %s63
    %p70 = scmp.eq.s32.totalorder %s18, 1
    %p71 = por %p69, %p70
    %p72 = scmp.ne.s32.totalorder %s63, %s64
    %p73 = scmp.eq.s32.totalorder %s18, 0
    %p74 = por %p72, %p73
    %p75 = scmp.ne.s32.totalorder %s63, %s64
    %p76 = scmp.eq.s32.totalorder %s19, 1
    %p77 = por %p75, %p76
    %p79 = scmp.ne.s32.totalorder %s64, %s78
    %p80 = scmp.eq.s32.totalorder %s19, 0
    %p81 = por %p79, %p80
    %s83 = sadd.s32 %s82, 1
    %p86 = scmp.eq.s32.totalorder %s13, 1
    %p87 = scmp.ne.s32.totalorder %s82, %s84
    %p88 = scmp.eq.s32.totalorder %s13, 0
    %p89 = por %p87, %p88
    %p90 = scmp.ne.s32.totalorder %s82, %s84
    %p91 = scmp.eq.s32.totalorder %s18, 1
    %p92 = por %p90, %p91
    %p93 = scmp.ne.s32.totalorder %s84, %s85
    %p94 = scmp.eq.s32.totalorder %s18, 0
    %p95 = por %p93, %p94
    %p96 = scmp.ne.s32.totalorder %s84, %s85
    %p97 = scmp.eq.s32.totalorder %s19, 1
    %p98 = por %p96, %p97
    %p100 = scmp.ne.s32.totalorder %s85, %s99
    %p101 = scmp.eq.s32.totalorder %s19, 0
    %p102 = por %p100, %p101
    %s104 = sadd.s32 %s103, 1
    %p107 = scmp.eq.s32.totalorder %s13, 1
    %p108 = scmp.ne.s32.totalorder %s103, %s105
    %p109 = scmp.eq.s32.totalorder %s13, 0
    %p110 = por %p108, %p109
    %p111 = scmp.ne.s32.totalorder %s103, %s105
    %p112 = scmp.eq.s32.totalorder %s18, 1
    %p113 = por %p111, %p112
    %p114 = scmp.ne.s32.totalorder %s105, %s106
    %p115 = scmp.eq.s32.totalorder %s18, 0
    %p116 = por %p114, %p115
    %p117 = scmp.ne.s32.totalorder %s105, %s106
    %p118 = scmp.eq.s32.totalorder %s19, 1
    %p119 = por %p117, %p118
    %p121 = scmp.ne.s32.totalorder %s106, %s120
    %p122 = scmp.eq.s32.totalorder %s19, 0
    %p123 = por %p121, %p122
    %s124 = sadd.s32 %s20, %s21
    %s125 = sadd.s32 %s32, %s28
    %s126 = ssub.s32 %s124, %s125
    %p127 = scmp.eq.s32.totalorder %s126, 0
    %s129 = sadd.s32 %s128, 1
    %s130 = scalar_select %p127, %s128, %s129
    %p133 = pneg %p127
    %p134 = scmp.eq.s32.totalorder %s13, 1
    %p135 = por %p133, %p134
    %p136 = scmp.ne.s32.totalorder %s128, %s131
    %p137 = scmp.eq.s32.totalorder %s13, 0
    %p138 = por %p136, %p137
    %p139 = scmp.ne.s32.totalorder %s128, %s131
    %p140 = scmp.eq.s32.totalorder %s18, 1
    %p141 = por %p139, %p140
    %p142 = scmp.ne.s32.totalorder %s131, %s132
    %p143 = scmp.eq.s32.totalorder %s18, 0
    %p144 = por %p142, %p143
    %p145 = scmp.ne.s32.totalorder %s131, %s132
    %p146 = scmp.eq.s32.totalorder %s19, 1
    %p147 = por %p145, %p146
    %p149 = scmp.ne.s32.totalorder %s132, %s148
    %p150 = scmp.eq.s32.totalorder %s19, 0
    %p151 = por %p149, %p150
    %s152 = ssub.s32 %s20, %s32
    %p153 = scmp.eq.s32.totalorder %s152, 0
    %s155 = sadd.s32 %s154, 1
    %s156 = scalar_select %p153, %s154, %s155
    %p159 = pneg %p153
    %p160 = scmp.eq.s32.totalorder %s13, 1
    %p161 = por %p159, %p160
    %p162 = scmp.ne.s32.totalorder %s154, %s157
    %p163 = scmp.eq.s32.totalorder %s13, 0
    %p164 = por %p162, %p163
    %p165 = scmp.ne.s32.totalorder %s154, %s157
    %p166 = scmp.eq.s32.totalorder %s18, 1
    %p167 = por %p165, %p166
    %p168 = scmp.ne.s32.totalorder %s157, %s158
    %p169 = scmp.eq.s32.totalorder %s18, 0
    %p170 = por %p168, %p169
    %p171 = scmp.ne.s32.totalorder %s157, %s158
    %p172 = scmp.eq.s32.totalorder %s19, 1
    %p173 = por %p171, %p172
    %p175 = scmp.ne.s32.totalorder %s158, %s174
    %p176 = scmp.eq.s32.totalorder %s19, 0
    %p177 = por %p175, %p176
    %s178 = ssub.s32 %s20, %s32
    %p179 = scmp.eq.s32.totalorder %s178, 0
    %s181 = sadd.s32 %s180, 1
    %s182 = scalar_select %p179, %s180, %s181
    %p185 = pneg %p179
    %p186 = scmp.eq.s32.totalorder %s13, 1
    %p187 = por %p185, %p186
    %p188 = scmp.ne.s32.totalorder %s180, %s183
    %p189 = scmp.eq.s32.totalorder %s13, 0
    %p190 = por %p188, %p189
    %p191 = scmp.ne.s32.totalorder %s180, %s183
    %p192 = scmp.eq.s32.totalorder %s18, 1
    %p193 = por %p191, %p192
    %p194 = scmp.ne.s32.totalorder %s183, %s184
    %p195 = scmp.eq.s32.totalorder %s18, 0
    %p196 = por %p194, %p195
    %p197 = scmp.ne.s32.totalorder %s183, %s184
    %p198 = scmp.eq.s32.totalorder %s19, 1
    %p199 = por %p197, %p198
    %p201 = scmp.ne.s32.totalorder %s184, %s200
    %p202 = scmp.eq.s32.totalorder %s19, 0
    %p203 = por %p201, %p202
    %p204 = scmp.le.s32.totalorder 1, %s13
    %p205 = scmp.lt.s32.totalorder %s13, 3
    %p206 = pnand %p204, %p205
    %p207 = pneg %p206
    // Predicated region
    $region9: #{sdf_forward.8} parent=5 // pred_check
      _
    $region10: #{sdf_forward.8} parent=5 // pred_check_branch
      %209 = sbr.rel (%p206) target = $region12
    $region11: #{sdf_forward.8} parent=5 // pred_region
      %s210 = ssub.s32 %s13, 1
      // Predicated region
      $region13: #{sdf_forward.8} parent=11 // pred_check
        %p211 = pneg %p74
      $region14: #{sdf_forward.8} parent=11 // pred_check_branch
        %213 = sbr.rel (%p211) target = $region16
      $region15: #{sdf_forward.8} parent=11 // pred_region
        _
      $region16: #{sdf_forward.8} parent=11 // pred_fallthru
        _
      // Predicated region
      $region17: #{sdf_forward.8} parent=11 // pred_check
        %p214 = pneg %p95
      $region18: #{sdf_forward.8} parent=11 // pred_check_branch
        %216 = sbr.rel (%p214) target = $region20
      $region19: #{sdf_forward.8} parent=11 // pred_region
        _
      $region20: #{sdf_forward.8} parent=11 // pred_fallthru
        _
      // Predicated region
      $region21: #{sdf_forward.8} parent=11 // pred_check
        %p217 = pneg %p116
      $region22: #{sdf_forward.8} parent=11 // pred_check_branch
        %219 = sbr.rel (%p217) target = $region24
      $region23: #{sdf_forward.8} parent=11 // pred_region
        _
      $region24: #{sdf_forward.8} parent=11 // pred_fallthru
        _
    $region12: #{sdf_forward.8} parent=5 // pred_fallthru
      _
    %p220 = scmp.lt.s32.totalorder %s13, 2
    // Predicated region
    $region25: #{sdf_forward.8} parent=5 // pred_check
      %p221 = pneg %p220
    $region26: #{sdf_forward.8} parent=5 // pred_check_branch
      %223 = sbr.rel (%p221) target = $region28
    $region27: #{sdf_forward.8} parent=5 // pred_region
      // Predicated region
      $region29: #{sdf_forward.8} parent=27 // pred_check
        %p224 = pneg %p47
      $region30: #{sdf_forward.8} parent=27 // pred_check_branch
        %226 = sbr.rel (%p224) target = $region32
      $region31: #{sdf_forward.8} parent=27 // pred_region
        %s227 = sadd.s32 %s20, %s21
        %s228 = smul.u32 32, %s227
        %p229 = scmp.lt.s32.totalorder %s228, 63
        %s230 = scalar_select %p229, %s228, 63
        %s231 = smul.addr %s230, 4
        %s232 = scalar_lea.vmem %s0, %s231
        %s233 = sadd.s32 %s20, %s21
        %s234 = smul.u32 32, %s233
      $region32: #{sdf_forward.8} parent=27 // pred_fallthru
        _
    $region28: #{sdf_forward.8} parent=5 // pred_fallthru
      _
    %p235 = scmp.le.s32.totalorder 1, %s13
    %p236 = scmp.lt.s32.totalorder %s13, 3
    %p237 = pnand %p235, %p236
    %p238 = pneg %p237
    // Predicated region
    $region33: #{sdf_forward.8} parent=5 // pred_check
      _
    $region34: #{sdf_forward.8} parent=5 // pred_check_branch
      %240 = sbr.rel (%p237) target = $region36
    $region35: #{sdf_forward.8} parent=5 // pred_region
      %s241 = ssub.s32 %s13, 1
      %s242 = sadd.s32 %s22, %s23
      %s243 = smul.u32 32, %s242
      %p244 = scmp.lt.s32.totalorder %s243, 63
      %s245 = scalar_select %p244, %s243, 63
      %s246 = smul.addr %s245, 4
      %s247 = scalar_lea.vmem %s0, %s246
      %p248 = pneg %p53
      %p249 = pneg %p50
      %p250 = pneg %p74
      %p251 = pneg %p71
      %p252 = pneg %p95
      %p253 = pneg %p92
      %p254 = pneg %p116
      %p255 = pneg %p113
      %p256 = pneg %p144
      %p257 = pneg %p141
      %s258 = sadd.s32 %s22, %s23
      %s259 = smul.u32 32, %s258
      %p260 = scmp.lt.s32.totalorder %s259, 63
      %s261 = scalar_select %p260, %s259, 63
      %s262 = smul.addr %s261, 4
      %s263 = scalar_lea.vmem %s4, %s262
      %p264 = pneg %p170
      %p265 = pneg %p167
      %p266 = scmp.lt.s32.totalorder %s22, 1
      %s267 = scalar_select %p266, %s22, 1
      %s268 = scalar_lea.vmem %s5, %s267
      %p269 = pneg %p196
      %p270 = pneg %p193
      %p271 = scmp.lt.s32.totalorder %s22, 1
      %s272 = scalar_select %p271, %s22, 1
      %s273 = scalar_lea.vmem %s6, %s272
      %s274 = sadd.s32 %s22, %s23
      %s275 = smul.u32 32, %s274
      %p276 = scmp.lt.s32.totalorder %s275, 63
      %s277 = scalar_select %p276, %s275, 63
      %s278 = smul.addr %s277, 4
      %s279 = scalar_lea.vmem %s0, %s278
      %s280 = sadd.s32 %s22, %s23
      %s281 = smul.u32 32, %s280
      %s282 = sadd.s32 %s22, %s23
      %s283 = smul.u32 32, %s282
      %p284 = scmp.lt.s32.totalorder %s283, 63
      %s285 = scalar_select %p284, %s283, 63
      %s286 = smul.addr %s285, 4
      %s287 = scalar_lea.vmem %s4, %s286
      %s288 = sadd.s32 %s22, %s23
      %s289 = smul.u32 32, %s288
      %p290 = scmp.lt.s32.totalorder %s22, 1
      %s291 = scalar_select %p290, %s22, 1
      %s292 = scalar_lea.vmem %s5, %s291
      %p293 = scmp.lt.s32.totalorder %s22, 1
      %s294 = scalar_select %p293, %s22, 1
      %s295 = scalar_lea.vmem %s6, %s294
      %p297 = scmp.eq.s32.totalorder %s23, 0
      // Predicated region
      $region37: #{sdf_forward.8} parent=35 // pred_check
        %p298 = pneg %p297
      $region38: #{sdf_forward.8} parent=35 // pred_check_branch
        %300 = sbr.rel (%p298) target = $region40
      $region39: #{sdf_forward.8} parent=35 // pred_region
        %301 = vst [vmem:[%s292] sm:$0x1] 0.0
        %302 = vst [vmem:[%s295] sm:$0x1] 0.0
      $region40: #{sdf_forward.8} parent=35 // pred_fallthru
        _
      %v303 = vld [vmem:[%s279] sm:$0xf]
      %v304 = vld [vmem:[%s279 + $0x4] sm:$0xf]
      %v305 = vld [vmem:[%s279 + $0x8] sm:$0xf]
      %v306 = vld [vmem:[%s279 + $0xc] sm:$0xf]
      %v307 = vld [vmem:[%s279 + $0x10] sm:$0xf]
      %v308 = vld [vmem:[%s279 + $0x14] sm:$0xf]
      %v309 = vld [vmem:[%s279 + $0x18] sm:$0xf]
      %v310 = vld [vmem:[%s279 + $0x1c] sm:$0xf]
      %v311 = vld [vmem:[%s279 + $0x20] sm:$0xf]
      %v312 = vld [vmem:[%s279 + $0x24] sm:$0xf]
      %v313 = vld [vmem:[%s279 + $0x28] sm:$0xf]
      %v314 = vld [vmem:[%s279 + $0x2c] sm:$0xf]
      %v315 = vld [vmem:[%s279 + $0x30] sm:$0xf]
      %v316 = vld [vmem:[%s279 + $0x34] sm:$0xf]
      %v317 = vld [vmem:[%s279 + $0x38] sm:$0xf]
      %v318 = vld [vmem:[%s279 + $0x3c] sm:$0xf]
      %v319 = vld [vmem:[%s279 + $0x40] sm:$0xf]
      %v320 = vld [vmem:[%s279 + $0x44] sm:$0xf]
      %v321 = vld [vmem:[%s279 + $0x48] sm:$0xf]
      %v322 = vld [vmem:[%s279 + $0x4c] sm:$0xf]
      %v323 = vld [vmem:[%s279 + $0x50] sm:$0xf]
      %v324 = vld [vmem:[%s279 + $0x54] sm:$0xf]
      %v325 = vld [vmem:[%s279 + $0x58] sm:$0xf]
      %v326 = vld [vmem:[%s279 + $0x5c] sm:$0xf]
      %v327 = vld [vmem:[%s279 + $0x60] sm:$0xf]
      %v328 = vld [vmem:[%s279 + $0x64] sm:$0xf]
      %v329 = vld [vmem:[%s279 + $0x68] sm:$0xf]
      %v330 = vld [vmem:[%s279 + $0x6c] sm:$0xf]
      %v331 = vld [vmem:[%s279 + $0x70] sm:$0xf]
      %v332 = vld [vmem:[%s279 + $0x74] sm:$0xf]
      %v333 = vld [vmem:[%s279 + $0x78] sm:$0xf]
      %v334 = vld [vmem:[%s279 + $0x7c] sm:$0xf]
      %v335 = vunpack.c.l.bf16 %v303
      %v336 = vunpack.c.l.bf16 %v304
      %v337 = vunpack.c.l.bf16 %v305
      %v338 = vunpack.c.l.bf16 %v306
      %v339 = vunpack.c.l.bf16 %v307
      %v340 = vunpack.c.l.bf16 %v308
      %v341 = vunpack.c.l.bf16 %v309
      %v342 = vunpack.c.l.bf16 %v310
      %v343 = vunpack.c.l.bf16 %v311
      %v344 = vunpack.c.l.bf16 %v312
      %v345 = vunpack.c.l.bf16 %v313
      %v346 = vunpack.c.l.bf16 %v314
      %v347 = vunpack.c.l.bf16 %v315
      %v348 = vunpack.c.l.bf16 %v316
      %v349 = vunpack.c.l.bf16 %v317
      %v350 = vunpack.c.l.bf16 %v318
      %v351 = vunpack.c.l.bf16 %v319
      %v352 = vunpack.c.l.bf16 %v320
      %v353 = vunpack.c.l.bf16 %v321
      %v354 = vunpack.c.l.bf16 %v322
      %v355 = vunpack.c.l.bf16 %v323
      %v356 = vunpack.c.l.bf16 %v324
      %v357 = vunpack.c.l.bf16 %v325
      %v358 = vunpack.c.l.bf16 %v326
      %v359 = vunpack.c.l.bf16 %v327
      %v360 = vunpack.c.l.bf16 %v328
      %v361 = vunpack.c.l.bf16 %v329
      %v362 = vunpack.c.l.bf16 %v330
      %v363 = vunpack.c.l.bf16 %v331
      %v364 = vunpack.c.l.bf16 %v332
      %v365 = vunpack.c.l.bf16 %v333
      %v366 = vunpack.c.l.bf16 %v334
      %v367 = vld [vmem:[%s2] sm:$0x1]
      %v369 = vlaneseq
      %v370 = vshrl.u32 %v369, 7
      %v371 = vsub.s32 0, %v370
      %v372 = vrot.slane %v367, %v371
      %v374 = vmul.f32 %v335, %v372
      %v375 = vmul.f32 %v336, %v372
      %v376 = vmul.f32 %v337, %v372
      %v377 = vmul.f32 %v338, %v372
      %v378 = vmul.f32 %v339, %v372
      %v379 = vmul.f32 %v340, %v372
      %v380 = vmul.f32 %v341, %v372
      %v381 = vmul.f32 %v342, %v372
      %v382 = vmul.f32 %v343, %v372
      %v383 = vmul.f32 %v344, %v372
      %v384 = vmul.f32 %v345, %v372
      %v385 = vmul.f32 %v346, %v372
      %v386 = vmul.f32 %v347, %v372
      %v387 = vmul.f32 %v348, %v372
      %v388 = vmul.f32 %v349, %v372
      %v389 = vmul.f32 %v350, %v372
      %v390 = vmul.f32 %v351, %v372
      %v391 = vmul.f32 %v352, %v372
      %v392 = vmul.f32 %v353, %v372
      %v393 = vmul.f32 %v354, %v372
      %v394 = vmul.f32 %v355, %v372
      %v395 = vmul.f32 %v356, %v372
      %v396 = vmul.f32 %v357, %v372
      %v397 = vmul.f32 %v358, %v372
      %v398 = vmul.f32 %v359, %v372
      %v399 = vmul.f32 %v360, %v372
      %v400 = vmul.f32 %v361, %v372
      %v401 = vmul.f32 %v362, %v372
      %v402 = vmul.f32 %v363, %v372
      %v403 = vmul.f32 %v364, %v372
      %v404 = vmul.f32 %v365, %v372
      %v405 = vmul.f32 %v366, %v372
      %v406 = vld [vmem:[%s3] sm:$0x1]
      %v408 = vlaneseq
      %v409 = vshrl.u32 %v408, 7
      %v410 = vsub.s32 0, %v409
      %v411 = vrot.slane %v406, %v410
      %v413 = vadd.f32 %v374, %v411
      %v414 = vadd.f32 %v375, %v411
      %v415 = vadd.f32 %v376, %v411
      %v416 = vadd.f32 %v377, %v411
      %v417 = vadd.f32 %v378, %v411
      %v418 = vadd.f32 %v379, %v411
      %v419 = vadd.f32 %v380, %v411
      %v420 = vadd.f32 %v381, %v411
      %v421 = vadd.f32 %v382, %v411
      %v422 = vadd.f32 %v383, %v411
      %v423 = vadd.f32 %v384, %v411
      %v424 = vadd.f32 %v385, %v411
      %v425 = vadd.f32 %v386, %v411
      %v426 = vadd.f32 %v387, %v411
      %v427 = vadd.f32 %v388, %v411
      %v428 = vadd.f32 %v389, %v411
      %v429 = vadd.f32 %v390, %v411
      %v430 = vadd.f32 %v391, %v411
      %v431 = vadd.f32 %v392, %v411
      %v432 = vadd.f32 %v393, %v411
      %v433 = vadd.f32 %v394, %v411
      %v434 = vadd.f32 %v395, %v411
      %v435 = vadd.f32 %v396, %v411
      %v436 = vadd.f32 %v397, %v411
      %v437 = vadd.f32 %v398, %v411
      %v438 = vadd.f32 %v399, %v411
      %v439 = vadd.f32 %v400, %v411
      %v440 = vadd.f32 %v401, %v411
      %v441 = vadd.f32 %v402, %v411
      %v442 = vadd.f32 %v403, %v411
      %v443 = vadd.f32 %v404, %v411
      %v444 = vadd.f32 %v405, %v411
      %v445 = vmax.f32 %v413, 0.0
      %v446 = vmax.f32 %v414, 0.0
      %v447 = vmax.f32 %v415, 0.0
      %v448 = vmax.f32 %v416, 0.0
      %v449 = vmax.f32 %v417, 0.0
      %v450 = vmax.f32 %v418, 0.0
      %v451 = vmax.f32 %v419, 0.0
      %v452 = vmax.f32 %v420, 0.0
      %v453 = vmax.f32 %v421, 0.0
      %v454 = vmax.f32 %v422, 0.0
      %v455 = vmax.f32 %v423, 0.0
      %v456 = vmax.f32 %v424, 0.0
      %v457 = vmax.f32 %v425, 0.0
      %v458 = vmax.f32 %v426, 0.0
      %v459 = vmax.f32 %v427, 0.0
      %v460 = vmax.f32 %v428, 0.0
      %v461 = vmax.f32 %v429, 0.0
      %v462 = vmax.f32 %v430, 0.0
      %v463 = vmax.f32 %v431, 0.0
      %v464 = vmax.f32 %v432, 0.0
      %v465 = vmax.f32 %v433, 0.0
      %v466 = vmax.f32 %v434, 0.0
      %v467 = vmax.f32 %v435, 0.0
      %v468 = vmax.f32 %v436, 0.0
      %v469 = vmax.f32 %v437, 0.0
      %v470 = vmax.f32 %v438, 0.0
      %v471 = vmax.f32 %v439, 0.0
      %v472 = vmax.f32 %v440, 0.0
      %v473 = vmax.f32 %v441, 0.0
      %v474 = vmax.f32 %v442, 0.0
      %v475 = vmax.f32 %v443, 0.0
      %v476 = vmax.f32 %v444, 0.0
      %v477 = vpack.c.bf16 %v446, %v445
      %v478 = vpack.c.bf16 %v448, %v447
      %v479 = vpack.c.bf16 %v450, %v449
      %v480 = vpack.c.bf16 %v452, %v451
      %v481 = vpack.c.bf16 %v454, %v453
      %v482 = vpack.c.bf16 %v456, %v455
      %v483 = vpack.c.bf16 %v458, %v457
      %v484 = vpack.c.bf16 %v460, %v459
      %v485 = vpack.c.bf16 %v462, %v461
      %v486 = vpack.c.bf16 %v464, %v463
      %v487 = vpack.c.bf16 %v466, %v465
      %v488 = vpack.c.bf16 %v468, %v467
      %v489 = vpack.c.bf16 %v470, %v469
      %v490 = vpack.c.bf16 %v472, %v471
      %v491 = vpack.c.bf16 %v474, %v473
      %v492 = vpack.c.bf16 %v476, %v475
      %v493 = vld [vmem:[%s1] sm:$0xf]
      %v494 = vld [vmem:[%s1 + $0x4] sm:$0xf]
      %v495 = vld [vmem:[%s1 + $0x8] sm:$0xf]
      %v496 = vld [vmem:[%s1 + $0xc] sm:$0xf]
      %v497 = vld [vmem:[%s1 + $0x10] sm:$0xf]
      %v498 = vld [vmem:[%s1 + $0x14] sm:$0xf]
      %v499 = vld [vmem:[%s1 + $0x18] sm:$0xf]
      %v500 = vld [vmem:[%s1 + $0x1c] sm:$0xf]
      %v501 = vld [vmem:[%s1 + $0x20] sm:$0xf]
      %v502 = vld [vmem:[%s1 + $0x24] sm:$0xf]
      %v503 = vld [vmem:[%s1 + $0x28] sm:$0xf]
      %v504 = vld [vmem:[%s1 + $0x2c] sm:$0xf]
      %v505 = vld [vmem:[%s1 + $0x30] sm:$0xf]
      %v506 = vld [vmem:[%s1 + $0x34] sm:$0xf]
      %v507 = vld [vmem:[%s1 + $0x38] sm:$0xf]
      %v508 = vld [vmem:[%s1 + $0x3c] sm:$0xf]
      %v525 = vunpack.c.l.b16 %v493
      %v526 = vunpack.c.l.b16 %v494
      %v527 = vunpack.c.l.b16 %v495
      %v528 = vunpack.c.l.b16 %v496
      %v529 = vunpack.c.l.b16 %v497
      %v530 = vunpack.c.l.b16 %v498
      %v531 = vunpack.c.l.b16 %v499
      %v532 = vunpack.c.l.b16 %v500
      %v533 = vunpack.c.l.b16 %v501
      %v534 = vunpack.c.l.b16 %v502
      %v535 = vunpack.c.l.b16 %v503
      %v536 = vunpack.c.l.b16 %v504
      %v537 = vunpack.c.l.b16 %v505
      %v538 = vunpack.c.l.b16 %v506
      %v539 = vunpack.c.l.b16 %v507
      %v540 = vunpack.c.l.b16 %v508
      %v541 = vpack.c.b16 %v526, %v525
      %v542 = vpack.c.b16 %v528, %v527
      %v543 = vpack.c.b16 %v530, %v529
      %v544 = vpack.c.b16 %v532, %v531
      %v545 = vpack.c.b16 %v534, %v533
      %v546 = vpack.c.b16 %v536, %v535
      %v547 = vpack.c.b16 %v538, %v537
      %v548 = vpack.c.b16 %v540, %v539
      %557 = vmatprep.subr.bf16.mxu0 0
      %558 = vmatpush1.bf16.msra.mxu0 %v541
      %559 = vmatprep.subr.bf16.mxu0 0
      %560 = vmatpush1.bf16.msra.mxu0 %v542
      %561 = vmatprep.subr.bf16.mxu0 0
      %562 = vmatpush1.bf16.msra.mxu0 %v543
      %563 = vmatprep.subr.bf16.mxu0 0
      %564 = vmatpush1.bf16.msra.mxu0 %v544
      %565 = vmatprep.subr.bf16.mxu0 0
      %566 = vmatpush1.bf16.msra.mxu0 %v545
      %567 = vmatprep.subr.bf16.mxu0 0
      %568 = vmatpush1.bf16.msra.mxu0 %v546
      %569 = vmatprep.subr.bf16.mxu0 0
      %570 = vmatpush1.bf16.msra.mxu0 %v547
      %571 = vmatprep.subr.bf16.mxu0 0
      %572 = vmatpush1.bf16.msra.mxu0 %v548
      %573 = vmatprep.subr.bf16.mxu0 0
      %574 = vmatpush1.bf16.msra.mxu0 0
      %575 = vmatprep.subr.bf16.mxu0 0
      %576 = vmatpush1.bf16.msra.mxu0 0
      %577 = vmatprep.subr.bf16.mxu0 0
      %578 = vmatpush1.bf16.msra.mxu0 0
      %579 = vmatprep.subr.bf16.mxu0 0
      %580 = vmatpush1.bf16.msra.mxu0 0
      %581 = vmatprep.subr.bf16.mxu0 0
      %582 = vmatpush1.bf16.msra.mxu0 0
      %583 = vmatprep.subr.bf16.mxu0 0
      %584 = vmatpush1.bf16.msra.mxu0 0
      %585 = vmatprep.subr.bf16.mxu0 0
      %586 = vmatpush1.bf16.msra.mxu0 0
      %587 = vmatprep.subr.bf16.mxu0 0
      %588 = vmatpush1.bf16.msra.mxu0 0
      %589 = vmatprep.mubr.bf16.mxu0 0
      %590 = vmatmul.mubr.bf16.gmra.mrb[0].mxu0 %v477
      %v591 = vpop.f32.mrb[0].mxu0
      %v592 = vadd.f32 0.0, %v591
      %v593 = vpop.f32.mrb[0].mxu0
      %v594 = vpop.f32.mrb[0].mxu0
      %v595 = vadd.f32 0.0, %v594
      %v596 = vpop.f32.mrb[0].mxu0
      %597 = vmatprep.mubr.bf16.mxu0 0
      %598 = vmatmul.mubr.bf16.gmra.mrb[0].mxu0 %v478
      %v599 = vpop.f32.mrb[0].mxu0
      %v600 = vadd.f32 0.0, %v599
      %v601 = vpop.f32.mrb[0].mxu0
      %v602 = vpop.f32.mrb[0].mxu0
      %v603 = vadd.f32 0.0, %v602
      %v604 = vpop.f32.mrb[0].mxu0
      %605 = vmatprep.mubr.bf16.mxu0 0
      %606 = vmatmul.mubr.bf16.gmra.mrb[0].mxu0 %v479
      %v607 = vpop.f32.mrb[0].mxu0
      %v608 = vadd.f32 0.0, %v607
      %v609 = vpop.f32.mrb[0].mxu0
      %v610 = vpop.f32.mrb[0].mxu0
      %v611 = vadd.f32 0.0, %v610
      %v612 = vpop.f32.mrb[0].mxu0
      %613 = vmatprep.mubr.bf16.mxu0 0
      %614 = vmatmul.mubr.bf16.gmra.mrb[0].mxu0 %v480
      %v615 = vpop.f32.mrb[0].mxu0
      %v616 = vadd.f32 0.0, %v615
      %v617 = vpop.f32.mrb[0].mxu0
      %v618 = vpop.f32.mrb[0].mxu0
      %v619 = vadd.f32 0.0, %v618
      %v620 = vpop.f32.mrb[0].mxu0
      %621 = vmatprep.mubr.bf16.mxu0 0
      %622 = vmatmul.mubr.bf16.gmra.mrb[0].mxu0 %v481
      %v623 = vpop.f32.mrb[0].mxu0
      %v624 = vadd.f32 0.0, %v623
      %v625 = vpop.f32.mrb[0].mxu0
      %v626 = vpop.f32.mrb[0].mxu0
      %v627 = vadd.f32 0.0, %v626
      %v628 = vpop.f32.mrb[0].mxu0
      %629 = vmatprep.mubr.bf16.mxu0 0
      %630 = vmatmul.mubr.bf16.gmra.mrb[0].mxu0 %v482
      %v631 = vpop.f32.mrb[0].mxu0
      %v632 = vadd.f32 0.0, %v631
      %v633 = vpop.f32.mrb[0].mxu0
      %v634 = vpop.f32.mrb[0].mxu0
      %v635 = vadd.f32 0.0, %v634
      %v636 = vpop.f32.mrb[0].mxu0
      %637 = vmatprep.mubr.bf16.mxu0 0
      %638 = vmatmul.mubr.bf16.gmra.mrb[0].mxu0 %v483
      %v639 = vpop.f32.mrb[0].mxu0
      %v640 = vadd.f32 0.0, %v639
      %v641 = vpop.f32.mrb[0].mxu0
      %v642 = vpop.f32.mrb[0].mxu0
      %v643 = vadd.f32 0.0, %v642
      %v644 = vpop.f32.mrb[0].mxu0
      %645 = vmatprep.mubr.bf16.mxu0 0
      %646 = vmatmul.mubr.bf16.gmra.mrb[0].mxu0 %v484
      %v647 = vpop.f32.mrb[0].mxu0
      %v648 = vadd.f32 0.0, %v647
      %v649 = vpop.f32.mrb[0].mxu0
      %v650 = vpop.f32.mrb[0].mxu0
      %v651 = vadd.f32 0.0, %v650
      %v652 = vpop.f32.mrb[0].mxu0
      %653 = vmatprep.mubr.bf16.mxu0 0
      %654 = vmatmul.mubr.bf16.gmra.mrb[0].mxu0 %v485
      %v655 = vpop.f32.mrb[0].mxu0
      %v656 = vadd.f32 0.0, %v655
      %v657 = vpop.f32.mrb[0].mxu0
      %v658 = vpop.f32.mrb[0].mxu0
      %v659 = vadd.f32 0.0, %v658
      %v660 = vpop.f32.mrb[0].mxu0
      %661 = vmatprep.mubr.bf16.mxu0 0
      %662 = vmatmul.mubr.bf16.gmra.mrb[0].mxu0 %v486
      %v663 = vpop.f32.mrb[0].mxu0
      %v664 = vadd.f32 0.0, %v663
      %v665 = vpop.f32.mrb[0].mxu0
      %v666 = vpop.f32.mrb[0].mxu0
      %v667 = vadd.f32 0.0, %v666
      %v668 = vpop.f32.mrb[0].mxu0
      %669 = vmatprep.mubr.bf16.mxu0 0
      %670 = vmatmul.mubr.bf16.gmra.mrb[0].mxu0 %v487
      %v671 = vpop.f32.mrb[0].mxu0
      %v672 = vadd.f32 0.0, %v671
      %v673 = vpop.f32.mrb[0].mxu0
      %v674 = vpop.f32.mrb[0].mxu0
      %v675 = vadd.f32 0.0, %v674
      %v676 = vpop.f32.mrb[0].mxu0
      %677 = vmatprep.mubr.bf16.mxu0 0
      %678 = vmatmul.mubr.bf16.gmra.mrb[0].mxu0 %v488
      %v679 = vpop.f32.mrb[0].mxu0
      %v680 = vadd.f32 0.0, %v679
      %v681 = vpop.f32.mrb[0].mxu0
      %v682 = vpop.f32.mrb[0].mxu0
      %v683 = vadd.f32 0.0, %v682
      %v684 = vpop.f32.mrb[0].mxu0
      %685 = vmatprep.mubr.bf16.mxu0 0
      %686 = vmatmul.mubr.bf16.gmra.mrb[0].mxu0 %v489
      %v687 = vpop.f32.mrb[0].mxu0
      %v688 = vadd.f32 0.0, %v687
      %v689 = vpop.f32.mrb[0].mxu0
      %v690 = vpop.f32.mrb[0].mxu0
      %v691 = vadd.f32 0.0, %v690
      %v692 = vpop.f32.mrb[0].mxu0
      %693 = vmatprep.mubr.bf16.mxu0 0
      %694 = vmatmul.mubr.bf16.gmra.mrb[0].mxu0 %v490
      %v695 = vpop.f32.mrb[0].mxu0
      %v696 = vadd.f32 0.0, %v695
      %v697 = vpop.f32.mrb[0].mxu0
      %v698 = vpop.f32.mrb[0].mxu0
      %v699 = vadd.f32 0.0, %v698
      %v700 = vpop.f32.mrb[0].mxu0
      %701 = vmatprep.mubr.bf16.mxu0 0
      %702 = vmatmul.mubr.bf16.gmra.mrb[0].mxu0 %v491
      %v703 = vpop.f32.mrb[0].mxu0
      %v704 = vadd.f32 0.0, %v703
      %v705 = vpop.f32.mrb[0].mxu0
      %v706 = vpop.f32.mrb[0].mxu0
      %v707 = vadd.f32 0.0, %v706
      %v708 = vpop.f32.mrb[0].mxu0
      %709 = vmatprep.mubr.bf16.mxu0 0
      %710 = vmatmul.mubr.bf16.gmra.mrb[0].mxu0 %v492
      %v711 = vpop.f32.mrb[0].mxu0
      %v712 = vadd.f32 0.0, %v711
      %v713 = vpop.f32.mrb[0].mxu0
      %v714 = vpop.f32.mrb[0].mxu0
      %v715 = vadd.f32 0.0, %v714
      %v716 = vpop.f32.mrb[0].mxu0
      %717 = vdwg.mxu0
      %s718 = sadd.s32 %s22, %s23
      %s719 = smul.u32 %s718, 256
      %s720 = sadd.s32 %s719, 256
      %p721 = scmp.le.s32.totalorder %s720, 400
      // Predicated region
      $region41: #{sdf_forward.8} parent=35 // pred_check
        %p722 = pneg %p721
      $region42: #{sdf_forward.8} parent=35 // pred_check_branch
        %724 = sbr.rel (%p722) target = $region44
      $region43: #{sdf_forward.8} parent=35 // pred_region
        %v725 = vld [vmem:[%s292] sm:$0x1]
        %v726 = vadd.f32 %v592, %v595
        %v727 = vadd.f32 %v726, %v600
        %v728 = vadd.f32 %v727, %v603
        %v729 = vadd.f32 %v728, %v608
        %v730 = vadd.f32 %v729, %v611
        %v731 = vadd.f32 %v730, %v616
        %v732 = vadd.f32 %v731, %v619
        %v733 = vadd.f32 %v732, %v624
        %v734 = vadd.f32 %v733, %v627
        %v735 = vadd.f32 %v734, %v632
        %v736 = vadd.f32 %v735, %v635
        %v737 = vadd.f32 %v736, %v640
        %v738 = vadd.f32 %v737, %v643
        %v739 = vadd.f32 %v738, %v648
        %v740 = vadd.f32 %v739, %v651
        %v741 = vadd.f32 %v740, %v656
        %v742 = vadd.f32 %v741, %v659
        %v743 = vadd.f32 %v742, %v664
        %v744 = vadd.f32 %v743, %v667
        %v745 = vadd.f32 %v744, %v672
        %v746 = vadd.f32 %v745, %v675
        %v747 = vadd.f32 %v746, %v680
        %v748 = vadd.f32 %v747, %v683
        %v749 = vadd.f32 %v748, %v688
        %v750 = vadd.f32 %v749, %v691
        %v751 = vadd.f32 %v750, %v696
        %v752 = vadd.f32 %v751, %v699
        %v753 = vadd.f32 %v752, %v704
        %v754 = vadd.f32 %v753, %v707
        %v755 = vadd.f32 %v754, %v712
        %v756 = vadd.f32 %v755, %v715
        %v757 = vrot.slane %v756, 4
        %v758 = vadd.f32 %v756, %v757
        %v759 = vrot.slane %v758, 2
        %v760 = vadd.f32 %v758, %v759
        %v761 = vrot.slane %v760, 1
        %v762 = vadd.f32 %v760, %v761
        %v763 = vadd.f32 %v725, %v762
        %764 = vst [vmem:[%s292] sm:$0x1] %v763
        %v765 = vld [vmem:[%s295] sm:$0x1]
        %v766 = vmul.f32 %v592, %v592
        %v767 = vmul.f32 %v595, %v595
        %v768 = vmul.f32 %v600, %v600
        %v769 = vmul.f32 %v603, %v603
        %v770 = vmul.f32 %v608, %v608
        %v771 = vmul.f32 %v611, %v611
        %v772 = vmul.f32 %v616, %v616
        %v773 = vmul.f32 %v619, %v619
        %v774 = vmul.f32 %v624, %v624
        %v775 = vmul.f32 %v627, %v627
        %v776 = vmul.f32 %v632, %v632
        %v777 = vmul.f32 %v635, %v635
        %v778 = vmul.f32 %v640, %v640
        %v779 = vmul.f32 %v643, %v643
        %v780 = vmul.f32 %v648, %v648
        %v781 = vmul.f32 %v651, %v651
        %v782 = vmul.f32 %v656, %v656
        %v783 = vmul.f32 %v659, %v659
        %v784 = vmul.f32 %v664, %v664
        %v785 = vmul.f32 %v667, %v667
        %v786 = vmul.f32 %v672, %v672
        %v787 = vmul.f32 %v675, %v675
        %v788 = vmul.f32 %v680, %v680
        %v789 = vmul.f32 %v683, %v683
        %v790 = vmul.f32 %v688, %v688
        %v791 = vmul.f32 %v691, %v691
        %v792 = vmul.f32 %v696, %v696
        %v793 = vmul.f32 %v699, %v699
        %v794 = vmul.f32 %v704, %v704
        %v795 = vmul.f32 %v707, %v707
        %v796 = vmul.f32 %v712, %v712
        %v797 = vmul.f32 %v715, %v715
        %v798 = vadd.f32 %v766, %v767
        %v799 = vadd.f32 %v798, %v768
        %v800 = vadd.f32 %v799, %v769
        %v801 = vadd.f32 %v800, %v770
        %v802 = vadd.f32 %v801, %v771
        %v803 = vadd.f32 %v802, %v772
        %v804 = vadd.f32 %v803, %v773
        %v805 = vadd.f32 %v804, %v774
        %v806 = vadd.f32 %v805, %v775
        %v807 = vadd.f32 %v806, %v776
        %v808 = vadd.f32 %v807, %v777
        %v809 = vadd.f32 %v808, %v778
        %v810 = vadd.f32 %v809, %v779
        %v811 = vadd.f32 %v810, %v780
        %v812 = vadd.f32 %v811, %v781
        %v813 = vadd.f32 %v812, %v782
        %v814 = vadd.f32 %v813, %v783
        %v815 = vadd.f32 %v814, %v784
        %v816 = vadd.f32 %v815, %v785
        %v817 = vadd.f32 %v816, %v786
        %v818 = vadd.f32 %v817, %v787
        %v819 = vadd.f32 %v818, %v788
        %v820 = vadd.f32 %v819, %v789
        %v821 = vadd.f32 %v820, %v790
        %v822 = vadd.f32 %v821, %v791
        %v823 = vadd.f32 %v822, %v792
        %v824 = vadd.f32 %v823, %v793
        %v825 = vadd.f32 %v824, %v794
        %v826 = vadd.f32 %v825, %v795
        %v827 = vadd.f32 %v826, %v796
        %v828 = vadd.f32 %v827, %v797
        %v829 = vrot.slane %v828, 4
        %v830 = vadd.f32 %v828, %v829
        %v831 = vrot.slane %v830, 2
        %v832 = vadd.f32 %v830, %v831
        %v833 = vrot.slane %v832, 1
        %v834 = vadd.f32 %v832, %v833
        %v835 = vadd.f32 %v765, %v834
        %836 = vst [vmem:[%s295] sm:$0x1] %v835
      $region44: #{sdf_forward.8} parent=35 // pred_fallthru
        _
      %p837 = scmp.gt.s32.totalorder %s720, 400
      // Predicated region
      $region45: #{sdf_forward.8} parent=35 // pred_check
        %p838 = pneg %p837
      $region46: #{sdf_forward.8} parent=35 // pred_check_branch
        %840 = sbr.rel (%p838) target = $region48
      $region47: #{sdf_forward.8} parent=35 // pred_region
        %v841 = vlaneseq
        %v842 = vshrl.u32 %v841, 7
        %v843 = vadd.s32 %v842, 8
        %v844 = vadd.s32 %v842, 16
        %v845 = vadd.s32 %v842, 24
        %v846 = vadd.s32 %v842, 32
        %v847 = vadd.s32 %v842, 40
        %v848 = vadd.s32 %v842, 48
        %v849 = vadd.s32 %v842, 56
        %v850 = vadd.s32 %v842, 64
        %v851 = vadd.s32 %v842, 72
        %v852 = vadd.s32 %v842, 80
        %v853 = vadd.s32 %v842, 88
        %v854 = vadd.s32 %v842, 96
        %v855 = vadd.s32 %v842, 104
        %v856 = vadd.s32 %v842, 112
        %v857 = vadd.s32 %v842, 120
        %v858 = vadd.s32 %v842, 128
        %v859 = vadd.s32 %v842, 136
        %v860 = vadd.s32 %v842, 144
        %v861 = vadd.s32 %v842, 152
        %v862 = vadd.s32 %v842, 160
        %v863 = vadd.s32 %v842, 168
        %v864 = vadd.s32 %v842, 176
        %v865 = vadd.s32 %v842, 184
        %v866 = vadd.s32 %v842, 192
        %v867 = vadd.s32 %v842, 200
        %v868 = vadd.s32 %v842, 208
        %v869 = vadd.s32 %v842, 216
        %v870 = vadd.s32 %v842, 224
        %v871 = vadd.s32 %v842, 232
        %v872 = vadd.s32 %v842, 240
        %v873 = vadd.s32 %v842, 248
        %v874 = vstv %s719
        %v875 = vadd.s32 %v874, %v842
        %v876 = vadd.s32 %v874, %v843
        %v877 = vadd.s32 %v874, %v844
        %v878 = vadd.s32 %v874, %v845
        %v879 = vadd.s32 %v874, %v846
        %v880 = vadd.s32 %v874, %v847
        %v881 = vadd.s32 %v874, %v848
        %v882 = vadd.s32 %v874, %v849
        %v883 = vadd.s32 %v874, %v850
        %v884 = vadd.s32 %v874, %v851
        %v885 = vadd.s32 %v874, %v852
        %v886 = vadd.s32 %v874, %v853
        %v887 = vadd.s32 %v874, %v854
        %v888 = vadd.s32 %v874, %v855
        %v889 = vadd.s32 %v874, %v856
        %v890 = vadd.s32 %v874, %v857
        %v891 = vadd.s32 %v874, %v858
        %v892 = vadd.s32 %v874, %v859
        %v893 = vadd.s32 %v874, %v860
        %v894 = vadd.s32 %v874, %v861
        %v895 = vadd.s32 %v874, %v862
        %v896 = vadd.s32 %v874, %v863
        %v897 = vadd.s32 %v874, %v864
        %v898 = vadd.s32 %v874, %v865
        %v899 = vadd.s32 %v874, %v866
        %v900 = vadd.s32 %v874, %v867
        %v901 = vadd.s32 %v874, %v868
        %v902 = vadd.s32 %v874, %v869
        %v903 = vadd.s32 %v874, %v870
        %v904 = vadd.s32 %v874, %v871
        %v905 = vadd.s32 %v874, %v872
        %v906 = vadd.s32 %v874, %v873
        %vm907 = vcmp.lt.s32.totalorder %v875, 400
        %vm908 = vcmp.lt.s32.totalorder %v876, 400
        %vm909 = vcmp.lt.s32.totalorder %v877, 400
        %vm910 = vcmp.lt.s32.totalorder %v878, 400
        %vm911 = vcmp.lt.s32.totalorder %v879, 400
        %vm912 = vcmp.lt.s32.totalorder %v880, 400
        %vm913 = vcmp.lt.s32.totalorder %v881, 400
        %vm914 = vcmp.lt.s32.totalorder %v882, 400
        %vm915 = vcmp.lt.s32.totalorder %v883, 400
        %vm916 = vcmp.lt.s32.totalorder %v884, 400
        %vm917 = vcmp.lt.s32.totalorder %v885, 400
        %vm918 = vcmp.lt.s32.totalorder %v886, 400
        %vm919 = vcmp.lt.s32.totalorder %v887, 400
        %vm920 = vcmp.lt.s32.totalorder %v888, 400
        %vm921 = vcmp.lt.s32.totalorder %v889, 400
        %vm922 = vcmp.lt.s32.totalorder %v890, 400
        %vm923 = vcmp.lt.s32.totalorder %v891, 400
        %vm924 = vcmp.lt.s32.totalorder %v892, 400
        %vm925 = vcmp.lt.s32.totalorder %v893, 400
        %vm926 = vcmp.lt.s32.totalorder %v894, 400
        %vm927 = vcmp.lt.s32.totalorder %v895, 400
        %vm928 = vcmp.lt.s32.totalorder %v896, 400
        %vm929 = vcmp.lt.s32.totalorder %v897, 400
        %vm930 = vcmp.lt.s32.totalorder %v898, 400
        %vm931 = vcmp.lt.s32.totalorder %v899, 400
        %vm932 = vcmp.lt.s32.totalorder %v900, 400
        %vm933 = vcmp.lt.s32.totalorder %v901, 400
        %vm934 = vcmp.lt.s32.totalorder %v902, 400
        %vm935 = vcmp.lt.s32.totalorder %v903, 400
        %vm936 = vcmp.lt.s32.totalorder %v904, 400
        %vm937 = vcmp.lt.s32.totalorder %v905, 400
        %vm938 = vcmp.lt.s32.totalorder %v906, 400
        %v939 = vsel %vm907, %v592, 0.0
        %v940 = vsel %vm908, %v595, 0.0
        %v941 = vsel %vm909, %v600, 0.0
        %v942 = vsel %vm910, %v603, 0.0
        %v943 = vsel %vm911, %v608, 0.0
        %v944 = vsel %vm912, %v611, 0.0
        %v945 = vsel %vm913, %v616, 0.0
        %v946 = vsel %vm914, %v619, 0.0
        %v947 = vsel %vm915, %v624, 0.0
        %v948 = vsel %vm916, %v627, 0.0
        %v949 = vsel %vm917, %v632, 0.0
        %v950 = vsel %vm918, %v635, 0.0
        %v951 = vsel %vm919, %v640, 0.0
        %v952 = vsel %vm920, %v643, 0.0
        %v953 = vsel %vm921, %v648, 0.0
        %v954 = vsel %vm922, %v651, 0.0
        %v955 = vsel %vm923, %v656, 0.0
        %v956 = vsel %vm924, %v659, 0.0
        %v957 = vsel %vm925, %v664, 0.0
        %v958 = vsel %vm926, %v667, 0.0
        %v959 = vsel %vm927, %v672, 0.0
        %v960 = vsel %vm928, %v675, 0.0
        %v961 = vsel %vm929, %v680, 0.0
        %v962 = vsel %vm930, %v683, 0.0
        %v963 = vsel %vm931, %v688, 0.0
        %v964 = vsel %vm932, %v691, 0.0
        %v965 = vsel %vm933, %v696, 0.0
        %v966 = vsel %vm934, %v699, 0.0
        %v967 = vsel %vm935, %v704, 0.0
        %v968 = vsel %vm936, %v707, 0.0
        %v969 = vsel %vm937, %v712, 0.0
        %v970 = vsel %vm938, %v715, 0.0
        %v971 = vld [vmem:[%s292] sm:$0x1]
        %v972 = vadd.f32 %v939, %v940
        %v973 = vadd.f32 %v972, %v941
        %v974 = vadd.f32 %v973, %v942
        %v975 = vadd.f32 %v974, %v943
        %v976 = vadd.f32 %v975, %v944
        %v977 = vadd.f32 %v976, %v945
        %v978 = vadd.f32 %v977, %v946
        %v979 = vadd.f32 %v978, %v947
        %v980 = vadd.f32 %v979, %v948
        %v981 = vadd.f32 %v980, %v949
        %v982 = vadd.f32 %v981, %v950
        %v983 = vadd.f32 %v982, %v951
        %v984 = vadd.f32 %v983, %v952
        %v985 = vadd.f32 %v984, %v953
        %v986 = vadd.f32 %v985, %v954
        %v987 = vadd.f32 %v986, %v955
        %v988 = vadd.f32 %v987, %v956
        %v989 = vadd.f32 %v988, %v957
        %v990 = vadd.f32 %v989, %v958
        %v991 = vadd.f32 %v990, %v959
        %v992 = vadd.f32 %v991, %v960
        %v993 = vadd.f32 %v992, %v961
        %v994 = vadd.f32 %v993, %v962
        %v995 = vadd.f32 %v994, %v963
        %v996 = vadd.f32 %v995, %v964
        %v997 = vadd.f32 %v996, %v965
        %v998 = vadd.f32 %v997, %v966
        %v999 = vadd.f32 %v998, %v967
        %v1000 = vadd.f32 %v999, %v968
        %v1001 = vadd.f32 %v1000, %v969
        %v1002 = vadd.f32 %v1001, %v970
        %v1003 = vrot.slane %v1002, 4
        %v1004 = vadd.f32 %v1002, %v1003
        %v1005 = vrot.slane %v1004, 2
        %v1006 = vadd.f32 %v1004, %v1005
        %v1007 = vrot.slane %v1006, 1
        %v1008 = vadd.f32 %v1006, %v1007
        %v1009 = vadd.f32 %v971, %v1008
        %1010 = vst [vmem:[%s292] sm:$0x1] %v1009
        %v1011 = vld [vmem:[%s295] sm:$0x1]
        %v1012 = vmul.f32 %v939, %v939
        %v1013 = vmul.f32 %v940, %v940
        %v1014 = vmul.f32 %v941, %v941
        %v1015 = vmul.f32 %v942, %v942
        %v1016 = vmul.f32 %v943, %v943
        %v1017 = vmul.f32 %v944, %v944
        %v1018 = vmul.f32 %v945, %v945
        %v1019 = vmul.f32 %v946, %v946
        %v1020 = vmul.f32 %v947, %v947
        %v1021 = vmul.f32 %v948, %v948
        %v1022 = vmul.f32 %v949, %v949
        %v1023 = vmul.f32 %v950, %v950
        %v1024 = vmul.f32 %v951, %v951
        %v1025 = vmul.f32 %v952, %v952
        %v1026 = vmul.f32 %v953, %v953
        %v1027 = vmul.f32 %v954, %v954
        %v1028 = vmul.f32 %v955, %v955
        %v1029 = vmul.f32 %v956, %v956
        %v1030 = vmul.f32 %v957, %v957
        %v1031 = vmul.f32 %v958, %v958
        %v1032 = vmul.f32 %v959, %v959
        %v1033 = vmul.f32 %v960, %v960
        %v1034 = vmul.f32 %v961, %v961
        %v1035 = vmul.f32 %v962, %v962
        %v1036 = vmul.f32 %v963, %v963
        %v1037 = vmul.f32 %v964, %v964
        %v1038 = vmul.f32 %v965, %v965
        %v1039 = vmul.f32 %v966, %v966
        %v1040 = vmul.f32 %v967, %v967
        %v1041 = vmul.f32 %v968, %v968
        %v1042 = vmul.f32 %v969, %v969
        %v1043 = vmul.f32 %v970, %v970
        %v1044 = vadd.f32 %v1012, %v1013
        %v1045 = vadd.f32 %v1044, %v1014
        %v1046 = vadd.f32 %v1045, %v1015
        %v1047 = vadd.f32 %v1046, %v1016
        %v1048 = vadd.f32 %v1047, %v1017
        %v1049 = vadd.f32 %v1048, %v1018
        %v1050 = vadd.f32 %v1049, %v1019
        %v1051 = vadd.f32 %v1050, %v1020
        %v1052 = vadd.f32 %v1051, %v1021
        %v1053 = vadd.f32 %v1052, %v1022
        %v1054 = vadd.f32 %v1053, %v1023
        %v1055 = vadd.f32 %v1054, %v1024
        %v1056 = vadd.f32 %v1055, %v1025
        %v1057 = vadd.f32 %v1056, %v1026
        %v1058 = vadd.f32 %v1057, %v1027
        %v1059 = vadd.f32 %v1058, %v1028
        %v1060 = vadd.f32 %v1059, %v1029
        %v1061 = vadd.f32 %v1060, %v1030
        %v1062 = vadd.f32 %v1061, %v1031
        %v1063 = vadd.f32 %v1062, %v1032
        %v1064 = vadd.f32 %v1063, %v1033
        %v1065 = vadd.f32 %v1064, %v1034
        %v1066 = vadd.f32 %v1065, %v1035
        %v1067 = vadd.f32 %v1066, %v1036
        %v1068 = vadd.f32 %v1067, %v1037
        %v1069 = vadd.f32 %v1068, %v1038
        %v1070 = vadd.f32 %v1069, %v1039
        %v1071 = vadd.f32 %v1070, %v1040
        %v1072 = vadd.f32 %v1071, %v1041
        %v1073 = vadd.f32 %v1072, %v1042
        %v1074 = vadd.f32 %v1073, %v1043
        %v1075 = vrot.slane %v1074, 4
        %v1076 = vadd.f32 %v1074, %v1075
        %v1077 = vrot.slane %v1076, 2
        %v1078 = vadd.f32 %v1076, %v1077
        %v1079 = vrot.slane %v1078, 1
        %v1080 = vadd.f32 %v1078, %v1079
        %v1081 = vadd.f32 %v1011, %v1080
        %1082 = vst [vmem:[%s295] sm:$0x1] %v1081
      $region48: #{sdf_forward.8} parent=35 // pred_fallthru
        _
      %v1083 = vpack.c.bf16 %v595, %v592
      %v1084 = vpack.c.bf16 %v603, %v600
      %v1085 = vpack.c.bf16 %v611, %v608
      %v1086 = vpack.c.bf16 %v619, %v616
      %v1087 = vpack.c.bf16 %v627, %v624
      %v1088 = vpack.c.bf16 %v635, %v632
      %v1089 = vpack.c.bf16 %v643, %v640
      %v1090 = vpack.c.bf16 %v651, %v648
      %v1091 = vpack.c.bf16 %v659, %v656
      %v1092 = vpack.c.bf16 %v667, %v664
      %v1093 = vpack.c.bf16 %v675, %v672
      %v1094 = vpack.c.bf16 %v683, %v680
      %v1095 = vpack.c.bf16 %v691, %v688
      %v1096 = vpack.c.bf16 %v699, %v696
      %v1097 = vpack.c.bf16 %v707, %v704
      %v1098 = vpack.c.bf16 %v715, %v712
      %v1115 = vunpack.c.l.b16 %v1083
      %v1116 = vunpack.c.h.b16 %v1083
      %v1117 = vunpack.c.l.b16 %v1084
      %v1118 = vunpack.c.h.b16 %v1084
      %v1119 = vunpack.c.l.b16 %v1085
      %v1120 = vunpack.c.h.b16 %v1085
      %v1121 = vunpack.c.l.b16 %v1086
      %v1122 = vunpack.c.h.b16 %v1086
      %v1123 = vunpack.c.l.b16 %v1087
      %v1124 = vunpack.c.h.b16 %v1087
      %v1125 = vunpack.c.l.b16 %v1088
      %v1126 = vunpack.c.h.b16 %v1088
      %v1127 = vunpack.c.l.b16 %v1089
      %v1128 = vunpack.c.h.b16 %v1089
      %v1129 = vunpack.c.l.b16 %v1090
      %v1130 = vunpack.c.h.b16 %v1090
      %v1131 = vunpack.c.l.b16 %v1091
      %v1132 = vunpack.c.h.b16 %v1091
      %v1133 = vunpack.c.l.b16 %v1092
      %v1134 = vunpack.c.h.b16 %v1092
      %v1135 = vunpack.c.l.b16 %v1093
      %v1136 = vunpack.c.h.b16 %v1093
      %v1137 = vunpack.c.l.b16 %v1094
      %v1138 = vunpack.c.h.b16 %v1094
      %v1139 = vunpack.c.l.b16 %v1095
      %v1140 = vunpack.c.h.b16 %v1095
      %v1141 = vunpack.c.l.b16 %v1096
      %v1142 = vunpack.c.h.b16 %v1096
      %v1143 = vunpack.c.l.b16 %v1097
      %v1144 = vunpack.c.h.b16 %v1097
      %v1145 = vunpack.c.l.b16 %v1098
      %v1146 = vunpack.c.h.b16 %v1098
      %v1147 = vpack.c.b16 %v1115, %v1115
      %v1148 = vpack.c.b16 %v1116, %v1116
      %v1149 = vpack.c.b16 %v1117, %v1117
      %v1150 = vpack.c.b16 %v1118, %v1118
      %v1151 = vpack.c.b16 %v1119, %v1119
      %v1152 = vpack.c.b16 %v1120, %v1120
      %v1153 = vpack.c.b16 %v1121, %v1121
      %v1154 = vpack.c.b16 %v1122, %v1122
      %v1155 = vpack.c.b16 %v1123, %v1123
      %v1156 = vpack.c.b16 %v1124, %v1124
      %v1157 = vpack.c.b16 %v1125, %v1125
      %v1158 = vpack.c.b16 %v1126, %v1126
      %v1159 = vpack.c.b16 %v1127, %v1127
      %v1160 = vpack.c.b16 %v1128, %v1128
      %v1161 = vpack.c.b16 %v1129, %v1129
      %v1162 = vpack.c.b16 %v1130, %v1130
      %v1163 = vpack.c.b16 %v1131, %v1131
      %v1164 = vpack.c.b16 %v1132, %v1132
      %v1165 = vpack.c.b16 %v1133, %v1133
      %v1166 = vpack.c.b16 %v1134, %v1134
      %v1167 = vpack.c.b16 %v1135, %v1135
      %v1168 = vpack.c.b16 %v1136, %v1136
      %v1169 = vpack.c.b16 %v1137, %v1137
      %v1170 = vpack.c.b16 %v1138, %v1138
      %v1171 = vpack.c.b16 %v1139, %v1139
      %v1172 = vpack.c.b16 %v1140, %v1140
      %v1173 = vpack.c.b16 %v1141, %v1141
      %v1174 = vpack.c.b16 %v1142, %v1142
      %v1175 = vpack.c.b16 %v1143, %v1143
      %v1176 = vpack.c.b16 %v1144, %v1144
      %v1177 = vpack.c.b16 %v1145, %v1145
      %v1178 = vpack.c.b16 %v1146, %v1146
      %1211 = vst [vmem:[%s287] sm:$0xf] %v1147
      %1212 = vst [vmem:[%s287 + $0x4] sm:$0xf] %v1148
      %1213 = vst [vmem:[%s287 + $0x8] sm:$0xf] %v1149
      %1214 = vst [vmem:[%s287 + $0xc] sm:$0xf] %v1150
      %1215 = vst [vmem:[%s287 + $0x10] sm:$0xf] %v1151
      %1216 = vst [vmem:[%s287 + $0x14] sm:$0xf] %v1152
      %1217 = vst [vmem:[%s287 + $0x18] sm:$0xf] %v1153
      %1218 = vst [vmem:[%s287 + $0x1c] sm:$0xf] %v1154
      %1219 = vst [vmem:[%s287 + $0x20] sm:$0xf] %v1155
      %1220 = vst [vmem:[%s287 + $0x24] sm:$0xf] %v1156
      %1221 = vst [vmem:[%s287 + $0x28] sm:$0xf] %v1157
      %1222 = vst [vmem:[%s287 + $0x2c] sm:$0xf] %v1158
      %1223 = vst [vmem:[%s287 + $0x30] sm:$0xf] %v1159
      %1224 = vst [vmem:[%s287 + $0x34] sm:$0xf] %v1160
      %1225 = vst [vmem:[%s287 + $0x38] sm:$0xf] %v1161
      %1226 = vst [vmem:[%s287 + $0x3c] sm:$0xf] %v1162
      %1227 = vst [vmem:[%s287 + $0x40] sm:$0xf] %v1163
      %1228 = vst [vmem:[%s287 + $0x44] sm:$0xf] %v1164
      %1229 = vst [vmem:[%s287 + $0x48] sm:$0xf] %v1165
      %1230 = vst [vmem:[%s287 + $0x4c] sm:$0xf] %v1166
      %1231 = vst [vmem:[%s287 + $0x50] sm:$0xf] %v1167
      %1232 = vst [vmem:[%s287 + $0x54] sm:$0xf] %v1168
      %1233 = vst [vmem:[%s287 + $0x58] sm:$0xf] %v1169
      %1234 = vst [vmem:[%s287 + $0x5c] sm:$0xf] %v1170
      %1235 = vst [vmem:[%s287 + $0x60] sm:$0xf] %v1171
      %1236 = vst [vmem:[%s287 + $0x64] sm:$0xf] %v1172
      %1237 = vst [vmem:[%s287 + $0x68] sm:$0xf] %v1173
      %1238 = vst [vmem:[%s287 + $0x6c] sm:$0xf] %v1174
      %1239 = vst [vmem:[%s287 + $0x70] sm:$0xf] %v1175
      %1240 = vst [vmem:[%s287 + $0x74] sm:$0xf] %v1176
      %1241 = vst [vmem:[%s287 + $0x78] sm:$0xf] %v1177
      %1242 = vst [vmem:[%s287 + $0x7c] sm:$0xf] %v1178
      %s1243 = sadd.s32 %s22, %s23
      %s1244 = smul.u32 32, %s1243
      %p1245 = scmp.lt.s32.totalorder %s1244, 63
      %s1246 = scalar_select %p1245, %s1244, 63
      %s1247 = smul.addr %s1246, 4
      %s1248 = scalar_lea.vmem %s4, %s1247
      %p1249 = scmp.lt.s32.totalorder %s22, 1
      %s1250 = scalar_select %p1249, %s22, 1
      %s1251 = scalar_lea.vmem %s5, %s1250
      %p1252 = scmp.lt.s32.totalorder %s22, 1
      %s1253 = scalar_select %p1252, %s22, 1
      %s1254 = scalar_lea.vmem %s6, %s1253
      // Predicated region
      $region49: #{sdf_forward.8} parent=35 // pred_check
        %p1255 = pneg %p141
      $region50: #{sdf_forward.8} parent=35 // pred_check_branch
        %1257 = sbr.rel (%p1255) target = $region52
      $region51: #{sdf_forward.8} parent=35 // pred_region
        %s1258 = sadd.s32 %s22, %s23
        %s1259 = smul.u32 32, %s1258
      $region52: #{sdf_forward.8} parent=35 // pred_fallthru
        _
      // Predicated region
      $region53: #{sdf_forward.8} parent=35 // pred_check
        %p1260 = pneg %p167
      $region54: #{sdf_forward.8} parent=35 // pred_check_branch
        %1262 = sbr.rel (%p1260) target = $region56
      $region55: #{sdf_forward.8} parent=35 // pred_region
        _
      $region56: #{sdf_forward.8} parent=35 // pred_fallthru
        _
      // Predicated region
      $region57: #{sdf_forward.8} parent=35 // pred_check
        %p1263 = pneg %p193
      $region58: #{sdf_forward.8} parent=35 // pred_check_branch
        %1265 = sbr.rel (%p1263) target = $region60
      $region59: #{sdf_forward.8} parent=35 // pred_region
        _
      $region60: #{sdf_forward.8} parent=35 // pred_fallthru
        _
    $region36: #{sdf_forward.8} parent=5 // pred_fallthru
      _
    %p1266 = scmp.le.s32.totalorder 2, %s13
    // Predicated region
    $region61: #{sdf_forward.8} parent=5 // pred_check
      %p1267 = pneg %p1266
    $region62: #{sdf_forward.8} parent=5 // pred_check_branch
      %1269 = sbr.rel (%p1267) target = $region64
    $region63: #{sdf_forward.8} parent=5 // pred_region
      %s1270 = ssub.s32 %s13, 2
      // Predicated region
      $region65: #{sdf_forward.8} parent=63 // pred_check
        %p1271 = pneg %p147
      $region66: #{sdf_forward.8} parent=63 // pred_check_branch
        %1273 = sbr.rel (%p1271) target = $region68
      $region67: #{sdf_forward.8} parent=63 // pred_region
        %s1274 = sadd.s32 %s24, %s25
        %s1275 = smul.u32 32, %s1274
        %p1276 = scmp.lt.s32.totalorder %s1275, 63
        %s1277 = scalar_select %p1276, %s1275, 63
        %s1278 = smul.addr %s1277, 4
        %s1279 = scalar_lea.vmem %s4, %s1278
      $region68: #{sdf_forward.8} parent=63 // pred_fallthru
        _
      // Predicated region
      $region69: #{sdf_forward.8} parent=63 // pred_check
        %p1280 = pneg %p173
      $region70: #{sdf_forward.8} parent=63 // pred_check_branch
        %1282 = sbr.rel (%p1280) target = $region72
      $region71: #{sdf_forward.8} parent=63 // pred_region
        %p1283 = scmp.lt.s32.totalorder %s24, 1
        %s1284 = scalar_select %p1283, %s24, 1
        %s1285 = scalar_lea.vmem %s5, %s1284
      $region72: #{sdf_forward.8} parent=63 // pred_fallthru
        _
      // Predicated region
      $region73: #{sdf_forward.8} parent=63 // pred_check
        %p1286 = pneg %p199
      $region74: #{sdf_forward.8} parent=63 // pred_check_branch
        %1288 = sbr.rel (%p1286) target = $region76
      $region75: #{sdf_forward.8} parent=63 // pred_region
        %p1289 = scmp.lt.s32.totalorder %s24, 1
        %s1290 = scalar_select %p1289, %s24, 1
        %s1291 = scalar_lea.vmem %s6, %s1290
      $region76: #{sdf_forward.8} parent=63 // pred_fallthru
        _
    $region64: #{sdf_forward.8} parent=5 // pred_fallthru
      _
  $region6: #{sdf_forward.8} parent=0 // loop_footer
    %s17 = sadd.s32 1, %s13
  $region7: #{sdf_forward.8} parent=0 // loop_footer_branch
    %12 = sbr.rel target = $region3
  $region8: #{sdf_forward.8} parent=0 // loop_exit
    _

// kernel: sdf_forward.7
$region0: #{sdf_forward.7}
  #allocation0 [shape = 'u32[]', space=smem, size = 0x4, offset = 0x4, fixed_abs, tag = 'smem constant byte address 0x4 - core index']
  #allocation1 [shape = 'u32[144,128]{1,0:T(1,128)}', space=vmem, size = 0x12000, scoped, tag = 'internal scratch']
  %s0 = inlined_call_operand.vmem [shape: f32[512,8], index: 0, kind: input, shape index: {}]
  %s1 = inlined_call_operand.vmem [shape: bf16[8,128], index: 1, kind: input, shape index: {}]
  %s2 = inlined_call_operand.vmem [shape: bf16[512,128], index: 2, kind: output, shape index: {0}]
  %s3 = inlined_call_operand.vmem [shape: f32[2,1,128], index: 3, kind: output, shape index: {1}]
  %s4 = inlined_call_operand.vmem [shape: f32[2,1,128], index: 4, kind: output, shape index: {2}]
  %5 = xla_tuple %s2, %s3, %s4
  %s6 = sld [smem:[#allocation0]]
  $region69: #{sdf_forward.7} parent=0
    _
  %s8 = ssub.s32 1, %s6
  %s9 = scalar_select 0, %s8, %s6
  loop: start=0, step=1, limit=4
  $region2: #{sdf_forward.7} parent=0 // loop_pre_header
    _
  $region3: #{sdf_forward.7} parent=0 // loop_header
    %s11 = sphi 0, %s15
    %p12 = scmp.ge.s32.totalorder %s11, 4
    %s18 = sphi 0, %s30
    %s19 = sphi 0, %s26
    %s20 = sphi 0, %s18
    %s21 = sphi 0, %s19
    %s22 = sphi 0, %s20
    %s23 = sphi 0, %s21
    %s35 = sphi 0, %s37
    %s38 = sphi 0, %s35
    %s39 = sphi 0, %s38
    %s55 = sphi 0, %s39
    %s59 = sphi 0, %s59
    %s61 = sphi 0, %s59
    %s62 = sphi 0, %s61
    %s76 = sphi 0, %s62
    %s84 = sphi 0, %s86
    %s87 = sphi 0, %s84
    %s88 = sphi 0, %s87
    %s104 = sphi 0, %s88
    %s110 = sphi 0, %s112
    %s113 = sphi 0, %s110
    %s114 = sphi 0, %s113
    %s130 = sphi 0, %s114
    %s136 = sphi 0, %s138
    %s139 = sphi 0, %s136
    %s140 = sphi 0, %s139
    %s156 = sphi 0, %s140
  $region4: #{sdf_forward.7} parent=0 // loop_header_branch
    %14 = sbr.rel (%p12) target = $region8
  $region5: #{sdf_forward.7} parent=0 // loop_body
    %s16 = ssub.s32 %s11, 1
    %s17 = ssub.s32 %s11, 2
    %s24 = sadd.s32 1, %s19
    %p25 = scmp.ge.s32.totalorder %s24, 1
    %s26 = scalar_select %p25, 0, %s24
    %s27 = sadd.s32 1, %s18
    %s28 = scalar_select %p25, %s27, %s18
    %p29 = scmp.ge.s32.totalorder %s28, 2
    %s30 = scalar_select %p29, 0, %s28
    %s31 = sadd.s32 %s18, %s19
    %s32 = sadd.s32 %s30, %s26
    %s33 = ssub.s32 %s31, %s32
    %p34 = scmp.eq.s32.totalorder %s33, 0
    %s36 = sadd.s32 %s35, 1
    %s37 = scalar_select %p34, %s35, %s36
    %p40 = pneg %p34
    %p41 = scmp.eq.s32.totalorder %s11, 1
    %p42 = por %p40, %p41
    %p43 = scmp.ne.s32.totalorder %s35, %s38
    %p44 = scmp.eq.s32.totalorder %s11, 0
    %p45 = por %p43, %p44
    %p46 = scmp.ne.s32.totalorder %s35, %s38
    %p47 = scmp.eq.s32.totalorder %s16, 1
    %p48 = por %p46, %p47
    %p49 = scmp.ne.s32.totalorder %s38, %s39
    %p50 = scmp.eq.s32.totalorder %s16, 0
    %p51 = por %p49, %p50
    %p52 = scmp.ne.s32.totalorder %s38, %s39
    %p53 = scmp.eq.s32.totalorder %s17, 1
    %p54 = por %p52, %p53
    %p56 = scmp.ne.s32.totalorder %s39, %s55
    %p57 = scmp.eq.s32.totalorder %s17, 0
    %p58 = por %p56, %p57
    %s60 = sadd.s32 %s59, 1
    %p63 = scmp.eq.s32.totalorder %s11, 1
    %p64 = scmp.ne.s32.totalorder %s59, %s61
    %p65 = scmp.eq.s32.totalorder %s11, 0
    %p66 = por %p64, %p65
    %p67 = scmp.ne.s32.totalorder %s59, %s61
    %p68 = scmp.eq.s32.totalorder %s16, 1
    %p69 = por %p67, %p68
    %p70 = scmp.ne.s32.totalorder %s61, %s62
    %p71 = scmp.eq.s32.totalorder %s16, 0
    %p72 = por %p70, %p71
    %p73 = scmp.ne.s32.totalorder %s61, %s62
    %p74 = scmp.eq.s32.totalorder %s17, 1
    %p75 = por %p73, %p74
    %p77 = scmp.ne.s32.totalorder %s62, %s76
    %p78 = scmp.eq.s32.totalorder %s17, 0
    %p79 = por %p77, %p78
    %s80 = sadd.s32 %s18, %s19
    %s81 = sadd.s32 %s30, %s26
    %s82 = ssub.s32 %s80, %s81
    %p83 = scmp.eq.s32.totalorder %s82, 0
    %s85 = sadd.s32 %s84, 1
    %s86 = scalar_select %p83, %s84, %s85
    %p89 = pneg %p83
    %p90 = scmp.eq.s32.totalorder %s11, 1
    %p91 = por %p89, %p90
    %p92 = scmp.ne.s32.totalorder %s84, %s87
    %p93 = scmp.eq.s32.totalorder %s11, 0
    %p94 = por %p92, %p93
    %p95 = scmp.ne.s32.totalorder %s84, %s87
    %p96 = scmp.eq.s32.totalorder %s16, 1
    %p97 = por %p95, %p96
    %p98 = scmp.ne.s32.totalorder %s87, %s88
    %p99 = scmp.eq.s32.totalorder %s16, 0
    %p100 = por %p98, %p99
    %p101 = scmp.ne.s32.totalorder %s87, %s88
    %p102 = scmp.eq.s32.totalorder %s17, 1
    %p103 = por %p101, %p102
    %p105 = scmp.ne.s32.totalorder %s88, %s104
    %p106 = scmp.eq.s32.totalorder %s17, 0
    %p107 = por %p105, %p106
    %s108 = ssub.s32 %s18, %s30
    %p109 = scmp.eq.s32.totalorder %s108, 0
    %s111 = sadd.s32 %s110, 1
    %s112 = scalar_select %p109, %s110, %s111
    %p115 = pneg %p109
    %p116 = scmp.eq.s32.totalorder %s11, 1
    %p117 = por %p115, %p116
    %p118 = scmp.ne.s32.totalorder %s110, %s113
    %p119 = scmp.eq.s32.totalorder %s11, 0
    %p120 = por %p118, %p119
    %p121 = scmp.ne.s32.totalorder %s110, %s113
    %p122 = scmp.eq.s32.totalorder %s16, 1
    %p123 = por %p121, %p122
    %p124 = scmp.ne.s32.totalorder %s113, %s114
    %p125 = scmp.eq.s32.totalorder %s16, 0
    %p126 = por %p124, %p125
    %p127 = scmp.ne.s32.totalorder %s113, %s114
    %p128 = scmp.eq.s32.totalorder %s17, 1
    %p129 = por %p127, %p128
    %p131 = scmp.ne.s32.totalorder %s114, %s130
    %p132 = scmp.eq.s32.totalorder %s17, 0
    %p133 = por %p131, %p132
    %s134 = ssub.s32 %s18, %s30
    %p135 = scmp.eq.s32.totalorder %s134, 0
    %s137 = sadd.s32 %s136, 1
    %s138 = scalar_select %p135, %s136, %s137
    %p141 = pneg %p135
    %p142 = scmp.eq.s32.totalorder %s11, 1
    %p143 = por %p141, %p142
    %p144 = scmp.ne.s32.totalorder %s136, %s139
    %p145 = scmp.eq.s32.totalorder %s11, 0
    %p146 = por %p144, %p145
    %p147 = scmp.ne.s32.totalorder %s136, %s139
    %p148 = scmp.eq.s32.totalorder %s16, 1
    %p149 = por %p147, %p148
    %p150 = scmp.ne.s32.totalorder %s139, %s140
    %p151 = scmp.eq.s32.totalorder %s16, 0
    %p152 = por %p150, %p151
    %p153 = scmp.ne.s32.totalorder %s139, %s140
    %p154 = scmp.eq.s32.totalorder %s17, 1
    %p155 = por %p153, %p154
    %p157 = scmp.ne.s32.totalorder %s140, %s156
    %p158 = scmp.eq.s32.totalorder %s17, 0
    %p159 = por %p157, %p158
    %p160 = scmp.le.s32.totalorder 1, %s11
    %p161 = scmp.lt.s32.totalorder %s11, 3
    %p162 = pnand %p160, %p161
    %p163 = pneg %p162
    // Predicated region
    $region9: #{sdf_forward.7} parent=5 // pred_check
      _
    $region10: #{sdf_forward.7} parent=5 // pred_check_branch
      %165 = sbr.rel (%p162) target = $region12
    $region11: #{sdf_forward.7} parent=5 // pred_region
      %s166 = ssub.s32 %s11, 1
      // Predicated region
      $region13: #{sdf_forward.7} parent=11 // pred_check
        %p167 = pneg %p72
      $region14: #{sdf_forward.7} parent=11 // pred_check_branch
        %169 = sbr.rel (%p167) target = $region16
      $region15: #{sdf_forward.7} parent=11 // pred_region
        _
      $region16: #{sdf_forward.7} parent=11 // pred_fallthru
        _
    $region12: #{sdf_forward.7} parent=5 // pred_fallthru
      _
    %p170 = scmp.lt.s32.totalorder %s11, 2
    // Predicated region
    $region17: #{sdf_forward.7} parent=5 // pred_check
      %p171 = pneg %p170
    $region18: #{sdf_forward.7} parent=5 // pred_check_branch
      %173 = sbr.rel (%p171) target = $region20
    $region19: #{sdf_forward.7} parent=5 // pred_region
      // Predicated region
      $region21: #{sdf_forward.7} parent=19 // pred_check
        %p174 = pneg %p45
      $region22: #{sdf_forward.7} parent=19 // pred_check_branch
        %176 = sbr.rel (%p174) target = $region24
      $region23: #{sdf_forward.7} parent=19 // pred_region
        %s177 = sadd.s32 %s18, %s19
        %s178 = smul.u32 32, %s177
        %p179 = scmp.lt.s32.totalorder %s178, 63
        %s180 = scalar_select %p179, %s178, 63
        %s181 = smul.addr %s180, 8
        %s182 = scalar_lea.vmem %s0, %s181
        %s183 = sadd.s32 %s18, %s19
        %s184 = smul.u32 32, %s183
      $region24: #{sdf_forward.7} parent=19 // pred_fallthru
        _
    $region20: #{sdf_forward.7} parent=5 // pred_fallthru
      _
    %p185 = scmp.le.s32.totalorder 1, %s11
    %p186 = scmp.lt.s32.totalorder %s11, 3
    %p187 = pnand %p185, %p186
    %p188 = pneg %p187
    // Predicated region
    $region25: #{sdf_forward.7} parent=5 // pred_check
      _
    $region26: #{sdf_forward.7} parent=5 // pred_check_branch
      %190 = sbr.rel (%p187) target = $region28
    $region27: #{sdf_forward.7} parent=5 // pred_region
      %s191 = ssub.s32 %s11, 1
      %s192 = sadd.s32 %s20, %s21
      %s193 = smul.u32 32, %s192
      %p194 = scmp.lt.s32.totalorder %s193, 63
      %s195 = scalar_select %p194, %s193, 63
      %s196 = smul.addr %s195, 8
      %s197 = scalar_lea.vmem %s0, %s196
      %p198 = pneg %p51
      %p199 = pneg %p48
      %p200 = pneg %p72
      %p201 = pneg %p69
      %p202 = pneg %p100
      %p203 = pneg %p97
      %s204 = sadd.s32 %s20, %s21
      %s205 = smul.u32 32, %s204
      %p206 = scmp.lt.s32.totalorder %s205, 63
      %s207 = scalar_select %p206, %s205, 63
      %s208 = smul.addr %s207, 4
      %s209 = scalar_lea.vmem %s2, %s208
      %p210 = pneg %p126
      %p211 = pneg %p123
      %p212 = scmp.lt.s32.totalorder %s20, 1
      %s213 = scalar_select %p212, %s20, 1
      %s214 = scalar_lea.vmem %s3, %s213
      %p215 = pneg %p152
      %p216 = pneg %p149
      %p217 = scmp.lt.s32.totalorder %s20, 1
      %s218 = scalar_select %p217, %s20, 1
      %s219 = scalar_lea.vmem %s4, %s218
      %s220 = sadd.s32 %s20, %s21
      %s221 = smul.u32 32, %s220
      %p222 = scmp.lt.s32.totalorder %s221, 63
      %s223 = scalar_select %p222, %s221, 63
      %s224 = smul.addr %s223, 8
      %s225 = scalar_lea.vmem %s0, %s224
      %s226 = sadd.s32 %s20, %s21
      %s227 = smul.u32 32, %s226
      %s228 = sadd.s32 %s20, %s21
      %s229 = smul.u32 32, %s228
      %p230 = scmp.lt.s32.totalorder %s229, 63
      %s231 = scalar_select %p230, %s229, 63
      %s232 = smul.addr %s231, 4
      %s233 = scalar_lea.vmem %s2, %s232
      %s234 = sadd.s32 %s20, %s21
      %s235 = smul.u32 32, %s234
      %p236 = scmp.lt.s32.totalorder %s20, 1
      %s237 = scalar_select %p236, %s20, 1
      %s238 = scalar_lea.vmem %s3, %s237
      %p239 = scmp.lt.s32.totalorder %s20, 1
      %s240 = scalar_select %p239, %s20, 1
      %s241 = scalar_lea.vmem %s4, %s240
      %p243 = scmp.eq.s32.totalorder %s21, 0
      // Predicated region
      $region29: #{sdf_forward.7} parent=27 // pred_check
        %p244 = pneg %p243
      $region30: #{sdf_forward.7} parent=27 // pred_check_branch
        %246 = sbr.rel (%p244) target = $region32
      $region31: #{sdf_forward.7} parent=27 // pred_region
        %247 = vst [vmem:[%s238] sm:$0x1] 0.0
        %248 = vst [vmem:[%s241] sm:$0x1] 0.0
      $region32: #{sdf_forward.7} parent=27 // pred_fallthru
        _
      %v249 = vld [vmem:[%s225] sm:$0xff]
      %v250 = vld [vmem:[%s225 + $0x8] sm:$0xff]
      %v251 = vld [vmem:[%s225 + $0x10] sm:$0xff]
      %v252 = vld [vmem:[%s225 + $0x18] sm:$0xff]
      %v253 = vld [vmem:[%s225 + $0x20] sm:$0xff]
      %v254 = vld [vmem:[%s225 + $0x28] sm:$0xff]
      %v255 = vld [vmem:[%s225 + $0x30] sm:$0xff]
      %v256 = vld [vmem:[%s225 + $0x38] sm:$0xff]
      %v257 = vld [vmem:[%s225 + $0x40] sm:$0xff]
      %v258 = vld [vmem:[%s225 + $0x48] sm:$0xff]
      %v259 = vld [vmem:[%s225 + $0x50] sm:$0xff]
      %v260 = vld [vmem:[%s225 + $0x58] sm:$0xff]
      %v261 = vld [vmem:[%s225 + $0x60] sm:$0xff]
      %v262 = vld [vmem:[%s225 + $0x68] sm:$0xff]
      %v263 = vld [vmem:[%s225 + $0x70] sm:$0xff]
      %v264 = vld [vmem:[%s225 + $0x78] sm:$0xff]
      %v265 = vld [vmem:[%s225 + $0x80] sm:$0xff]
      %v266 = vld [vmem:[%s225 + $0x88] sm:$0xff]
      %v267 = vld [vmem:[%s225 + $0x90] sm:$0xff]
      %v268 = vld [vmem:[%s225 + $0x98] sm:$0xff]
      %v269 = vld [vmem:[%s225 + $0xa0] sm:$0xff]
      %v270 = vld [vmem:[%s225 + $0xa8] sm:$0xff]
      %v271 = vld [vmem:[%s225 + $0xb0] sm:$0xff]
      %v272 = vld [vmem:[%s225 + $0xb8] sm:$0xff]
      %v273 = vld [vmem:[%s225 + $0xc0] sm:$0xff]
      %v274 = vld [vmem:[%s225 + $0xc8] sm:$0xff]
      %v275 = vld [vmem:[%s225 + $0xd0] sm:$0xff]
      %v276 = vld [vmem:[%s225 + $0xd8] sm:$0xff]
      %v277 = vld [vmem:[%s225 + $0xe0] sm:$0xff]
      %v278 = vld [vmem:[%s225 + $0xe8] sm:$0xff]
      %v279 = vld [vmem:[%s225 + $0xf0] sm:$0xff]
      %v280 = vld [vmem:[%s225 + $0xf8] sm:$0xff]
      %v281 = vpack.c.bf16 %v250, %v249
      %v282 = vpack.c.bf16 %v252, %v251
      %v283 = vpack.c.bf16 %v254, %v253
      %v284 = vpack.c.bf16 %v256, %v255
      %v285 = vpack.c.bf16 %v258, %v257
      %v286 = vpack.c.bf16 %v260, %v259
      %v287 = vpack.c.bf16 %v262, %v261
      %v288 = vpack.c.bf16 %v264, %v263
      %v289 = vpack.c.bf16 %v266, %v265
      %v290 = vpack.c.bf16 %v268, %v267
      %v291 = vpack.c.bf16 %v270, %v269
      %v292 = vpack.c.bf16 %v272, %v271
      %v293 = vpack.c.bf16 %v274, %v273
      %v294 = vpack.c.bf16 %v276, %v275
      %v295 = vpack.c.bf16 %v278, %v277
      %v296 = vpack.c.bf16 %v280, %v279
      %v297 = vld [vmem:[%s1] sm:$0xf]
      %vm298 = vcmask 64512
      %v300 = vsel %vm298, %v281, 0
      %v303 = vsel %vm298, %v282, 0
      %v306 = vsel %vm298, %v283, 0
      %v309 = vsel %vm298, %v284, 0
      %v312 = vsel %vm298, %v285, 0
      %v315 = vsel %vm298, %v286, 0
      %v318 = vsel %vm298, %v287, 0
      %v321 = vsel %vm298, %v288, 0
      %v324 = vsel %vm298, %v289, 0
      %v327 = vsel %vm298, %v290, 0
      %v330 = vsel %vm298, %v291, 0
      %v333 = vsel %vm298, %v292, 0
      %v336 = vsel %vm298, %v293, 0
      %v339 = vsel %vm298, %v294, 0
      %v342 = vsel %vm298, %v295, 0
      %v345 = vsel %vm298, %v296, 0
      %vm347 = vcmask 1043456
      %v349 = vsel %vm347, %v297, 0
      %351 = vmatprep.subr.bf16.mxu0 0
      %352 = vmatpush1.bf16.msra.mxu0 %v349
      %353 = vmatprep.subr.bf16.mxu0 0
      %354 = vmatpush1.bf16.msra.mxu0 0
      %355 = vmatprep.subr.bf16.mxu0 0
      %356 = vmatpush1.bf16.msra.mxu0 0
      %357 = vmatprep.subr.bf16.mxu0 0
      %358 = vmatpush1.bf16.msra.mxu0 0
      %359 = vmatprep.subr.bf16.mxu0 0
      %360 = vmatpush1.bf16.msra.mxu0 0
      %361 = vmatprep.subr.bf16.mxu0 0
      %362 = vmatpush1.bf16.msra.mxu0 0
      %363 = vmatprep.subr.bf16.mxu0 0
      %364 = vmatpush1.bf16.msra.mxu0 0
      %365 = vmatprep.subr.bf16.mxu0 0
      %366 = vmatpush1.bf16.msra.mxu0 0
      %367 = vmatprep.subr.bf16.mxu0 0
      %368 = vmatpush1.bf16.msra.mxu0 0
      %369 = vmatprep.subr.bf16.mxu0 0
      %370 = vmatpush1.bf16.msra.mxu0 0
      %371 = vmatprep.subr.bf16.mxu0 0
      %372 = vmatpush1.bf16.msra.mxu0 0
      %373 = vmatprep.subr.bf16.mxu0 0
      %374 = vmatpush1.bf16.msra.mxu0 0
      %375 = vmatprep.subr.bf16.mxu0 0
      %376 = vmatpush1.bf16.msra.mxu0 0
      %377 = vmatprep.subr.bf16.mxu0 0
      %378 = vmatpush1.bf16.msra.mxu0 0
      %379 = vmatprep.subr.bf16.mxu0 0
      %380 = vmatpush1.bf16.msra.mxu0 0
      %381 = vmatprep.subr.bf16.mxu0 0
      %382 = vmatpush1.bf16.msra.mxu0 0
      %383 = vmatprep.mubr.bf16.mxu0 0
      %384 = vmatmul.mubr.bf16.gmra.mrb[0].mxu0 %v300
      %v385 = vpop.f32.mrb[0].mxu0
      %v386 = vadd.f32 0.0, %v385
      %v387 = vpop.f32.mrb[0].mxu0
      %v388 = vpop.f32.mrb[0].mxu0
      %v389 = vadd.f32 0.0, %v388
      %v390 = vpop.f32.mrb[0].mxu0
      %391 = vmatprep.mubr.bf16.mxu0 0
      %392 = vmatmul.mubr.bf16.gmra.mrb[0].mxu0 %v303
      %v393 = vpop.f32.mrb[0].mxu0
      %v394 = vadd.f32 0.0, %v393
      %v395 = vpop.f32.mrb[0].mxu0
      %v396 = vpop.f32.mrb[0].mxu0
      %v397 = vadd.f32 0.0, %v396
      %v398 = vpop.f32.mrb[0].mxu0
      %399 = vmatprep.mubr.bf16.mxu0 0
      %400 = vmatmul.mubr.bf16.gmra.mrb[0].mxu0 %v306
      %v401 = vpop.f32.mrb[0].mxu0
      %v402 = vadd.f32 0.0, %v401
      %v403 = vpop.f32.mrb[0].mxu0
      %v404 = vpop.f32.mrb[0].mxu0
      %v405 = vadd.f32 0.0, %v404
      %v406 = vpop.f32.mrb[0].mxu0
      %407 = vmatprep.mubr.bf16.mxu0 0
      %408 = vmatmul.mubr.bf16.gmra.mrb[0].mxu0 %v309
      %v409 = vpop.f32.mrb[0].mxu0
      %v410 = vadd.f32 0.0, %v409
      %v411 = vpop.f32.mrb[0].mxu0
      %v412 = vpop.f32.mrb[0].mxu0
      %v413 = vadd.f32 0.0, %v412
      %v414 = vpop.f32.mrb[0].mxu0
      %415 = vmatprep.mubr.bf16.mxu0 0
      %416 = vmatmul.mubr.bf16.gmra.mrb[0].mxu0 %v312
      %v417 = vpop.f32.mrb[0].mxu0
      %v418 = vadd.f32 0.0, %v417
      %v419 = vpop.f32.mrb[0].mxu0
      %v420 = vpop.f32.mrb[0].mxu0
      %v421 = vadd.f32 0.0, %v420
      %v422 = vpop.f32.mrb[0].mxu0
      %423 = vmatprep.mubr.bf16.mxu0 0
      %424 = vmatmul.mubr.bf16.gmra.mrb[0].mxu0 %v315
      %v425 = vpop.f32.mrb[0].mxu0
      %v426 = vadd.f32 0.0, %v425
      %v427 = vpop.f32.mrb[0].mxu0
      %v428 = vpop.f32.mrb[0].mxu0
      %v429 = vadd.f32 0.0, %v428
      %v430 = vpop.f32.mrb[0].mxu0
      %431 = vmatprep.mubr.bf16.mxu0 0
      %432 = vmatmul.mubr.bf16.gmra.mrb[0].mxu0 %v318
      %v433 = vpop.f32.mrb[0].mxu0
      %v434 = vadd.f32 0.0, %v433
      %v435 = vpop.f32.mrb[0].mxu0
      %v436 = vpop.f32.mrb[0].mxu0
      %v437 = vadd.f32 0.0, %v436
      %v438 = vpop.f32.mrb[0].mxu0
      %439 = vmatprep.mubr.bf16.mxu0 0
      %440 = vmatmul.mubr.bf16.gmra.mrb[0].mxu0 %v321
      %v441 = vpop.f32.mrb[0].mxu0
      %v442 = vadd.f32 0.0, %v441
      %v443 = vpop.f32.mrb[0].mxu0
      %v444 = vpop.f32.mrb[0].mxu0
      %v445 = vadd.f32 0.0, %v444
      %v446 = vpop.f32.mrb[0].mxu0
      %447 = vmatprep.mubr.bf16.mxu0 0
      %448 = vmatmul.mubr.bf16.gmra.mrb[0].mxu0 %v324
      %v449 = vpop.f32.mrb[0].mxu0
      %v450 = vadd.f32 0.0, %v449
      %v451 = vpop.f32.mrb[0].mxu0
      %v452 = vpop.f32.mrb[0].mxu0
      %v453 = vadd.f32 0.0, %v452
      %v454 = vpop.f32.mrb[0].mxu0
      %455 = vmatprep.mubr.bf16.mxu0 0
      %456 = vmatmul.mubr.bf16.gmra.mrb[0].mxu0 %v327
      %v457 = vpop.f32.mrb[0].mxu0
      %v458 = vadd.f32 0.0, %v457
      %v459 = vpop.f32.mrb[0].mxu0
      %v460 = vpop.f32.mrb[0].mxu0
      %v461 = vadd.f32 0.0, %v460
      %v462 = vpop.f32.mrb[0].mxu0
      %463 = vmatprep.mubr.bf16.mxu0 0
      %464 = vmatmul.mubr.bf16.gmra.mrb[0].mxu0 %v330
      %v465 = vpop.f32.mrb[0].mxu0
      %v466 = vadd.f32 0.0, %v465
      %v467 = vpop.f32.mrb[0].mxu0
      %v468 = vpop.f32.mrb[0].mxu0
      %v469 = vadd.f32 0.0, %v468
      %v470 = vpop.f32.mrb[0].mxu0
      %471 = vmatprep.mubr.bf16.mxu0 0
      %472 = vmatmul.mubr.bf16.gmra.mrb[0].mxu0 %v333
      %v473 = vpop.f32.mrb[0].mxu0
      %v474 = vadd.f32 0.0, %v473
      %v475 = vpop.f32.mrb[0].mxu0
      %v476 = vpop.f32.mrb[0].mxu0
      %v477 = vadd.f32 0.0, %v476
      %v478 = vpop.f32.mrb[0].mxu0
      %479 = vmatprep.mubr.bf16.mxu0 0
      %480 = vmatmul.mubr.bf16.gmra.mrb[0].mxu0 %v336
      %v481 = vpop.f32.mrb[0].mxu0
      %v482 = vadd.f32 0.0, %v481
      %v483 = vpop.f32.mrb[0].mxu0
      %v484 = vpop.f32.mrb[0].mxu0
      %v485 = vadd.f32 0.0, %v484
      %v486 = vpop.f32.mrb[0].mxu0
      %487 = vmatprep.mubr.bf16.mxu0 0
      %488 = vmatmul.mubr.bf16.gmra.mrb[0].mxu0 %v339
      %v489 = vpop.f32.mrb[0].mxu0
      %v490 = vadd.f32 0.0, %v489
      %v491 = vpop.f32.mrb[0].mxu0
      %v492 = vpop.f32.mrb[0].mxu0
      %v493 = vadd.f32 0.0, %v492
      %v494 = vpop.f32.mrb[0].mxu0
      %495 = vmatprep.mubr.bf16.mxu0 0
      %496 = vmatmul.mubr.bf16.gmra.mrb[0].mxu0 %v342
      %v497 = vpop.f32.mrb[0].mxu0
      %v498 = vadd.f32 0.0, %v497
      %v499 = vpop.f32.mrb[0].mxu0
      %v500 = vpop.f32.mrb[0].mxu0
      %v501 = vadd.f32 0.0, %v500
      %v502 = vpop.f32.mrb[0].mxu0
      %503 = vmatprep.mubr.bf16.mxu0 0
      %504 = vmatmul.mubr.bf16.gmra.mrb[0].mxu0 %v345
      %v505 = vpop.f32.mrb[0].mxu0
      %v506 = vadd.f32 0.0, %v505
      %v507 = vpop.f32.mrb[0].mxu0
      %v508 = vpop.f32.mrb[0].mxu0
      %v509 = vadd.f32 0.0, %v508
      %v510 = vpop.f32.mrb[0].mxu0
      %511 = vdwg.mxu0
      %s512 = sadd.s32 %s20, %s21
      %s513 = smul.u32 %s512, 256
      %s514 = sadd.s32 %s513, 256
      %p515 = scmp.le.s32.totalorder %s514, 400
      // Predicated region
      $region33: #{sdf_forward.7} parent=27 // pred_check
        %p516 = pneg %p515
      $region34: #{sdf_forward.7} parent=27 // pred_check_branch
        %518 = sbr.rel (%p516) target = $region36
      $region35: #{sdf_forward.7} parent=27 // pred_region
        %v519 = vld [vmem:[%s238] sm:$0x1]
        %v520 = vadd.f32 %v386, %v389
        %v521 = vadd.f32 %v520, %v394
        %v522 = vadd.f32 %v521, %v397
        %v523 = vadd.f32 %v522, %v402
        %v524 = vadd.f32 %v523, %v405
        %v525 = vadd.f32 %v524, %v410
        %v526 = vadd.f32 %v525, %v413
        %v527 = vadd.f32 %v526, %v418
        %v528 = vadd.f32 %v527, %v421
        %v529 = vadd.f32 %v528, %v426
        %v530 = vadd.f32 %v529, %v429
        %v531 = vadd.f32 %v530, %v434
        %v532 = vadd.f32 %v531, %v437
        %v533 = vadd.f32 %v532, %v442
        %v534 = vadd.f32 %v533, %v445
        %v535 = vadd.f32 %v534, %v450
        %v536 = vadd.f32 %v535, %v453
        %v537 = vadd.f32 %v536, %v458
        %v538 = vadd.f32 %v537, %v461
        %v539 = vadd.f32 %v538, %v466
        %v540 = vadd.f32 %v539, %v469
        %v541 = vadd.f32 %v540, %v474
        %v542 = vadd.f32 %v541, %v477
        %v543 = vadd.f32 %v542, %v482
        %v544 = vadd.f32 %v543, %v485
        %v545 = vadd.f32 %v544, %v490
        %v546 = vadd.f32 %v545, %v493
        %v547 = vadd.f32 %v546, %v498
        %v548 = vadd.f32 %v547, %v501
        %v549 = vadd.f32 %v548, %v506
        %v550 = vadd.f32 %v549, %v509
        %v551 = vrot.slane %v550, 4
        %v552 = vadd.f32 %v550, %v551
        %v553 = vrot.slane %v552, 2
        %v554 = vadd.f32 %v552, %v553
        %v555 = vrot.slane %v554, 1
        %v556 = vadd.f32 %v554, %v555
        %v557 = vadd.f32 %v519, %v556
        %558 = vst [vmem:[%s238] sm:$0x1] %v557
        %v559 = vld [vmem:[%s241] sm:$0x1]
        %v560 = vmul.f32 %v386, %v386
        %v561 = vmul.f32 %v389, %v389
        %v562 = vmul.f32 %v394, %v394
        %v563 = vmul.f32 %v397, %v397
        %v564 = vmul.f32 %v402, %v402
        %v565 = vmul.f32 %v405, %v405
        %v566 = vmul.f32 %v410, %v410
        %v567 = vmul.f32 %v413, %v413
        %v568 = vmul.f32 %v418, %v418
        %v569 = vmul.f32 %v421, %v421
        %v570 = vmul.f32 %v426, %v426
        %v571 = vmul.f32 %v429, %v429
        %v572 = vmul.f32 %v434, %v434
        %v573 = vmul.f32 %v437, %v437
        %v574 = vmul.f32 %v442, %v442
        %v575 = vmul.f32 %v445, %v445
        %v576 = vmul.f32 %v450, %v450
        %v577 = vmul.f32 %v453, %v453
        %v578 = vmul.f32 %v458, %v458
        %v579 = vmul.f32 %v461, %v461
        %v580 = vmul.f32 %v466, %v466
        %v581 = vmul.f32 %v469, %v469
        %v582 = vmul.f32 %v474, %v474
        %v583 = vmul.f32 %v477, %v477
        %v584 = vmul.f32 %v482, %v482
        %v585 = vmul.f32 %v485, %v485
        %v586 = vmul.f32 %v490, %v490
        %v587 = vmul.f32 %v493, %v493
        %v588 = vmul.f32 %v498, %v498
        %v589 = vmul.f32 %v501, %v501
        %v590 = vmul.f32 %v506, %v506
        %v591 = vmul.f32 %v509, %v509
        %v592 = vadd.f32 %v560, %v561
        %v593 = vadd.f32 %v592, %v562
        %v594 = vadd.f32 %v593, %v563
        %v595 = vadd.f32 %v594, %v564
        %v596 = vadd.f32 %v595, %v565
        %v597 = vadd.f32 %v596, %v566
        %v598 = vadd.f32 %v597, %v567
        %v599 = vadd.f32 %v598, %v568
        %v600 = vadd.f32 %v599, %v569
        %v601 = vadd.f32 %v600, %v570
        %v602 = vadd.f32 %v601, %v571
        %v603 = vadd.f32 %v602, %v572
        %v604 = vadd.f32 %v603, %v573
        %v605 = vadd.f32 %v604, %v574
        %v606 = vadd.f32 %v605, %v575
        %v607 = vadd.f32 %v606, %v576
        %v608 = vadd.f32 %v607, %v577
        %v609 = vadd.f32 %v608, %v578
        %v610 = vadd.f32 %v609, %v579
        %v611 = vadd.f32 %v610, %v580
        %v612 = vadd.f32 %v611, %v581
        %v613 = vadd.f32 %v612, %v582
        %v614 = vadd.f32 %v613, %v583
        %v615 = vadd.f32 %v614, %v584
        %v616 = vadd.f32 %v615, %v585
        %v617 = vadd.f32 %v616, %v586
        %v618 = vadd.f32 %v617, %v587
        %v619 = vadd.f32 %v618, %v588
        %v620 = vadd.f32 %v619, %v589
        %v621 = vadd.f32 %v620, %v590
        %v622 = vadd.f32 %v621, %v591
        %v623 = vrot.slane %v622, 4
        %v624 = vadd.f32 %v622, %v623
        %v625 = vrot.slane %v624, 2
        %v626 = vadd.f32 %v624, %v625
        %v627 = vrot.slane %v626, 1
        %v628 = vadd.f32 %v626, %v627
        %v629 = vadd.f32 %v559, %v628
        %630 = vst [vmem:[%s241] sm:$0x1] %v629
      $region36: #{sdf_forward.7} parent=27 // pred_fallthru
        _
      %p631 = scmp.gt.s32.totalorder %s514, 400
      // Predicated region
      $region37: #{sdf_forward.7} parent=27 // pred_check
        %p632 = pneg %p631
      $region38: #{sdf_forward.7} parent=27 // pred_check_branch
        %634 = sbr.rel (%p632) target = $region40
      $region39: #{sdf_forward.7} parent=27 // pred_region
        %v635 = vlaneseq
        %v636 = vshrl.u32 %v635, 7
        %v637 = vadd.s32 %v636, 8
        %v638 = vadd.s32 %v636, 16
        %v639 = vadd.s32 %v636, 24
        %v640 = vadd.s32 %v636, 32
        %v641 = vadd.s32 %v636, 40
        %v642 = vadd.s32 %v636, 48
        %v643 = vadd.s32 %v636, 56
        %v644 = vadd.s32 %v636, 64
        %v645 = vadd.s32 %v636, 72
        %v646 = vadd.s32 %v636, 80
        %v647 = vadd.s32 %v636, 88
        %v648 = vadd.s32 %v636, 96
        %v649 = vadd.s32 %v636, 104
        %v650 = vadd.s32 %v636, 112
        %v651 = vadd.s32 %v636, 120
        %v652 = vadd.s32 %v636, 128
        %v653 = vadd.s32 %v636, 136
        %v654 = vadd.s32 %v636, 144
        %v655 = vadd.s32 %v636, 152
        %v656 = vadd.s32 %v636, 160
        %v657 = vadd.s32 %v636, 168
        %v658 = vadd.s32 %v636, 176
        %v659 = vadd.s32 %v636, 184
        %v660 = vadd.s32 %v636, 192
        %v661 = vadd.s32 %v636, 200
        %v662 = vadd.s32 %v636, 208
        %v663 = vadd.s32 %v636, 216
        %v664 = vadd.s32 %v636, 224
        %v665 = vadd.s32 %v636, 232
        %v666 = vadd.s32 %v636, 240
        %v667 = vadd.s32 %v636, 248
        %v668 = vstv %s513
        %v669 = vadd.s32 %v668, %v636
        %v670 = vadd.s32 %v668, %v637
        %v671 = vadd.s32 %v668, %v638
        %v672 = vadd.s32 %v668, %v639
        %v673 = vadd.s32 %v668, %v640
        %v674 = vadd.s32 %v668, %v641
        %v675 = vadd.s32 %v668, %v642
        %v676 = vadd.s32 %v668, %v643
        %v677 = vadd.s32 %v668, %v644
        %v678 = vadd.s32 %v668, %v645
        %v679 = vadd.s32 %v668, %v646
        %v680 = vadd.s32 %v668, %v647
        %v681 = vadd.s32 %v668, %v648
        %v682 = vadd.s32 %v668, %v649
        %v683 = vadd.s32 %v668, %v650
        %v684 = vadd.s32 %v668, %v651
        %v685 = vadd.s32 %v668, %v652
        %v686 = vadd.s32 %v668, %v653
        %v687 = vadd.s32 %v668, %v654
        %v688 = vadd.s32 %v668, %v655
        %v689 = vadd.s32 %v668, %v656
        %v690 = vadd.s32 %v668, %v657
        %v691 = vadd.s32 %v668, %v658
        %v692 = vadd.s32 %v668, %v659
        %v693 = vadd.s32 %v668, %v660
        %v694 = vadd.s32 %v668, %v661
        %v695 = vadd.s32 %v668, %v662
        %v696 = vadd.s32 %v668, %v663
        %v697 = vadd.s32 %v668, %v664
        %v698 = vadd.s32 %v668, %v665
        %v699 = vadd.s32 %v668, %v666
        %v700 = vadd.s32 %v668, %v667
        %vm701 = vcmp.lt.s32.totalorder %v669, 400
        %vm702 = vcmp.lt.s32.totalorder %v670, 400
        %vm703 = vcmp.lt.s32.totalorder %v671, 400
        %vm704 = vcmp.lt.s32.totalorder %v672, 400
        %vm705 = vcmp.lt.s32.totalorder %v673, 400
        %vm706 = vcmp.lt.s32.totalorder %v674, 400
        %vm707 = vcmp.lt.s32.totalorder %v675, 400
        %vm708 = vcmp.lt.s32.totalorder %v676, 400
        %vm709 = vcmp.lt.s32.totalorder %v677, 400
        %vm710 = vcmp.lt.s32.totalorder %v678, 400
        %vm711 = vcmp.lt.s32.totalorder %v679, 400
        %vm712 = vcmp.lt.s32.totalorder %v680, 400
        %vm713 = vcmp.lt.s32.totalorder %v681, 400
        %vm714 = vcmp.lt.s32.totalorder %v682, 400
        %vm715 = vcmp.lt.s32.totalorder %v683, 400
        %vm716 = vcmp.lt.s32.totalorder %v684, 400
        %vm717 = vcmp.lt.s32.totalorder %v685, 400
        %vm718 = vcmp.lt.s32.totalorder %v686, 400
        %vm719 = vcmp.lt.s32.totalorder %v687, 400
        %vm720 = vcmp.lt.s32.totalorder %v688, 400
        %vm721 = vcmp.lt.s32.totalorder %v689, 400
        %vm722 = vcmp.lt.s32.totalorder %v690, 400
        %vm723 = vcmp.lt.s32.totalorder %v691, 400
        %vm724 = vcmp.lt.s32.totalorder %v692, 400
        %vm725 = vcmp.lt.s32.totalorder %v693, 400
        %vm726 = vcmp.lt.s32.totalorder %v694, 400
        %vm727 = vcmp.lt.s32.totalorder %v695, 400
        %vm728 = vcmp.lt.s32.totalorder %v696, 400
        %vm729 = vcmp.lt.s32.totalorder %v697, 400
        %vm730 = vcmp.lt.s32.totalorder %v698, 400
        %vm731 = vcmp.lt.s32.totalorder %v699, 400
        %vm732 = vcmp.lt.s32.totalorder %v700, 400
        %v733 = vsel %vm701, %v386, 0.0
        %v734 = vsel %vm702, %v389, 0.0
        %v735 = vsel %vm703, %v394, 0.0
        %v736 = vsel %vm704, %v397, 0.0
        %v737 = vsel %vm705, %v402, 0.0
        %v738 = vsel %vm706, %v405, 0.0
        %v739 = vsel %vm707, %v410, 0.0
        %v740 = vsel %vm708, %v413, 0.0
        %v741 = vsel %vm709, %v418, 0.0
        %v742 = vsel %vm710, %v421, 0.0
        %v743 = vsel %vm711, %v426, 0.0
        %v744 = vsel %vm712, %v429, 0.0
        %v745 = vsel %vm713, %v434, 0.0
        %v746 = vsel %vm714, %v437, 0.0
        %v747 = vsel %vm715, %v442, 0.0
        %v748 = vsel %vm716, %v445, 0.0
        %v749 = vsel %vm717, %v450, 0.0
        %v750 = vsel %vm718, %v453, 0.0
        %v751 = vsel %vm719, %v458, 0.0
        %v752 = vsel %vm720, %v461, 0.0
        %v753 = vsel %vm721, %v466, 0.0
        %v754 = vsel %vm722, %v469, 0.0
        %v755 = vsel %vm723, %v474, 0.0
        %v756 = vsel %vm724, %v477, 0.0
        %v757 = vsel %vm725, %v482, 0.0
        %v758 = vsel %vm726, %v485, 0.0
        %v759 = vsel %vm727, %v490, 0.0
        %v760 = vsel %vm728, %v493, 0.0
        %v761 = vsel %vm729, %v498, 0.0
        %v762 = vsel %vm730, %v501, 0.0
        %v763 = vsel %vm731, %v506, 0.0
        %v764 = vsel %vm732, %v509, 0.0
        %v765 = vld [vmem:[%s238] sm:$0x1]
        %v766 = vadd.f32 %v733, %v734
        %v767 = vadd.f32 %v766, %v735
        %v768 = vadd.f32 %v767, %v736
        %v769 = vadd.f32 %v768, %v737
        %v770 = vadd.f32 %v769, %v738
        %v771 = vadd.f32 %v770, %v739
        %v772 = vadd.f32 %v771, %v740
        %v773 = vadd.f32 %v772, %v741
        %v774 = vadd.f32 %v773, %v742
        %v775 = vadd.f32 %v774, %v743
        %v776 = vadd.f32 %v775, %v744
        %v777 = vadd.f32 %v776, %v745
        %v778 = vadd.f32 %v777, %v746
        %v779 = vadd.f32 %v778, %v747
        %v780 = vadd.f32 %v779, %v748
        %v781 = vadd.f32 %v780, %v749
        %v782 = vadd.f32 %v781, %v750
        %v783 = vadd.f32 %v782, %v751
        %v784 = vadd.f32 %v783, %v752
        %v785 = vadd.f32 %v784, %v753
        %v786 = vadd.f32 %v785, %v754
        %v787 = vadd.f32 %v786, %v755
        %v788 = vadd.f32 %v787, %v756
        %v789 = vadd.f32 %v788, %v757
        %v790 = vadd.f32 %v789, %v758
        %v791 = vadd.f32 %v790, %v759
        %v792 = vadd.f32 %v791, %v760
        %v793 = vadd.f32 %v792, %v761
        %v794 = vadd.f32 %v793, %v762
        %v795 = vadd.f32 %v794, %v763
        %v796 = vadd.f32 %v795, %v764
        %v797 = vrot.slane %v796, 4
        %v798 = vadd.f32 %v796, %v797
        %v799 = vrot.slane %v798, 2
        %v800 = vadd.f32 %v798, %v799
        %v801 = vrot.slane %v800, 1
        %v802 = vadd.f32 %v800, %v801
        %v803 = vadd.f32 %v765, %v802
        %804 = vst [vmem:[%s238] sm:$0x1] %v803
        %v805 = vld [vmem:[%s241] sm:$0x1]
        %v806 = vmul.f32 %v733, %v733
        %v807 = vmul.f32 %v734, %v734
        %v808 = vmul.f32 %v735, %v735
        %v809 = vmul.f32 %v736, %v736
        %v810 = vmul.f32 %v737, %v737
        %v811 = vmul.f32 %v738, %v738
        %v812 = vmul.f32 %v739, %v739
        %v813 = vmul.f32 %v740, %v740
        %v814 = vmul.f32 %v741, %v741
        %v815 = vmul.f32 %v742, %v742
        %v816 = vmul.f32 %v743, %v743
        %v817 = vmul.f32 %v744, %v744
        %v818 = vmul.f32 %v745, %v745
        %v819 = vmul.f32 %v746, %v746
        %v820 = vmul.f32 %v747, %v747
        %v821 = vmul.f32 %v748, %v748
        %v822 = vmul.f32 %v749, %v749
        %v823 = vmul.f32 %v750, %v750
        %v824 = vmul.f32 %v751, %v751
        %v825 = vmul.f32 %v752, %v752
        %v826 = vmul.f32 %v753, %v753
        %v827 = vmul.f32 %v754, %v754
        %v828 = vmul.f32 %v755, %v755
        %v829 = vmul.f32 %v756, %v756
        %v830 = vmul.f32 %v757, %v757
        %v831 = vmul.f32 %v758, %v758
        %v832 = vmul.f32 %v759, %v759
        %v833 = vmul.f32 %v760, %v760
        %v834 = vmul.f32 %v761, %v761
        %v835 = vmul.f32 %v762, %v762
        %v836 = vmul.f32 %v763, %v763
        %v837 = vmul.f32 %v764, %v764
        %v838 = vadd.f32 %v806, %v807
        %v839 = vadd.f32 %v838, %v808
        %v840 = vadd.f32 %v839, %v809
        %v841 = vadd.f32 %v840, %v810
        %v842 = vadd.f32 %v841, %v811
        %v843 = vadd.f32 %v842, %v812
        %v844 = vadd.f32 %v843, %v813
        %v845 = vadd.f32 %v844, %v814
        %v846 = vadd.f32 %v845, %v815
        %v847 = vadd.f32 %v846, %v816
        %v848 = vadd.f32 %v847, %v817
        %v849 = vadd.f32 %v848, %v818
        %v850 = vadd.f32 %v849, %v819
        %v851 = vadd.f32 %v850, %v820
        %v852 = vadd.f32 %v851, %v821
        %v853 = vadd.f32 %v852, %v822
        %v854 = vadd.f32 %v853, %v823
        %v855 = vadd.f32 %v854, %v824
        %v856 = vadd.f32 %v855, %v825
        %v857 = vadd.f32 %v856, %v826
        %v858 = vadd.f32 %v857, %v827
        %v859 = vadd.f32 %v858, %v828
        %v860 = vadd.f32 %v859, %v829
        %v861 = vadd.f32 %v860, %v830
        %v862 = vadd.f32 %v861, %v831
        %v863 = vadd.f32 %v862, %v832
        %v864 = vadd.f32 %v863, %v833
        %v865 = vadd.f32 %v864, %v834
        %v866 = vadd.f32 %v865, %v835
        %v867 = vadd.f32 %v866, %v836
        %v868 = vadd.f32 %v867, %v837
        %v869 = vrot.slane %v868, 4
        %v870 = vadd.f32 %v868, %v869
        %v871 = vrot.slane %v870, 2
        %v872 = vadd.f32 %v870, %v871
        %v873 = vrot.slane %v872, 1
        %v874 = vadd.f32 %v872, %v873
        %v875 = vadd.f32 %v805, %v874
        %876 = vst [vmem:[%s241] sm:$0x1] %v875
      $region40: #{sdf_forward.7} parent=27 // pred_fallthru
        _
      %v877 = vpack.c.bf16 %v389, %v386
      %v878 = vpack.c.bf16 %v397, %v394
      %v879 = vpack.c.bf16 %v405, %v402
      %v880 = vpack.c.bf16 %v413, %v410
      %v881 = vpack.c.bf16 %v421, %v418
      %v882 = vpack.c.bf16 %v429, %v426
      %v883 = vpack.c.bf16 %v437, %v434
      %v884 = vpack.c.bf16 %v445, %v442
      %v885 = vpack.c.bf16 %v453, %v450
      %v886 = vpack.c.bf16 %v461, %v458
      %v887 = vpack.c.bf16 %v469, %v466
      %v888 = vpack.c.bf16 %v477, %v474
      %v889 = vpack.c.bf16 %v485, %v482
      %v890 = vpack.c.bf16 %v493, %v490
      %v891 = vpack.c.bf16 %v501, %v498
      %v892 = vpack.c.bf16 %v509, %v506
      %v909 = vunpack.c.l.b16 %v877
      %v910 = vunpack.c.h.b16 %v877
      %v911 = vunpack.c.l.b16 %v878
      %v912 = vunpack.c.h.b16 %v878
      %v913 = vunpack.c.l.b16 %v879
      %v914 = vunpack.c.h.b16 %v879
      %v915 = vunpack.c.l.b16 %v880
      %v916 = vunpack.c.h.b16 %v880
      %v917 = vunpack.c.l.b16 %v881
      %v918 = vunpack.c.h.b16 %v881
      %v919 = vunpack.c.l.b16 %v882
      %v920 = vunpack.c.h.b16 %v882
      %v921 = vunpack.c.l.b16 %v883
      %v922 = vunpack.c.h.b16 %v883
      %v923 = vunpack.c.l.b16 %v884
      %v924 = vunpack.c.h.b16 %v884
      %v925 = vunpack.c.l.b16 %v885
      %v926 = vunpack.c.h.b16 %v885
      %v927 = vunpack.c.l.b16 %v886
      %v928 = vunpack.c.h.b16 %v886
      %v929 = vunpack.c.l.b16 %v887
      %v930 = vunpack.c.h.b16 %v887
      %v931 = vunpack.c.l.b16 %v888
      %v932 = vunpack.c.h.b16 %v888
      %v933 = vunpack.c.l.b16 %v889
      %v934 = vunpack.c.h.b16 %v889
      %v935 = vunpack.c.l.b16 %v890
      %v936 = vunpack.c.h.b16 %v890
      %v937 = vunpack.c.l.b16 %v891
      %v938 = vunpack.c.h.b16 %v891
      %v939 = vunpack.c.l.b16 %v892
      %v940 = vunpack.c.h.b16 %v892
      %v941 = vpack.c.b16 %v909, %v909
      %v942 = vpack.c.b16 %v910, %v910
      %v943 = vpack.c.b16 %v911, %v911
      %v944 = vpack.c.b16 %v912, %v912
      %v945 = vpack.c.b16 %v913, %v913
      %v946 = vpack.c.b16 %v914, %v914
      %v947 = vpack.c.b16 %v915, %v915
      %v948 = vpack.c.b16 %v916, %v916
      %v949 = vpack.c.b16 %v917, %v917
      %v950 = vpack.c.b16 %v918, %v918
      %v951 = vpack.c.b16 %v919, %v919
      %v952 = vpack.c.b16 %v920, %v920
      %v953 = vpack.c.b16 %v921, %v921
      %v954 = vpack.c.b16 %v922, %v922
      %v955 = vpack.c.b16 %v923, %v923
      %v956 = vpack.c.b16 %v924, %v924
      %v957 = vpack.c.b16 %v925, %v925
      %v958 = vpack.c.b16 %v926, %v926
      %v959 = vpack.c.b16 %v927, %v927
      %v960 = vpack.c.b16 %v928, %v928
      %v961 = vpack.c.b16 %v929, %v929
      %v962 = vpack.c.b16 %v930, %v930
      %v963 = vpack.c.b16 %v931, %v931
      %v964 = vpack.c.b16 %v932, %v932
      %v965 = vpack.c.b16 %v933, %v933
      %v966 = vpack.c.b16 %v934, %v934
      %v967 = vpack.c.b16 %v935, %v935
      %v968 = vpack.c.b16 %v936, %v936
      %v969 = vpack.c.b16 %v937, %v937
      %v970 = vpack.c.b16 %v938, %v938
      %v971 = vpack.c.b16 %v939, %v939
      %v972 = vpack.c.b16 %v940, %v940
      %1005 = vst [vmem:[%s233] sm:$0xf] %v941
      %1006 = vst [vmem:[%s233 + $0x4] sm:$0xf] %v942
      %1007 = vst [vmem:[%s233 + $0x8] sm:$0xf] %v943
      %1008 = vst [vmem:[%s233 + $0xc] sm:$0xf] %v944
      %1009 = vst [vmem:[%s233 + $0x10] sm:$0xf] %v945
      %1010 = vst [vmem:[%s233 + $0x14] sm:$0xf] %v946
      %1011 = vst [vmem:[%s233 + $0x18] sm:$0xf] %v947
      %1012 = vst [vmem:[%s233 + $0x1c] sm:$0xf] %v948
      %1013 = vst [vmem:[%s233 + $0x20] sm:$0xf] %v949
      %1014 = vst [vmem:[%s233 + $0x24] sm:$0xf] %v950
      %1015 = vst [vmem:[%s233 + $0x28] sm:$0xf] %v951
      %1016 = vst [vmem:[%s233 + $0x2c] sm:$0xf] %v952
      %1017 = vst [vmem:[%s233 + $0x30] sm:$0xf] %v953
      %1018 = vst [vmem:[%s233 + $0x34] sm:$0xf] %v954
      %1019 = vst [vmem:[%s233 + $0x38] sm:$0xf] %v955
      %1020 = vst [vmem:[%s233 + $0x3c] sm:$0xf] %v956
      %1021 = vst [vmem:[%s233 + $0x40] sm:$0xf] %v957
      %1022 = vst [vmem:[%s233 + $0x44] sm:$0xf] %v958
      %1023 = vst [vmem:[%s233 + $0x48] sm:$0xf] %v959
      %1024 = vst [vmem:[%s233 + $0x4c] sm:$0xf] %v960
      %1025 = vst [vmem:[%s233 + $0x50] sm:$0xf] %v961
      %1026 = vst [vmem:[%s233 + $0x54] sm:$0xf] %v962
      %1027 = vst [vmem:[%s233 + $0x58] sm:$0xf] %v963
      %1028 = vst [vmem:[%s233 + $0x5c] sm:$0xf] %v964
      %1029 = vst [vmem:[%s233 + $0x60] sm:$0xf] %v965
      %1030 = vst [vmem:[%s233 + $0x64] sm:$0xf] %v966
      %1031 = vst [vmem:[%s233 + $0x68] sm:$0xf] %v967
      %1032 = vst [vmem:[%s233 + $0x6c] sm:$0xf] %v968
      %1033 = vst [vmem:[%s233 + $0x70] sm:$0xf] %v969
      %1034 = vst [vmem:[%s233 + $0x74] sm:$0xf] %v970
      %1035 = vst [vmem:[%s233 + $0x78] sm:$0xf] %v971
      %1036 = vst [vmem:[%s233 + $0x7c] sm:$0xf] %v972
      %s1037 = sadd.s32 %s20, %s21
      %s1038 = smul.u32 32, %s1037
      %p1039 = scmp.lt.s32.totalorder %s1038, 63
      %s1040 = scalar_select %p1039, %s1038, 63
      %s1041 = smul.addr %s1040, 4
      %s1042 = scalar_lea.vmem %s2, %s1041
      %p1043 = scmp.lt.s32.totalorder %s20, 1
      %s1044 = scalar_select %p1043, %s20, 1
      %s1045 = scalar_lea.vmem %s3, %s1044
      %p1046 = scmp.lt.s32.totalorder %s20, 1
      %s1047 = scalar_select %p1046, %s20, 1
      %s1048 = scalar_lea.vmem %s4, %s1047
      // Predicated region
      $region41: #{sdf_forward.7} parent=27 // pred_check
        %p1049 = pneg %p97
      $region42: #{sdf_forward.7} parent=27 // pred_check_branch
        %1051 = sbr.rel (%p1049) target = $region44
      $region43: #{sdf_forward.7} parent=27 // pred_region
        %s1052 = sadd.s32 %s20, %s21
        %s1053 = smul.u32 32, %s1052
      $region44: #{sdf_forward.7} parent=27 // pred_fallthru
        _
      // Predicated region
      $region45: #{sdf_forward.7} parent=27 // pred_check
        %p1054 = pneg %p123
      $region46: #{sdf_forward.7} parent=27 // pred_check_branch
        %1056 = sbr.rel (%p1054) target = $region48
      $region47: #{sdf_forward.7} parent=27 // pred_region
        _
      $region48: #{sdf_forward.7} parent=27 // pred_fallthru
        _
      // Predicated region
      $region49: #{sdf_forward.7} parent=27 // pred_check
        %p1057 = pneg %p149
      $region50: #{sdf_forward.7} parent=27 // pred_check_branch
        %1059 = sbr.rel (%p1057) target = $region52
      $region51: #{sdf_forward.7} parent=27 // pred_region
        _
      $region52: #{sdf_forward.7} parent=27 // pred_fallthru
        _
    $region28: #{sdf_forward.7} parent=5 // pred_fallthru
      _
    %p1060 = scmp.le.s32.totalorder 2, %s11
    // Predicated region
    $region53: #{sdf_forward.7} parent=5 // pred_check
      %p1061 = pneg %p1060
    $region54: #{sdf_forward.7} parent=5 // pred_check_branch
      %1063 = sbr.rel (%p1061) target = $region56
    $region55: #{sdf_forward.7} parent=5 // pred_region
      %s1064 = ssub.s32 %s11, 2
      // Predicated region
      $region57: #{sdf_forward.7} parent=55 // pred_check
        %p1065 = pneg %p103
      $region58: #{sdf_forward.7} parent=55 // pred_check_branch
        %1067 = sbr.rel (%p1065) target = $region60
      $region59: #{sdf_forward.7} parent=55 // pred_region
        %s1068 = sadd.s32 %s22, %s23
        %s1069 = smul.u32 32, %s1068
        %p1070 = scmp.lt.s32.totalorder %s1069, 63
        %s1071 = scalar_select %p1070, %s1069, 63
        %s1072 = smul.addr %s1071, 4
        %s1073 = scalar_lea.vmem %s2, %s1072
      $region60: #{sdf_forward.7} parent=55 // pred_fallthru
        _
      // Predicated region
      $region61: #{sdf_forward.7} parent=55 // pred_check
        %p1074 = pneg %p129
      $region62: #{sdf_forward.7} parent=55 // pred_check_branch
        %1076 = sbr.rel (%p1074) target = $region64
      $region63: #{sdf_forward.7} parent=55 // pred_region
        %p1077 = scmp.lt.s32.totalorder %s22, 1
        %s1078 = scalar_select %p1077, %s22, 1
        %s1079 = scalar_lea.vmem %s3, %s1078
      $region64: #{sdf_forward.7} parent=55 // pred_fallthru
        _
      // Predicated region
      $region65: #{sdf_forward.7} parent=55 // pred_check
        %p1080 = pneg %p155
      $region66: #{sdf_forward.7} parent=55 // pred_check_branch
        %1082 = sbr.rel (%p1080) target = $region68
      $region67: #{sdf_forward.7} parent=55 // pred_region
        %p1083 = scmp.lt.s32.totalorder %s22, 1
        %s1084 = scalar_select %p1083, %s22, 1
        %s1085 = scalar_lea.vmem %s4, %s1084
      $region68: #{sdf_forward.7} parent=55 // pred_fallthru
        _
    $region56: #{sdf_forward.7} parent=5 // pred_fallthru
      _
  $region6: #{sdf_forward.7} parent=0 // loop_footer
    %s15 = sadd.s32 1, %s11
  $region7: #{sdf_forward.7} parent=0 // loop_footer_branch
    %10 = sbr.rel target = $region3
  $region8: #{sdf_forward.7} parent=0 // loop_exit
    _

// kernel: sdf_forward.10
$region0: #{sdf_forward.10}
  #allocation0 [shape = 'u32[]', space=smem, size = 0x4, offset = 0x4, fixed_abs, tag = 'smem constant byte address 0x4 - core index']
  #allocation1 [shape = 'u32[144,128]{1,0:T(1,128)}', space=vmem, size = 0x12000, scoped, tag = 'internal scratch']
  %s0 = inlined_call_operand.vmem [shape: bf16[512,128], index: 0, kind: input, shape index: {}]
  %s1 = inlined_call_operand.vmem [shape: bf16[128,256], index: 1, kind: input, shape index: {}]
  %s2 = inlined_call_operand.vmem [shape: f32[1,128], index: 2, kind: input, shape index: {}]
  %s3 = inlined_call_operand.vmem [shape: f32[1,128], index: 3, kind: input, shape index: {}]
  %s4 = inlined_call_operand.vmem [shape: bf16[512,256], index: 4, kind: output, shape index: {0}]
  %s5 = inlined_call_operand.vmem [shape: f32[2,1,256], index: 5, kind: output, shape index: {1}]
  %s6 = inlined_call_operand.vmem [shape: f32[2,1,256], index: 6, kind: output, shape index: {2}]
  %7 = xla_tuple %s4, %s5, %s6
  %s8 = sld [smem:[#allocation0]]
  $region77: #{sdf_forward.10} parent=0
    _
  %s10 = ssub.s32 1, %s8
  %s11 = scalar_select 0, %s10, %s8
  loop: start=0, step=1, limit=4
  $region2: #{sdf_forward.10} parent=0 // loop_pre_header
    _
  $region3: #{sdf_forward.10} parent=0 // loop_header
    %s13 = sphi 0, %s17
    %p14 = scmp.ge.s32.totalorder %s13, 4
    %s20 = sphi 0, %s32
    %s21 = sphi 0, %s28
    %s22 = sphi 0, %s20
    %s23 = sphi 0, %s21
    %s24 = sphi 0, %s22
    %s25 = sphi 0, %s23
    %s37 = sphi 0, %s39
    %s40 = sphi 0, %s37
    %s41 = sphi 0, %s40
    %s57 = sphi 0, %s41
    %s61 = sphi 0, %s61
    %s63 = sphi 0, %s61
    %s64 = sphi 0, %s63
    %s78 = sphi 0, %s64
    %s82 = sphi 0, %s82
    %s84 = sphi 0, %s82
    %s85 = sphi 0, %s84
    %s99 = sphi 0, %s85
    %s103 = sphi 0, %s103
    %s105 = sphi 0, %s103
    %s106 = sphi 0, %s105
    %s120 = sphi 0, %s106
    %s128 = sphi 0, %s130
    %s131 = sphi 0, %s128
    %s132 = sphi 0, %s131
    %s148 = sphi 0, %s132
    %s154 = sphi 0, %s156
    %s157 = sphi 0, %s154
    %s158 = sphi 0, %s157
    %s174 = sphi 0, %s158
    %s180 = sphi 0, %s182
    %s183 = sphi 0, %s180
    %s184 = sphi 0, %s183
    %s200 = sphi 0, %s184
  $region4: #{sdf_forward.10} parent=0 // loop_header_branch
    %16 = sbr.rel (%p14) target = $region8
  $region5: #{sdf_forward.10} parent=0 // loop_body
    %s18 = ssub.s32 %s13, 1
    %s19 = ssub.s32 %s13, 2
    %s26 = sadd.s32 1, %s21
    %p27 = scmp.ge.s32.totalorder %s26, 1
    %s28 = scalar_select %p27, 0, %s26
    %s29 = sadd.s32 1, %s20
    %s30 = scalar_select %p27, %s29, %s20
    %p31 = scmp.ge.s32.totalorder %s30, 2
    %s32 = scalar_select %p31, 0, %s30
    %s33 = sadd.s32 %s20, %s21
    %s34 = sadd.s32 %s32, %s28
    %s35 = ssub.s32 %s33, %s34
    %p36 = scmp.eq.s32.totalorder %s35, 0
    %s38 = sadd.s32 %s37, 1
    %s39 = scalar_select %p36, %s37, %s38
    %p42 = pneg %p36
    %p43 = scmp.eq.s32.totalorder %s13, 1
    %p44 = por %p42, %p43
    %p45 = scmp.ne.s32.totalorder %s37, %s40
    %p46 = scmp.eq.s32.totalorder %s13, 0
    %p47 = por %p45, %p46
    %p48 = scmp.ne.s32.totalorder %s37, %s40
    %p49 = scmp.eq.s32.totalorder %s18, 1
    %p50 = por %p48, %p49
    %p51 = scmp.ne.s32.totalorder %s40, %s41
    %p52 = scmp.eq.s32.totalorder %s18, 0
    %p53 = por %p51, %p52
    %p54 = scmp.ne.s32.totalorder %s40, %s41
    %p55 = scmp.eq.s32.totalorder %s19, 1
    %p56 = por %p54, %p55
    %p58 = scmp.ne.s32.totalorder %s41, %s57
    %p59 = scmp.eq.s32.totalorder %s19, 0
    %p60 = por %p58, %p59
    %s62 = sadd.s32 %s61, 1
    %p65 = scmp.eq.s32.totalorder %s13, 1
    %p66 = scmp.ne.s32.totalorder %s61, %s63
    %p67 = scmp.eq.s32.totalorder %s13, 0
    %p68 = por %p66, %p67
    %p69 = scmp.ne.s32.totalorder %s61, %s63
    %p70 = scmp.eq.s32.totalorder %s18, 1
    %p71 = por %p69, %p70
    %p72 = scmp.ne.s32.totalorder %s63, %s64
    %p73 = scmp.eq.s32.totalorder %s18, 0
    %p74 = por %p72, %p73
    %p75 = scmp.ne.s32.totalorder %s63, %s64
    %p76 = scmp.eq.s32.totalorder %s19, 1
    %p77 = por %p75, %p76
    %p79 = scmp.ne.s32.totalorder %s64, %s78
    %p80 = scmp.eq.s32.totalorder %s19, 0
    %p81 = por %p79, %p80
    %s83 = sadd.s32 %s82, 1
    %p86 = scmp.eq.s32.totalorder %s13, 1
    %p87 = scmp.ne.s32.totalorder %s82, %s84
    %p88 = scmp.eq.s32.totalorder %s13, 0
    %p89 = por %p87, %p88
    %p90 = scmp.ne.s32.totalorder %s82, %s84
    %p91 = scmp.eq.s32.totalorder %s18, 1
    %p92 = por %p90, %p91
    %p93 = scmp.ne.s32.totalorder %s84, %s85
    %p94 = scmp.eq.s32.totalorder %s18, 0
    %p95 = por %p93, %p94
    %p96 = scmp.ne.s32.totalorder %s84, %s85
    %p97 = scmp.eq.s32.totalorder %s19, 1
    %p98 = por %p96, %p97
    %p100 = scmp.ne.s32.totalorder %s85, %s99
    %p101 = scmp.eq.s32.totalorder %s19, 0
    %p102 = por %p100, %p101
    %s104 = sadd.s32 %s103, 1
    %p107 = scmp.eq.s32.totalorder %s13, 1
    %p108 = scmp.ne.s32.totalorder %s103, %s105
    %p109 = scmp.eq.s32.totalorder %s13, 0
    %p110 = por %p108, %p109
    %p111 = scmp.ne.s32.totalorder %s103, %s105
    %p112 = scmp.eq.s32.totalorder %s18, 1
    %p113 = por %p111, %p112
    %p114 = scmp.ne.s32.totalorder %s105, %s106
    %p115 = scmp.eq.s32.totalorder %s18, 0
    %p116 = por %p114, %p115
    %p117 = scmp.ne.s32.totalorder %s105, %s106
    %p118 = scmp.eq.s32.totalorder %s19, 1
    %p119 = por %p117, %p118
    %p121 = scmp.ne.s32.totalorder %s106, %s120
    %p122 = scmp.eq.s32.totalorder %s19, 0
    %p123 = por %p121, %p122
    %s124 = sadd.s32 %s20, %s21
    %s125 = sadd.s32 %s32, %s28
    %s126 = ssub.s32 %s124, %s125
    %p127 = scmp.eq.s32.totalorder %s126, 0
    %s129 = sadd.s32 %s128, 1
    %s130 = scalar_select %p127, %s128, %s129
    %p133 = pneg %p127
    %p134 = scmp.eq.s32.totalorder %s13, 1
    %p135 = por %p133, %p134
    %p136 = scmp.ne.s32.totalorder %s128, %s131
    %p137 = scmp.eq.s32.totalorder %s13, 0
    %p138 = por %p136, %p137
    %p139 = scmp.ne.s32.totalorder %s128, %s131
    %p140 = scmp.eq.s32.totalorder %s18, 1
    %p141 = por %p139, %p140
    %p142 = scmp.ne.s32.totalorder %s131, %s132
    %p143 = scmp.eq.s32.totalorder %s18, 0
    %p144 = por %p142, %p143
    %p145 = scmp.ne.s32.totalorder %s131, %s132
    %p146 = scmp.eq.s32.totalorder %s19, 1
    %p147 = por %p145, %p146
    %p149 = scmp.ne.s32.totalorder %s132, %s148
    %p150 = scmp.eq.s32.totalorder %s19, 0
    %p151 = por %p149, %p150
    %s152 = ssub.s32 %s20, %s32
    %p153 = scmp.eq.s32.totalorder %s152, 0
    %s155 = sadd.s32 %s154, 1
    %s156 = scalar_select %p153, %s154, %s155
    %p159 = pneg %p153
    %p160 = scmp.eq.s32.totalorder %s13, 1
    %p161 = por %p159, %p160
    %p162 = scmp.ne.s32.totalorder %s154, %s157
    %p163 = scmp.eq.s32.totalorder %s13, 0
    %p164 = por %p162, %p163
    %p165 = scmp.ne.s32.totalorder %s154, %s157
    %p166 = scmp.eq.s32.totalorder %s18, 1
    %p167 = por %p165, %p166
    %p168 = scmp.ne.s32.totalorder %s157, %s158
    %p169 = scmp.eq.s32.totalorder %s18, 0
    %p170 = por %p168, %p169
    %p171 = scmp.ne.s32.totalorder %s157, %s158
    %p172 = scmp.eq.s32.totalorder %s19, 1
    %p173 = por %p171, %p172
    %p175 = scmp.ne.s32.totalorder %s158, %s174
    %p176 = scmp.eq.s32.totalorder %s19, 0
    %p177 = por %p175, %p176
    %s178 = ssub.s32 %s20, %s32
    %p179 = scmp.eq.s32.totalorder %s178, 0
    %s181 = sadd.s32 %s180, 1
    %s182 = scalar_select %p179, %s180, %s181
    %p185 = pneg %p179
    %p186 = scmp.eq.s32.totalorder %s13, 1
    %p187 = por %p185, %p186
    %p188 = scmp.ne.s32.totalorder %s180, %s183
    %p189 = scmp.eq.s32.totalorder %s13, 0
    %p190 = por %p188, %p189
    %p191 = scmp.ne.s32.totalorder %s180, %s183
    %p192 = scmp.eq.s32.totalorder %s18, 1
    %p193 = por %p191, %p192
    %p194 = scmp.ne.s32.totalorder %s183, %s184
    %p195 = scmp.eq.s32.totalorder %s18, 0
    %p196 = por %p194, %p195
    %p197 = scmp.ne.s32.totalorder %s183, %s184
    %p198 = scmp.eq.s32.totalorder %s19, 1
    %p199 = por %p197, %p198
    %p201 = scmp.ne.s32.totalorder %s184, %s200
    %p202 = scmp.eq.s32.totalorder %s19, 0
    %p203 = por %p201, %p202
    %p204 = scmp.le.s32.totalorder 1, %s13
    %p205 = scmp.lt.s32.totalorder %s13, 3
    %p206 = pnand %p204, %p205
    %p207 = pneg %p206
    // Predicated region
    $region9: #{sdf_forward.10} parent=5 // pred_check
      _
    $region10: #{sdf_forward.10} parent=5 // pred_check_branch
      %209 = sbr.rel (%p206) target = $region12
    $region11: #{sdf_forward.10} parent=5 // pred_region
      %s210 = ssub.s32 %s13, 1
      // Predicated region
      $region13: #{sdf_forward.10} parent=11 // pred_check
        %p211 = pneg %p74
      $region14: #{sdf_forward.10} parent=11 // pred_check_branch
        %213 = sbr.rel (%p211) target = $region16
      $region15: #{sdf_forward.10} parent=11 // pred_region
        _
      $region16: #{sdf_forward.10} parent=11 // pred_fallthru
        _
      // Predicated region
      $region17: #{sdf_forward.10} parent=11 // pred_check
        %p214 = pneg %p95
      $region18: #{sdf_forward.10} parent=11 // pred_check_branch
        %216 = sbr.rel (%p214) target = $region20
      $region19: #{sdf_forward.10} parent=11 // pred_region
        _
      $region20: #{sdf_forward.10} parent=11 // pred_fallthru
        _
      // Predicated region
      $region21: #{sdf_forward.10} parent=11 // pred_check
        %p217 = pneg %p116
      $region22: #{sdf_forward.10} parent=11 // pred_check_branch
        %219 = sbr.rel (%p217) target = $region24
      $region23: #{sdf_forward.10} parent=11 // pred_region
        _
      $region24: #{sdf_forward.10} parent=11 // pred_fallthru
        _
    $region12: #{sdf_forward.10} parent=5 // pred_fallthru
      _
    %p220 = scmp.lt.s32.totalorder %s13, 2
    // Predicated region
    $region25: #{sdf_forward.10} parent=5 // pred_check
      %p221 = pneg %p220
    $region26: #{sdf_forward.10} parent=5 // pred_check_branch
      %223 = sbr.rel (%p221) target = $region28
    $region27: #{sdf_forward.10} parent=5 // pred_region
      // Predicated region
      $region29: #{sdf_forward.10} parent=27 // pred_check
        %p224 = pneg %p47
      $region30: #{sdf_forward.10} parent=27 // pred_check_branch
        %226 = sbr.rel (%p224) target = $region32
      $region31: #{sdf_forward.10} parent=27 // pred_region
        %s227 = sadd.s32 %s20, %s21
        %s228 = smul.u32 32, %s227
        %p229 = scmp.lt.s32.totalorder %s228, 63
        %s230 = scalar_select %p229, %s228, 63
        %s231 = smul.addr %s230, 4
        %s232 = scalar_lea.vmem %s0, %s231
        %s233 = sadd.s32 %s20, %s21
        %s234 = smul.u32 32, %s233
      $region32: #{sdf_forward.10} parent=27 // pred_fallthru
        _
    $region28: #{sdf_forward.10} parent=5 // pred_fallthru
      _
    %p235 = scmp.le.s32.totalorder 1, %s13
    %p236 = scmp.lt.s32.totalorder %s13, 3
    %p237 = pnand %p235, %p236
    %p238 = pneg %p237
    // Predicated region
    $region33: #{sdf_forward.10} parent=5 // pred_check
      _
    $region34: #{sdf_forward.10} parent=5 // pred_check_branch
      %240 = sbr.rel (%p237) target = $region36
    $region35: #{sdf_forward.10} parent=5 // pred_region
      %s241 = ssub.s32 %s13, 1
      %s242 = sadd.s32 %s22, %s23
      %s243 = smul.u32 32, %s242
      %p244 = scmp.lt.s32.totalorder %s243, 63
      %s245 = scalar_select %p244, %s243, 63
      %s246 = smul.addr %s245, 4
      %s247 = scalar_lea.vmem %s0, %s246
      %p248 = pneg %p53
      %p249 = pneg %p50
      %p250 = pneg %p74
      %p251 = pneg %p71
      %p252 = pneg %p95
      %p253 = pneg %p92
      %p254 = pneg %p116
      %p255 = pneg %p113
      %p256 = pneg %p144
      %p257 = pneg %p141
      %s258 = sadd.s32 %s22, %s23
      %s259 = smul.u32 32, %s258
      %p260 = scmp.lt.s32.totalorder %s259, 63
      %s261 = scalar_select %p260, %s259, 63
      %s262 = smul.addr %s261, 2
      %s263 = smul.addr %s262, 4
      %s264 = scalar_lea.vmem %s4, %s263
      %p265 = pneg %p170
      %p266 = pneg %p167
      %p267 = scmp.lt.s32.totalorder %s22, 1
      %s268 = scalar_select %p267, %s22, 1
      %s269 = smul.addr %s268, 2
      %s270 = scalar_lea.vmem %s5, %s269
      %p271 = pneg %p196
      %p272 = pneg %p193
      %p273 = scmp.lt.s32.totalorder %s22, 1
      %s274 = scalar_select %p273, %s22, 1
      %s275 = smul.addr %s274, 2
      %s276 = scalar_lea.vmem %s6, %s275
      %s277 = sadd.s32 %s22, %s23
      %s278 = smul.u32 32, %s277
      %p279 = scmp.lt.s32.totalorder %s278, 63
      %s280 = scalar_select %p279, %s278, 63
      %s281 = smul.addr %s280, 4
      %s282 = scalar_lea.vmem %s0, %s281
      %s283 = sadd.s32 %s22, %s23
      %s284 = smul.u32 32, %s283
      %s285 = sadd.s32 %s22, %s23
      %s286 = smul.u32 32, %s285
      %p287 = scmp.lt.s32.totalorder %s286, 63
      %s288 = scalar_select %p287, %s286, 63
      %s289 = smul.addr %s288, 2
      %s290 = smul.addr %s289, 4
      %s291 = scalar_lea.vmem %s4, %s290
      %s292 = sadd.s32 %s22, %s23
      %s293 = smul.u32 32, %s292
      %p294 = scmp.lt.s32.totalorder %s22, 1
      %s295 = scalar_select %p294, %s22, 1
      %s296 = smul.addr %s295, 2
      %s297 = scalar_lea.vmem %s5, %s296
      %p298 = scmp.lt.s32.totalorder %s22, 1
      %s299 = scalar_select %p298, %s22, 1
      %s300 = smul.addr %s299, 2
      %s301 = scalar_lea.vmem %s6, %s300
      %p303 = scmp.eq.s32.totalorder %s23, 0
      // Predicated region
      $region37: #{sdf_forward.10} parent=35 // pred_check
        %p304 = pneg %p303
      $region38: #{sdf_forward.10} parent=35 // pred_check_branch
        %306 = sbr.rel (%p304) target = $region40
      $region39: #{sdf_forward.10} parent=35 // pred_region
        %v307 = vlaneseq
        %vm308 = vcmp.ge.s32.totalorder %v307, 0
        %vm309 = vcmp.lt.s32.totalorder %v307, 256
        %vm310 = vmand %vm308, %vm309
        %311 = vst.msk [vmem:[%s297] sm:$0x3] %vm310, 0.0
        %312 = vst.msk [vmem:[%s301] sm:$0x3] %vm310, 0.0
      $region40: #{sdf_forward.10} parent=35 // pred_fallthru
        _
      %v313 = vld [vmem:[%s282] sm:$0xf]
      %v314 = vld [vmem:[%s282 + $0x4] sm:$0xf]
      %v315 = vld [vmem:[%s282 + $0x8] sm:$0xf]
      %v316 = vld [vmem:[%s282 + $0xc] sm:$0xf]
      %v317 = vld [vmem:[%s282 + $0x10] sm:$0xf]
      %v318 = vld [vmem:[%s282 + $0x14] sm:$0xf]
      %v319 = vld [vmem:[%s282 + $0x18] sm:$0xf]
      %v320 = vld [vmem:[%s282 + $0x1c] sm:$0xf]
      %v321 = vld [vmem:[%s282 + $0x20] sm:$0xf]
      %v322 = vld [vmem:[%s282 + $0x24] sm:$0xf]
      %v323 = vld [vmem:[%s282 + $0x28] sm:$0xf]
      %v324 = vld [vmem:[%s282 + $0x2c] sm:$0xf]
      %v325 = vld [vmem:[%s282 + $0x30] sm:$0xf]
      %v326 = vld [vmem:[%s282 + $0x34] sm:$0xf]
      %v327 = vld [vmem:[%s282 + $0x38] sm:$0xf]
      %v328 = vld [vmem:[%s282 + $0x3c] sm:$0xf]
      %v329 = vld [vmem:[%s282 + $0x40] sm:$0xf]
      %v330 = vld [vmem:[%s282 + $0x44] sm:$0xf]
      %v331 = vld [vmem:[%s282 + $0x48] sm:$0xf]
      %v332 = vld [vmem:[%s282 + $0x4c] sm:$0xf]
      %v333 = vld [vmem:[%s282 + $0x50] sm:$0xf]
      %v334 = vld [vmem:[%s282 + $0x54] sm:$0xf]
      %v335 = vld [vmem:[%s282 + $0x58] sm:$0xf]
      %v336 = vld [vmem:[%s282 + $0x5c] sm:$0xf]
      %v337 = vld [vmem:[%s282 + $0x60] sm:$0xf]
      %v338 = vld [vmem:[%s282 + $0x64] sm:$0xf]
      %v339 = vld [vmem:[%s282 + $0x68] sm:$0xf]
      %v340 = vld [vmem:[%s282 + $0x6c] sm:$0xf]
      %v341 = vld [vmem:[%s282 + $0x70] sm:$0xf]
      %v342 = vld [vmem:[%s282 + $0x74] sm:$0xf]
      %v343 = vld [vmem:[%s282 + $0x78] sm:$0xf]
      %v344 = vld [vmem:[%s282 + $0x7c] sm:$0xf]
      %v345 = vunpack.c.l.bf16 %v313
      %v346 = vunpack.c.l.bf16 %v314
      %v347 = vunpack.c.l.bf16 %v315
      %v348 = vunpack.c.l.bf16 %v316
      %v349 = vunpack.c.l.bf16 %v317
      %v350 = vunpack.c.l.bf16 %v318
      %v351 = vunpack.c.l.bf16 %v319
      %v352 = vunpack.c.l.bf16 %v320
      %v353 = vunpack.c.l.bf16 %v321
      %v354 = vunpack.c.l.bf16 %v322
      %v355 = vunpack.c.l.bf16 %v323
      %v356 = vunpack.c.l.bf16 %v324
      %v357 = vunpack.c.l.bf16 %v325
      %v358 = vunpack.c.l.bf16 %v326
      %v359 = vunpack.c.l.bf16 %v327
      %v360 = vunpack.c.l.bf16 %v328
      %v361 = vunpack.c.l.bf16 %v329
      %v362 = vunpack.c.l.bf16 %v330
      %v363 = vunpack.c.l.bf16 %v331
      %v364 = vunpack.c.l.bf16 %v332
      %v365 = vunpack.c.l.bf16 %v333
      %v366 = vunpack.c.l.bf16 %v334
      %v367 = vunpack.c.l.bf16 %v335
      %v368 = vunpack.c.l.bf16 %v336
      %v369 = vunpack.c.l.bf16 %v337
      %v370 = vunpack.c.l.bf16 %v338
      %v371 = vunpack.c.l.bf16 %v339
      %v372 = vunpack.c.l.bf16 %v340
      %v373 = vunpack.c.l.bf16 %v341
      %v374 = vunpack.c.l.bf16 %v342
      %v375 = vunpack.c.l.bf16 %v343
      %v376 = vunpack.c.l.bf16 %v344
      %v377 = vld [vmem:[%s2] sm:$0x1]
      %v379 = vlaneseq
      %v380 = vshrl.u32 %v379, 7
      %v381 = vsub.s32 0, %v380
      %v382 = vrot.slane %v377, %v381
      %v384 = vmul.f32 %v345, %v382
      %v385 = vmul.f32 %v346, %v382
      %v386 = vmul.f32 %v347, %v382
      %v387 = vmul.f32 %v348, %v382
      %v388 = vmul.f32 %v349, %v382
      %v389 = vmul.f32 %v350, %v382
      %v390 = vmul.f32 %v351, %v382
      %v391 = vmul.f32 %v352, %v382
      %v392 = vmul.f32 %v353, %v382
      %v393 = vmul.f32 %v354, %v382
      %v394 = vmul.f32 %v355, %v382
      %v395 = vmul.f32 %v356, %v382
      %v396 = vmul.f32 %v357, %v382
      %v397 = vmul.f32 %v358, %v382
      %v398 = vmul.f32 %v359, %v382
      %v399 = vmul.f32 %v360, %v382
      %v400 = vmul.f32 %v361, %v382
      %v401 = vmul.f32 %v362, %v382
      %v402 = vmul.f32 %v363, %v382
      %v403 = vmul.f32 %v364, %v382
      %v404 = vmul.f32 %v365, %v382
      %v405 = vmul.f32 %v366, %v382
      %v406 = vmul.f32 %v367, %v382
      %v407 = vmul.f32 %v368, %v382
      %v408 = vmul.f32 %v369, %v382
      %v409 = vmul.f32 %v370, %v382
      %v410 = vmul.f32 %v371, %v382
      %v411 = vmul.f32 %v372, %v382
      %v412 = vmul.f32 %v373, %v382
      %v413 = vmul.f32 %v374, %v382
      %v414 = vmul.f32 %v375, %v382
      %v415 = vmul.f32 %v376, %v382
      %v416 = vld [vmem:[%s3] sm:$0x1]
      %v418 = vlaneseq
      %v419 = vshrl.u32 %v418, 7
      %v420 = vsub.s32 0, %v419
      %v421 = vrot.slane %v416, %v420
      %v423 = vadd.f32 %v384, %v421
      %v424 = vadd.f32 %v385, %v421
      %v425 = vadd.f32 %v386, %v421
      %v426 = vadd.f32 %v387, %v421
      %v427 = vadd.f32 %v388, %v421
      %v428 = vadd.f32 %v389, %v421
      %v429 = vadd.f32 %v390, %v421
      %v430 = vadd.f32 %v391, %v421
      %v431 = vadd.f32 %v392, %v421
      %v432 = vadd.f32 %v393, %v421
      %v433 = vadd.f32 %v394, %v421
      %v434 = vadd.f32 %v395, %v421
      %v435 = vadd.f32 %v396, %v421
      %v436 = vadd.f32 %v397, %v421
      %v437 = vadd.f32 %v398, %v421
      %v438 = vadd.f32 %v399, %v421
      %v439 = vadd.f32 %v400, %v421
      %v440 = vadd.f32 %v401, %v421
      %v441 = vadd.f32 %v402, %v421
      %v442 = vadd.f32 %v403, %v421
      %v443 = vadd.f32 %v404, %v421
      %v444 = vadd.f32 %v405, %v421
      %v445 = vadd.f32 %v406, %v421
      %v446 = vadd.f32 %v407, %v421
      %v447 = vadd.f32 %v408, %v421
      %v448 = vadd.f32 %v409, %v421
      %v449 = vadd.f32 %v410, %v421
      %v450 = vadd.f32 %v411, %v421
      %v451 = vadd.f32 %v412, %v421
      %v452 = vadd.f32 %v413, %v421
      %v453 = vadd.f32 %v414, %v421
      %v454 = vadd.f32 %v415, %v421
      %v455 = vmax.f32 %v423, 0.0
      %v456 = vmax.f32 %v424, 0.0
      %v457 = vmax.f32 %v425, 0.0
      %v458 = vmax.f32 %v426, 0.0
      %v459 = vmax.f32 %v427, 0.0
      %v460 = vmax.f32 %v428, 0.0
      %v461 = vmax.f32 %v429, 0.0
      %v462 = vmax.f32 %v430, 0.0
      %v463 = vmax.f32 %v431, 0.0
      %v464 = vmax.f32 %v432, 0.0
      %v465 = vmax.f32 %v433, 0.0
      %v466 = vmax.f32 %v434, 0.0
      %v467 = vmax.f32 %v435, 0.0
      %v468 = vmax.f32 %v436, 0.0
      %v469 = vmax.f32 %v437, 0.0
      %v470 = vmax.f32 %v438, 0.0
      %v471 = vmax.f32 %v439, 0.0
      %v472 = vmax.f32 %v440, 0.0
      %v473 = vmax.f32 %v441, 0.0
      %v474 = vmax.f32 %v442, 0.0
      %v475 = vmax.f32 %v443, 0.0
      %v476 = vmax.f32 %v444, 0.0
      %v477 = vmax.f32 %v445, 0.0
      %v478 = vmax.f32 %v446, 0.0
      %v479 = vmax.f32 %v447, 0.0
      %v480 = vmax.f32 %v448, 0.0
      %v481 = vmax.f32 %v449, 0.0
      %v482 = vmax.f32 %v450, 0.0
      %v483 = vmax.f32 %v451, 0.0
      %v484 = vmax.f32 %v452, 0.0
      %v485 = vmax.f32 %v453, 0.0
      %v486 = vmax.f32 %v454, 0.0
      %v487 = vpack.c.bf16 %v456, %v455
      %v488 = vpack.c.bf16 %v458, %v457
      %v489 = vpack.c.bf16 %v460, %v459
      %v490 = vpack.c.bf16 %v462, %v461
      %v491 = vpack.c.bf16 %v464, %v463
      %v492 = vpack.c.bf16 %v466, %v465
      %v493 = vpack.c.bf16 %v468, %v467
      %v494 = vpack.c.bf16 %v470, %v469
      %v495 = vpack.c.bf16 %v472, %v471
      %v496 = vpack.c.bf16 %v474, %v473
      %v497 = vpack.c.bf16 %v476, %v475
      %v498 = vpack.c.bf16 %v478, %v477
      %v499 = vpack.c.bf16 %v480, %v479
      %v500 = vpack.c.bf16 %v482, %v481
      %v501 = vpack.c.bf16 %v484, %v483
      %v502 = vpack.c.bf16 %v486, %v485
      %v503 = vld [vmem:[%s1] sm:$0xff]
      %v504 = vld [vmem:[%s1 + $0x8] sm:$0xff]
      %v505 = vld [vmem:[%s1 + $0x10] sm:$0xff]
      %v506 = vld [vmem:[%s1 + $0x18] sm:$0xff]
      %v507 = vld [vmem:[%s1 + $0x20] sm:$0xff]
      %v508 = vld [vmem:[%s1 + $0x28] sm:$0xff]
      %v509 = vld [vmem:[%s1 + $0x30] sm:$0xff]
      %v510 = vld [vmem:[%s1 + $0x38] sm:$0xff]
      %v511 = vld [vmem:[%s1 + $0x40] sm:$0xff]
      %v512 = vld [vmem:[%s1 + $0x48] sm:$0xff]
      %v513 = vld [vmem:[%s1 + $0x50] sm:$0xff]
      %v514 = vld [vmem:[%s1 + $0x58] sm:$0xff]
      %v515 = vld [vmem:[%s1 + $0x60] sm:$0xff]
      %v516 = vld [vmem:[%s1 + $0x68] sm:$0xff]
      %v517 = vld [vmem:[%s1 + $0x70] sm:$0xff]
      %v518 = vld [vmem:[%s1 + $0x78] sm:$0xff]
      %v535 = vunpack.c.l.b16 %v503
      %v536 = vunpack.c.h.b16 %v503
      %v537 = vunpack.c.l.b16 %v504
      %v538 = vunpack.c.h.b16 %v504
      %v539 = vunpack.c.l.b16 %v505
      %v540 = vunpack.c.h.b16 %v505
      %v541 = vunpack.c.l.b16 %v506
      %v542 = vunpack.c.h.b16 %v506
      %v543 = vunpack.c.l.b16 %v507
      %v544 = vunpack.c.h.b16 %v507
      %v545 = vunpack.c.l.b16 %v508
      %v546 = vunpack.c.h.b16 %v508
      %v547 = vunpack.c.l.b16 %v509
      %v548 = vunpack.c.h.b16 %v509
      %v549 = vunpack.c.l.b16 %v510
      %v550 = vunpack.c.h.b16 %v510
      %v551 = vunpack.c.l.b16 %v511
      %v552 = vunpack.c.h.b16 %v511
      %v553 = vunpack.c.l.b16 %v512
      %v554 = vunpack.c.h.b16 %v512
      %v555 = vunpack.c.l.b16 %v513
      %v556 = vunpack.c.h.b16 %v513
      %v557 = vunpack.c.l.b16 %v514
      %v558 = vunpack.c.h.b16 %v514
      %v559 = vunpack.c.l.b16 %v515
      %v560 = vunpack.c.h.b16 %v515
      %v561 = vunpack.c.l.b16 %v516
      %v562 = vunpack.c.h.b16 %v516
      %v563 = vunpack.c.l.b16 %v517
      %v564 = vunpack.c.h.b16 %v517
      %v565 = vunpack.c.l.b16 %v518
      %v566 = vunpack.c.h.b16 %v518
      %v567 = vpack.c.b16 %v537, %v535
      %v568 = vpack.c.b16 %v538, %v536
      %v569 = vpack.c.b16 %v541, %v539
      %v570 = vpack.c.b16 %v542, %v540
      %v571 = vpack.c.b16 %v545, %v543
      %v572 = vpack.c.b16 %v546, %v544
      %v573 = vpack.c.b16 %v549, %v547
      %v574 = vpack.c.b16 %v550, %v548
      %v575 = vpack.c.b16 %v553, %v551
      %v576 = vpack.c.b16 %v554, %v552
      %v577 = vpack.c.b16 %v557, %v555
      %v578 = vpack.c.b16 %v558, %v556
      %v579 = vpack.c.b16 %v561, %v559
      %v580 = vpack.c.b16 %v562, %v560
      %v581 = vpack.c.b16 %v565, %v563
      %v582 = vpack.c.b16 %v566, %v564
      %599 = vmatprep.subr.bf16.mxu0 %v568
      %600 = vmatpush1.bf16.msra.mxu0 %v567
      %601 = vmatprep.subr.bf16.mxu0 %v570
      %602 = vmatpush1.bf16.msra.mxu0 %v569
      %603 = vmatprep.subr.bf16.mxu0 %v572
      %604 = vmatpush1.bf16.msra.mxu0 %v571
      %605 = vmatprep.subr.bf16.mxu0 %v574
      %606 = vmatpush1.bf16.msra.mxu0 %v573
      %607 = vmatprep.subr.bf16.mxu0 %v576
      %608 = vmatpush1.bf16.msra.mxu0 %v575
      %609 = vmatprep.subr.bf16.mxu0 %v578
      %610 = vmatpush1.bf16.msra.mxu0 %v577
      %611 = vmatprep.subr.bf16.mxu0 %v580
      %612 = vmatpush1.bf16.msra.mxu0 %v579
      %613 = vmatprep.subr.bf16.mxu0 %v582
      %614 = vmatpush1.bf16.msra.mxu0 %v581
      %615 = vmatprep.subr.bf16.mxu0 0
      %616 = vmatpush1.bf16.msra.mxu0 0
      %617 = vmatprep.subr.bf16.mxu0 0
      %618 = vmatpush1.bf16.msra.mxu0 0
      %619 = vmatprep.subr.bf16.mxu0 0
      %620 = vmatpush1.bf16.msra.mxu0 0
      %621 = vmatprep.subr.bf16.mxu0 0
      %622 = vmatpush1.bf16.msra.mxu0 0
      %623 = vmatprep.subr.bf16.mxu0 0
      %624 = vmatpush1.bf16.msra.mxu0 0
      %625 = vmatprep.subr.bf16.mxu0 0
      %626 = vmatpush1.bf16.msra.mxu0 0
      %627 = vmatprep.subr.bf16.mxu0 0
      %628 = vmatpush1.bf16.msra.mxu0 0
      %629 = vmatprep.subr.bf16.mxu0 0
      %630 = vmatpush1.bf16.msra.mxu0 0
      %631 = vmatprep.mubr.bf16.mxu0 0
      %632 = vmatmul.mubr.bf16.gmra.mrb[0].mxu0 %v487
      %v633 = vpop.f32.mrb[0].mxu0
      %v634 = vadd.f32 0.0, %v633
      %v635 = vpop.f32.mrb[0].mxu0
      %v636 = vadd.f32 0.0, %v635
      %v637 = vpop.f32.mrb[0].mxu0
      %v638 = vadd.f32 0.0, %v637
      %v639 = vpop.f32.mrb[0].mxu0
      %v640 = vadd.f32 0.0, %v639
      %641 = vmatprep.mubr.bf16.mxu0 0
      %642 = vmatmul.mubr.bf16.gmra.mrb[0].mxu0 %v488
      %v643 = vpop.f32.mrb[0].mxu0
      %v644 = vadd.f32 0.0, %v643
      %v645 = vpop.f32.mrb[0].mxu0
      %v646 = vadd.f32 0.0, %v645
      %v647 = vpop.f32.mrb[0].mxu0
      %v648 = vadd.f32 0.0, %v647
      %v649 = vpop.f32.mrb[0].mxu0
      %v650 = vadd.f32 0.0, %v649
      %651 = vmatprep.mubr.bf16.mxu0 0
      %652 = vmatmul.mubr.bf16.gmra.mrb[0].mxu0 %v489
      %v653 = vpop.f32.mrb[0].mxu0
      %v654 = vadd.f32 0.0, %v653
      %v655 = vpop.f32.mrb[0].mxu0
      %v656 = vadd.f32 0.0, %v655
      %v657 = vpop.f32.mrb[0].mxu0
      %v658 = vadd.f32 0.0, %v657
      %v659 = vpop.f32.mrb[0].mxu0
      %v660 = vadd.f32 0.0, %v659
      %661 = vmatprep.mubr.bf16.mxu0 0
      %662 = vmatmul.mubr.bf16.gmra.mrb[0].mxu0 %v490
      %v663 = vpop.f32.mrb[0].mxu0
      %v664 = vadd.f32 0.0, %v663
      %v665 = vpop.f32.mrb[0].mxu0
      %v666 = vadd.f32 0.0, %v665
      %v667 = vpop.f32.mrb[0].mxu0
      %v668 = vadd.f32 0.0, %v667
      %v669 = vpop.f32.mrb[0].mxu0
      %v670 = vadd.f32 0.0, %v669
      %671 = vmatprep.mubr.bf16.mxu0 0
      %672 = vmatmul.mubr.bf16.gmra.mrb[0].mxu0 %v491
      %v673 = vpop.f32.mrb[0].mxu0
      %v674 = vadd.f32 0.0, %v673
      %v675 = vpop.f32.mrb[0].mxu0
      %v676 = vadd.f32 0.0, %v675
      %v677 = vpop.f32.mrb[0].mxu0
      %v678 = vadd.f32 0.0, %v677
      %v679 = vpop.f32.mrb[0].mxu0
      %v680 = vadd.f32 0.0, %v679
      %681 = vmatprep.mubr.bf16.mxu0 0
      %682 = vmatmul.mubr.bf16.gmra.mrb[0].mxu0 %v492
      %v683 = vpop.f32.mrb[0].mxu0
      %v684 = vadd.f32 0.0, %v683
      %v685 = vpop.f32.mrb[0].mxu0
      %v686 = vadd.f32 0.0, %v685
      %v687 = vpop.f32.mrb[0].mxu0
      %v688 = vadd.f32 0.0, %v687
      %v689 = vpop.f32.mrb[0].mxu0
      %v690 = vadd.f32 0.0, %v689
      %691 = vmatprep.mubr.bf16.mxu0 0
      %692 = vmatmul.mubr.bf16.gmra.mrb[0].mxu0 %v493
      %v693 = vpop.f32.mrb[0].mxu0
      %v694 = vadd.f32 0.0, %v693
      %v695 = vpop.f32.mrb[0].mxu0
      %v696 = vadd.f32 0.0, %v695
      %v697 = vpop.f32.mrb[0].mxu0
      %v698 = vadd.f32 0.0, %v697
      %v699 = vpop.f32.mrb[0].mxu0
      %v700 = vadd.f32 0.0, %v699
      %701 = vmatprep.mubr.bf16.mxu0 0
      %702 = vmatmul.mubr.bf16.gmra.mrb[0].mxu0 %v494
      %v703 = vpop.f32.mrb[0].mxu0
      %v704 = vadd.f32 0.0, %v703
      %v705 = vpop.f32.mrb[0].mxu0
      %v706 = vadd.f32 0.0, %v705
      %v707 = vpop.f32.mrb[0].mxu0
      %v708 = vadd.f32 0.0, %v707
      %v709 = vpop.f32.mrb[0].mxu0
      %v710 = vadd.f32 0.0, %v709
      %711 = vmatprep.mubr.bf16.mxu0 0
      %712 = vmatmul.mubr.bf16.gmra.mrb[0].mxu0 %v495
      %v713 = vpop.f32.mrb[0].mxu0
      %v714 = vadd.f32 0.0, %v713
      %v715 = vpop.f32.mrb[0].mxu0
      %v716 = vadd.f32 0.0, %v715
      %v717 = vpop.f32.mrb[0].mxu0
      %v718 = vadd.f32 0.0, %v717
      %v719 = vpop.f32.mrb[0].mxu0
      %v720 = vadd.f32 0.0, %v719
      %721 = vmatprep.mubr.bf16.mxu0 0
      %722 = vmatmul.mubr.bf16.gmra.mrb[0].mxu0 %v496
      %v723 = vpop.f32.mrb[0].mxu0
      %v724 = vadd.f32 0.0, %v723
      %v725 = vpop.f32.mrb[0].mxu0
      %v726 = vadd.f32 0.0, %v725
      %v727 = vpop.f32.mrb[0].mxu0
      %v728 = vadd.f32 0.0, %v727
      %v729 = vpop.f32.mrb[0].mxu0
      %v730 = vadd.f32 0.0, %v729
      %731 = vmatprep.mubr.bf16.mxu0 0
      %732 = vmatmul.mubr.bf16.gmra.mrb[0].mxu0 %v497
      %v733 = vpop.f32.mrb[0].mxu0
      %v734 = vadd.f32 0.0, %v733
      %v735 = vpop.f32.mrb[0].mxu0
      %v736 = vadd.f32 0.0, %v735
      %v737 = vpop.f32.mrb[0].mxu0
      %v738 = vadd.f32 0.0, %v737
      %v739 = vpop.f32.mrb[0].mxu0
      %v740 = vadd.f32 0.0, %v739
      %741 = vmatprep.mubr.bf16.mxu0 0
      %742 = vmatmul.mubr.bf16.gmra.mrb[0].mxu0 %v498
      %v743 = vpop.f32.mrb[0].mxu0
      %v744 = vadd.f32 0.0, %v743
      %v745 = vpop.f32.mrb[0].mxu0
      %v746 = vadd.f32 0.0, %v745
      %v747 = vpop.f32.mrb[0].mxu0
      %v748 = vadd.f32 0.0, %v747
      %v749 = vpop.f32.mrb[0].mxu0
      %v750 = vadd.f32 0.0, %v749
      %751 = vmatprep.mubr.bf16.mxu0 0
      %752 = vmatmul.mubr.bf16.gmra.mrb[0].mxu0 %v499
      %v753 = vpop.f32.mrb[0].mxu0
      %v754 = vadd.f32 0.0, %v753
      %v755 = vpop.f32.mrb[0].mxu0
      %v756 = vadd.f32 0.0, %v755
      %v757 = vpop.f32.mrb[0].mxu0
      %v758 = vadd.f32 0.0, %v757
      %v759 = vpop.f32.mrb[0].mxu0
      %v760 = vadd.f32 0.0, %v759
      %761 = vmatprep.mubr.bf16.mxu0 0
      %762 = vmatmul.mubr.bf16.gmra.mrb[0].mxu0 %v500
      %v763 = vpop.f32.mrb[0].mxu0
      %v764 = vadd.f32 0.0, %v763
      %v765 = vpop.f32.mrb[0].mxu0
      %v766 = vadd.f32 0.0, %v765
      %v767 = vpop.f32.mrb[0].mxu0
      %v768 = vadd.f32 0.0, %v767
      %v769 = vpop.f32.mrb[0].mxu0
      %v770 = vadd.f32 0.0, %v769
      %771 = vmatprep.mubr.bf16.mxu0 0
      %772 = vmatmul.mubr.bf16.gmra.mrb[0].mxu0 %v501
      %v773 = vpop.f32.mrb[0].mxu0
      %v774 = vadd.f32 0.0, %v773
      %v775 = vpop.f32.mrb[0].mxu0
      %v776 = vadd.f32 0.0, %v775
      %v777 = vpop.f32.mrb[0].mxu0
      %v778 = vadd.f32 0.0, %v777
      %v779 = vpop.f32.mrb[0].mxu0
      %v780 = vadd.f32 0.0, %v779
      %781 = vmatprep.mubr.bf16.mxu0 0
      %782 = vmatmul.mubr.bf16.gmra.mrb[0].mxu0 %v502
      %v783 = vpop.f32.mrb[0].mxu0
      %v784 = vadd.f32 0.0, %v783
      %v785 = vpop.f32.mrb[0].mxu0
      %v786 = vadd.f32 0.0, %v785
      %v787 = vpop.f32.mrb[0].mxu0
      %v788 = vadd.f32 0.0, %v787
      %v789 = vpop.f32.mrb[0].mxu0
      %v790 = vadd.f32 0.0, %v789
      %791 = vdwg.mxu0
      %s792 = sadd.s32 %s22, %s23
      %s793 = smul.u32 %s792, 256
      %s794 = sadd.s32 %s793, 256
      %p795 = scmp.le.s32.totalorder %s794, 400
      // Predicated region
      $region41: #{sdf_forward.10} parent=35 // pred_check
        %p796 = pneg %p795
      $region42: #{sdf_forward.10} parent=35 // pred_check_branch
        %798 = sbr.rel (%p796) target = $region44
      $region43: #{sdf_forward.10} parent=35 // pred_region
        %v799 = vld [vmem:[%s297] sm:$0x3]
        %v800 = vadd.f32 %v634, %v638
        %v801 = vadd.f32 %v800, %v644
        %v802 = vadd.f32 %v801, %v648
        %v803 = vadd.f32 %v802, %v654
        %v804 = vadd.f32 %v803, %v658
        %v805 = vadd.f32 %v804, %v664
        %v806 = vadd.f32 %v805, %v668
        %v807 = vadd.f32 %v806, %v674
        %v808 = vadd.f32 %v807, %v678
        %v809 = vadd.f32 %v808, %v684
        %v810 = vadd.f32 %v809, %v688
        %v811 = vadd.f32 %v810, %v694
        %v812 = vadd.f32 %v811, %v698
        %v813 = vadd.f32 %v812, %v704
        %v814 = vadd.f32 %v813, %v708
        %v815 = vadd.f32 %v814, %v714
        %v816 = vadd.f32 %v815, %v718
        %v817 = vadd.f32 %v816, %v724
        %v818 = vadd.f32 %v817, %v728
        %v819 = vadd.f32 %v818, %v734
        %v820 = vadd.f32 %v819, %v738
        %v821 = vadd.f32 %v820, %v744
        %v822 = vadd.f32 %v821, %v748
        %v823 = vadd.f32 %v822, %v754
        %v824 = vadd.f32 %v823, %v758
        %v825 = vadd.f32 %v824, %v764
        %v826 = vadd.f32 %v825, %v768
        %v827 = vadd.f32 %v826, %v774
        %v828 = vadd.f32 %v827, %v778
        %v829 = vadd.f32 %v828, %v784
        %v830 = vadd.f32 %v829, %v788
        %v831 = vrot.slane %v830, 4
        %v832 = vadd.f32 %v830, %v831
        %v833 = vrot.slane %v832, 2
        %v834 = vadd.f32 %v832, %v833
        %v835 = vrot.slane %v834, 1
        %v836 = vadd.f32 %v834, %v835
        %v837 = vadd.f32 %v636, %v640
        %v838 = vadd.f32 %v837, %v646
        %v839 = vadd.f32 %v838, %v650
        %v840 = vadd.f32 %v839, %v656
        %v841 = vadd.f32 %v840, %v660
        %v842 = vadd.f32 %v841, %v666
        %v843 = vadd.f32 %v842, %v670
        %v844 = vadd.f32 %v843, %v676
        %v845 = vadd.f32 %v844, %v680
        %v846 = vadd.f32 %v845, %v686
        %v847 = vadd.f32 %v846, %v690
        %v848 = vadd.f32 %v847, %v696
        %v849 = vadd.f32 %v848, %v700
        %v850 = vadd.f32 %v849, %v706
        %v851 = vadd.f32 %v850, %v710
        %v852 = vadd.f32 %v851, %v716
        %v853 = vadd.f32 %v852, %v720
        %v854 = vadd.f32 %v853, %v726
        %v855 = vadd.f32 %v854, %v730
        %v856 = vadd.f32 %v855, %v736
        %v857 = vadd.f32 %v856, %v740
        %v858 = vadd.f32 %v857, %v746
        %v859 = vadd.f32 %v858, %v750
        %v860 = vadd.f32 %v859, %v756
        %v861 = vadd.f32 %v860, %v760
        %v862 = vadd.f32 %v861, %v766
        %v863 = vadd.f32 %v862, %v770
        %v864 = vadd.f32 %v863, %v776
        %v865 = vadd.f32 %v864, %v780
        %v866 = vadd.f32 %v865, %v786
        %v867 = vadd.f32 %v866, %v790
        %v868 = vrot.slane %v867, 4
        %v869 = vadd.f32 %v867, %v868
        %v870 = vrot.slane %v869, 2
        %v871 = vadd.f32 %v869, %v870
        %v872 = vrot.slane %v871, 1
        %v873 = vadd.f32 %v871, %v872
        %v876 = vcombine.low %v836, %v873
        %v878 = vunpack.c.l.s4 1966171168
        %v879 = vunpack.c.0.s8 %v878
        %v880 = vlaneseq
        %v881 = vshrl.u32 %v880, 7
        %v882 = vsub.s32 %v879, %v881
        %v883 = vrot.slane %v876, %v882
        %v885 = vunpack.c.l.s4 1966171168
        %v886 = vunpack.c.0.s8 %v885
        %v887 = vlaneseq
        %v888 = vshrl.u32 %v887, 7
        %v889 = vsub.s32 %v886, %v888
        %v890 = vrot.slane %v883, %v889
        %v892 = vadd.f32 %v799, %v890
        %v893 = vlaneseq
        %vm894 = vcmp.ge.s32.totalorder %v893, 0
        %vm895 = vcmp.lt.s32.totalorder %v893, 256
        %vm896 = vmand %vm894, %vm895
        %897 = vst.msk [vmem:[%s297] sm:$0x3] %vm896, %v892
        %v898 = vld [vmem:[%s301] sm:$0x3]
        %v899 = vmul.f32 %v634, %v634
        %v900 = vmul.f32 %v636, %v636
        %v901 = vmul.f32 %v638, %v638
        %v902 = vmul.f32 %v640, %v640
        %v903 = vmul.f32 %v644, %v644
        %v904 = vmul.f32 %v646, %v646
        %v905 = vmul.f32 %v648, %v648
        %v906 = vmul.f32 %v650, %v650
        %v907 = vmul.f32 %v654, %v654
        %v908 = vmul.f32 %v656, %v656
        %v909 = vmul.f32 %v658, %v658
        %v910 = vmul.f32 %v660, %v660
        %v911 = vmul.f32 %v664, %v664
        %v912 = vmul.f32 %v666, %v666
        %v913 = vmul.f32 %v668, %v668
        %v914 = vmul.f32 %v670, %v670
        %v915 = vmul.f32 %v674, %v674
        %v916 = vmul.f32 %v676, %v676
        %v917 = vmul.f32 %v678, %v678
        %v918 = vmul.f32 %v680, %v680
        %v919 = vmul.f32 %v684, %v684
        %v920 = vmul.f32 %v686, %v686
        %v921 = vmul.f32 %v688, %v688
        %v922 = vmul.f32 %v690, %v690
        %v923 = vmul.f32 %v694, %v694
        %v924 = vmul.f32 %v696, %v696
        %v925 = vmul.f32 %v698, %v698
        %v926 = vmul.f32 %v700, %v700
        %v927 = vmul.f32 %v704, %v704
        %v928 = vmul.f32 %v706, %v706
        %v929 = vmul.f32 %v708, %v708
        %v930 = vmul.f32 %v710, %v710
        %v931 = vmul.f32 %v714, %v714
        %v932 = vmul.f32 %v716, %v716
        %v933 = vmul.f32 %v718, %v718
        %v934 = vmul.f32 %v720, %v720
        %v935 = vmul.f32 %v724, %v724
        %v936 = vmul.f32 %v726, %v726
        %v937 = vmul.f32 %v728, %v728
        %v938 = vmul.f32 %v730, %v730
        %v939 = vmul.f32 %v734, %v734
        %v940 = vmul.f32 %v736, %v736
        %v941 = vmul.f32 %v738, %v738
        %v942 = vmul.f32 %v740, %v740
        %v943 = vmul.f32 %v744, %v744
        %v944 = vmul.f32 %v746, %v746
        %v945 = vmul.f32 %v748, %v748
        %v946 = vmul.f32 %v750, %v750
        %v947 = vmul.f32 %v754, %v754
        %v948 = vmul.f32 %v756, %v756
        %v949 = vmul.f32 %v758, %v758
        %v950 = vmul.f32 %v760, %v760
        %v951 = vmul.f32 %v764, %v764
        %v952 = vmul.f32 %v766, %v766
        %v953 = vmul.f32 %v768, %v768
        %v954 = vmul.f32 %v770, %v770
        %v955 = vmul.f32 %v774, %v774
        %v956 = vmul.f32 %v776, %v776
        %v957 = vmul.f32 %v778, %v778
        %v958 = vmul.f32 %v780, %v780
        %v959 = vmul.f32 %v784, %v784
        %v960 = vmul.f32 %v786, %v786
        %v961 = vmul.f32 %v788, %v788
        %v962 = vmul.f32 %v790, %v790
        %v963 = vadd.f32 %v899, %v901
        %v964 = vadd.f32 %v963, %v903
        %v965 = vadd.f32 %v964, %v905
        %v966 = vadd.f32 %v965, %v907
        %v967 = vadd.f32 %v966, %v909
        %v968 = vadd.f32 %v967, %v911
        %v969 = vadd.f32 %v968, %v913
        %v970 = vadd.f32 %v969, %v915
        %v971 = vadd.f32 %v970, %v917
        %v972 = vadd.f32 %v971, %v919
        %v973 = vadd.f32 %v972, %v921
        %v974 = vadd.f32 %v973, %v923
        %v975 = vadd.f32 %v974, %v925
        %v976 = vadd.f32 %v975, %v927
        %v977 = vadd.f32 %v976, %v929
        %v978 = vadd.f32 %v977, %v931
        %v979 = vadd.f32 %v978, %v933
        %v980 = vadd.f32 %v979, %v935
        %v981 = vadd.f32 %v980, %v937
        %v982 = vadd.f32 %v981, %v939
        %v983 = vadd.f32 %v982, %v941
        %v984 = vadd.f32 %v983, %v943
        %v985 = vadd.f32 %v984, %v945
        %v986 = vadd.f32 %v985, %v947
        %v987 = vadd.f32 %v986, %v949
        %v988 = vadd.f32 %v987, %v951
        %v989 = vadd.f32 %v988, %v953
        %v990 = vadd.f32 %v989, %v955
        %v991 = vadd.f32 %v990, %v957
        %v992 = vadd.f32 %v991, %v959
        %v993 = vadd.f32 %v992, %v961
        %v994 = vrot.slane %v993, 4
        %v995 = vadd.f32 %v993, %v994
        %v996 = vrot.slane %v995, 2
        %v997 = vadd.f32 %v995, %v996
        %v998 = vrot.slane %v997, 1
        %v999 = vadd.f32 %v997, %v998
        %v1000 = vadd.f32 %v900, %v902
        %v1001 = vadd.f32 %v1000, %v904
        %v1002 = vadd.f32 %v1001, %v906
        %v1003 = vadd.f32 %v1002, %v908
        %v1004 = vadd.f32 %v1003, %v910
        %v1005 = vadd.f32 %v1004, %v912
        %v1006 = vadd.f32 %v1005, %v914
        %v1007 = vadd.f32 %v1006, %v916
        %v1008 = vadd.f32 %v1007, %v918
        %v1009 = vadd.f32 %v1008, %v920
        %v1010 = vadd.f32 %v1009, %v922
        %v1011 = vadd.f32 %v1010, %v924
        %v1012 = vadd.f32 %v1011, %v926
        %v1013 = vadd.f32 %v1012, %v928
        %v1014 = vadd.f32 %v1013, %v930
        %v1015 = vadd.f32 %v1014, %v932
        %v1016 = vadd.f32 %v1015, %v934
        %v1017 = vadd.f32 %v1016, %v936
        %v1018 = vadd.f32 %v1017, %v938
        %v1019 = vadd.f32 %v1018, %v940
        %v1020 = vadd.f32 %v1019, %v942
        %v1021 = vadd.f32 %v1020, %v944
        %v1022 = vadd.f32 %v1021, %v946
        %v1023 = vadd.f32 %v1022, %v948
        %v1024 = vadd.f32 %v1023, %v950
        %v1025 = vadd.f32 %v1024, %v952
        %v1026 = vadd.f32 %v1025, %v954
        %v1027 = vadd.f32 %v1026, %v956
        %v1028 = vadd.f32 %v1027, %v958
        %v1029 = vadd.f32 %v1028, %v960
        %v1030 = vadd.f32 %v1029, %v962
        %v1031 = vrot.slane %v1030, 4
        %v1032 = vadd.f32 %v1030, %v1031
        %v1033 = vrot.slane %v1032, 2
        %v1034 = vadd.f32 %v1032, %v1033
        %v1035 = vrot.slane %v1034, 1
        %v1036 = vadd.f32 %v1034, %v1035
        %v1039 = vcombine.low %v999, %v1036
        %v1041 = vunpack.c.l.s4 1966171168
        %v1042 = vunpack.c.0.s8 %v1041
        %v1043 = vlaneseq
        %v1044 = vshrl.u32 %v1043, 7
        %v1045 = vsub.s32 %v1042, %v1044
        %v1046 = vrot.slane %v1039, %v1045
        %v1048 = vunpack.c.l.s4 1966171168
        %v1049 = vunpack.c.0.s8 %v1048
        %v1050 = vlaneseq
        %v1051 = vshrl.u32 %v1050, 7
        %v1052 = vsub.s32 %v1049, %v1051
        %v1053 = vrot.slane %v1046, %v1052
        %v1055 = vadd.f32 %v898, %v1053
        %1056 = vst.msk [vmem:[%s301] sm:$0x3] %vm896, %v1055
      $region44: #{sdf_forward.10} parent=35 // pred_fallthru
        _
      %p1057 = scmp.gt.s32.totalorder %s794, 400
      // Predicated region
      $region45: #{sdf_forward.10} parent=35 // pred_check
        %p1058 = pneg %p1057
      $region46: #{sdf_forward.10} parent=35 // pred_check_branch
        %1060 = sbr.rel (%p1058) target = $region48
      $region47: #{sdf_forward.10} parent=35 // pred_region
        %v1061 = vlaneseq
        %v1062 = vshrl.u32 %v1061, 7
        %v1063 = vadd.s32 %v1062, 8
        %v1064 = vadd.s32 %v1062, 16
        %v1065 = vadd.s32 %v1062, 24
        %v1066 = vadd.s32 %v1062, 32
        %v1067 = vadd.s32 %v1062, 40
        %v1068 = vadd.s32 %v1062, 48
        %v1069 = vadd.s32 %v1062, 56
        %v1070 = vadd.s32 %v1062, 64
        %v1071 = vadd.s32 %v1062, 72
        %v1072 = vadd.s32 %v1062, 80
        %v1073 = vadd.s32 %v1062, 88
        %v1074 = vadd.s32 %v1062, 96
        %v1075 = vadd.s32 %v1062, 104
        %v1076 = vadd.s32 %v1062, 112
        %v1077 = vadd.s32 %v1062, 120
        %v1078 = vadd.s32 %v1062, 128
        %v1079 = vadd.s32 %v1062, 136
        %v1080 = vadd.s32 %v1062, 144
        %v1081 = vadd.s32 %v1062, 152
        %v1082 = vadd.s32 %v1062, 160
        %v1083 = vadd.s32 %v1062, 168
        %v1084 = vadd.s32 %v1062, 176
        %v1085 = vadd.s32 %v1062, 184
        %v1086 = vadd.s32 %v1062, 192
        %v1087 = vadd.s32 %v1062, 200
        %v1088 = vadd.s32 %v1062, 208
        %v1089 = vadd.s32 %v1062, 216
        %v1090 = vadd.s32 %v1062, 224
        %v1091 = vadd.s32 %v1062, 232
        %v1092 = vadd.s32 %v1062, 240
        %v1093 = vadd.s32 %v1062, 248
        %v1094 = vstv %s793
        %v1095 = vadd.s32 %v1094, %v1062
        %v1096 = vadd.s32 %v1094, %v1063
        %v1097 = vadd.s32 %v1094, %v1064
        %v1098 = vadd.s32 %v1094, %v1065
        %v1099 = vadd.s32 %v1094, %v1066
        %v1100 = vadd.s32 %v1094, %v1067
        %v1101 = vadd.s32 %v1094, %v1068
        %v1102 = vadd.s32 %v1094, %v1069
        %v1103 = vadd.s32 %v1094, %v1070
        %v1104 = vadd.s32 %v1094, %v1071
        %v1105 = vadd.s32 %v1094, %v1072
        %v1106 = vadd.s32 %v1094, %v1073
        %v1107 = vadd.s32 %v1094, %v1074
        %v1108 = vadd.s32 %v1094, %v1075
        %v1109 = vadd.s32 %v1094, %v1076
        %v1110 = vadd.s32 %v1094, %v1077
        %v1111 = vadd.s32 %v1094, %v1078
        %v1112 = vadd.s32 %v1094, %v1079
        %v1113 = vadd.s32 %v1094, %v1080
        %v1114 = vadd.s32 %v1094, %v1081
        %v1115 = vadd.s32 %v1094, %v1082
        %v1116 = vadd.s32 %v1094, %v1083
        %v1117 = vadd.s32 %v1094, %v1084
        %v1118 = vadd.s32 %v1094, %v1085
        %v1119 = vadd.s32 %v1094, %v1086
        %v1120 = vadd.s32 %v1094, %v1087
        %v1121 = vadd.s32 %v1094, %v1088
        %v1122 = vadd.s32 %v1094, %v1089
        %v1123 = vadd.s32 %v1094, %v1090
        %v1124 = vadd.s32 %v1094, %v1091
        %v1125 = vadd.s32 %v1094, %v1092
        %v1126 = vadd.s32 %v1094, %v1093
        %vm1127 = vcmp.lt.s32.totalorder %v1095, 400
        %vm1128 = vcmp.lt.s32.totalorder %v1096, 400
        %vm1129 = vcmp.lt.s32.totalorder %v1097, 400
        %vm1130 = vcmp.lt.s32.totalorder %v1098, 400
        %vm1131 = vcmp.lt.s32.totalorder %v1099, 400
        %vm1132 = vcmp.lt.s32.totalorder %v1100, 400
        %vm1133 = vcmp.lt.s32.totalorder %v1101, 400
        %vm1134 = vcmp.lt.s32.totalorder %v1102, 400
        %vm1135 = vcmp.lt.s32.totalorder %v1103, 400
        %vm1136 = vcmp.lt.s32.totalorder %v1104, 400
        %vm1137 = vcmp.lt.s32.totalorder %v1105, 400
        %vm1138 = vcmp.lt.s32.totalorder %v1106, 400
        %vm1139 = vcmp.lt.s32.totalorder %v1107, 400
        %vm1140 = vcmp.lt.s32.totalorder %v1108, 400
        %vm1141 = vcmp.lt.s32.totalorder %v1109, 400
        %vm1142 = vcmp.lt.s32.totalorder %v1110, 400
        %vm1143 = vcmp.lt.s32.totalorder %v1111, 400
        %vm1144 = vcmp.lt.s32.totalorder %v1112, 400
        %vm1145 = vcmp.lt.s32.totalorder %v1113, 400
        %vm1146 = vcmp.lt.s32.totalorder %v1114, 400
        %vm1147 = vcmp.lt.s32.totalorder %v1115, 400
        %vm1148 = vcmp.lt.s32.totalorder %v1116, 400
        %vm1149 = vcmp.lt.s32.totalorder %v1117, 400
        %vm1150 = vcmp.lt.s32.totalorder %v1118, 400
        %vm1151 = vcmp.lt.s32.totalorder %v1119, 400
        %vm1152 = vcmp.lt.s32.totalorder %v1120, 400
        %vm1153 = vcmp.lt.s32.totalorder %v1121, 400
        %vm1154 = vcmp.lt.s32.totalorder %v1122, 400
        %vm1155 = vcmp.lt.s32.totalorder %v1123, 400
        %vm1156 = vcmp.lt.s32.totalorder %v1124, 400
        %vm1157 = vcmp.lt.s32.totalorder %v1125, 400
        %vm1158 = vcmp.lt.s32.totalorder %v1126, 400
        %v1159 = vsel %vm1127, %v634, 0.0
        %v1160 = vsel %vm1127, %v636, 0.0
        %v1161 = vsel %vm1128, %v638, 0.0
        %v1162 = vsel %vm1128, %v640, 0.0
        %v1163 = vsel %vm1129, %v644, 0.0
        %v1164 = vsel %vm1129, %v646, 0.0
        %v1165 = vsel %vm1130, %v648, 0.0
        %v1166 = vsel %vm1130, %v650, 0.0
        %v1167 = vsel %vm1131, %v654, 0.0
        %v1168 = vsel %vm1131, %v656, 0.0
        %v1169 = vsel %vm1132, %v658, 0.0
        %v1170 = vsel %vm1132, %v660, 0.0
        %v1171 = vsel %vm1133, %v664, 0.0
        %v1172 = vsel %vm1133, %v666, 0.0
        %v1173 = vsel %vm1134, %v668, 0.0
        %v1174 = vsel %vm1134, %v670, 0.0
        %v1175 = vsel %vm1135, %v674, 0.0
        %v1176 = vsel %vm1135, %v676, 0.0
        %v1177 = vsel %vm1136, %v678, 0.0
        %v1178 = vsel %vm1136, %v680, 0.0
        %v1179 = vsel %vm1137, %v684, 0.0
        %v1180 = vsel %vm1137, %v686, 0.0
        %v1181 = vsel %vm1138, %v688, 0.0
        %v1182 = vsel %vm1138, %v690, 0.0
        %v1183 = vsel %vm1139, %v694, 0.0
        %v1184 = vsel %vm1139, %v696, 0.0
        %v1185 = vsel %vm1140, %v698, 0.0
        %v1186 = vsel %vm1140, %v700, 0.0
        %v1187 = vsel %vm1141, %v704, 0.0
        %v1188 = vsel %vm1141, %v706, 0.0
        %v1189 = vsel %vm1142, %v708, 0.0
        %v1190 = vsel %vm1142, %v710, 0.0
        %v1191 = vsel %vm1143, %v714, 0.0
        %v1192 = vsel %vm1143, %v716, 0.0
        %v1193 = vsel %vm1144, %v718, 0.0
        %v1194 = vsel %vm1144, %v720, 0.0
        %v1195 = vsel %vm1145, %v724, 0.0
        %v1196 = vsel %vm1145, %v726, 0.0
        %v1197 = vsel %vm1146, %v728, 0.0
        %v1198 = vsel %vm1146, %v730, 0.0
        %v1199 = vsel %vm1147, %v734, 0.0
        %v1200 = vsel %vm1147, %v736, 0.0
        %v1201 = vsel %vm1148, %v738, 0.0
        %v1202 = vsel %vm1148, %v740, 0.0
        %v1203 = vsel %vm1149, %v744, 0.0
        %v1204 = vsel %vm1149, %v746, 0.0
        %v1205 = vsel %vm1150, %v748, 0.0
        %v1206 = vsel %vm1150, %v750, 0.0
        %v1207 = vsel %vm1151, %v754, 0.0
        %v1208 = vsel %vm1151, %v756, 0.0
        %v1209 = vsel %vm1152, %v758, 0.0
        %v1210 = vsel %vm1152, %v760, 0.0
        %v1211 = vsel %vm1153, %v764, 0.0
        %v1212 = vsel %vm1153, %v766, 0.0
        %v1213 = vsel %vm1154, %v768, 0.0
        %v1214 = vsel %vm1154, %v770, 0.0
        %v1215 = vsel %vm1155, %v774, 0.0
        %v1216 = vsel %vm1155, %v776, 0.0
        %v1217 = vsel %vm1156, %v778, 0.0
        %v1218 = vsel %vm1156, %v780, 0.0
        %v1219 = vsel %vm1157, %v784, 0.0
        %v1220 = vsel %vm1157, %v786, 0.0
        %v1221 = vsel %vm1158, %v788, 0.0
        %v1222 = vsel %vm1158, %v790, 0.0
        %v1223 = vld [vmem:[%s297] sm:$0x3]
        %v1224 = vadd.f32 %v1159, %v1161
        %v1225 = vadd.f32 %v1224, %v1163
        %v1226 = vadd.f32 %v1225, %v1165
        %v1227 = vadd.f32 %v1226, %v1167
        %v1228 = vadd.f32 %v1227, %v1169
        %v1229 = vadd.f32 %v1228, %v1171
        %v1230 = vadd.f32 %v1229, %v1173
        %v1231 = vadd.f32 %v1230, %v1175
        %v1232 = vadd.f32 %v1231, %v1177
        %v1233 = vadd.f32 %v1232, %v1179
        %v1234 = vadd.f32 %v1233, %v1181
        %v1235 = vadd.f32 %v1234, %v1183
        %v1236 = vadd.f32 %v1235, %v1185
        %v1237 = vadd.f32 %v1236, %v1187
        %v1238 = vadd.f32 %v1237, %v1189
        %v1239 = vadd.f32 %v1238, %v1191
        %v1240 = vadd.f32 %v1239, %v1193
        %v1241 = vadd.f32 %v1240, %v1195
        %v1242 = vadd.f32 %v1241, %v1197
        %v1243 = vadd.f32 %v1242, %v1199
        %v1244 = vadd.f32 %v1243, %v1201
        %v1245 = vadd.f32 %v1244, %v1203
        %v1246 = vadd.f32 %v1245, %v1205
        %v1247 = vadd.f32 %v1246, %v1207
        %v1248 = vadd.f32 %v1247, %v1209
        %v1249 = vadd.f32 %v1248, %v1211
        %v1250 = vadd.f32 %v1249, %v1213
        %v1251 = vadd.f32 %v1250, %v1215
        %v1252 = vadd.f32 %v1251, %v1217
        %v1253 = vadd.f32 %v1252, %v1219
        %v1254 = vadd.f32 %v1253, %v1221
        %v1255 = vrot.slane %v1254, 4
        %v1256 = vadd.f32 %v1254, %v1255
        %v1257 = vrot.slane %v1256, 2
        %v1258 = vadd.f32 %v1256, %v1257
        %v1259 = vrot.slane %v1258, 1
        %v1260 = vadd.f32 %v1258, %v1259
        %v1261 = vadd.f32 %v1160, %v1162
        %v1262 = vadd.f32 %v1261, %v1164
        %v1263 = vadd.f32 %v1262, %v1166
        %v1264 = vadd.f32 %v1263, %v1168
        %v1265 = vadd.f32 %v1264, %v1170
        %v1266 = vadd.f32 %v1265, %v1172
        %v1267 = vadd.f32 %v1266, %v1174
        %v1268 = vadd.f32 %v1267, %v1176
        %v1269 = vadd.f32 %v1268, %v1178
        %v1270 = vadd.f32 %v1269, %v1180
        %v1271 = vadd.f32 %v1270, %v1182
        %v1272 = vadd.f32 %v1271, %v1184
        %v1273 = vadd.f32 %v1272, %v1186
        %v1274 = vadd.f32 %v1273, %v1188
        %v1275 = vadd.f32 %v1274, %v1190
        %v1276 = vadd.f32 %v1275, %v1192
        %v1277 = vadd.f32 %v1276, %v1194
        %v1278 = vadd.f32 %v1277, %v1196
        %v1279 = vadd.f32 %v1278, %v1198
        %v1280 = vadd.f32 %v1279, %v1200
        %v1281 = vadd.f32 %v1280, %v1202
        %v1282 = vadd.f32 %v1281, %v1204
        %v1283 = vadd.f32 %v1282, %v1206
        %v1284 = vadd.f32 %v1283, %v1208
        %v1285 = vadd.f32 %v1284, %v1210
        %v1286 = vadd.f32 %v1285, %v1212
        %v1287 = vadd.f32 %v1286, %v1214
        %v1288 = vadd.f32 %v1287, %v1216
        %v1289 = vadd.f32 %v1288, %v1218
        %v1290 = vadd.f32 %v1289, %v1220
        %v1291 = vadd.f32 %v1290, %v1222
        %v1292 = vrot.slane %v1291, 4
        %v1293 = vadd.f32 %v1291, %v1292
        %v1294 = vrot.slane %v1293, 2
        %v1295 = vadd.f32 %v1293, %v1294
        %v1296 = vrot.slane %v1295, 1
        %v1297 = vadd.f32 %v1295, %v1296
        %v1300 = vcombine.low %v1260, %v1297
        %v1302 = vunpack.c.l.s4 1966171168
        %v1303 = vunpack.c.0.s8 %v1302
        %v1304 = vlaneseq
        %v1305 = vshrl.u32 %v1304, 7
        %v1306 = vsub.s32 %v1303, %v1305
        %v1307 = vrot.slane %v1300, %v1306
        %v1309 = vunpack.c.l.s4 1966171168
        %v1310 = vunpack.c.0.s8 %v1309
        %v1311 = vlaneseq
        %v1312 = vshrl.u32 %v1311, 7
        %v1313 = vsub.s32 %v1310, %v1312
        %v1314 = vrot.slane %v1307, %v1313
        %v1316 = vadd.f32 %v1223, %v1314
        %v1317 = vlaneseq
        %vm1318 = vcmp.ge.s32.totalorder %v1317, 0
        %vm1319 = vcmp.lt.s32.totalorder %v1317, 256
        %vm1320 = vmand %vm1318, %vm1319
        %1321 = vst.msk [vmem:[%s297] sm:$0x3] %vm1320, %v1316
        %v1322 = vld [vmem:[%s301] sm:$0x3]
        %v1323 = vmul.f32 %v1159, %v1159
        %v1324 = vmul.f32 %v1160, %v1160
        %v1325 = vmul.f32 %v1161, %v1161
        %v1326 = vmul.f32 %v1162, %v1162
        %v1327 = vmul.f32 %v1163, %v1163
        %v1328 = vmul.f32 %v1164, %v1164
        %v1329 = vmul.f32 %v1165, %v1165
        %v1330 = vmul.f32 %v1166, %v1166
        %v1331 = vmul.f32 %v1167, %v1167
        %v1332 = vmul.f32 %v1168, %v1168
        %v1333 = vmul.f32 %v1169, %v1169
        %v1334 = vmul.f32 %v1170, %v1170
        %v1335 = vmul.f32 %v1171, %v1171
        %v1336 = vmul.f32 %v1172, %v1172
        %v1337 = vmul.f32 %v1173, %v1173
        %v1338 = vmul.f32 %v1174, %v1174
        %v1339 = vmul.f32 %v1175, %v1175
        %v1340 = vmul.f32 %v1176, %v1176
        %v1341 = vmul.f32 %v1177, %v1177
        %v1342 = vmul.f32 %v1178, %v1178
        %v1343 = vmul.f32 %v1179, %v1179
        %v1344 = vmul.f32 %v1180, %v1180
        %v1345 = vmul.f32 %v1181, %v1181
        %v1346 = vmul.f32 %v1182, %v1182
        %v1347 = vmul.f32 %v1183, %v1183
        %v1348 = vmul.f32 %v1184, %v1184
        %v1349 = vmul.f32 %v1185, %v1185
        %v1350 = vmul.f32 %v1186, %v1186
        %v1351 = vmul.f32 %v1187, %v1187
        %v1352 = vmul.f32 %v1188, %v1188
        %v1353 = vmul.f32 %v1189, %v1189
        %v1354 = vmul.f32 %v1190, %v1190
        %v1355 = vmul.f32 %v1191, %v1191
        %v1356 = vmul.f32 %v1192, %v1192
        %v1357 = vmul.f32 %v1193, %v1193
        %v1358 = vmul.f32 %v1194, %v1194
        %v1359 = vmul.f32 %v1195, %v1195
        %v1360 = vmul.f32 %v1196, %v1196
        %v1361 = vmul.f32 %v1197, %v1197
        %v1362 = vmul.f32 %v1198, %v1198
        %v1363 = vmul.f32 %v1199, %v1199
        %v1364 = vmul.f32 %v1200, %v1200
        %v1365 = vmul.f32 %v1201, %v1201
        %v1366 = vmul.f32 %v1202, %v1202
        %v1367 = vmul.f32 %v1203, %v1203
        %v1368 = vmul.f32 %v1204, %v1204
        %v1369 = vmul.f32 %v1205, %v1205
        %v1370 = vmul.f32 %v1206, %v1206
        %v1371 = vmul.f32 %v1207, %v1207
        %v1372 = vmul.f32 %v1208, %v1208
        %v1373 = vmul.f32 %v1209, %v1209
        %v1374 = vmul.f32 %v1210, %v1210
        %v1375 = vmul.f32 %v1211, %v1211
        %v1376 = vmul.f32 %v1212, %v1212
        %v1377 = vmul.f32 %v1213, %v1213
        %v1378 = vmul.f32 %v1214, %v1214
        %v1379 = vmul.f32 %v1215, %v1215
        %v1380 = vmul.f32 %v1216, %v1216
        %v1381 = vmul.f32 %v1217, %v1217
        %v1382 = vmul.f32 %v1218, %v1218
        %v1383 = vmul.f32 %v1219, %v1219
        %v1384 = vmul.f32 %v1220, %v1220
        %v1385 = vmul.f32 %v1221, %v1221
        %v1386 = vmul.f32 %v1222, %v1222
        %v1387 = vadd.f32 %v1323, %v1325
        %v1388 = vadd.f32 %v1387, %v1327
        %v1389 = vadd.f32 %v1388, %v1329
        %v1390 = vadd.f32 %v1389, %v1331
        %v1391 = vadd.f32 %v1390, %v1333
        %v1392 = vadd.f32 %v1391, %v1335
        %v1393 = vadd.f32 %v1392, %v1337
        %v1394 = vadd.f32 %v1393, %v1339
        %v1395 = vadd.f32 %v1394, %v1341
        %v1396 = vadd.f32 %v1395, %v1343
        %v1397 = vadd.f32 %v1396, %v1345
        %v1398 = vadd.f32 %v1397, %v1347
        %v1399 = vadd.f32 %v1398, %v1349
        %v1400 = vadd.f32 %v1399, %v1351
        %v1401 = vadd.f32 %v1400, %v1353
        %v1402 = vadd.f32 %v1401, %v1355
        %v1403 = vadd.f32 %v1402, %v1357
        %v1404 = vadd.f32 %v1403, %v1359
        %v1405 = vadd.f32 %v1404, %v1361
        %v1406 = vadd.f32 %v1405, %v1363
        %v1407 = vadd.f32 %v1406, %v1365
        %v1408 = vadd.f32 %v1407, %v1367
        %v1409 = vadd.f32 %v1408, %v1369
        %v1410 = vadd.f32 %v1409, %v1371
        %v1411 = vadd.f32 %v1410, %v1373
        %v1412 = vadd.f32 %v1411, %v1375
        %v1413 = vadd.f32 %v1412, %v1377
        %v1414 = vadd.f32 %v1413, %v1379
        %v1415 = vadd.f32 %v1414, %v1381
        %v1416 = vadd.f32 %v1415, %v1383
        %v1417 = vadd.f32 %v1416, %v1385
        %v1418 = vrot.slane %v1417, 4
        %v1419 = vadd.f32 %v1417, %v1418
        %v1420 = vrot.slane %v1419, 2
        %v1421 = vadd.f32 %v1419, %v1420
        %v1422 = vrot.slane %v1421, 1
        %v1423 = vadd.f32 %v1421, %v1422
        %v1424 = vadd.f32 %v1324, %v1326
        %v1425 = vadd.f32 %v1424, %v1328
        %v1426 = vadd.f32 %v1425, %v1330
        %v1427 = vadd.f32 %v1426, %v1332
        %v1428 = vadd.f32 %v1427, %v1334
        %v1429 = vadd.f32 %v1428, %v1336
        %v1430 = vadd.f32 %v1429, %v1338
        %v1431 = vadd.f32 %v1430, %v1340
        %v1432 = vadd.f32 %v1431, %v1342
        %v1433 = vadd.f32 %v1432, %v1344
        %v1434 = vadd.f32 %v1433, %v1346
        %v1435 = vadd.f32 %v1434, %v1348
        %v1436 = vadd.f32 %v1435, %v1350
        %v1437 = vadd.f32 %v1436, %v1352
        %v1438 = vadd.f32 %v1437, %v1354
        %v1439 = vadd.f32 %v1438, %v1356
        %v1440 = vadd.f32 %v1439, %v1358
        %v1441 = vadd.f32 %v1440, %v1360
        %v1442 = vadd.f32 %v1441, %v1362
        %v1443 = vadd.f32 %v1442, %v1364
        %v1444 = vadd.f32 %v1443, %v1366
        %v1445 = vadd.f32 %v1444, %v1368
        %v1446 = vadd.f32 %v1445, %v1370
        %v1447 = vadd.f32 %v1446, %v1372
        %v1448 = vadd.f32 %v1447, %v1374
        %v1449 = vadd.f32 %v1448, %v1376
        %v1450 = vadd.f32 %v1449, %v1378
        %v1451 = vadd.f32 %v1450, %v1380
        %v1452 = vadd.f32 %v1451, %v1382
        %v1453 = vadd.f32 %v1452, %v1384
        %v1454 = vadd.f32 %v1453, %v1386
        %v1455 = vrot.slane %v1454, 4
        %v1456 = vadd.f32 %v1454, %v1455
        %v1457 = vrot.slane %v1456, 2
        %v1458 = vadd.f32 %v1456, %v1457
        %v1459 = vrot.slane %v1458, 1
        %v1460 = vadd.f32 %v1458, %v1459
        %v1463 = vcombine.low %v1423, %v1460
        %v1465 = vunpack.c.l.s4 1966171168
        %v1466 = vunpack.c.0.s8 %v1465
        %v1467 = vlaneseq
        %v1468 = vshrl.u32 %v1467, 7
        %v1469 = vsub.s32 %v1466, %v1468
        %v1470 = vrot.slane %v1463, %v1469
        %v1472 = vunpack.c.l.s4 1966171168
        %v1473 = vunpack.c.0.s8 %v1472
        %v1474 = vlaneseq
        %v1475 = vshrl.u32 %v1474, 7
        %v1476 = vsub.s32 %v1473, %v1475
        %v1477 = vrot.slane %v1470, %v1476
        %v1479 = vadd.f32 %v1322, %v1477
        %1480 = vst.msk [vmem:[%s301] sm:$0x3] %vm1320, %v1479
      $region48: #{sdf_forward.10} parent=35 // pred_fallthru
        _
      %v1481 = vpack.c.bf16 %v638, %v634
      %v1482 = vpack.c.bf16 %v640, %v636
      %v1483 = vpack.c.bf16 %v648, %v644
      %v1484 = vpack.c.bf16 %v650, %v646
      %v1485 = vpack.c.bf16 %v658, %v654
      %v1486 = vpack.c.bf16 %v660, %v656
      %v1487 = vpack.c.bf16 %v668, %v664
      %v1488 = vpack.c.bf16 %v670, %v666
      %v1489 = vpack.c.bf16 %v678, %v674
      %v1490 = vpack.c.bf16 %v680, %v676
      %v1491 = vpack.c.bf16 %v688, %v684
      %v1492 = vpack.c.bf16 %v690, %v686
      %v1493 = vpack.c.bf16 %v698, %v694
      %v1494 = vpack.c.bf16 %v700, %v696
      %v1495 = vpack.c.bf16 %v708, %v704
      %v1496 = vpack.c.bf16 %v710, %v706
      %v1497 = vpack.c.bf16 %v718, %v714
      %v1498 = vpack.c.bf16 %v720, %v716
      %v1499 = vpack.c.bf16 %v728, %v724
      %v1500 = vpack.c.bf16 %v730, %v726
      %v1501 = vpack.c.bf16 %v738, %v734
      %v1502 = vpack.c.bf16 %v740, %v736
      %v1503 = vpack.c.bf16 %v748, %v744
      %v1504 = vpack.c.bf16 %v750, %v746
      %v1505 = vpack.c.bf16 %v758, %v754
      %v1506 = vpack.c.bf16 %v760, %v756
      %v1507 = vpack.c.bf16 %v768, %v764
      %v1508 = vpack.c.bf16 %v770, %v766
      %v1509 = vpack.c.bf16 %v778, %v774
      %v1510 = vpack.c.bf16 %v780, %v776
      %v1511 = vpack.c.bf16 %v788, %v784
      %v1512 = vpack.c.bf16 %v790, %v786
      %v1545 = vunpack.c.l.b16 %v1481
      %v1546 = vunpack.c.l.b16 %v1482
      %v1547 = vunpack.c.h.b16 %v1481
      %v1548 = vunpack.c.h.b16 %v1482
      %v1549 = vunpack.c.l.b16 %v1483
      %v1550 = vunpack.c.l.b16 %v1484
      %v1551 = vunpack.c.h.b16 %v1483
      %v1552 = vunpack.c.h.b16 %v1484
      %v1553 = vunpack.c.l.b16 %v1485
      %v1554 = vunpack.c.l.b16 %v1486
      %v1555 = vunpack.c.h.b16 %v1485
      %v1556 = vunpack.c.h.b16 %v1486
      %v1557 = vunpack.c.l.b16 %v1487
      %v1558 = vunpack.c.l.b16 %v1488
      %v1559 = vunpack.c.h.b16 %v1487
      %v1560 = vunpack.c.h.b16 %v1488
      %v1561 = vunpack.c.l.b16 %v1489
      %v1562 = vunpack.c.l.b16 %v1490
      %v1563 = vunpack.c.h.b16 %v1489
      %v1564 = vunpack.c.h.b16 %v1490
      %v1565 = vunpack.c.l.b16 %v1491
      %v1566 = vunpack.c.l.b16 %v1492
      %v1567 = vunpack.c.h.b16 %v1491
      %v1568 = vunpack.c.h.b16 %v1492
      %v1569 = vunpack.c.l.b16 %v1493
      %v1570 = vunpack.c.l.b16 %v1494
      %v1571 = vunpack.c.h.b16 %v1493
      %v1572 = vunpack.c.h.b16 %v1494
      %v1573 = vunpack.c.l.b16 %v1495
      %v1574 = vunpack.c.l.b16 %v1496
      %v1575 = vunpack.c.h.b16 %v1495
      %v1576 = vunpack.c.h.b16 %v1496
      %v1577 = vunpack.c.l.b16 %v1497
      %v1578 = vunpack.c.l.b16 %v1498
      %v1579 = vunpack.c.h.b16 %v1497
      %v1580 = vunpack.c.h.b16 %v1498
      %v1581 = vunpack.c.l.b16 %v1499
      %v1582 = vunpack.c.l.b16 %v1500
      %v1583 = vunpack.c.h.b16 %v1499
      %v1584 = vunpack.c.h.b16 %v1500
      %v1585 = vunpack.c.l.b16 %v1501
      %v1586 = vunpack.c.l.b16 %v1502
      %v1587 = vunpack.c.h.b16 %v1501
      %v1588 = vunpack.c.h.b16 %v1502
      %v1589 = vunpack.c.l.b16 %v1503
      %v1590 = vunpack.c.l.b16 %v1504
      %v1591 = vunpack.c.h.b16 %v1503
      %v1592 = vunpack.c.h.b16 %v1504
      %v1593 = vunpack.c.l.b16 %v1505
      %v1594 = vunpack.c.l.b16 %v1506
      %v1595 = vunpack.c.h.b16 %v1505
      %v1596 = vunpack.c.h.b16 %v1506
      %v1597 = vunpack.c.l.b16 %v1507
      %v1598 = vunpack.c.l.b16 %v1508
      %v1599 = vunpack.c.h.b16 %v1507
      %v1600 = vunpack.c.h.b16 %v1508
      %v1601 = vunpack.c.l.b16 %v1509
      %v1602 = vunpack.c.l.b16 %v1510
      %v1603 = vunpack.c.h.b16 %v1509
      %v1604 = vunpack.c.h.b16 %v1510
      %v1605 = vunpack.c.l.b16 %v1511
      %v1606 = vunpack.c.l.b16 %v1512
      %v1607 = vunpack.c.h.b16 %v1511
      %v1608 = vunpack.c.h.b16 %v1512
      %v1609 = vpack.c.b16 %v1546, %v1545
      %v1610 = vpack.c.b16 %v1548, %v1547
      %v1611 = vpack.c.b16 %v1550, %v1549
      %v1612 = vpack.c.b16 %v1552, %v1551
      %v1613 = vpack.c.b16 %v1554, %v1553
      %v1614 = vpack.c.b16 %v1556, %v1555
      %v1615 = vpack.c.b16 %v1558, %v1557
      %v1616 = vpack.c.b16 %v1560, %v1559
      %v1617 = vpack.c.b16 %v1562, %v1561
      %v1618 = vpack.c.b16 %v1564, %v1563
      %v1619 = vpack.c.b16 %v1566, %v1565
      %v1620 = vpack.c.b16 %v1568, %v1567
      %v1621 = vpack.c.b16 %v1570, %v1569
      %v1622 = vpack.c.b16 %v1572, %v1571
      %v1623 = vpack.c.b16 %v1574, %v1573
      %v1624 = vpack.c.b16 %v1576, %v1575
      %v1625 = vpack.c.b16 %v1578, %v1577
      %v1626 = vpack.c.b16 %v1580, %v1579
      %v1627 = vpack.c.b16 %v1582, %v1581
      %v1628 = vpack.c.b16 %v1584, %v1583
      %v1629 = vpack.c.b16 %v1586, %v1585
      %v1630 = vpack.c.b16 %v1588, %v1587
      %v1631 = vpack.c.b16 %v1590, %v1589
      %v1632 = vpack.c.b16 %v1592, %v1591
      %v1633 = vpack.c.b16 %v1594, %v1593
      %v1634 = vpack.c.b16 %v1596, %v1595
      %v1635 = vpack.c.b16 %v1598, %v1597
      %v1636 = vpack.c.b16 %v1600, %v1599
      %v1637 = vpack.c.b16 %v1602, %v1601
      %v1638 = vpack.c.b16 %v1604, %v1603
      %v1639 = vpack.c.b16 %v1606, %v1605
      %v1640 = vpack.c.b16 %v1608, %v1607
      %1673 = vst [vmem:[%s291] sm:$0xff] %v1609
      %1674 = vst [vmem:[%s291 + $0x8] sm:$0xff] %v1610
      %1675 = vst [vmem:[%s291 + $0x10] sm:$0xff] %v1611
      %1676 = vst [vmem:[%s291 + $0x18] sm:$0xff] %v1612
      %1677 = vst [vmem:[%s291 + $0x20] sm:$0xff] %v1613
      %1678 = vst [vmem:[%s291 + $0x28] sm:$0xff] %v1614
      %1679 = vst [vmem:[%s291 + $0x30] sm:$0xff] %v1615
      %1680 = vst [vmem:[%s291 + $0x38] sm:$0xff] %v1616
      %1681 = vst [vmem:[%s291 + $0x40] sm:$0xff] %v1617
      %1682 = vst [vmem:[%s291 + $0x48] sm:$0xff] %v1618
      %1683 = vst [vmem:[%s291 + $0x50] sm:$0xff] %v1619
      %1684 = vst [vmem:[%s291 + $0x58] sm:$0xff] %v1620
      %1685 = vst [vmem:[%s291 + $0x60] sm:$0xff] %v1621
      %1686 = vst [vmem:[%s291 + $0x68] sm:$0xff] %v1622
      %1687 = vst [vmem:[%s291 + $0x70] sm:$0xff] %v1623
      %1688 = vst [vmem:[%s291 + $0x78] sm:$0xff] %v1624
      %1689 = vst [vmem:[%s291 + $0x80] sm:$0xff] %v1625
      %1690 = vst [vmem:[%s291 + $0x88] sm:$0xff] %v1626
      %1691 = vst [vmem:[%s291 + $0x90] sm:$0xff] %v1627
      %1692 = vst [vmem:[%s291 + $0x98] sm:$0xff] %v1628
      %1693 = vst [vmem:[%s291 + $0xa0] sm:$0xff] %v1629
      %1694 = vst [vmem:[%s291 + $0xa8] sm:$0xff] %v1630
      %1695 = vst [vmem:[%s291 + $0xb0] sm:$0xff] %v1631
      %1696 = vst [vmem:[%s291 + $0xb8] sm:$0xff] %v1632
      %1697 = vst [vmem:[%s291 + $0xc0] sm:$0xff] %v1633
      %1698 = vst [vmem:[%s291 + $0xc8] sm:$0xff] %v1634
      %1699 = vst [vmem:[%s291 + $0xd0] sm:$0xff] %v1635
      %1700 = vst [vmem:[%s291 + $0xd8] sm:$0xff] %v1636
      %1701 = vst [vmem:[%s291 + $0xe0] sm:$0xff] %v1637
      %1702 = vst [vmem:[%s291 + $0xe8] sm:$0xff] %v1638
      %1703 = vst [vmem:[%s291 + $0xf0] sm:$0xff] %v1639
      %1704 = vst [vmem:[%s291 + $0xf8] sm:$0xff] %v1640
      %s1705 = sadd.s32 %s22, %s23
      %s1706 = smul.u32 32, %s1705
      %p1707 = scmp.lt.s32.totalorder %s1706, 63
      %s1708 = scalar_select %p1707, %s1706, 63
      %s1709 = smul.addr %s1708, 2
      %s1710 = smul.addr %s1709, 4
      %s1711 = scalar_lea.vmem %s4, %s1710
      %p1712 = scmp.lt.s32.totalorder %s22, 1
      %s1713 = scalar_select %p1712, %s22, 1
      %s1714 = smul.addr %s1713, 2
      %s1715 = scalar_lea.vmem %s5, %s1714
      %p1716 = scmp.lt.s32.totalorder %s22, 1
      %s1717 = scalar_select %p1716, %s22, 1
      %s1718 = smul.addr %s1717, 2
      %s1719 = scalar_lea.vmem %s6, %s1718
      // Predicated region
      $region49: #{sdf_forward.10} parent=35 // pred_check
        %p1720 = pneg %p141
      $region50: #{sdf_forward.10} parent=35 // pred_check_branch
        %1722 = sbr.rel (%p1720) target = $region52
      $region51: #{sdf_forward.10} parent=35 // pred_region
        %s1723 = sadd.s32 %s22, %s23
        %s1724 = smul.u32 32, %s1723
      $region52: #{sdf_forward.10} parent=35 // pred_fallthru
        _
      // Predicated region
      $region53: #{sdf_forward.10} parent=35 // pred_check
        %p1725 = pneg %p167
      $region54: #{sdf_forward.10} parent=35 // pred_check_branch
        %1727 = sbr.rel (%p1725) target = $region56
      $region55: #{sdf_forward.10} parent=35 // pred_region
        _
      $region56: #{sdf_forward.10} parent=35 // pred_fallthru
        _
      // Predicated region
      $region57: #{sdf_forward.10} parent=35 // pred_check
        %p1728 = pneg %p193
      $region58: #{sdf_forward.10} parent=35 // pred_check_branch
        %1730 = sbr.rel (%p1728) target = $region60
      $region59: #{sdf_forward.10} parent=35 // pred_region
        _
      $region60: #{sdf_forward.10} parent=35 // pred_fallthru
        _
    $region36: #{sdf_forward.10} parent=5 // pred_fallthru
      _
    %p1731 = scmp.le.s32.totalorder 2, %s13
    // Predicated region
    $region61: #{sdf_forward.10} parent=5 // pred_check
      %p1732 = pneg %p1731
    $region62: #{sdf_forward.10} parent=5 // pred_check_branch
      %1734 = sbr.rel (%p1732) target = $region64
    $region63: #{sdf_forward.10} parent=5 // pred_region
      %s1735 = ssub.s32 %s13, 2
      // Predicated region
      $region65: #{sdf_forward.10} parent=63 // pred_check
        %p1736 = pneg %p147
      $region66: #{sdf_forward.10} parent=63 // pred_check_branch
        %1738 = sbr.rel (%p1736) target = $region68
      $region67: #{sdf_forward.10} parent=63 // pred_region
        %s1739 = sadd.s32 %s24, %s25
        %s1740 = smul.u32 32, %s1739
        %p1741 = scmp.lt.s32.totalorder %s1740, 63
        %s1742 = scalar_select %p1741, %s1740, 63
        %s1743 = smul.addr %s1742, 2
        %s1744 = smul.addr %s1743, 4
        %s1745 = scalar_lea.vmem %s4, %s1744
      $region68: #{sdf_forward.10} parent=63 // pred_fallthru
        _
      // Predicated region
      $region69: #{sdf_forward.10} parent=63 // pred_check
        %p1746 = pneg %p173
      $region70: #{sdf_forward.10} parent=63 // pred_check_branch
        %1748 = sbr.rel (%p1746) target = $region72
      $region71: #{sdf_forward.10} parent=63 // pred_region
        %p1749 = scmp.lt.s32.totalorder %s24, 1
        %s1750 = scalar_select %p1749, %s24, 1
        %s1751 = smul.addr %s1750, 2
        %s1752 = scalar_lea.vmem %s5, %s1751
      $region72: #{sdf_forward.10} parent=63 // pred_fallthru
        _
      // Predicated region
      $region73: #{sdf_forward.10} parent=63 // pred_check
        %p1753 = pneg %p199
      $region74: #{sdf_forward.10} parent=63 // pred_check_branch
        %1755 = sbr.rel (%p1753) target = $region76
      $region75: #{sdf_forward.10} parent=63 // pred_region
        %p1756 = scmp.lt.s32.totalorder %s24, 1
        %s1757 = scalar_select %p1756, %s24, 1
        %s1758 = smul.addr %s1757, 2
        %s1759 = scalar_lea.vmem %s6, %s1758
      $region76: #{sdf_forward.10} parent=63 // pred_fallthru
        _
    $region64: #{sdf_forward.10} parent=5 // pred_fallthru
      _
  $region6: #{sdf_forward.10} parent=0 // loop_footer
    %s17 = sadd.s32 1, %s13
  $region7: #{sdf_forward.10} parent=0 // loop_footer_branch
    %12 = sbr.rel target = $region3
  $region8: #{sdf_forward.10} parent=0 // loop_exit
    _

// kernel: sdf_forward.13
$region0: #{sdf_forward.13}
  #allocation0 [shape = 'u32[]', space=smem, size = 0x4, offset = 0x4, fixed_abs, tag = 'smem constant byte address 0x4 - core index']
  #allocation1 [shape = 'u32[144,128]{1,0:T(1,128)}', space=vmem, size = 0x12000, scoped, tag = 'internal scratch']
  %s0 = inlined_call_operand.vmem [shape: bf16[512,128], index: 0, kind: input, shape index: {}]
  %s1 = inlined_call_operand.vmem [shape: f32[1,128], index: 1, kind: input, shape index: {}]
  %s2 = inlined_call_operand.vmem [shape: f32[1,128], index: 2, kind: input, shape index: {}]
  %s3 = inlined_call_operand.vmem [shape: bf16[1,128], index: 3, kind: input, shape index: {}]
  %s4 = inlined_call_operand.hbm [shape: f32[1,512], index: 4, kind: output, shape index: {}]
  %s5 = sld [smem:[#allocation0]]
  $region49: #{sdf_forward.13} parent=0
    _
  %s7 = ssub.s32 1, %s5
  %s8 = scalar_select 0, %s7, %s5
  $region1: #{sdf_forward.13} parent=0
    #allocation2 [shape = 'u8[2048]{0}', space=vmem, size = 0x800, scoped, tag = 'output window, operand 0']
    #allocation3 [shape = 's32[2]{0}', space=sflag, size = 0x8, scoped, tag = 'scoped memory for sdf_forward.13']
    %9 = vsyncpa [#allocation3], 0
    %s10 = scalar_lea.sflag [#allocation3], 1
    %11 = vsyncpa %s10, 0
    loop: start=0, step=1, limit=4
    $region2: #{sdf_forward.13} parent=1 // loop_pre_header
      _
    $region3: #{sdf_forward.13} parent=1 // loop_header
      %s13 = sphi 0, %s17
      %p14 = scmp.ge.s32.totalorder %s13, 4
      %s23 = sphi 0, %s25
      %s26 = sphi 0, %s23
      %s27 = sphi 0, %s26
      %s43 = sphi 0, %s27
      %s47 = sphi 0, %s47
      %s49 = sphi 0, %s47
      %s50 = sphi 0, %s49
      %s64 = sphi 0, %s50
      %s68 = sphi 0, %s68
      %s70 = sphi 0, %s68
      %s71 = sphi 0, %s70
      %s85 = sphi 0, %s71
      %s89 = sphi 0, %s89
      %s91 = sphi 0, %s89
      %s92 = sphi 0, %s91
      %s106 = sphi 0, %s92
      %s112 = sphi 0, %s114
      %s115 = sphi 0, %s112
      %s116 = sphi 0, %s115
      %s132 = sphi 0, %s116
    $region4: #{sdf_forward.13} parent=1 // loop_header_branch
      %16 = sbr.rel (%p14) target = $region8
    $region5: #{sdf_forward.13} parent=1 // loop_body
      %s18 = ssub.s32 %s13, 1
      %s19 = ssub.s32 %s13, 2
      %s20 = sadd.s32 %s13, 1
      %s21 = ssub.s32 %s13, %s20
      %p22 = scmp.eq.s32.totalorder %s21, 0
      %s24 = sadd.s32 %s23, 1
      %s25 = scalar_select %p22, %s23, %s24
      %p28 = pneg %p22
      %p29 = scmp.eq.s32.totalorder %s13, 1
      %p30 = por %p28, %p29
      %p31 = scmp.ne.s32.totalorder %s23, %s26
      %p32 = scmp.eq.s32.totalorder %s13, 0
      %p33 = por %p31, %p32
      %p34 = scmp.ne.s32.totalorder %s23, %s26
      %p35 = scmp.eq.s32.totalorder %s18, 1
      %p36 = por %p34, %p35
      %p37 = scmp.ne.s32.totalorder %s26, %s27
      %p38 = scmp.eq.s32.totalorder %s18, 0
      %p39 = por %p37, %p38
      %p40 = scmp.ne.s32.totalorder %s26, %s27
      %p41 = scmp.eq.s32.totalorder %s19, 1
      %p42 = por %p40, %p41
      %p44 = scmp.ne.s32.totalorder %s27, %s43
      %p45 = scmp.eq.s32.totalorder %s19, 0
      %p46 = por %p44, %p45
      %s48 = sadd.s32 %s47, 1
      %p51 = scmp.eq.s32.totalorder %s13, 1
      %p52 = scmp.ne.s32.totalorder %s47, %s49
      %p53 = scmp.eq.s32.totalorder %s13, 0
      %p54 = por %p52, %p53
      %p55 = scmp.ne.s32.totalorder %s47, %s49
      %p56 = scmp.eq.s32.totalorder %s18, 1
      %p57 = por %p55, %p56
      %p58 = scmp.ne.s32.totalorder %s49, %s50
      %p59 = scmp.eq.s32.totalorder %s18, 0
      %p60 = por %p58, %p59
      %p61 = scmp.ne.s32.totalorder %s49, %s50
      %p62 = scmp.eq.s32.totalorder %s19, 1
      %p63 = por %p61, %p62
      %p65 = scmp.ne.s32.totalorder %s50, %s64
      %p66 = scmp.eq.s32.totalorder %s19, 0
      %p67 = por %p65, %p66
      %s69 = sadd.s32 %s68, 1
      %p72 = scmp.eq.s32.totalorder %s13, 1
      %p73 = scmp.ne.s32.totalorder %s68, %s70
      %p74 = scmp.eq.s32.totalorder %s13, 0
      %p75 = por %p73, %p74
      %p76 = scmp.ne.s32.totalorder %s68, %s70
      %p77 = scmp.eq.s32.totalorder %s18, 1
      %p78 = por %p76, %p77
      %p79 = scmp.ne.s32.totalorder %s70, %s71
      %p80 = scmp.eq.s32.totalorder %s18, 0
      %p81 = por %p79, %p80
      %p82 = scmp.ne.s32.totalorder %s70, %s71
      %p83 = scmp.eq.s32.totalorder %s19, 1
      %p84 = por %p82, %p83
      %p86 = scmp.ne.s32.totalorder %s71, %s85
      %p87 = scmp.eq.s32.totalorder %s19, 0
      %p88 = por %p86, %p87
      %s90 = sadd.s32 %s89, 1
      %p93 = scmp.eq.s32.totalorder %s13, 1
      %p94 = scmp.ne.s32.totalorder %s89, %s91
      %p95 = scmp.eq.s32.totalorder %s13, 0
      %p96 = por %p94, %p95
      %p97 = scmp.ne.s32.totalorder %s89, %s91
      %p98 = scmp.eq.s32.totalorder %s18, 1
      %p99 = por %p97, %p98
      %p100 = scmp.ne.s32.totalorder %s91, %s92
      %p101 = scmp.eq.s32.totalorder %s18, 0
      %p102 = por %p100, %p101
      %p103 = scmp.ne.s32.totalorder %s91, %s92
      %p104 = scmp.eq.s32.totalorder %s19, 1
      %p105 = por %p103, %p104
      %p107 = scmp.ne.s32.totalorder %s92, %s106
      %p108 = scmp.eq.s32.totalorder %s19, 0
      %p109 = por %p107, %p108
      %s110 = ssub.s32 %s13, %s20
      %p111 = scmp.eq.s32.totalorder %s110, 0
      %s113 = sadd.s32 %s112, 1
      %s114 = scalar_select %p111, %s112, %s113
      %p117 = pneg %p111
      %p118 = scmp.eq.s32.totalorder %s13, 1
      %p119 = por %p117, %p118
      %p120 = scmp.ne.s32.totalorder %s112, %s115
      %p121 = scmp.eq.s32.totalorder %s13, 0
      %p122 = por %p120, %p121
      %p123 = scmp.ne.s32.totalorder %s112, %s115
      %p124 = scmp.eq.s32.totalorder %s18, 1
      %p125 = por %p123, %p124
      %p126 = scmp.ne.s32.totalorder %s115, %s116
      %p127 = scmp.eq.s32.totalorder %s18, 0
      %p128 = por %p126, %p127
      %p129 = scmp.ne.s32.totalorder %s115, %s116
      %p130 = scmp.eq.s32.totalorder %s19, 1
      %p131 = por %p129, %p130
      %p133 = scmp.ne.s32.totalorder %s116, %s132
      %p134 = scmp.eq.s32.totalorder %s19, 0
      %p135 = por %p133, %p134
      %p136 = scmp.le.s32.totalorder 1, %s13
      %p137 = scmp.lt.s32.totalorder %s13, 3
      %p138 = pnand %p136, %p137
      %p139 = pneg %p138
      // Predicated region
      $region9: #{sdf_forward.13} parent=5 // pred_check
        _
      $region10: #{sdf_forward.13} parent=5 // pred_check_branch
        %141 = sbr.rel (%p138) target = $region12
      $region11: #{sdf_forward.13} parent=5 // pred_region
        %s142 = ssub.s32 %s13, 1
        // Predicated region
        $region13: #{sdf_forward.13} parent=11 // pred_check
          %p143 = pneg %p60
        $region14: #{sdf_forward.13} parent=11 // pred_check_branch
          %145 = sbr.rel (%p143) target = $region16
        $region15: #{sdf_forward.13} parent=11 // pred_region
          _
        $region16: #{sdf_forward.13} parent=11 // pred_fallthru
          _
        // Predicated region
        $region17: #{sdf_forward.13} parent=11 // pred_check
          %p146 = pneg %p81
        $region18: #{sdf_forward.13} parent=11 // pred_check_branch
          %148 = sbr.rel (%p146) target = $region20
        $region19: #{sdf_forward.13} parent=11 // pred_region
          _
        $region20: #{sdf_forward.13} parent=11 // pred_fallthru
          _
        // Predicated region
        $region21: #{sdf_forward.13} parent=11 // pred_check
          %p149 = pneg %p102
        $region22: #{sdf_forward.13} parent=11 // pred_check_branch
          %151 = sbr.rel (%p149) target = $region24
        $region23: #{sdf_forward.13} parent=11 // pred_region
          _
        $region24: #{sdf_forward.13} parent=11 // pred_fallthru
          _
      $region12: #{sdf_forward.13} parent=5 // pred_fallthru
        _
      %p152 = scmp.lt.s32.totalorder %s13, 2
      // Predicated region
      $region25: #{sdf_forward.13} parent=5 // pred_check
        %p153 = pneg %p152
      $region26: #{sdf_forward.13} parent=5 // pred_check_branch
        %155 = sbr.rel (%p153) target = $region28
      $region27: #{sdf_forward.13} parent=5 // pred_region
        // Predicated region
        $region29: #{sdf_forward.13} parent=27 // pred_check
          %p156 = pneg %p33
        $region30: #{sdf_forward.13} parent=27 // pred_check_branch
          %158 = sbr.rel (%p156) target = $region32
        $region31: #{sdf_forward.13} parent=27 // pred_region
          %s159 = smul.u32 32, %s13
          %p160 = scmp.lt.s32.totalorder %s159, 63
          %s161 = scalar_select %p160, %s159, 63
          %s162 = smul.addr %s161, 4
          %s163 = scalar_lea.vmem %s0, %s162
          %s164 = smul.u32 32, %s13
        $region32: #{sdf_forward.13} parent=27 // pred_fallthru
          _
      $region28: #{sdf_forward.13} parent=5 // pred_fallthru
        _
      %p165 = scmp.le.s32.totalorder 1, %s13
      %p166 = scmp.lt.s32.totalorder %s13, 3
      %p167 = pnand %p165, %p166
      %p168 = pneg %p167
      // Predicated region
      $region33: #{sdf_forward.13} parent=5 // pred_check
        _
      $region34: #{sdf_forward.13} parent=5 // pred_check_branch
        %170 = sbr.rel (%p167) target = $region36
      $region35: #{sdf_forward.13} parent=5 // pred_region
        %s171 = ssub.s32 %s13, 1
        %s172 = smul.u32 32, %s18
        %p173 = scmp.lt.s32.totalorder %s172, 63
        %s174 = scalar_select %p173, %s172, 63
        %s175 = smul.addr %s174, 4
        %s176 = scalar_lea.vmem %s0, %s175
        %p177 = pneg %p39
        %p178 = pneg %p36
        %p179 = pneg %p60
        %p180 = pneg %p57
        %p181 = pneg %p81
        %p182 = pneg %p78
        %p183 = pneg %p102
        %p184 = pneg %p99
        %p185 = pneg %p128
        %p186 = pneg %p125
        %s187 = sand.u32 %s115, 1
        %s188 = scalar_lea.sflag [#allocation3], %s187
        %s189 = sand.u32 %s115, 1
        %s190 = smul.addr %s189, 2
        %s191 = scalar_lea.vmem [#allocation2], %s190
        %s192 = smul.u32 32, %s18
        %p193 = scmp.lt.s32.totalorder %s192, 63
        %s194 = scalar_select %p193, %s192, 63
        %s195 = smul.addr %s194, 4
        %s196 = scalar_lea.vmem %s0, %s195
        %s197 = smul.u32 32, %s18
        %s198 = smul.u32 2, %s18
        %v200 = vld [vmem:[%s196] sm:$0xf]
        %v201 = vld [vmem:[%s196 + $0x4] sm:$0xf]
        %v202 = vld [vmem:[%s196 + $0x8] sm:$0xf]
        %v203 = vld [vmem:[%s196 + $0xc] sm:$0xf]
        %v204 = vld [vmem:[%s196 + $0x10] sm:$0xf]
        %v205 = vld [vmem:[%s196 + $0x14] sm:$0xf]
        %v206 = vld [vmem:[%s196 + $0x18] sm:$0xf]
        %v207 = vld [vmem:[%s196 + $0x1c] sm:$0xf]
        %v208 = vld [vmem:[%s196 + $0x20] sm:$0xf]
        %v209 = vld [vmem:[%s196 + $0x24] sm:$0xf]
        %v210 = vld [vmem:[%s196 + $0x28] sm:$0xf]
        %v211 = vld [vmem:[%s196 + $0x2c] sm:$0xf]
        %v212 = vld [vmem:[%s196 + $0x30] sm:$0xf]
        %v213 = vld [vmem:[%s196 + $0x34] sm:$0xf]
        %v214 = vld [vmem:[%s196 + $0x38] sm:$0xf]
        %v215 = vld [vmem:[%s196 + $0x3c] sm:$0xf]
        %v216 = vld [vmem:[%s196 + $0x40] sm:$0xf]
        %v217 = vld [vmem:[%s196 + $0x44] sm:$0xf]
        %v218 = vld [vmem:[%s196 + $0x48] sm:$0xf]
        %v219 = vld [vmem:[%s196 + $0x4c] sm:$0xf]
        %v220 = vld [vmem:[%s196 + $0x50] sm:$0xf]
        %v221 = vld [vmem:[%s196 + $0x54] sm:$0xf]
        %v222 = vld [vmem:[%s196 + $0x58] sm:$0xf]
        %v223 = vld [vmem:[%s196 + $0x5c] sm:$0xf]
        %v224 = vld [vmem:[%s196 + $0x60] sm:$0xf]
        %v225 = vld [vmem:[%s196 + $0x64] sm:$0xf]
        %v226 = vld [vmem:[%s196 + $0x68] sm:$0xf]
        %v227 = vld [vmem:[%s196 + $0x6c] sm:$0xf]
        %v228 = vld [vmem:[%s196 + $0x70] sm:$0xf]
        %v229 = vld [vmem:[%s196 + $0x74] sm:$0xf]
        %v230 = vld [vmem:[%s196 + $0x78] sm:$0xf]
        %v231 = vld [vmem:[%s196 + $0x7c] sm:$0xf]
        %v232 = vunpack.c.l.bf16 %v200
        %v233 = vunpack.c.l.bf16 %v201
        %v234 = vunpack.c.l.bf16 %v202
        %v235 = vunpack.c.l.bf16 %v203
        %v236 = vunpack.c.l.bf16 %v204
        %v237 = vunpack.c.l.bf16 %v205
        %v238 = vunpack.c.l.bf16 %v206
        %v239 = vunpack.c.l.bf16 %v207
        %v240 = vunpack.c.l.bf16 %v208
        %v241 = vunpack.c.l.bf16 %v209
        %v242 = vunpack.c.l.bf16 %v210
        %v243 = vunpack.c.l.bf16 %v211
        %v244 = vunpack.c.l.bf16 %v212
        %v245 = vunpack.c.l.bf16 %v213
        %v246 = vunpack.c.l.bf16 %v214
        %v247 = vunpack.c.l.bf16 %v215
        %v248 = vunpack.c.l.bf16 %v216
        %v249 = vunpack.c.l.bf16 %v217
        %v250 = vunpack.c.l.bf16 %v218
        %v251 = vunpack.c.l.bf16 %v219
        %v252 = vunpack.c.l.bf16 %v220
        %v253 = vunpack.c.l.bf16 %v221
        %v254 = vunpack.c.l.bf16 %v222
        %v255 = vunpack.c.l.bf16 %v223
        %v256 = vunpack.c.l.bf16 %v224
        %v257 = vunpack.c.l.bf16 %v225
        %v258 = vunpack.c.l.bf16 %v226
        %v259 = vunpack.c.l.bf16 %v227
        %v260 = vunpack.c.l.bf16 %v228
        %v261 = vunpack.c.l.bf16 %v229
        %v262 = vunpack.c.l.bf16 %v230
        %v263 = vunpack.c.l.bf16 %v231
        %v264 = vld [vmem:[%s1] sm:$0x1]
        %v266 = vlaneseq
        %v267 = vshrl.u32 %v266, 7
        %v268 = vsub.s32 0, %v267
        %v269 = vrot.slane %v264, %v268
        %v271 = vmul.f32 %v232, %v269
        %v272 = vmul.f32 %v233, %v269
        %v273 = vmul.f32 %v234, %v269
        %v274 = vmul.f32 %v235, %v269
        %v275 = vmul.f32 %v236, %v269
        %v276 = vmul.f32 %v237, %v269
        %v277 = vmul.f32 %v238, %v269
        %v278 = vmul.f32 %v239, %v269
        %v279 = vmul.f32 %v240, %v269
        %v280 = vmul.f32 %v241, %v269
        %v281 = vmul.f32 %v242, %v269
        %v282 = vmul.f32 %v243, %v269
        %v283 = vmul.f32 %v244, %v269
        %v284 = vmul.f32 %v245, %v269
        %v285 = vmul.f32 %v246, %v269
        %v286 = vmul.f32 %v247, %v269
        %v287 = vmul.f32 %v248, %v269
        %v288 = vmul.f32 %v249, %v269
        %v289 = vmul.f32 %v250, %v269
        %v290 = vmul.f32 %v251, %v269
        %v291 = vmul.f32 %v252, %v269
        %v292 = vmul.f32 %v253, %v269
        %v293 = vmul.f32 %v254, %v269
        %v294 = vmul.f32 %v255, %v269
        %v295 = vmul.f32 %v256, %v269
        %v296 = vmul.f32 %v257, %v269
        %v297 = vmul.f32 %v258, %v269
        %v298 = vmul.f32 %v259, %v269
        %v299 = vmul.f32 %v260, %v269
        %v300 = vmul.f32 %v261, %v269
        %v301 = vmul.f32 %v262, %v269
        %v302 = vmul.f32 %v263, %v269
        %v303 = vld [vmem:[%s2] sm:$0x1]
        %v305 = vlaneseq
        %v306 = vshrl.u32 %v305, 7
        %v307 = vsub.s32 0, %v306
        %v308 = vrot.slane %v303, %v307
        %v310 = vadd.f32 %v271, %v308
        %v311 = vadd.f32 %v272, %v308
        %v312 = vadd.f32 %v273, %v308
        %v313 = vadd.f32 %v274, %v308
        %v314 = vadd.f32 %v275, %v308
        %v315 = vadd.f32 %v276, %v308
        %v316 = vadd.f32 %v277, %v308
        %v317 = vadd.f32 %v278, %v308
        %v318 = vadd.f32 %v279, %v308
        %v319 = vadd.f32 %v280, %v308
        %v320 = vadd.f32 %v281, %v308
        %v321 = vadd.f32 %v282, %v308
        %v322 = vadd.f32 %v283, %v308
        %v323 = vadd.f32 %v284, %v308
        %v324 = vadd.f32 %v285, %v308
        %v325 = vadd.f32 %v286, %v308
        %v326 = vadd.f32 %v287, %v308
        %v327 = vadd.f32 %v288, %v308
        %v328 = vadd.f32 %v289, %v308
        %v329 = vadd.f32 %v290, %v308
        %v330 = vadd.f32 %v291, %v308
        %v331 = vadd.f32 %v292, %v308
        %v332 = vadd.f32 %v293, %v308
        %v333 = vadd.f32 %v294, %v308
        %v334 = vadd.f32 %v295, %v308
        %v335 = vadd.f32 %v296, %v308
        %v336 = vadd.f32 %v297, %v308
        %v337 = vadd.f32 %v298, %v308
        %v338 = vadd.f32 %v299, %v308
        %v339 = vadd.f32 %v300, %v308
        %v340 = vadd.f32 %v301, %v308
        %v341 = vadd.f32 %v302, %v308
        %v342 = vmax.f32 %v310, 0.0
        %v343 = vmax.f32 %v311, 0.0
        %v344 = vmax.f32 %v312, 0.0
        %v345 = vmax.f32 %v313, 0.0
        %v346 = vmax.f32 %v314, 0.0
        %v347 = vmax.f32 %v315, 0.0
        %v348 = vmax.f32 %v316, 0.0
        %v349 = vmax.f32 %v317, 0.0
        %v350 = vmax.f32 %v318, 0.0
        %v351 = vmax.f32 %v319, 0.0
        %v352 = vmax.f32 %v320, 0.0
        %v353 = vmax.f32 %v321, 0.0
        %v354 = vmax.f32 %v322, 0.0
        %v355 = vmax.f32 %v323, 0.0
        %v356 = vmax.f32 %v324, 0.0
        %v357 = vmax.f32 %v325, 0.0
        %v358 = vmax.f32 %v326, 0.0
        %v359 = vmax.f32 %v327, 0.0
        %v360 = vmax.f32 %v328, 0.0
        %v361 = vmax.f32 %v329, 0.0
        %v362 = vmax.f32 %v330, 0.0
        %v363 = vmax.f32 %v331, 0.0
        %v364 = vmax.f32 %v332, 0.0
        %v365 = vmax.f32 %v333, 0.0
        %v366 = vmax.f32 %v334, 0.0
        %v367 = vmax.f32 %v335, 0.0
        %v368 = vmax.f32 %v336, 0.0
        %v369 = vmax.f32 %v337, 0.0
        %v370 = vmax.f32 %v338, 0.0
        %v371 = vmax.f32 %v339, 0.0
        %v372 = vmax.f32 %v340, 0.0
        %v373 = vmax.f32 %v341, 0.0
        %v374 = vld [vmem:[%s3] sm:$0x1]
        %v375 = vpack.c.bf16 %v343, %v342
        %v376 = vpack.c.bf16 %v345, %v344
        %v377 = vpack.c.bf16 %v347, %v346
        %v378 = vpack.c.bf16 %v349, %v348
        %v379 = vpack.c.bf16 %v351, %v350
        %v380 = vpack.c.bf16 %v353, %v352
        %v381 = vpack.c.bf16 %v355, %v354
        %v382 = vpack.c.bf16 %v357, %v356
        %v383 = vpack.c.bf16 %v359, %v358
        %v384 = vpack.c.bf16 %v361, %v360
        %v385 = vpack.c.bf16 %v363, %v362
        %v386 = vpack.c.bf16 %v365, %v364
        %v387 = vpack.c.bf16 %v367, %v366
        %v388 = vpack.c.bf16 %v369, %v368
        %v389 = vpack.c.bf16 %v371, %v370
        %v390 = vpack.c.bf16 %v373, %v372
        %391 = vmatprep.subr.bf16.mxu0 0
        %392 = vmatpush1.bf16.xpose.msra.mxu0 %v375
        %393 = vmatprep.subr.bf16.mxu0 0
        %394 = vmatpush1.bf16.xpose.msra.mxu0 %v376
        %395 = vmatprep.subr.bf16.mxu0 0
        %396 = vmatpush1.bf16.xpose.msra.mxu0 %v377
        %397 = vmatprep.subr.bf16.mxu0 0
        %398 = vmatpush1.bf16.xpose.msra.mxu0 %v378
        %399 = vmatprep.subr.bf16.mxu0 0
        %400 = vmatpush1.bf16.xpose.msra.mxu0 %v379
        %401 = vmatprep.subr.bf16.mxu0 0
        %402 = vmatpush1.bf16.xpose.msra.mxu0 %v380
        %403 = vmatprep.subr.bf16.mxu0 0
        %404 = vmatpush1.bf16.xpose.msra.mxu0 %v381
        %405 = vmatprep.subr.bf16.mxu0 0
        %406 = vmatpush1.bf16.xpose.msra.mxu0 %v382
        %407 = vmatprep.subr.bf16.mxu0 0
        %408 = vmatpush1.bf16.xpose.msra.mxu0 %v383
        %409 = vmatprep.subr.bf16.mxu0 0
        %410 = vmatpush1.bf16.xpose.msra.mxu0 %v384
        %411 = vmatprep.subr.bf16.mxu0 0
        %412 = vmatpush1.bf16.xpose.msra.mxu0 %v385
        %413 = vmatprep.subr.bf16.mxu0 0
        %414 = vmatpush1.bf16.xpose.msra.mxu0 %v386
        %415 = vmatprep.subr.bf16.mxu0 0
        %416 = vmatpush1.bf16.xpose.msra.mxu0 %v387
        %417 = vmatprep.subr.bf16.mxu0 0
        %418 = vmatpush1.bf16.xpose.msra.mxu0 %v388
        %419 = vmatprep.subr.bf16.mxu0 0
        %420 = vmatpush1.bf16.xpose.msra.mxu0 %v389
        %421 = vmatprep.subr.bf16.mxu0 0
        %422 = vmatpush1.bf16.xpose.msra.mxu0 %v390
        %423 = vmatprep.mubr.bf16.mxu0 0
        %424 = vmatmul.mubr.bf16.gmra.mrb[0].mxu0 %v374
        %v425 = vpop.f32.mrb[0].mxu0
        %v426 = vadd.f32 0.0, %v425
        %v427 = vpop.f32.mrb[0].mxu0
        %v428 = vadd.f32 0.0, %v427
        %v429 = vpop.f32.mrb[0].mxu0
        %v430 = vpop.f32.mrb[0].mxu0
        %431 = vdwg.mxu0
        %v434 = vcombine.low %v426, %v428
        %v436 = vunpack.c.l.s4 1966171168
        %v437 = vunpack.c.0.s8 %v436
        %v438 = vlaneseq
        %v439 = vshrl.u32 %v438, 7
        %v440 = vsub.s32 %v437, %v439
        %v441 = vrot.slane %v434, %v440
        %v443 = vunpack.c.l.s4 1966171168
        %v444 = vunpack.c.0.s8 %v443
        %v445 = vlaneseq
        %v446 = vshrl.u32 %v445, 7
        %v447 = vsub.s32 %v444, %v446
        %v448 = vrot.slane %v441, %v447
        %v450 = vlaneseq
        %vm451 = vcmp.ge.s32.totalorder %v450, 0
        %vm452 = vcmp.lt.s32.totalorder %v450, 256
        %vm453 = vmand %vm451, %vm452
        %454 = vst.msk [vmem:[%s191] sm:$0x3] %vm453, %v448
        %s455 = sand.u32 %s115, 1
        %s456 = scalar_lea.sflag [#allocation3], %s455
        %s457 = sand.u32 %s115, 1
        %s458 = smul.addr %s457, 2
        %s459 = scalar_lea.vmem [#allocation2], %s458
        // Predicated region
        $region37: #{sdf_forward.13} parent=35 // pred_check
          %p460 = pneg %p125
        $region38: #{sdf_forward.13} parent=35 // pred_check_branch
          %462 = sbr.rel (%p460) target = $region40
        $region39: #{sdf_forward.13} parent=35 // pred_region
          %s463 = smul.u32 2, %s18
          %s465 = ssub.s32 32, 32
          %466 = vsyncadd %s456, %s465
          %s467 = smul.addr %s463, 16
          %s468 = scalar_lea.hbm %s4, %s467
          %s470 = sshll.u32 %s459, 4
          %s471 = int_to_ptr.vmem [resolvable:$true] %s470
          %473 = dma.vmem_to_hbm [thread:$0]  %s471, 32, %s468, %s456
        $region40: #{sdf_forward.13} parent=35 // pred_fallthru
          _
      $region36: #{sdf_forward.13} parent=5 // pred_fallthru
        _
      %p474 = scmp.le.s32.totalorder 2, %s13
      // Predicated region
      $region41: #{sdf_forward.13} parent=5 // pred_check
        %p475 = pneg %p474
      $region42: #{sdf_forward.13} parent=5 // pred_check_branch
        %477 = sbr.rel (%p475) target = $region44
      $region43: #{sdf_forward.13} parent=5 // pred_region
        %s478 = ssub.s32 %s13, 2
        // Predicated region
        $region45: #{sdf_forward.13} parent=43 // pred_check
          %p479 = pneg %p131
        $region46: #{sdf_forward.13} parent=43 // pred_check_branch
          %481 = sbr.rel (%p479) target = $region48
        $region47: #{sdf_forward.13} parent=43 // pred_region
          %s482 = sand.u32 %s116, 1
          %s483 = scalar_lea.sflag [#allocation3], %s482
          %s484 = sand.u32 %s116, 1
          %s485 = smul.addr %s484, 2
          %s486 = scalar_lea.vmem [#allocation2], %s485
          %487 = dma.done %s483, 32
        $region48: #{sdf_forward.13} parent=43 // pred_fallthru
          _
      $region44: #{sdf_forward.13} parent=5 // pred_fallthru
        _
    $region6: #{sdf_forward.13} parent=1 // loop_footer
      %s17 = sadd.s32 1, %s13
    $region7: #{sdf_forward.13} parent=1 // loop_footer_branch
      %12 = sbr.rel target = $region3
    $region8: #{sdf_forward.13} parent=1 // loop_exit
      _
    %488 = vsyncpa [#allocation3], 1
    %s489 = scalar_lea.sflag [#allocation3], 1
    %490 = vsyncpa %s489, 1

// kernel: sdf_forward.11
$region0: #{sdf_forward.11}
  #allocation0 [shape = 'u32[]', space=smem, size = 0x4, offset = 0x4, fixed_abs, tag = 'smem constant byte address 0x4 - core index']
  #allocation1 [shape = 'u32[144,128]{1,0:T(1,128)}', space=vmem, size = 0x12000, scoped, tag = 'internal scratch']
  %s0 = inlined_call_operand.vmem [shape: bf16[512,256], index: 0, kind: input, shape index: {}]
  %s1 = inlined_call_operand.vmem [shape: bf16[256,512], index: 1, kind: input, shape index: {}]
  %s2 = inlined_call_operand.vmem [shape: f32[1,256], index: 2, kind: input, shape index: {}]
  %s3 = inlined_call_operand.vmem [shape: f32[1,256], index: 3, kind: input, shape index: {}]
  %s4 = inlined_call_operand.vmem [shape: bf16[512,512], index: 4, kind: output, shape index: {0}]
  %s5 = inlined_call_operand.vmem [shape: f32[2,1,512], index: 5, kind: output, shape index: {1}]
  %s6 = inlined_call_operand.vmem [shape: f32[2,1,512], index: 6, kind: output, shape index: {2}]
  %7 = xla_tuple %s4, %s5, %s6
  %s8 = sld [smem:[#allocation0]]
  $region77: #{sdf_forward.11} parent=0
    _
  %s10 = ssub.s32 1, %s8
  %s11 = scalar_select 0, %s10, %s8
  loop: start=0, step=1, limit=4
  $region2: #{sdf_forward.11} parent=0 // loop_pre_header
    _
  $region3: #{sdf_forward.11} parent=0 // loop_header
    %s13 = sphi 0, %s17
    %p14 = scmp.ge.s32.totalorder %s13, 4
    %s20 = sphi 0, %s32
    %s21 = sphi 0, %s28
    %s22 = sphi 0, %s20
    %s23 = sphi 0, %s21
    %s24 = sphi 0, %s22
    %s25 = sphi 0, %s23
    %s37 = sphi 0, %s39
    %s40 = sphi 0, %s37
    %s41 = sphi 0, %s40
    %s57 = sphi 0, %s41
    %s61 = sphi 0, %s61
    %s63 = sphi 0, %s61
    %s64 = sphi 0, %s63
    %s78 = sphi 0, %s64
    %s82 = sphi 0, %s82
    %s84 = sphi 0, %s82
    %s85 = sphi 0, %s84
    %s99 = sphi 0, %s85
    %s103 = sphi 0, %s103
    %s105 = sphi 0, %s103
    %s106 = sphi 0, %s105
    %s120 = sphi 0, %s106
    %s128 = sphi 0, %s130
    %s131 = sphi 0, %s128
    %s132 = sphi 0, %s131
    %s148 = sphi 0, %s132
    %s154 = sphi 0, %s156
    %s157 = sphi 0, %s154
    %s158 = sphi 0, %s157
    %s174 = sphi 0, %s158
    %s180 = sphi 0, %s182
    %s183 = sphi 0, %s180
    %s184 = sphi 0, %s183
    %s200 = sphi 0, %s184
  $region4: #{sdf_forward.11} parent=0 // loop_header_branch
    %16 = sbr.rel (%p14) target = $region8
  $region5: #{sdf_forward.11} parent=0 // loop_body
    %s18 = ssub.s32 %s13, 1
    %s19 = ssub.s32 %s13, 2
    %s26 = sadd.s32 1, %s21
    %p27 = scmp.ge.s32.totalorder %s26, 1
    %s28 = scalar_select %p27, 0, %s26
    %s29 = sadd.s32 1, %s20
    %s30 = scalar_select %p27, %s29, %s20
    %p31 = scmp.ge.s32.totalorder %s30, 2
    %s32 = scalar_select %p31, 0, %s30
    %s33 = sadd.s32 %s20, %s21
    %s34 = sadd.s32 %s32, %s28
    %s35 = ssub.s32 %s33, %s34
    %p36 = scmp.eq.s32.totalorder %s35, 0
    %s38 = sadd.s32 %s37, 1
    %s39 = scalar_select %p36, %s37, %s38
    %p42 = pneg %p36
    %p43 = scmp.eq.s32.totalorder %s13, 1
    %p44 = por %p42, %p43
    %p45 = scmp.ne.s32.totalorder %s37, %s40
    %p46 = scmp.eq.s32.totalorder %s13, 0
    %p47 = por %p45, %p46
    %p48 = scmp.ne.s32.totalorder %s37, %s40
    %p49 = scmp.eq.s32.totalorder %s18, 1
    %p50 = por %p48, %p49
    %p51 = scmp.ne.s32.totalorder %s40, %s41
    %p52 = scmp.eq.s32.totalorder %s18, 0
    %p53 = por %p51, %p52
    %p54 = scmp.ne.s32.totalorder %s40, %s41
    %p55 = scmp.eq.s32.totalorder %s19, 1
    %p56 = por %p54, %p55
    %p58 = scmp.ne.s32.totalorder %s41, %s57
    %p59 = scmp.eq.s32.totalorder %s19, 0
    %p60 = por %p58, %p59
    %s62 = sadd.s32 %s61, 1
    %p65 = scmp.eq.s32.totalorder %s13, 1
    %p66 = scmp.ne.s32.totalorder %s61, %s63
    %p67 = scmp.eq.s32.totalorder %s13, 0
    %p68 = por %p66, %p67
    %p69 = scmp.ne.s32.totalorder %s61, %s63
    %p70 = scmp.eq.s32.totalorder %s18, 1
    %p71 = por %p69, %p70
    %p72 = scmp.ne.s32.totalorder %s63, %s64
    %p73 = scmp.eq.s32.totalorder %s18, 0
    %p74 = por %p72, %p73
    %p75 = scmp.ne.s32.totalorder %s63, %s64
    %p76 = scmp.eq.s32.totalorder %s19, 1
    %p77 = por %p75, %p76
    %p79 = scmp.ne.s32.totalorder %s64, %s78
    %p80 = scmp.eq.s32.totalorder %s19, 0
    %p81 = por %p79, %p80
    %s83 = sadd.s32 %s82, 1
    %p86 = scmp.eq.s32.totalorder %s13, 1
    %p87 = scmp.ne.s32.totalorder %s82, %s84
    %p88 = scmp.eq.s32.totalorder %s13, 0
    %p89 = por %p87, %p88
    %p90 = scmp.ne.s32.totalorder %s82, %s84
    %p91 = scmp.eq.s32.totalorder %s18, 1
    %p92 = por %p90, %p91
    %p93 = scmp.ne.s32.totalorder %s84, %s85
    %p94 = scmp.eq.s32.totalorder %s18, 0
    %p95 = por %p93, %p94
    %p96 = scmp.ne.s32.totalorder %s84, %s85
    %p97 = scmp.eq.s32.totalorder %s19, 1
    %p98 = por %p96, %p97
    %p100 = scmp.ne.s32.totalorder %s85, %s99
    %p101 = scmp.eq.s32.totalorder %s19, 0
    %p102 = por %p100, %p101
    %s104 = sadd.s32 %s103, 1
    %p107 = scmp.eq.s32.totalorder %s13, 1
    %p108 = scmp.ne.s32.totalorder %s103, %s105
    %p109 = scmp.eq.s32.totalorder %s13, 0
    %p110 = por %p108, %p109
    %p111 = scmp.ne.s32.totalorder %s103, %s105
    %p112 = scmp.eq.s32.totalorder %s18, 1
    %p113 = por %p111, %p112
    %p114 = scmp.ne.s32.totalorder %s105, %s106
    %p115 = scmp.eq.s32.totalorder %s18, 0
    %p116 = por %p114, %p115
    %p117 = scmp.ne.s32.totalorder %s105, %s106
    %p118 = scmp.eq.s32.totalorder %s19, 1
    %p119 = por %p117, %p118
    %p121 = scmp.ne.s32.totalorder %s106, %s120
    %p122 = scmp.eq.s32.totalorder %s19, 0
    %p123 = por %p121, %p122
    %s124 = sadd.s32 %s20, %s21
    %s125 = sadd.s32 %s32, %s28
    %s126 = ssub.s32 %s124, %s125
    %p127 = scmp.eq.s32.totalorder %s126, 0
    %s129 = sadd.s32 %s128, 1
    %s130 = scalar_select %p127, %s128, %s129
    %p133 = pneg %p127
    %p134 = scmp.eq.s32.totalorder %s13, 1
    %p135 = por %p133, %p134
    %p136 = scmp.ne.s32.totalorder %s128, %s131
    %p137 = scmp.eq.s32.totalorder %s13, 0
    %p138 = por %p136, %p137
    %p139 = scmp.ne.s32.totalorder %s128, %s131
    %p140 = scmp.eq.s32.totalorder %s18, 1
    %p141 = por %p139, %p140
    %p142 = scmp.ne.s32.totalorder %s131, %s132
    %p143 = scmp.eq.s32.totalorder %s18, 0
    %p144 = por %p142, %p143
    %p145 = scmp.ne.s32.totalorder %s131, %s132
    %p146 = scmp.eq.s32.totalorder %s19, 1
    %p147 = por %p145, %p146
    %p149 = scmp.ne.s32.totalorder %s132, %s148
    %p150 = scmp.eq.s32.totalorder %s19, 0
    %p151 = por %p149, %p150
    %s152 = ssub.s32 %s20, %s32
    %p153 = scmp.eq.s32.totalorder %s152, 0
    %s155 = sadd.s32 %s154, 1
    %s156 = scalar_select %p153, %s154, %s155
    %p159 = pneg %p153
    %p160 = scmp.eq.s32.totalorder %s13, 1
    %p161 = por %p159, %p160
    %p162 = scmp.ne.s32.totalorder %s154, %s157
    %p163 = scmp.eq.s32.totalorder %s13, 0
    %p164 = por %p162, %p163
    %p165 = scmp.ne.s32.totalorder %s154, %s157
    %p166 = scmp.eq.s32.totalorder %s18, 1
    %p167 = por %p165, %p166
    %p168 = scmp.ne.s32.totalorder %s157, %s158
    %p169 = scmp.eq.s32.totalorder %s18, 0
    %p170 = por %p168, %p169
    %p171 = scmp.ne.s32.totalorder %s157, %s158
    %p172 = scmp.eq.s32.totalorder %s19, 1
    %p173 = por %p171, %p172
    %p175 = scmp.ne.s32.totalorder %s158, %s174
    %p176 = scmp.eq.s32.totalorder %s19, 0
    %p177 = por %p175, %p176
    %s178 = ssub.s32 %s20, %s32
    %p179 = scmp.eq.s32.totalorder %s178, 0
    %s181 = sadd.s32 %s180, 1
    %s182 = scalar_select %p179, %s180, %s181
    %p185 = pneg %p179
    %p186 = scmp.eq.s32.totalorder %s13, 1
    %p187 = por %p185, %p186
    %p188 = scmp.ne.s32.totalorder %s180, %s183
    %p189 = scmp.eq.s32.totalorder %s13, 0
    %p190 = por %p188, %p189
    %p191 = scmp.ne.s32.totalorder %s180, %s183
    %p192 = scmp.eq.s32.totalorder %s18, 1
    %p193 = por %p191, %p192
    %p194 = scmp.ne.s32.totalorder %s183, %s184
    %p195 = scmp.eq.s32.totalorder %s18, 0
    %p196 = por %p194, %p195
    %p197 = scmp.ne.s32.totalorder %s183, %s184
    %p198 = scmp.eq.s32.totalorder %s19, 1
    %p199 = por %p197, %p198
    %p201 = scmp.ne.s32.totalorder %s184, %s200
    %p202 = scmp.eq.s32.totalorder %s19, 0
    %p203 = por %p201, %p202
    %p204 = scmp.le.s32.totalorder 1, %s13
    %p205 = scmp.lt.s32.totalorder %s13, 3
    %p206 = pnand %p204, %p205
    %p207 = pneg %p206
    // Predicated region
    $region9: #{sdf_forward.11} parent=5 // pred_check
      _
    $region10: #{sdf_forward.11} parent=5 // pred_check_branch
      %209 = sbr.rel (%p206) target = $region12
    $region11: #{sdf_forward.11} parent=5 // pred_region
      %s210 = ssub.s32 %s13, 1
      // Predicated region
      $region13: #{sdf_forward.11} parent=11 // pred_check
        %p211 = pneg %p74
      $region14: #{sdf_forward.11} parent=11 // pred_check_branch
        %213 = sbr.rel (%p211) target = $region16
      $region15: #{sdf_forward.11} parent=11 // pred_region
        _
      $region16: #{sdf_forward.11} parent=11 // pred_fallthru
        _
      // Predicated region
      $region17: #{sdf_forward.11} parent=11 // pred_check
        %p214 = pneg %p95
      $region18: #{sdf_forward.11} parent=11 // pred_check_branch
        %216 = sbr.rel (%p214) target = $region20
      $region19: #{sdf_forward.11} parent=11 // pred_region
        _
      $region20: #{sdf_forward.11} parent=11 // pred_fallthru
        _
      // Predicated region
      $region21: #{sdf_forward.11} parent=11 // pred_check
        %p217 = pneg %p116
      $region22: #{sdf_forward.11} parent=11 // pred_check_branch
        %219 = sbr.rel (%p217) target = $region24
      $region23: #{sdf_forward.11} parent=11 // pred_region
        _
      $region24: #{sdf_forward.11} parent=11 // pred_fallthru
        _
    $region12: #{sdf_forward.11} parent=5 // pred_fallthru
      _
    %p220 = scmp.lt.s32.totalorder %s13, 2
    // Predicated region
    $region25: #{sdf_forward.11} parent=5 // pred_check
      %p221 = pneg %p220
    $region26: #{sdf_forward.11} parent=5 // pred_check_branch
      %223 = sbr.rel (%p221) target = $region28
    $region27: #{sdf_forward.11} parent=5 // pred_region
      // Predicated region
      $region29: #{sdf_forward.11} parent=27 // pred_check
        %p224 = pneg %p47
      $region30: #{sdf_forward.11} parent=27 // pred_check_branch
        %226 = sbr.rel (%p224) target = $region32
      $region31: #{sdf_forward.11} parent=27 // pred_region
        %s227 = sadd.s32 %s20, %s21
        %s228 = smul.u32 32, %s227
        %p229 = scmp.lt.s32.totalorder %s228, 63
        %s230 = scalar_select %p229, %s228, 63
        %s231 = smul.addr %s230, 2
        %s232 = smul.addr %s231, 4
        %s233 = scalar_lea.vmem %s0, %s232
        %s234 = sadd.s32 %s20, %s21
        %s235 = smul.u32 32, %s234
      $region32: #{sdf_forward.11} parent=27 // pred_fallthru
        _
    $region28: #{sdf_forward.11} parent=5 // pred_fallthru
      _
    %p236 = scmp.le.s32.totalorder 1, %s13
    %p237 = scmp.lt.s32.totalorder %s13, 3
    %p238 = pnand %p236, %p237
    %p239 = pneg %p238
    // Predicated region
    $region33: #{sdf_forward.11} parent=5 // pred_check
      _
    $region34: #{sdf_forward.11} parent=5 // pred_check_branch
      %241 = sbr.rel (%p238) target = $region36
    $region35: #{sdf_forward.11} parent=5 // pred_region
      %s242 = ssub.s32 %s13, 1
      %s243 = sadd.s32 %s22, %s23
      %s244 = smul.u32 32, %s243
      %p245 = scmp.lt.s32.totalorder %s244, 63
      %s246 = scalar_select %p245, %s244, 63
      %s247 = smul.addr %s246, 2
      %s248 = smul.addr %s247, 4
      %s249 = scalar_lea.vmem %s0, %s248
      %p250 = pneg %p53
      %p251 = pneg %p50
      %p252 = pneg %p74
      %p253 = pneg %p71
      %p254 = pneg %p95
      %p255 = pneg %p92
      %p256 = pneg %p116
      %p257 = pneg %p113
      %p258 = pneg %p144
      %p259 = pneg %p141
      %s260 = sadd.s32 %s22, %s23
      %s261 = smul.u32 32, %s260
      %p262 = scmp.lt.s32.totalorder %s261, 63
      %s263 = scalar_select %p262, %s261, 63
      %s264 = smul.addr %s263, 4
      %s265 = smul.addr %s264, 4
      %s266 = scalar_lea.vmem %s4, %s265
      %p267 = pneg %p170
      %p268 = pneg %p167
      %p269 = scmp.lt.s32.totalorder %s22, 1
      %s270 = scalar_select %p269, %s22, 1
      %s271 = smul.addr %s270, 4
      %s272 = scalar_lea.vmem %s5, %s271
      %p273 = pneg %p196
      %p274 = pneg %p193
      %p275 = scmp.lt.s32.totalorder %s22, 1
      %s276 = scalar_select %p275, %s22, 1
      %s277 = smul.addr %s276, 4
      %s278 = scalar_lea.vmem %s6, %s277
      %s279 = sadd.s32 %s22, %s23
      %s280 = smul.u32 32, %s279
      %p281 = scmp.lt.s32.totalorder %s280, 63
      %s282 = scalar_select %p281, %s280, 63
      %s283 = smul.addr %s282, 2
      %s284 = smul.addr %s283, 4
      %s285 = scalar_lea.vmem %s0, %s284
      %s286 = sadd.s32 %s22, %s23
      %s287 = smul.u32 32, %s286
      %s288 = sadd.s32 %s22, %s23
      %s289 = smul.u32 32, %s288
      %p290 = scmp.lt.s32.totalorder %s289, 63
      %s291 = scalar_select %p290, %s289, 63
      %s292 = smul.addr %s291, 4
      %s293 = smul.addr %s292, 4
      %s294 = scalar_lea.vmem %s4, %s293
      %s295 = sadd.s32 %s22, %s23
      %s296 = smul.u32 32, %s295
      %p297 = scmp.lt.s32.totalorder %s22, 1
      %s298 = scalar_select %p297, %s22, 1
      %s299 = smul.addr %s298, 4
      %s300 = scalar_lea.vmem %s5, %s299
      %p301 = scmp.lt.s32.totalorder %s22, 1
      %s302 = scalar_select %p301, %s22, 1
      %s303 = smul.addr %s302, 4
      %s304 = scalar_lea.vmem %s6, %s303
      %p305 = scmp.eq.s32.totalorder %s23, 0
      // Predicated region
      $region37: #{sdf_forward.11} parent=35 // pred_check
        %p306 = pneg %p305
      $region38: #{sdf_forward.11} parent=35 // pred_check_branch
        %308 = sbr.rel (%p306) target = $region40
      $region39: #{sdf_forward.11} parent=35 // pred_region
        %v309 = vlaneseq
        %vm310 = vcmp.ge.s32.totalorder %v309, 0
        %vm311 = vcmp.lt.s32.totalorder %v309, 512
        %vm312 = vmand %vm310, %vm311
        %313 = vst.msk [vmem:[%s300] sm:$0xf] %vm312, 0.0
        %314 = vst.msk [vmem:[%s304] sm:$0xf] %vm312, 0.0
      $region40: #{sdf_forward.11} parent=35 // pred_fallthru
        _
      %v315 = vld [vmem:[%s285] sm:$0xff]
      %v316 = vld [vmem:[%s285 + $0x8] sm:$0xff]
      %v317 = vld [vmem:[%s285 + $0x10] sm:$0xff]
      %v318 = vld [vmem:[%s285 + $0x18] sm:$0xff]
      %v319 = vld [vmem:[%s285 + $0x20] sm:$0xff]
      %v320 = vld [vmem:[%s285 + $0x28] sm:$0xff]
      %v321 = vld [vmem:[%s285 + $0x30] sm:$0xff]
      %v322 = vld [vmem:[%s285 + $0x38] sm:$0xff]
      %v323 = vld [vmem:[%s285 + $0x40] sm:$0xff]
      %v324 = vld [vmem:[%s285 + $0x48] sm:$0xff]
      %v325 = vld [vmem:[%s285 + $0x50] sm:$0xff]
      %v326 = vld [vmem:[%s285 + $0x58] sm:$0xff]
      %v327 = vld [vmem:[%s285 + $0x60] sm:$0xff]
      %v328 = vld [vmem:[%s285 + $0x68] sm:$0xff]
      %v329 = vld [vmem:[%s285 + $0x70] sm:$0xff]
      %v330 = vld [vmem:[%s285 + $0x78] sm:$0xff]
      %v331 = vld [vmem:[%s285 + $0x80] sm:$0xff]
      %v332 = vld [vmem:[%s285 + $0x88] sm:$0xff]
      %v333 = vld [vmem:[%s285 + $0x90] sm:$0xff]
      %v334 = vld [vmem:[%s285 + $0x98] sm:$0xff]
      %v335 = vld [vmem:[%s285 + $0xa0] sm:$0xff]
      %v336 = vld [vmem:[%s285 + $0xa8] sm:$0xff]
      %v337 = vld [vmem:[%s285 + $0xb0] sm:$0xff]
      %v338 = vld [vmem:[%s285 + $0xb8] sm:$0xff]
      %v339 = vld [vmem:[%s285 + $0xc0] sm:$0xff]
      %v340 = vld [vmem:[%s285 + $0xc8] sm:$0xff]
      %v341 = vld [vmem:[%s285 + $0xd0] sm:$0xff]
      %v342 = vld [vmem:[%s285 + $0xd8] sm:$0xff]
      %v343 = vld [vmem:[%s285 + $0xe0] sm:$0xff]
      %v344 = vld [vmem:[%s285 + $0xe8] sm:$0xff]
      %v345 = vld [vmem:[%s285 + $0xf0] sm:$0xff]
      %v346 = vld [vmem:[%s285 + $0xf8] sm:$0xff]
      %v347 = vunpack.c.l.bf16 %v315
      %v348 = vunpack.c.h.bf16 %v315
      %v349 = vunpack.c.l.bf16 %v316
      %v350 = vunpack.c.h.bf16 %v316
      %v351 = vunpack.c.l.bf16 %v317
      %v352 = vunpack.c.h.bf16 %v317
      %v353 = vunpack.c.l.bf16 %v318
      %v354 = vunpack.c.h.bf16 %v318
      %v355 = vunpack.c.l.bf16 %v319
      %v356 = vunpack.c.h.bf16 %v319
      %v357 = vunpack.c.l.bf16 %v320
      %v358 = vunpack.c.h.bf16 %v320
      %v359 = vunpack.c.l.bf16 %v321
      %v360 = vunpack.c.h.bf16 %v321
      %v361 = vunpack.c.l.bf16 %v322
      %v362 = vunpack.c.h.bf16 %v322
      %v363 = vunpack.c.l.bf16 %v323
      %v364 = vunpack.c.h.bf16 %v323
      %v365 = vunpack.c.l.bf16 %v324
      %v366 = vunpack.c.h.bf16 %v324
      %v367 = vunpack.c.l.bf16 %v325
      %v368 = vunpack.c.h.bf16 %v325
      %v369 = vunpack.c.l.bf16 %v326
      %v370 = vunpack.c.h.bf16 %v326
      %v371 = vunpack.c.l.bf16 %v327
      %v372 = vunpack.c.h.bf16 %v327
      %v373 = vunpack.c.l.bf16 %v328
      %v374 = vunpack.c.h.bf16 %v328
      %v375 = vunpack.c.l.bf16 %v329
      %v376 = vunpack.c.h.bf16 %v329
      %v377 = vunpack.c.l.bf16 %v330
      %v378 = vunpack.c.h.bf16 %v330
      %v379 = vunpack.c.l.bf16 %v331
      %v380 = vunpack.c.h.bf16 %v331
      %v381 = vunpack.c.l.bf16 %v332
      %v382 = vunpack.c.h.bf16 %v332
      %v383 = vunpack.c.l.bf16 %v333
      %v384 = vunpack.c.h.bf16 %v333
      %v385 = vunpack.c.l.bf16 %v334
      %v386 = vunpack.c.h.bf16 %v334
      %v387 = vunpack.c.l.bf16 %v335
      %v388 = vunpack.c.h.bf16 %v335
      %v389 = vunpack.c.l.bf16 %v336
      %v390 = vunpack.c.h.bf16 %v336
      %v391 = vunpack.c.l.bf16 %v337
      %v392 = vunpack.c.h.bf16 %v337
      %v393 = vunpack.c.l.bf16 %v338
      %v394 = vunpack.c.h.bf16 %v338
      %v395 = vunpack.c.l.bf16 %v339
      %v396 = vunpack.c.h.bf16 %v339
      %v397 = vunpack.c.l.bf16 %v340
      %v398 = vunpack.c.h.bf16 %v340
      %v399 = vunpack.c.l.bf16 %v341
      %v400 = vunpack.c.h.bf16 %v341
      %v401 = vunpack.c.l.bf16 %v342
      %v402 = vunpack.c.h.bf16 %v342
      %v403 = vunpack.c.l.bf16 %v343
      %v404 = vunpack.c.h.bf16 %v343
      %v405 = vunpack.c.l.bf16 %v344
      %v406 = vunpack.c.h.bf16 %v344
      %v407 = vunpack.c.l.bf16 %v345
      %v408 = vunpack.c.h.bf16 %v345
      %v409 = vunpack.c.l.bf16 %v346
      %v410 = vunpack.c.h.bf16 %v346
      %v411 = vld [vmem:[%s2] sm:$0x3]
      %v413 = vlaneseq
      %v414 = vshrl.u32 %v413, 7
      %v415 = vsub.s32 0, %v414
      %v416 = vrot.slane %v411, %v415
      %v417 = vlaneseq
      %v418 = vshrl.u32 %v417, 7
      %v419 = vsub.s32 1, %v418
      %v420 = vrot.slane %v411, %v419
      %v423 = vmul.f32 %v347, %v416
      %v424 = vmul.f32 %v348, %v420
      %v425 = vmul.f32 %v349, %v416
      %v426 = vmul.f32 %v350, %v420
      %v427 = vmul.f32 %v351, %v416
      %v428 = vmul.f32 %v352, %v420
      %v429 = vmul.f32 %v353, %v416
      %v430 = vmul.f32 %v354, %v420
      %v431 = vmul.f32 %v355, %v416
      %v432 = vmul.f32 %v356, %v420
      %v433 = vmul.f32 %v357, %v416
      %v434 = vmul.f32 %v358, %v420
      %v435 = vmul.f32 %v359, %v416
      %v436 = vmul.f32 %v360, %v420
      %v437 = vmul.f32 %v361, %v416
      %v438 = vmul.f32 %v362, %v420
      %v439 = vmul.f32 %v363, %v416
      %v440 = vmul.f32 %v364, %v420
      %v441 = vmul.f32 %v365, %v416
      %v442 = vmul.f32 %v366, %v420
      %v443 = vmul.f32 %v367, %v416
      %v444 = vmul.f32 %v368, %v420
      %v445 = vmul.f32 %v369, %v416
      %v446 = vmul.f32 %v370, %v420
      %v447 = vmul.f32 %v371, %v416
      %v448 = vmul.f32 %v372, %v420
      %v449 = vmul.f32 %v373, %v416
      %v450 = vmul.f32 %v374, %v420
      %v451 = vmul.f32 %v375, %v416
      %v452 = vmul.f32 %v376, %v420
      %v453 = vmul.f32 %v377, %v416
      %v454 = vmul.f32 %v378, %v420
      %v455 = vmul.f32 %v379, %v416
      %v456 = vmul.f32 %v380, %v420
      %v457 = vmul.f32 %v381, %v416
      %v458 = vmul.f32 %v382, %v420
      %v459 = vmul.f32 %v383, %v416
      %v460 = vmul.f32 %v384, %v420
      %v461 = vmul.f32 %v385, %v416
      %v462 = vmul.f32 %v386, %v420
      %v463 = vmul.f32 %v387, %v416
      %v464 = vmul.f32 %v388, %v420
      %v465 = vmul.f32 %v389, %v416
      %v466 = vmul.f32 %v390, %v420
      %v467 = vmul.f32 %v391, %v416
      %v468 = vmul.f32 %v392, %v420
      %v469 = vmul.f32 %v393, %v416
      %v470 = vmul.f32 %v394, %v420
      %v471 = vmul.f32 %v395, %v416
      %v472 = vmul.f32 %v396, %v420
      %v473 = vmul.f32 %v397, %v416
      %v474 = vmul.f32 %v398, %v420
      %v475 = vmul.f32 %v399, %v416
      %v476 = vmul.f32 %v400, %v420
      %v477 = vmul.f32 %v401, %v416
      %v478 = vmul.f32 %v402, %v420
      %v479 = vmul.f32 %v403, %v416
      %v480 = vmul.f32 %v404, %v420
      %v481 = vmul.f32 %v405, %v416
      %v482 = vmul.f32 %v406, %v420
      %v483 = vmul.f32 %v407, %v416
      %v484 = vmul.f32 %v408, %v420
      %v485 = vmul.f32 %v409, %v416
      %v486 = vmul.f32 %v410, %v420
      %v487 = vld [vmem:[%s3] sm:$0x3]
      %v489 = vlaneseq
      %v490 = vshrl.u32 %v489, 7
      %v491 = vsub.s32 0, %v490
      %v492 = vrot.slane %v487, %v491
      %v493 = vlaneseq
      %v494 = vshrl.u32 %v493, 7
      %v495 = vsub.s32 1, %v494
      %v496 = vrot.slane %v487, %v495
      %v499 = vadd.f32 %v423, %v492
      %v500 = vadd.f32 %v424, %v496
      %v501 = vadd.f32 %v425, %v492
      %v502 = vadd.f32 %v426, %v496
      %v503 = vadd.f32 %v427, %v492
      %v504 = vadd.f32 %v428, %v496
      %v505 = vadd.f32 %v429, %v492
      %v506 = vadd.f32 %v430, %v496
      %v507 = vadd.f32 %v431, %v492
      %v508 = vadd.f32 %v432, %v496
      %v509 = vadd.f32 %v433, %v492
      %v510 = vadd.f32 %v434, %v496
      %v511 = vadd.f32 %v435, %v492
      %v512 = vadd.f32 %v436, %v496
      %v513 = vadd.f32 %v437, %v492
      %v514 = vadd.f32 %v438, %v496
      %v515 = vadd.f32 %v439, %v492
      %v516 = vadd.f32 %v440, %v496
      %v517 = vadd.f32 %v441, %v492
      %v518 = vadd.f32 %v442, %v496
      %v519 = vadd.f32 %v443, %v492
      %v520 = vadd.f32 %v444, %v496
      %v521 = vadd.f32 %v445, %v492
      %v522 = vadd.f32 %v446, %v496
      %v523 = vadd.f32 %v447, %v492
      %v524 = vadd.f32 %v448, %v496
      %v525 = vadd.f32 %v449, %v492
      %v526 = vadd.f32 %v450, %v496
      %v527 = vadd.f32 %v451, %v492
      %v528 = vadd.f32 %v452, %v496
      %v529 = vadd.f32 %v453, %v492
      %v530 = vadd.f32 %v454, %v496
      %v531 = vadd.f32 %v455, %v492
      %v532 = vadd.f32 %v456, %v496
      %v533 = vadd.f32 %v457, %v492
      %v534 = vadd.f32 %v458, %v496
      %v535 = vadd.f32 %v459, %v492
      %v536 = vadd.f32 %v460, %v496
      %v537 = vadd.f32 %v461, %v492
      %v538 = vadd.f32 %v462, %v496
      %v539 = vadd.f32 %v463, %v492
      %v540 = vadd.f32 %v464, %v496
      %v541 = vadd.f32 %v465, %v492
      %v542 = vadd.f32 %v466, %v496
      %v543 = vadd.f32 %v467, %v492
      %v544 = vadd.f32 %v468, %v496
      %v545 = vadd.f32 %v469, %v492
      %v546 = vadd.f32 %v470, %v496
      %v547 = vadd.f32 %v471, %v492
      %v548 = vadd.f32 %v472, %v496
      %v549 = vadd.f32 %v473, %v492
      %v550 = vadd.f32 %v474, %v496
      %v551 = vadd.f32 %v475, %v492
      %v552 = vadd.f32 %v476, %v496
      %v553 = vadd.f32 %v477, %v492
      %v554 = vadd.f32 %v478, %v496
      %v555 = vadd.f32 %v479, %v492
      %v556 = vadd.f32 %v480, %v496
      %v557 = vadd.f32 %v481, %v492
      %v558 = vadd.f32 %v482, %v496
      %v559 = vadd.f32 %v483, %v492
      %v560 = vadd.f32 %v484, %v496
      %v561 = vadd.f32 %v485, %v492
      %v562 = vadd.f32 %v486, %v496
      %v563 = vmax.f32 %v499, 0.0
      %v564 = vmax.f32 %v500, 0.0
      %v565 = vmax.f32 %v501, 0.0
      %v566 = vmax.f32 %v502, 0.0
      %v567 = vmax.f32 %v503, 0.0
      %v568 = vmax.f32 %v504, 0.0
      %v569 = vmax.f32 %v505, 0.0
      %v570 = vmax.f32 %v506, 0.0
      %v571 = vmax.f32 %v507, 0.0
      %v572 = vmax.f32 %v508, 0.0
      %v573 = vmax.f32 %v509, 0.0
      %v574 = vmax.f32 %v510, 0.0
      %v575 = vmax.f32 %v511, 0.0
      %v576 = vmax.f32 %v512, 0.0
      %v577 = vmax.f32 %v513, 0.0
      %v578 = vmax.f32 %v514, 0.0
      %v579 = vmax.f32 %v515, 0.0
      %v580 = vmax.f32 %v516, 0.0
      %v581 = vmax.f32 %v517, 0.0
      %v582 = vmax.f32 %v518, 0.0
      %v583 = vmax.f32 %v519, 0.0
      %v584 = vmax.f32 %v520, 0.0
      %v585 = vmax.f32 %v521, 0.0
      %v586 = vmax.f32 %v522, 0.0
      %v587 = vmax.f32 %v523, 0.0
      %v588 = vmax.f32 %v524, 0.0
      %v589 = vmax.f32 %v525, 0.0
      %v590 = vmax.f32 %v526, 0.0
      %v591 = vmax.f32 %v527, 0.0
      %v592 = vmax.f32 %v528, 0.0
      %v593 = vmax.f32 %v529, 0.0
      %v594 = vmax.f32 %v530, 0.0
      %v595 = vmax.f32 %v531, 0.0
      %v596 = vmax.f32 %v532, 0.0
      %v597 = vmax.f32 %v533, 0.0
      %v598 = vmax.f32 %v534, 0.0
      %v599 = vmax.f32 %v535, 0.0
      %v600 = vmax.f32 %v536, 0.0
      %v601 = vmax.f32 %v537, 0.0
      %v602 = vmax.f32 %v538, 0.0
      %v603 = vmax.f32 %v539, 0.0
      %v604 = vmax.f32 %v540, 0.0
      %v605 = vmax.f32 %v541, 0.0
      %v606 = vmax.f32 %v542, 0.0
      %v607 = vmax.f32 %v543, 0.0
      %v608 = vmax.f32 %v544, 0.0
      %v609 = vmax.f32 %v545, 0.0
      %v610 = vmax.f32 %v546, 0.0
      %v611 = vmax.f32 %v547, 0.0
      %v612 = vmax.f32 %v548, 0.0
      %v613 = vmax.f32 %v549, 0.0
      %v614 = vmax.f32 %v550, 0.0
      %v615 = vmax.f32 %v551, 0.0
      %v616 = vmax.f32 %v552, 0.0
      %v617 = vmax.f32 %v553, 0.0
      %v618 = vmax.f32 %v554, 0.0
      %v619 = vmax.f32 %v555, 0.0
      %v620 = vmax.f32 %v556, 0.0
      %v621 = vmax.f32 %v557, 0.0
      %v622 = vmax.f32 %v558, 0.0
      %v623 = vmax.f32 %v559, 0.0
      %v624 = vmax.f32 %v560, 0.0
      %v625 = vmax.f32 %v561, 0.0
      %v626 = vmax.f32 %v562, 0.0
      %v627 = vpack.c.bf16 %v565, %v563
      %v628 = vpack.c.bf16 %v566, %v564
      %v629 = vpack.c.bf16 %v569, %v567
      %v630 = vpack.c.bf16 %v570, %v568
      %v631 = vpack.c.bf16 %v573, %v571
      %v632 = vpack.c.bf16 %v574, %v572
      %v633 = vpack.c.bf16 %v577, %v575
      %v634 = vpack.c.bf16 %v578, %v576
      %v635 = vpack.c.bf16 %v581, %v579
      %v636 = vpack.c.bf16 %v582, %v580
      %v637 = vpack.c.bf16 %v585, %v583
      %v638 = vpack.c.bf16 %v586, %v584
      %v639 = vpack.c.bf16 %v589, %v587
      %v640 = vpack.c.bf16 %v590, %v588
      %v641 = vpack.c.bf16 %v593, %v591
      %v642 = vpack.c.bf16 %v594, %v592
      %v643 = vpack.c.bf16 %v597, %v595
      %v644 = vpack.c.bf16 %v598, %v596
      %v645 = vpack.c.bf16 %v601, %v599
      %v646 = vpack.c.bf16 %v602, %v600
      %v647 = vpack.c.bf16 %v605, %v603
      %v648 = vpack.c.bf16 %v606, %v604
      %v649 = vpack.c.bf16 %v609, %v607
      %v650 = vpack.c.bf16 %v610, %v608
      %v651 = vpack.c.bf16 %v613, %v611
      %v652 = vpack.c.bf16 %v614, %v612
      %v653 = vpack.c.bf16 %v617, %v615
      %v654 = vpack.c.bf16 %v618, %v616
      %v655 = vpack.c.bf16 %v621, %v619
      %v656 = vpack.c.bf16 %v622, %v620
      %v657 = vpack.c.bf16 %v625, %v623
      %v658 = vpack.c.bf16 %v626, %v624
      %v659 = vld [vmem:[%s1] sm:$0xff]
      %v660 = vld [vmem:[%s1 + $0x8] sm:$0xff]
      %v661 = vld [vmem:[%s1 + $0x10] sm:$0xff]
      %v662 = vld [vmem:[%s1 + $0x18] sm:$0xff]
      %v663 = vld [vmem:[%s1 + $0x20] sm:$0xff]
      %v664 = vld [vmem:[%s1 + $0x28] sm:$0xff]
      %v665 = vld [vmem:[%s1 + $0x30] sm:$0xff]
      %v666 = vld [vmem:[%s1 + $0x38] sm:$0xff]
      %v667 = vld [vmem:[%s1 + $0x40] sm:$0xff]
      %v668 = vld [vmem:[%s1 + $0x48] sm:$0xff]
      %v669 = vld [vmem:[%s1 + $0x50] sm:$0xff]
      %v670 = vld [vmem:[%s1 + $0x58] sm:$0xff]
      %v671 = vld [vmem:[%s1 + $0x60] sm:$0xff]
      %v672 = vld [vmem:[%s1 + $0x68] sm:$0xff]
      %v673 = vld [vmem:[%s1 + $0x70] sm:$0xff]
      %v674 = vld [vmem:[%s1 + $0x78] sm:$0xff]
      %v675 = vld [vmem:[%s1 + $0x80] sm:$0xff]
      %v676 = vld [vmem:[%s1 + $0x88] sm:$0xff]
      %v677 = vld [vmem:[%s1 + $0x90] sm:$0xff]
      %v678 = vld [vmem:[%s1 + $0x98] sm:$0xff]
      %v679 = vld [vmem:[%s1 + $0xa0] sm:$0xff]
      %v680 = vld [vmem:[%s1 + $0xa8] sm:$0xff]
      %v681 = vld [vmem:[%s1 + $0xb0] sm:$0xff]
      %v682 = vld [vmem:[%s1 + $0xb8] sm:$0xff]
      %v683 = vld [vmem:[%s1 + $0xc0] sm:$0xff]
      %v684 = vld [vmem:[%s1 + $0xc8] sm:$0xff]
      %v685 = vld [vmem:[%s1 + $0xd0] sm:$0xff]
      %v686 = vld [vmem:[%s1 + $0xd8] sm:$0xff]
      %v687 = vld [vmem:[%s1 + $0xe0] sm:$0xff]
      %v688 = vld [vmem:[%s1 + $0xe8] sm:$0xff]
      %v689 = vld [vmem:[%s1 + $0xf0] sm:$0xff]
      %v690 = vld [vmem:[%s1 + $0xf8] sm:$0xff]
      %v691 = vld [vmem:[%s1 + $0x100] sm:$0xff]
      %v692 = vld [vmem:[%s1 + $0x108] sm:$0xff]
      %v693 = vld [vmem:[%s1 + $0x110] sm:$0xff]
      %v694 = vld [vmem:[%s1 + $0x118] sm:$0xff]
      %v695 = vld [vmem:[%s1 + $0x120] sm:$0xff]
      %v696 = vld [vmem:[%s1 + $0x128] sm:$0xff]
      %v697 = vld [vmem:[%s1 + $0x130] sm:$0xff]
      %v698 = vld [vmem:[%s1 + $0x138] sm:$0xff]
      %v699 = vld [vmem:[%s1 + $0x140] sm:$0xff]
      %v700 = vld [vmem:[%s1 + $0x148] sm:$0xff]
      %v701 = vld [vmem:[%s1 + $0x150] sm:$0xff]
      %v702 = vld [vmem:[%s1 + $0x158] sm:$0xff]
      %v703 = vld [vmem:[%s1 + $0x160] sm:$0xff]
      %v704 = vld [vmem:[%s1 + $0x168] sm:$0xff]
      %v705 = vld [vmem:[%s1 + $0x170] sm:$0xff]
      %v706 = vld [vmem:[%s1 + $0x178] sm:$0xff]
      %v707 = vld [vmem:[%s1 + $0x180] sm:$0xff]
      %v708 = vld [vmem:[%s1 + $0x188] sm:$0xff]
      %v709 = vld [vmem:[%s1 + $0x190] sm:$0xff]
      %v710 = vld [vmem:[%s1 + $0x198] sm:$0xff]
      %v711 = vld [vmem:[%s1 + $0x1a0] sm:$0xff]
      %v712 = vld [vmem:[%s1 + $0x1a8] sm:$0xff]
      %v713 = vld [vmem:[%s1 + $0x1b0] sm:$0xff]
      %v714 = vld [vmem:[%s1 + $0x1b8] sm:$0xff]
      %v715 = vld [vmem:[%s1 + $0x1c0] sm:$0xff]
      %v716 = vld [vmem:[%s1 + $0x1c8] sm:$0xff]
      %v717 = vld [vmem:[%s1 + $0x1d0] sm:$0xff]
      %v718 = vld [vmem:[%s1 + $0x1d8] sm:$0xff]
      %v719 = vld [vmem:[%s1 + $0x1e0] sm:$0xff]
      %v720 = vld [vmem:[%s1 + $0x1e8] sm:$0xff]
      %v721 = vld [vmem:[%s1 + $0x1f0] sm:$0xff]
      %v722 = vld [vmem:[%s1 + $0x1f8] sm:$0xff]
      %v787 = vunpack.c.l.b16 %v659
      %v788 = vunpack.c.h.b16 %v659
      %v789 = vunpack.c.l.b16 %v660
      %v790 = vunpack.c.h.b16 %v660
      %v791 = vunpack.c.l.b16 %v661
      %v792 = vunpack.c.h.b16 %v661
      %v793 = vunpack.c.l.b16 %v662
      %v794 = vunpack.c.h.b16 %v662
      %v795 = vunpack.c.l.b16 %v663
      %v796 = vunpack.c.h.b16 %v663
      %v797 = vunpack.c.l.b16 %v664
      %v798 = vunpack.c.h.b16 %v664
      %v799 = vunpack.c.l.b16 %v665
      %v800 = vunpack.c.h.b16 %v665
      %v801 = vunpack.c.l.b16 %v666
      %v802 = vunpack.c.h.b16 %v666
      %v803 = vunpack.c.l.b16 %v667
      %v804 = vunpack.c.h.b16 %v667
      %v805 = vunpack.c.l.b16 %v668
      %v806 = vunpack.c.h.b16 %v668
      %v807 = vunpack.c.l.b16 %v669
      %v808 = vunpack.c.h.b16 %v669
      %v809 = vunpack.c.l.b16 %v670
      %v810 = vunpack.c.h.b16 %v670
      %v811 = vunpack.c.l.b16 %v671
      %v812 = vunpack.c.h.b16 %v671
      %v813 = vunpack.c.l.b16 %v672
      %v814 = vunpack.c.h.b16 %v672
      %v815 = vunpack.c.l.b16 %v673
      %v816 = vunpack.c.h.b16 %v673
      %v817 = vunpack.c.l.b16 %v674
      %v818 = vunpack.c.h.b16 %v674
      %v819 = vunpack.c.l.b16 %v675
      %v820 = vunpack.c.h.b16 %v675
      %v821 = vunpack.c.l.b16 %v676
      %v822 = vunpack.c.h.b16 %v676
      %v823 = vunpack.c.l.b16 %v677
      %v824 = vunpack.c.h.b16 %v677
      %v825 = vunpack.c.l.b16 %v678
      %v826 = vunpack.c.h.b16 %v678
      %v827 = vunpack.c.l.b16 %v679
      %v828 = vunpack.c.h.b16 %v679
      %v829 = vunpack.c.l.b16 %v680
      %v830 = vunpack.c.h.b16 %v680
      %v831 = vunpack.c.l.b16 %v681
      %v832 = vunpack.c.h.b16 %v681
      %v833 = vunpack.c.l.b16 %v682
      %v834 = vunpack.c.h.b16 %v682
      %v835 = vunpack.c.l.b16 %v683
      %v836 = vunpack.c.h.b16 %v683
      %v837 = vunpack.c.l.b16 %v684
      %v838 = vunpack.c.h.b16 %v684
      %v839 = vunpack.c.l.b16 %v685
      %v840 = vunpack.c.h.b16 %v685
      %v841 = vunpack.c.l.b16 %v686
      %v842 = vunpack.c.h.b16 %v686
      %v843 = vunpack.c.l.b16 %v687
      %v844 = vunpack.c.h.b16 %v687
      %v845 = vunpack.c.l.b16 %v688
      %v846 = vunpack.c.h.b16 %v688
      %v847 = vunpack.c.l.b16 %v689
      %v848 = vunpack.c.h.b16 %v689
      %v849 = vunpack.c.l.b16 %v690
      %v850 = vunpack.c.h.b16 %v690
      %v851 = vunpack.c.l.b16 %v691
      %v852 = vunpack.c.h.b16 %v691
      %v853 = vunpack.c.l.b16 %v692
      %v854 = vunpack.c.h.b16 %v692
      %v855 = vunpack.c.l.b16 %v693
      %v856 = vunpack.c.h.b16 %v693
      %v857 = vunpack.c.l.b16 %v694
      %v858 = vunpack.c.h.b16 %v694
      %v859 = vunpack.c.l.b16 %v695
      %v860 = vunpack.c.h.b16 %v695
      %v861 = vunpack.c.l.b16 %v696
      %v862 = vunpack.c.h.b16 %v696
      %v863 = vunpack.c.l.b16 %v697
      %v864 = vunpack.c.h.b16 %v697
      %v865 = vunpack.c.l.b16 %v698
      %v866 = vunpack.c.h.b16 %v698
      %v867 = vunpack.c.l.b16 %v699
      %v868 = vunpack.c.h.b16 %v699
      %v869 = vunpack.c.l.b16 %v700
      %v870 = vunpack.c.h.b16 %v700
      %v871 = vunpack.c.l.b16 %v701
      %v872 = vunpack.c.h.b16 %v701
      %v873 = vunpack.c.l.b16 %v702
      %v874 = vunpack.c.h.b16 %v702
      %v875 = vunpack.c.l.b16 %v703
      %v876 = vunpack.c.h.b16 %v703
      %v877 = vunpack.c.l.b16 %v704
      %v878 = vunpack.c.h.b16 %v704
      %v879 = vunpack.c.l.b16 %v705
      %v880 = vunpack.c.h.b16 %v705
      %v881 = vunpack.c.l.b16 %v706
      %v882 = vunpack.c.h.b16 %v706
      %v883 = vunpack.c.l.b16 %v707
      %v884 = vunpack.c.h.b16 %v707
      %v885 = vunpack.c.l.b16 %v708
      %v886 = vunpack.c.h.b16 %v708
      %v887 = vunpack.c.l.b16 %v709
      %v888 = vunpack.c.h.b16 %v709
      %v889 = vunpack.c.l.b16 %v710
      %v890 = vunpack.c.h.b16 %v710
      %v891 = vunpack.c.l.b16 %v711
      %v892 = vunpack.c.h.b16 %v711
      %v893 = vunpack.c.l.b16 %v712
      %v894 = vunpack.c.h.b16 %v712
      %v895 = vunpack.c.l.b16 %v713
      %v896 = vunpack.c.h.b16 %v713
      %v897 = vunpack.c.l.b16 %v714
      %v898 = vunpack.c.h.b16 %v714
      %v899 = vunpack.c.l.b16 %v715
      %v900 = vunpack.c.h.b16 %v715
      %v901 = vunpack.c.l.b16 %v716
      %v902 = vunpack.c.h.b16 %v716
      %v903 = vunpack.c.l.b16 %v717
      %v904 = vunpack.c.h.b16 %v717
      %v905 = vunpack.c.l.b16 %v718
      %v906 = vunpack.c.h.b16 %v718
      %v907 = vunpack.c.l.b16 %v719
      %v908 = vunpack.c.h.b16 %v719
      %v909 = vunpack.c.l.b16 %v720
      %v910 = vunpack.c.h.b16 %v720
      %v911 = vunpack.c.l.b16 %v721
      %v912 = vunpack.c.h.b16 %v721
      %v913 = vunpack.c.l.b16 %v722
      %v914 = vunpack.c.h.b16 %v722
      %v915 = vpack.c.b16 %v791, %v787
      %v916 = vpack.c.b16 %v792, %v788
      %v917 = vpack.c.b16 %v793, %v789
      %v918 = vpack.c.b16 %v794, %v790
      %v919 = vpack.c.b16 %v799, %v795
      %v920 = vpack.c.b16 %v800, %v796
      %v921 = vpack.c.b16 %v801, %v797
      %v922 = vpack.c.b16 %v802, %v798
      %v923 = vpack.c.b16 %v807, %v803
      %v924 = vpack.c.b16 %v808, %v804
      %v925 = vpack.c.b16 %v809, %v805
      %v926 = vpack.c.b16 %v810, %v806
      %v927 = vpack.c.b16 %v815, %v811
      %v928 = vpack.c.b16 %v816, %v812
      %v929 = vpack.c.b16 %v817, %v813
      %v930 = vpack.c.b16 %v818, %v814
      %v931 = vpack.c.b16 %v823, %v819
      %v932 = vpack.c.b16 %v824, %v820
      %v933 = vpack.c.b16 %v825, %v821
      %v934 = vpack.c.b16 %v826, %v822
      %v935 = vpack.c.b16 %v831, %v827
      %v936 = vpack.c.b16 %v832, %v828
      %v937 = vpack.c.b16 %v833, %v829
      %v938 = vpack.c.b16 %v834, %v830
      %v939 = vpack.c.b16 %v839, %v835
      %v940 = vpack.c.b16 %v840, %v836
      %v941 = vpack.c.b16 %v841, %v837
      %v942 = vpack.c.b16 %v842, %v838
      %v943 = vpack.c.b16 %v847, %v843
      %v944 = vpack.c.b16 %v848, %v844
      %v945 = vpack.c.b16 %v849, %v845
      %v946 = vpack.c.b16 %v850, %v846
      %v947 = vpack.c.b16 %v855, %v851
      %v948 = vpack.c.b16 %v856, %v852
      %v949 = vpack.c.b16 %v857, %v853
      %v950 = vpack.c.b16 %v858, %v854
      %v951 = vpack.c.b16 %v863, %v859
      %v952 = vpack.c.b16 %v864, %v860
      %v953 = vpack.c.b16 %v865, %v861
      %v954 = vpack.c.b16 %v866, %v862
      %v955 = vpack.c.b16 %v871, %v867
      %v956 = vpack.c.b16 %v872, %v868
      %v957 = vpack.c.b16 %v873, %v869
      %v958 = vpack.c.b16 %v874, %v870
      %v959 = vpack.c.b16 %v879, %v875
      %v960 = vpack.c.b16 %v880, %v876
      %v961 = vpack.c.b16 %v881, %v877
      %v962 = vpack.c.b16 %v882, %v878
      %v963 = vpack.c.b16 %v887, %v883
      %v964 = vpack.c.b16 %v888, %v884
      %v965 = vpack.c.b16 %v889, %v885
      %v966 = vpack.c.b16 %v890, %v886
      %v967 = vpack.c.b16 %v895, %v891
      %v968 = vpack.c.b16 %v896, %v892
      %v969 = vpack.c.b16 %v897, %v893
      %v970 = vpack.c.b16 %v898, %v894
      %v971 = vpack.c.b16 %v903, %v899
      %v972 = vpack.c.b16 %v904, %v900
      %v973 = vpack.c.b16 %v905, %v901
      %v974 = vpack.c.b16 %v906, %v902
      %v975 = vpack.c.b16 %v911, %v907
      %v976 = vpack.c.b16 %v912, %v908
      %v977 = vpack.c.b16 %v913, %v909
      %v978 = vpack.c.b16 %v914, %v910
      %1043 = vmatprep.subr.bf16.mxu0 %v916
      %1044 = vmatpush1.bf16.msra.mxu0 %v915
      %1045 = vmatprep.subr.bf16.mxu0 %v920
      %1046 = vmatpush1.bf16.msra.mxu0 %v919
      %1047 = vmatprep.subr.bf16.mxu0 %v924
      %1048 = vmatpush1.bf16.msra.mxu0 %v923
      %1049 = vmatprep.subr.bf16.mxu0 %v928
      %1050 = vmatpush1.bf16.msra.mxu0 %v927
      %1051 = vmatprep.subr.bf16.mxu0 %v932
      %1052 = vmatpush1.bf16.msra.mxu0 %v931
      %1053 = vmatprep.subr.bf16.mxu0 %v936
      %1054 = vmatpush1.bf16.msra.mxu0 %v935
      %1055 = vmatprep.subr.bf16.mxu0 %v940
      %1056 = vmatpush1.bf16.msra.mxu0 %v939
      %1057 = vmatprep.subr.bf16.mxu0 %v944
      %1058 = vmatpush1.bf16.msra.mxu0 %v943
      %1059 = vmatprep.subr.bf16.mxu0 %v948
      %1060 = vmatpush1.bf16.msra.mxu0 %v947
      %1061 = vmatprep.subr.bf16.mxu0 %v952
      %1062 = vmatpush1.bf16.msra.mxu0 %v951
      %1063 = vmatprep.subr.bf16.mxu0 %v956
      %1064 = vmatpush1.bf16.msra.mxu0 %v955
      %1065 = vmatprep.subr.bf16.mxu0 %v960
      %1066 = vmatpush1.bf16.msra.mxu0 %v959
      %1067 = vmatprep.subr.bf16.mxu0 %v964
      %1068 = vmatpush1.bf16.msra.mxu0 %v963
      %1069 = vmatprep.subr.bf16.mxu0 %v968
      %1070 = vmatpush1.bf16.msra.mxu0 %v967
      %1071 = vmatprep.subr.bf16.mxu0 %v972
      %1072 = vmatpush1.bf16.msra.mxu0 %v971
      %1073 = vmatprep.subr.bf16.mxu0 %v976
      %1074 = vmatpush1.bf16.msra.mxu0 %v975
      %1075 = vmatprep.mubr.bf16.mxu0 %v628
      %1076 = vmatmul.mubr.bf16.gmra.mrb[0].mxu0 %v627
      %v1077 = vpop.f32.mrb[0].mxu0
      %v1078 = vadd.f32 0.0, %v1077
      %v1079 = vpop.f32.mrb[0].mxu0
      %v1080 = vadd.f32 0.0, %v1079
      %v1081 = vpop.f32.mrb[0].mxu0
      %v1082 = vadd.f32 0.0, %v1081
      %v1083 = vpop.f32.mrb[0].mxu0
      %v1084 = vadd.f32 0.0, %v1083
      %1085 = vmatprep.mubr.bf16.mxu0 %v630
      %1086 = vmatmul.mubr.bf16.gmra.mrb[0].mxu0 %v629
      %v1087 = vpop.f32.mrb[0].mxu0
      %v1088 = vadd.f32 0.0, %v1087
      %v1089 = vpop.f32.mrb[0].mxu0
      %v1090 = vadd.f32 0.0, %v1089
      %v1091 = vpop.f32.mrb[0].mxu0
      %v1092 = vadd.f32 0.0, %v1091
      %v1093 = vpop.f32.mrb[0].mxu0
      %v1094 = vadd.f32 0.0, %v1093
      %1095 = vmatprep.mubr.bf16.mxu0 %v632
      %1096 = vmatmul.mubr.bf16.gmra.mrb[0].mxu0 %v631
      %v1097 = vpop.f32.mrb[0].mxu0
      %v1098 = vadd.f32 0.0, %v1097
      %v1099 = vpop.f32.mrb[0].mxu0
      %v1100 = vadd.f32 0.0, %v1099
      %v1101 = vpop.f32.mrb[0].mxu0
      %v1102 = vadd.f32 0.0, %v1101
      %v1103 = vpop.f32.mrb[0].mxu0
      %v1104 = vadd.f32 0.0, %v1103
      %1105 = vmatprep.mubr.bf16.mxu0 %v634
      %1106 = vmatmul.mubr.bf16.gmra.mrb[0].mxu0 %v633
      %v1107 = vpop.f32.mrb[0].mxu0
      %v1108 = vadd.f32 0.0, %v1107
      %v1109 = vpop.f32.mrb[0].mxu0
      %v1110 = vadd.f32 0.0, %v1109
      %v1111 = vpop.f32.mrb[0].mxu0
      %v1112 = vadd.f32 0.0, %v1111
      %v1113 = vpop.f32.mrb[0].mxu0
      %v1114 = vadd.f32 0.0, %v1113
      %1115 = vmatprep.mubr.bf16.mxu0 %v636
      %1116 = vmatmul.mubr.bf16.gmra.mrb[0].mxu0 %v635
      %v1117 = vpop.f32.mrb[0].mxu0
      %v1118 = vadd.f32 0.0, %v1117
      %v1119 = vpop.f32.mrb[0].mxu0
      %v1120 = vadd.f32 0.0, %v1119
      %v1121 = vpop.f32.mrb[0].mxu0
      %v1122 = vadd.f32 0.0, %v1121
      %v1123 = vpop.f32.mrb[0].mxu0
      %v1124 = vadd.f32 0.0, %v1123
      %1125 = vmatprep.mubr.bf16.mxu0 %v638
      %1126 = vmatmul.mubr.bf16.gmra.mrb[0].mxu0 %v637
      %v1127 = vpop.f32.mrb[0].mxu0
      %v1128 = vadd.f32 0.0, %v1127
      %v1129 = vpop.f32.mrb[0].mxu0
      %v1130 = vadd.f32 0.0, %v1129
      %v1131 = vpop.f32.mrb[0].mxu0
      %v1132 = vadd.f32 0.0, %v1131
      %v1133 = vpop.f32.mrb[0].mxu0
      %v1134 = vadd.f32 0.0, %v1133
      %1135 = vmatprep.mubr.bf16.mxu0 %v640
      %1136 = vmatmul.mubr.bf16.gmra.mrb[0].mxu0 %v639
      %v1137 = vpop.f32.mrb[0].mxu0
      %v1138 = vadd.f32 0.0, %v1137
      %v1139 = vpop.f32.mrb[0].mxu0
      %v1140 = vadd.f32 0.0, %v1139
      %v1141 = vpop.f32.mrb[0].mxu0
      %v1142 = vadd.f32 0.0, %v1141
      %v1143 = vpop.f32.mrb[0].mxu0
      %v1144 = vadd.f32 0.0, %v1143
      %1145 = vmatprep.mubr.bf16.mxu0 %v642
      %1146 = vmatmul.mubr.bf16.gmra.mrb[0].mxu0 %v641
      %v1147 = vpop.f32.mrb[0].mxu0
      %v1148 = vadd.f32 0.0, %v1147
      %v1149 = vpop.f32.mrb[0].mxu0
      %v1150 = vadd.f32 0.0, %v1149
      %v1151 = vpop.f32.mrb[0].mxu0
      %v1152 = vadd.f32 0.0, %v1151
      %v1153 = vpop.f32.mrb[0].mxu0
      %v1154 = vadd.f32 0.0, %v1153
      %1155 = vmatprep.mubr.bf16.mxu0 %v644
      %1156 = vmatmul.mubr.bf16.gmra.mrb[0].mxu0 %v643
      %v1157 = vpop.f32.mrb[0].mxu0
      %v1158 = vadd.f32 0.0, %v1157
      %v1159 = vpop.f32.mrb[0].mxu0
      %v1160 = vadd.f32 0.0, %v1159
      %v1161 = vpop.f32.mrb[0].mxu0
      %v1162 = vadd.f32 0.0, %v1161
      %v1163 = vpop.f32.mrb[0].mxu0
      %v1164 = vadd.f32 0.0, %v1163
      %1165 = vmatprep.mubr.bf16.mxu0 %v646
      %1166 = vmatmul.mubr.bf16.gmra.mrb[0].mxu0 %v645
      %v1167 = vpop.f32.mrb[0].mxu0
      %v1168 = vadd.f32 0.0, %v1167
      %v1169 = vpop.f32.mrb[0].mxu0
      %v1170 = vadd.f32 0.0, %v1169
      %v1171 = vpop.f32.mrb[0].mxu0
      %v1172 = vadd.f32 0.0, %v1171
      %v1173 = vpop.f32.mrb[0].mxu0
      %v1174 = vadd.f32 0.0, %v1173
      %1175 = vmatprep.mubr.bf16.mxu0 %v648
      %1176 = vmatmul.mubr.bf16.gmra.mrb[0].mxu0 %v647
      %v1177 = vpop.f32.mrb[0].mxu0
      %v1178 = vadd.f32 0.0, %v1177
      %v1179 = vpop.f32.mrb[0].mxu0
      %v1180 = vadd.f32 0.0, %v1179
      %v1181 = vpop.f32.mrb[0].mxu0
      %v1182 = vadd.f32 0.0, %v1181
      %v1183 = vpop.f32.mrb[0].mxu0
      %v1184 = vadd.f32 0.0, %v1183
      %1185 = vmatprep.mubr.bf16.mxu0 %v650
      %1186 = vmatmul.mubr.bf16.gmra.mrb[0].mxu0 %v649
      %v1187 = vpop.f32.mrb[0].mxu0
      %v1188 = vadd.f32 0.0, %v1187
      %v1189 = vpop.f32.mrb[0].mxu0
      %v1190 = vadd.f32 0.0, %v1189
      %v1191 = vpop.f32.mrb[0].mxu0
      %v1192 = vadd.f32 0.0, %v1191
      %v1193 = vpop.f32.mrb[0].mxu0
      %v1194 = vadd.f32 0.0, %v1193
      %1195 = vmatprep.mubr.bf16.mxu0 %v652
      %1196 = vmatmul.mubr.bf16.gmra.mrb[0].mxu0 %v651
      %v1197 = vpop.f32.mrb[0].mxu0
      %v1198 = vadd.f32 0.0, %v1197
      %v1199 = vpop.f32.mrb[0].mxu0
      %v1200 = vadd.f32 0.0, %v1199
      %v1201 = vpop.f32.mrb[0].mxu0
      %v1202 = vadd.f32 0.0, %v1201
      %v1203 = vpop.f32.mrb[0].mxu0
      %v1204 = vadd.f32 0.0, %v1203
      %1205 = vmatprep.mubr.bf16.mxu0 %v654
      %1206 = vmatmul.mubr.bf16.gmra.mrb[0].mxu0 %v653
      %v1207 = vpop.f32.mrb[0].mxu0
      %v1208 = vadd.f32 0.0, %v1207
      %v1209 = vpop.f32.mrb[0].mxu0
      %v1210 = vadd.f32 0.0, %v1209
      %v1211 = vpop.f32.mrb[0].mxu0
      %v1212 = vadd.f32 0.0, %v1211
      %v1213 = vpop.f32.mrb[0].mxu0
      %v1214 = vadd.f32 0.0, %v1213
      %1215 = vmatprep.mubr.bf16.mxu0 %v656
      %1216 = vmatmul.mubr.bf16.gmra.mrb[0].mxu0 %v655
      %v1217 = vpop.f32.mrb[0].mxu0
      %v1218 = vadd.f32 0.0, %v1217
      %v1219 = vpop.f32.mrb[0].mxu0
      %v1220 = vadd.f32 0.0, %v1219
      %v1221 = vpop.f32.mrb[0].mxu0
      %v1222 = vadd.f32 0.0, %v1221
      %v1223 = vpop.f32.mrb[0].mxu0
      %v1224 = vadd.f32 0.0, %v1223
      %1225 = vmatprep.mubr.bf16.mxu0 %v658
      %1226 = vmatmul.mubr.bf16.gmra.mrb[0].mxu0 %v657
      %v1227 = vpop.f32.mrb[0].mxu0
      %v1228 = vadd.f32 0.0, %v1227
      %v1229 = vpop.f32.mrb[0].mxu0
      %v1230 = vadd.f32 0.0, %v1229
      %v1231 = vpop.f32.mrb[0].mxu0
      %v1232 = vadd.f32 0.0, %v1231
      %v1233 = vpop.f32.mrb[0].mxu0
      %v1234 = vadd.f32 0.0, %v1233
      %1235 = vdwg.mxu0
      %1236 = vmatprep.subr.bf16.mxu0 %v918
      %1237 = vmatpush1.bf16.msra.mxu0 %v917
      %1238 = vmatprep.subr.bf16.mxu0 %v922
      %1239 = vmatpush1.bf16.msra.mxu0 %v921
      %1240 = vmatprep.subr.bf16.mxu0 %v926
      %1241 = vmatpush1.bf16.msra.mxu0 %v925
      %1242 = vmatprep.subr.bf16.mxu0 %v930
      %1243 = vmatpush1.bf16.msra.mxu0 %v929
      %1244 = vmatprep.subr.bf16.mxu0 %v934
      %1245 = vmatpush1.bf16.msra.mxu0 %v933
      %1246 = vmatprep.subr.bf16.mxu0 %v938
      %1247 = vmatpush1.bf16.msra.mxu0 %v937
      %1248 = vmatprep.subr.bf16.mxu0 %v942
      %1249 = vmatpush1.bf16.msra.mxu0 %v941
      %1250 = vmatprep.subr.bf16.mxu0 %v946
      %1251 = vmatpush1.bf16.msra.mxu0 %v945
      %1252 = vmatprep.subr.bf16.mxu0 %v950
      %1253 = vmatpush1.bf16.msra.mxu0 %v949
      %1254 = vmatprep.subr.bf16.mxu0 %v954
      %1255 = vmatpush1.bf16.msra.mxu0 %v953
      %1256 = vmatprep.subr.bf16.mxu0 %v958
      %1257 = vmatpush1.bf16.msra.mxu0 %v957
      %1258 = vmatprep.subr.bf16.mxu0 %v962
      %1259 = vmatpush1.bf16.msra.mxu0 %v961
      %1260 = vmatprep.subr.bf16.mxu0 %v966
      %1261 = vmatpush1.bf16.msra.mxu0 %v965
      %1262 = vmatprep.subr.bf16.mxu0 %v970
      %1263 = vmatpush1.bf16.msra.mxu0 %v969
      %1264 = vmatprep.subr.bf16.mxu0 %v974
      %1265 = vmatpush1.bf16.msra.mxu0 %v973
      %1266 = vmatprep.subr.bf16.mxu0 %v978
      %1267 = vmatpush1.bf16.msra.mxu0 %v977
      %1268 = vmatprep.mubr.bf16.mxu0 %v628
      %1269 = vmatmul.mubr.bf16.gmra.mrb[0].mxu0 %v627
      %v1270 = vpop.f32.mrb[0].mxu0
      %v1271 = vadd.f32 0.0, %v1270
      %v1272 = vpop.f32.mrb[0].mxu0
      %v1273 = vadd.f32 0.0, %v1272
      %v1274 = vpop.f32.mrb[0].mxu0
      %v1275 = vadd.f32 0.0, %v1274
      %v1276 = vpop.f32.mrb[0].mxu0
      %v1277 = vadd.f32 0.0, %v1276
      %1278 = vmatprep.mubr.bf16.mxu0 %v630
      %1279 = vmatmul.mubr.bf16.gmra.mrb[0].mxu0 %v629
      %v1280 = vpop.f32.mrb[0].mxu0
      %v1281 = vadd.f32 0.0, %v1280
      %v1282 = vpop.f32.mrb[0].mxu0
      %v1283 = vadd.f32 0.0, %v1282
      %v1284 = vpop.f32.mrb[0].mxu0
      %v1285 = vadd.f32 0.0, %v1284
      %v1286 = vpop.f32.mrb[0].mxu0
      %v1287 = vadd.f32 0.0, %v1286
      %1288 = vmatprep.mubr.bf16.mxu0 %v632
      %1289 = vmatmul.mubr.bf16.gmra.mrb[0].mxu0 %v631
      %v1290 = vpop.f32.mrb[0].mxu0
      %v1291 = vadd.f32 0.0, %v1290
      %v1292 = vpop.f32.mrb[0].mxu0
      %v1293 = vadd.f32 0.0, %v1292
      %v1294 = vpop.f32.mrb[0].mxu0
      %v1295 = vadd.f32 0.0, %v1294
      %v1296 = vpop.f32.mrb[0].mxu0
      %v1297 = vadd.f32 0.0, %v1296
      %1298 = vmatprep.mubr.bf16.mxu0 %v634
      %1299 = vmatmul.mubr.bf16.gmra.mrb[0].mxu0 %v633
      %v1300 = vpop.f32.mrb[0].mxu0
      %v1301 = vadd.f32 0.0, %v1300
      %v1302 = vpop.f32.mrb[0].mxu0
      %v1303 = vadd.f32 0.0, %v1302
      %v1304 = vpop.f32.mrb[0].mxu0
      %v1305 = vadd.f32 0.0, %v1304
      %v1306 = vpop.f32.mrb[0].mxu0
      %v1307 = vadd.f32 0.0, %v1306
      %1308 = vmatprep.mubr.bf16.mxu0 %v636
      %1309 = vmatmul.mubr.bf16.gmra.mrb[0].mxu0 %v635
      %v1310 = vpop.f32.mrb[0].mxu0
      %v1311 = vadd.f32 0.0, %v1310
      %v1312 = vpop.f32.mrb[0].mxu0
      %v1313 = vadd.f32 0.0, %v1312
      %v1314 = vpop.f32.mrb[0].mxu0
      %v1315 = vadd.f32 0.0, %v1314
      %v1316 = vpop.f32.mrb[0].mxu0
      %v1317 = vadd.f32 0.0, %v1316
      %1318 = vmatprep.mubr.bf16.mxu0 %v638
      %1319 = vmatmul.mubr.bf16.gmra.mrb[0].mxu0 %v637
      %v1320 = vpop.f32.mrb[0].mxu0
      %v1321 = vadd.f32 0.0, %v1320
      %v1322 = vpop.f32.mrb[0].mxu0
      %v1323 = vadd.f32 0.0, %v1322
      %v1324 = vpop.f32.mrb[0].mxu0
      %v1325 = vadd.f32 0.0, %v1324
      %v1326 = vpop.f32.mrb[0].mxu0
      %v1327 = vadd.f32 0.0, %v1326
      %1328 = vmatprep.mubr.bf16.mxu0 %v640
      %1329 = vmatmul.mubr.bf16.gmra.mrb[0].mxu0 %v639
      %v1330 = vpop.f32.mrb[0].mxu0
      %v1331 = vadd.f32 0.0, %v1330
      %v1332 = vpop.f32.mrb[0].mxu0
      %v1333 = vadd.f32 0.0, %v1332
      %v1334 = vpop.f32.mrb[0].mxu0
      %v1335 = vadd.f32 0.0, %v1334
      %v1336 = vpop.f32.mrb[0].mxu0
      %v1337 = vadd.f32 0.0, %v1336
      %1338 = vmatprep.mubr.bf16.mxu0 %v642
      %1339 = vmatmul.mubr.bf16.gmra.mrb[0].mxu0 %v641
      %v1340 = vpop.f32.mrb[0].mxu0
      %v1341 = vadd.f32 0.0, %v1340
      %v1342 = vpop.f32.mrb[0].mxu0
      %v1343 = vadd.f32 0.0, %v1342
      %v1344 = vpop.f32.mrb[0].mxu0
      %v1345 = vadd.f32 0.0, %v1344
      %v1346 = vpop.f32.mrb[0].mxu0
      %v1347 = vadd.f32 0.0, %v1346
      %1348 = vmatprep.mubr.bf16.mxu0 %v644
      %1349 = vmatmul.mubr.bf16.gmra.mrb[0].mxu0 %v643
      %v1350 = vpop.f32.mrb[0].mxu0
      %v1351 = vadd.f32 0.0, %v1350
      %v1352 = vpop.f32.mrb[0].mxu0
      %v1353 = vadd.f32 0.0, %v1352
      %v1354 = vpop.f32.mrb[0].mxu0
      %v1355 = vadd.f32 0.0, %v1354
      %v1356 = vpop.f32.mrb[0].mxu0
      %v1357 = vadd.f32 0.0, %v1356
      %1358 = vmatprep.mubr.bf16.mxu0 %v646
      %1359 = vmatmul.mubr.bf16.gmra.mrb[0].mxu0 %v645
      %v1360 = vpop.f32.mrb[0].mxu0
      %v1361 = vadd.f32 0.0, %v1360
      %v1362 = vpop.f32.mrb[0].mxu0
      %v1363 = vadd.f32 0.0, %v1362
      %v1364 = vpop.f32.mrb[0].mxu0
      %v1365 = vadd.f32 0.0, %v1364
      %v1366 = vpop.f32.mrb[0].mxu0
      %v1367 = vadd.f32 0.0, %v1366
      %1368 = vmatprep.mubr.bf16.mxu0 %v648
      %1369 = vmatmul.mubr.bf16.gmra.mrb[0].mxu0 %v647
      %v1370 = vpop.f32.mrb[0].mxu0
      %v1371 = vadd.f32 0.0, %v1370
      %v1372 = vpop.f32.mrb[0].mxu0
      %v1373 = vadd.f32 0.0, %v1372
      %v1374 = vpop.f32.mrb[0].mxu0
      %v1375 = vadd.f32 0.0, %v1374
      %v1376 = vpop.f32.mrb[0].mxu0
      %v1377 = vadd.f32 0.0, %v1376
      %1378 = vmatprep.mubr.bf16.mxu0 %v650
      %1379 = vmatmul.mubr.bf16.gmra.mrb[0].mxu0 %v649
      %v1380 = vpop.f32.mrb[0].mxu0
      %v1381 = vadd.f32 0.0, %v1380
      %v1382 = vpop.f32.mrb[0].mxu0
      %v1383 = vadd.f32 0.0, %v1382
      %v1384 = vpop.f32.mrb[0].mxu0
      %v1385 = vadd.f32 0.0, %v1384
      %v1386 = vpop.f32.mrb[0].mxu0
      %v1387 = vadd.f32 0.0, %v1386
      %1388 = vmatprep.mubr.bf16.mxu0 %v652
      %1389 = vmatmul.mubr.bf16.gmra.mrb[0].mxu0 %v651
      %v1390 = vpop.f32.mrb[0].mxu0
      %v1391 = vadd.f32 0.0, %v1390
      %v1392 = vpop.f32.mrb[0].mxu0
      %v1393 = vadd.f32 0.0, %v1392
      %v1394 = vpop.f32.mrb[0].mxu0
      %v1395 = vadd.f32 0.0, %v1394
      %v1396 = vpop.f32.mrb[0].mxu0
      %v1397 = vadd.f32 0.0, %v1396
      %1398 = vmatprep.mubr.bf16.mxu0 %v654
      %1399 = vmatmul.mubr.bf16.gmra.mrb[0].mxu0 %v653
      %v1400 = vpop.f32.mrb[0].mxu0
      %v1401 = vadd.f32 0.0, %v1400
      %v1402 = vpop.f32.mrb[0].mxu0
      %v1403 = vadd.f32 0.0, %v1402
      %v1404 = vpop.f32.mrb[0].mxu0
      %v1405 = vadd.f32 0.0, %v1404
      %v1406 = vpop.f32.mrb[0].mxu0
      %v1407 = vadd.f32 0.0, %v1406
      %1408 = vmatprep.mubr.bf16.mxu0 %v656
      %1409 = vmatmul.mubr.bf16.gmra.mrb[0].mxu0 %v655
      %v1410 = vpop.f32.mrb[0].mxu0
      %v1411 = vadd.f32 0.0, %v1410
      %v1412 = vpop.f32.mrb[0].mxu0
      %v1413 = vadd.f32 0.0, %v1412
      %v1414 = vpop.f32.mrb[0].mxu0
      %v1415 = vadd.f32 0.0, %v1414
      %v1416 = vpop.f32.mrb[0].mxu0
      %v1417 = vadd.f32 0.0, %v1416
      %1418 = vmatprep.mubr.bf16.mxu0 %v658
      %1419 = vmatmul.mubr.bf16.gmra.mrb[0].mxu0 %v657
      %v1420 = vpop.f32.mrb[0].mxu0
      %v1421 = vadd.f32 0.0, %v1420
      %v1422 = vpop.f32.mrb[0].mxu0
      %v1423 = vadd.f32 0.0, %v1422
      %v1424 = vpop.f32.mrb[0].mxu0
      %v1425 = vadd.f32 0.0, %v1424
      %v1426 = vpop.f32.mrb[0].mxu0
      %v1427 = vadd.f32 0.0, %v1426
      %1428 = vdwg.mxu0
      %s1429 = sadd.s32 %s22, %s23
      %s1430 = smul.u32 %s1429, 256
      %s1431 = sadd.s32 %s1430, 256
      %p1432 = scmp.le.s32.totalorder %s1431, 400
      // Predicated region
      $region41: #{sdf_forward.11} parent=35 // pred_check
        %p1433 = pneg %p1432
      $region42: #{sdf_forward.11} parent=35 // pred_check_branch
        %1435 = sbr.rel (%p1433) target = $region44
      $region43: #{sdf_forward.11} parent=35 // pred_region
        %v1436 = vld [vmem:[%s300] sm:$0xf]
        %v1437 = vadd.f32 %v1078, %v1082
        %v1438 = vadd.f32 %v1437, %v1088
        %v1439 = vadd.f32 %v1438, %v1092
        %v1440 = vadd.f32 %v1439, %v1098
        %v1441 = vadd.f32 %v1440, %v1102
        %v1442 = vadd.f32 %v1441, %v1108
        %v1443 = vadd.f32 %v1442, %v1112
        %v1444 = vadd.f32 %v1443, %v1118
        %v1445 = vadd.f32 %v1444, %v1122
        %v1446 = vadd.f32 %v1445, %v1128
        %v1447 = vadd.f32 %v1446, %v1132
        %v1448 = vadd.f32 %v1447, %v1138
        %v1449 = vadd.f32 %v1448, %v1142
        %v1450 = vadd.f32 %v1449, %v1148
        %v1451 = vadd.f32 %v1450, %v1152
        %v1452 = vadd.f32 %v1451, %v1158
        %v1453 = vadd.f32 %v1452, %v1162
        %v1454 = vadd.f32 %v1453, %v1168
        %v1455 = vadd.f32 %v1454, %v1172
        %v1456 = vadd.f32 %v1455, %v1178
        %v1457 = vadd.f32 %v1456, %v1182
        %v1458 = vadd.f32 %v1457, %v1188
        %v1459 = vadd.f32 %v1458, %v1192
        %v1460 = vadd.f32 %v1459, %v1198
        %v1461 = vadd.f32 %v1460, %v1202
        %v1462 = vadd.f32 %v1461, %v1208
        %v1463 = vadd.f32 %v1462, %v1212
        %v1464 = vadd.f32 %v1463, %v1218
        %v1465 = vadd.f32 %v1464, %v1222
        %v1466 = vadd.f32 %v1465, %v1228
        %v1467 = vadd.f32 %v1466, %v1232
        %v1468 = vrot.slane %v1467, 4
        %v1469 = vadd.f32 %v1467, %v1468
        %v1470 = vrot.slane %v1469, 2
        %v1471 = vadd.f32 %v1469, %v1470
        %v1472 = vrot.slane %v1471, 1
        %v1473 = vadd.f32 %v1471, %v1472
        %v1474 = vadd.f32 %v1080, %v1084
        %v1475 = vadd.f32 %v1474, %v1090
        %v1476 = vadd.f32 %v1475, %v1094
        %v1477 = vadd.f32 %v1476, %v1100
        %v1478 = vadd.f32 %v1477, %v1104
        %v1479 = vadd.f32 %v1478, %v1110
        %v1480 = vadd.f32 %v1479, %v1114
        %v1481 = vadd.f32 %v1480, %v1120
        %v1482 = vadd.f32 %v1481, %v1124
        %v1483 = vadd.f32 %v1482, %v1130
        %v1484 = vadd.f32 %v1483, %v1134
        %v1485 = vadd.f32 %v1484, %v1140
        %v1486 = vadd.f32 %v1485, %v1144
        %v1487 = vadd.f32 %v1486, %v1150
        %v1488 = vadd.f32 %v1487, %v1154
        %v1489 = vadd.f32 %v1488, %v1160
        %v1490 = vadd.f32 %v1489, %v1164
        %v1491 = vadd.f32 %v1490, %v1170
        %v1492 = vadd.f32 %v1491, %v1174
        %v1493 = vadd.f32 %v1492, %v1180
        %v1494 = vadd.f32 %v1493, %v1184
        %v1495 = vadd.f32 %v1494, %v1190
        %v1496 = vadd.f32 %v1495, %v1194
        %v1497 = vadd.f32 %v1496, %v1200
        %v1498 = vadd.f32 %v1497, %v1204
        %v1499 = vadd.f32 %v1498, %v1210
        %v1500 = vadd.f32 %v1499, %v1214
        %v1501 = vadd.f32 %v1500, %v1220
        %v1502 = vadd.f32 %v1501, %v1224
        %v1503 = vadd.f32 %v1502, %v1230
        %v1504 = vadd.f32 %v1503, %v1234
        %v1505 = vrot.slane %v1504, 4
        %v1506 = vadd.f32 %v1504, %v1505
        %v1507 = vrot.slane %v1506, 2
        %v1508 = vadd.f32 %v1506, %v1507
        %v1509 = vrot.slane %v1508, 1
        %v1510 = vadd.f32 %v1508, %v1509
        %v1511 = vadd.f32 %v1271, %v1275
        %v1512 = vadd.f32 %v1511, %v1281
        %v1513 = vadd.f32 %v1512, %v1285
        %v1514 = vadd.f32 %v1513, %v1291
        %v1515 = vadd.f32 %v1514, %v1295
        %v1516 = vadd.f32 %v1515, %v1301
        %v1517 = vadd.f32 %v1516, %v1305
        %v1518 = vadd.f32 %v1517, %v1311
        %v1519 = vadd.f32 %v1518, %v1315
        %v1520 = vadd.f32 %v1519, %v1321
        %v1521 = vadd.f32 %v1520, %v1325
        %v1522 = vadd.f32 %v1521, %v1331
        %v1523 = vadd.f32 %v1522, %v1335
        %v1524 = vadd.f32 %v1523, %v1341
        %v1525 = vadd.f32 %v1524, %v1345
        %v1526 = vadd.f32 %v1525, %v1351
        %v1527 = vadd.f32 %v1526, %v1355
        %v1528 = vadd.f32 %v1527, %v1361
        %v1529 = vadd.f32 %v1528, %v1365
        %v1530 = vadd.f32 %v1529, %v1371
        %v1531 = vadd.f32 %v1530, %v1375
        %v1532 = vadd.f32 %v1531, %v1381
        %v1533 = vadd.f32 %v1532, %v1385
        %v1534 = vadd.f32 %v1533, %v1391
        %v1535 = vadd.f32 %v1534, %v1395
        %v1536 = vadd.f32 %v1535, %v1401
        %v1537 = vadd.f32 %v1536, %v1405
        %v1538 = vadd.f32 %v1537, %v1411
        %v1539 = vadd.f32 %v1538, %v1415
        %v1540 = vadd.f32 %v1539, %v1421
        %v1541 = vadd.f32 %v1540, %v1425
        %v1542 = vrot.slane %v1541, 4
        %v1543 = vadd.f32 %v1541, %v1542
        %v1544 = vrot.slane %v1543, 2
        %v1545 = vadd.f32 %v1543, %v1544
        %v1546 = vrot.slane %v1545, 1
        %v1547 = vadd.f32 %v1545, %v1546
        %v1548 = vadd.f32 %v1273, %v1277
        %v1549 = vadd.f32 %v1548, %v1283
        %v1550 = vadd.f32 %v1549, %v1287
        %v1551 = vadd.f32 %v1550, %v1293
        %v1552 = vadd.f32 %v1551, %v1297
        %v1553 = vadd.f32 %v1552, %v1303
        %v1554 = vadd.f32 %v1553, %v1307
        %v1555 = vadd.f32 %v1554, %v1313
        %v1556 = vadd.f32 %v1555, %v1317
        %v1557 = vadd.f32 %v1556, %v1323
        %v1558 = vadd.f32 %v1557, %v1327
        %v1559 = vadd.f32 %v1558, %v1333
        %v1560 = vadd.f32 %v1559, %v1337
        %v1561 = vadd.f32 %v1560, %v1343
        %v1562 = vadd.f32 %v1561, %v1347
        %v1563 = vadd.f32 %v1562, %v1353
        %v1564 = vadd.f32 %v1563, %v1357
        %v1565 = vadd.f32 %v1564, %v1363
        %v1566 = vadd.f32 %v1565, %v1367
        %v1567 = vadd.f32 %v1566, %v1373
        %v1568 = vadd.f32 %v1567, %v1377
        %v1569 = vadd.f32 %v1568, %v1383
        %v1570 = vadd.f32 %v1569, %v1387
        %v1571 = vadd.f32 %v1570, %v1393
        %v1572 = vadd.f32 %v1571, %v1397
        %v1573 = vadd.f32 %v1572, %v1403
        %v1574 = vadd.f32 %v1573, %v1407
        %v1575 = vadd.f32 %v1574, %v1413
        %v1576 = vadd.f32 %v1575, %v1417
        %v1577 = vadd.f32 %v1576, %v1423
        %v1578 = vadd.f32 %v1577, %v1427
        %v1579 = vrot.slane %v1578, 4
        %v1580 = vadd.f32 %v1578, %v1579
        %v1581 = vrot.slane %v1580, 2
        %v1582 = vadd.f32 %v1580, %v1581
        %v1583 = vrot.slane %v1582, 1
        %v1584 = vadd.f32 %v1582, %v1583
        %v1589 = vcombine.low %v1473, %v1510
        %v1590 = vcombine.low %v1547, %v1584
        %v1592 = vunpack.c.l.s4 1966171168
        %v1593 = vunpack.c.0.s8 %v1592
        %v1594 = vlaneseq
        %v1595 = vshrl.u32 %v1594, 7
        %v1596 = vsub.s32 %v1593, %v1595
        %v1597 = vrot.slane %v1589, %v1596
        %v1599 = vunpack.c.l.s4 1966171168
        %v1600 = vunpack.c.0.s8 %v1599
        %v1601 = vlaneseq
        %v1602 = vshrl.u32 %v1601, 7
        %v1603 = vsub.s32 %v1600, %v1602
        %v1604 = vrot.slane %v1590, %v1603
        %v1605 = vcombine.low %v1597, %v1604
        %v1607 = vunpack.c.l.s4 1966171168
        %v1608 = vunpack.c.0.s8 %v1607
        %v1609 = vlaneseq
        %v1610 = vshrl.u32 %v1609, 7
        %v1611 = vsub.s32 %v1608, %v1610
        %v1612 = vrot.slane %v1605, %v1611
        %v1614 = vadd.f32 %v1436, %v1612
        %v1615 = vlaneseq
        %vm1616 = vcmp.ge.s32.totalorder %v1615, 0
        %vm1617 = vcmp.lt.s32.totalorder %v1615, 512
        %vm1618 = vmand %vm1616, %vm1617
        %1619 = vst.msk [vmem:[%s300] sm:$0xf] %vm1618, %v1614
        %v1620 = vld [vmem:[%s304] sm:$0xf]
        %v1621 = vmul.f32 %v1078, %v1078
        %v1622 = vmul.f32 %v1080, %v1080
        %v1623 = vmul.f32 %v1271, %v1271
        %v1624 = vmul.f32 %v1273, %v1273
        %v1625 = vmul.f32 %v1082, %v1082
        %v1626 = vmul.f32 %v1084, %v1084
        %v1627 = vmul.f32 %v1275, %v1275
        %v1628 = vmul.f32 %v1277, %v1277
        %v1629 = vmul.f32 %v1088, %v1088
        %v1630 = vmul.f32 %v1090, %v1090
        %v1631 = vmul.f32 %v1281, %v1281
        %v1632 = vmul.f32 %v1283, %v1283
        %v1633 = vmul.f32 %v1092, %v1092
        %v1634 = vmul.f32 %v1094, %v1094
        %v1635 = vmul.f32 %v1285, %v1285
        %v1636 = vmul.f32 %v1287, %v1287
        %v1637 = vmul.f32 %v1098, %v1098
        %v1638 = vmul.f32 %v1100, %v1100
        %v1639 = vmul.f32 %v1291, %v1291
        %v1640 = vmul.f32 %v1293, %v1293
        %v1641 = vmul.f32 %v1102, %v1102
        %v1642 = vmul.f32 %v1104, %v1104
        %v1643 = vmul.f32 %v1295, %v1295
        %v1644 = vmul.f32 %v1297, %v1297
        %v1645 = vmul.f32 %v1108, %v1108
        %v1646 = vmul.f32 %v1110, %v1110
        %v1647 = vmul.f32 %v1301, %v1301
        %v1648 = vmul.f32 %v1303, %v1303
        %v1649 = vmul.f32 %v1112, %v1112
        %v1650 = vmul.f32 %v1114, %v1114
        %v1651 = vmul.f32 %v1305, %v1305
        %v1652 = vmul.f32 %v1307, %v1307
        %v1653 = vmul.f32 %v1118, %v1118
        %v1654 = vmul.f32 %v1120, %v1120
        %v1655 = vmul.f32 %v1311, %v1311
        %v1656 = vmul.f32 %v1313, %v1313
        %v1657 = vmul.f32 %v1122, %v1122
        %v1658 = vmul.f32 %v1124, %v1124
        %v1659 = vmul.f32 %v1315, %v1315
        %v1660 = vmul.f32 %v1317, %v1317
        %v1661 = vmul.f32 %v1128, %v1128
        %v1662 = vmul.f32 %v1130, %v1130
        %v1663 = vmul.f32 %v1321, %v1321
        %v1664 = vmul.f32 %v1323, %v1323
        %v1665 = vmul.f32 %v1132, %v1132
        %v1666 = vmul.f32 %v1134, %v1134
        %v1667 = vmul.f32 %v1325, %v1325
        %v1668 = vmul.f32 %v1327, %v1327
        %v1669 = vmul.f32 %v1138, %v1138
        %v1670 = vmul.f32 %v1140, %v1140
        %v1671 = vmul.f32 %v1331, %v1331
        %v1672 = vmul.f32 %v1333, %v1333
        %v1673 = vmul.f32 %v1142, %v1142
        %v1674 = vmul.f32 %v1144, %v1144
        %v1675 = vmul.f32 %v1335, %v1335
        %v1676 = vmul.f32 %v1337, %v1337
        %v1677 = vmul.f32 %v1148, %v1148
        %v1678 = vmul.f32 %v1150, %v1150
        %v1679 = vmul.f32 %v1341, %v1341
        %v1680 = vmul.f32 %v1343, %v1343
        %v1681 = vmul.f32 %v1152, %v1152
        %v1682 = vmul.f32 %v1154, %v1154
        %v1683 = vmul.f32 %v1345, %v1345
        %v1684 = vmul.f32 %v1347, %v1347
        %v1685 = vmul.f32 %v1158, %v1158
        %v1686 = vmul.f32 %v1160, %v1160
        %v1687 = vmul.f32 %v1351, %v1351
        %v1688 = vmul.f32 %v1353, %v1353
        %v1689 = vmul.f32 %v1162, %v1162
        %v1690 = vmul.f32 %v1164, %v1164
        %v1691 = vmul.f32 %v1355, %v1355
        %v1692 = vmul.f32 %v1357, %v1357
        %v1693 = vmul.f32 %v1168, %v1168
        %v1694 = vmul.f32 %v1170, %v1170
        %v1695 = vmul.f32 %v1361, %v1361
        %v1696 = vmul.f32 %v1363, %v1363
        %v1697 = vmul.f32 %v1172, %v1172
        %v1698 = vmul.f32 %v1174, %v1174
        %v1699 = vmul.f32 %v1365, %v1365
        %v1700 = vmul.f32 %v1367, %v1367
        %v1701 = vmul.f32 %v1178, %v1178
        %v1702 = vmul.f32 %v1180, %v1180
        %v1703 = vmul.f32 %v1371, %v1371
        %v1704 = vmul.f32 %v1373, %v1373
        %v1705 = vmul.f32 %v1182, %v1182
        %v1706 = vmul.f32 %v1184, %v1184
        %v1707 = vmul.f32 %v1375, %v1375
        %v1708 = vmul.f32 %v1377, %v1377
        %v1709 = vmul.f32 %v1188, %v1188
        %v1710 = vmul.f32 %v1190, %v1190
        %v1711 = vmul.f32 %v1381, %v1381
        %v1712 = vmul.f32 %v1383, %v1383
        %v1713 = vmul.f32 %v1192, %v1192
        %v1714 = vmul.f32 %v1194, %v1194
        %v1715 = vmul.f32 %v1385, %v1385
        %v1716 = vmul.f32 %v1387, %v1387
        %v1717 = vmul.f32 %v1198, %v1198
        %v1718 = vmul.f32 %v1200, %v1200
        %v1719 = vmul.f32 %v1391, %v1391
        %v1720 = vmul.f32 %v1393, %v1393
        %v1721 = vmul.f32 %v1202, %v1202
        %v1722 = vmul.f32 %v1204, %v1204
        %v1723 = vmul.f32 %v1395, %v1395
        %v1724 = vmul.f32 %v1397, %v1397
        %v1725 = vmul.f32 %v1208, %v1208
        %v1726 = vmul.f32 %v1210, %v1210
        %v1727 = vmul.f32 %v1401, %v1401
        %v1728 = vmul.f32 %v1403, %v1403
        %v1729 = vmul.f32 %v1212, %v1212
        %v1730 = vmul.f32 %v1214, %v1214
        %v1731 = vmul.f32 %v1405, %v1405
        %v1732 = vmul.f32 %v1407, %v1407
        %v1733 = vmul.f32 %v1218, %v1218
        %v1734 = vmul.f32 %v1220, %v1220
        %v1735 = vmul.f32 %v1411, %v1411
        %v1736 = vmul.f32 %v1413, %v1413
        %v1737 = vmul.f32 %v1222, %v1222
        %v1738 = vmul.f32 %v1224, %v1224
        %v1739 = vmul.f32 %v1415, %v1415
        %v1740 = vmul.f32 %v1417, %v1417
        %v1741 = vmul.f32 %v1228, %v1228
        %v1742 = vmul.f32 %v1230, %v1230
        %v1743 = vmul.f32 %v1421, %v1421
        %v1744 = vmul.f32 %v1423, %v1423
        %v1745 = vmul.f32 %v1232, %v1232
        %v1746 = vmul.f32 %v1234, %v1234
        %v1747 = vmul.f32 %v1425, %v1425
        %v1748 = vmul.f32 %v1427, %v1427
        %v1749 = vadd.f32 %v1621, %v1625
        %v1750 = vadd.f32 %v1749, %v1629
        %v1751 = vadd.f32 %v1750, %v1633
        %v1752 = vadd.f32 %v1751, %v1637
        %v1753 = vadd.f32 %v1752, %v1641
        %v1754 = vadd.f32 %v1753, %v1645
        %v1755 = vadd.f32 %v1754, %v1649
        %v1756 = vadd.f32 %v1755, %v1653
        %v1757 = vadd.f32 %v1756, %v1657
        %v1758 = vadd.f32 %v1757, %v1661
        %v1759 = vadd.f32 %v1758, %v1665
        %v1760 = vadd.f32 %v1759, %v1669
        %v1761 = vadd.f32 %v1760, %v1673
        %v1762 = vadd.f32 %v1761, %v1677
        %v1763 = vadd.f32 %v1762, %v1681
        %v1764 = vadd.f32 %v1763, %v1685
        %v1765 = vadd.f32 %v1764, %v1689
        %v1766 = vadd.f32 %v1765, %v1693
        %v1767 = vadd.f32 %v1766, %v1697
        %v1768 = vadd.f32 %v1767, %v1701
        %v1769 = vadd.f32 %v1768, %v1705
        %v1770 = vadd.f32 %v1769, %v1709
        %v1771 = vadd.f32 %v1770, %v1713
        %v1772 = vadd.f32 %v1771, %v1717
        %v1773 = vadd.f32 %v1772, %v1721
        %v1774 = vadd.f32 %v1773, %v1725
        %v1775 = vadd.f32 %v1774, %v1729
        %v1776 = vadd.f32 %v1775, %v1733
        %v1777 = vadd.f32 %v1776, %v1737
        %v1778 = vadd.f32 %v1777, %v1741
        %v1779 = vadd.f32 %v1778, %v1745
        %v1780 = vrot.slane %v1779, 4
        %v1781 = vadd.f32 %v1779, %v1780
        %v1782 = vrot.slane %v1781, 2
        %v1783 = vadd.f32 %v1781, %v1782
        %v1784 = vrot.slane %v1783, 1
        %v1785 = vadd.f32 %v1783, %v1784
        %v1786 = vadd.f32 %v1622, %v1626
        %v1787 = vadd.f32 %v1786, %v1630
        %v1788 = vadd.f32 %v1787, %v1634
        %v1789 = vadd.f32 %v1788, %v1638
        %v1790 = vadd.f32 %v1789, %v1642
        %v1791 = vadd.f32 %v1790, %v1646
        %v1792 = vadd.f32 %v1791, %v1650
        %v1793 = vadd.f32 %v1792, %v1654
        %v1794 = vadd.f32 %v1793, %v1658
        %v1795 = vadd.f32 %v1794, %v1662
        %v1796 = vadd.f32 %v1795, %v1666
        %v1797 = vadd.f32 %v1796, %v1670
        %v1798 = vadd.f32 %v1797, %v1674
        %v1799 = vadd.f32 %v1798, %v1678
        %v1800 = vadd.f32 %v1799, %v1682
        %v1801 = vadd.f32 %v1800, %v1686
        %v1802 = vadd.f32 %v1801, %v1690
        %v1803 = vadd.f32 %v1802, %v1694
        %v1804 = vadd.f32 %v1803, %v1698
        %v1805 = vadd.f32 %v1804, %v1702
        %v1806 = vadd.f32 %v1805, %v1706
        %v1807 = vadd.f32 %v1806, %v1710
        %v1808 = vadd.f32 %v1807, %v1714
        %v1809 = vadd.f32 %v1808, %v1718
        %v1810 = vadd.f32 %v1809, %v1722
        %v1811 = vadd.f32 %v1810, %v1726
        %v1812 = vadd.f32 %v1811, %v1730
        %v1813 = vadd.f32 %v1812, %v1734
        %v1814 = vadd.f32 %v1813, %v1738
        %v1815 = vadd.f32 %v1814, %v1742
        %v1816 = vadd.f32 %v1815, %v1746
        %v1817 = vrot.slane %v1816, 4
        %v1818 = vadd.f32 %v1816, %v1817
        %v1819 = vrot.slane %v1818, 2
        %v1820 = vadd.f32 %v1818, %v1819
        %v1821 = vrot.slane %v1820, 1
        %v1822 = vadd.f32 %v1820, %v1821
        %v1823 = vadd.f32 %v1623, %v1627
        %v1824 = vadd.f32 %v1823, %v1631
        %v1825 = vadd.f32 %v1824, %v1635
        %v1826 = vadd.f32 %v1825, %v1639
        %v1827 = vadd.f32 %v1826, %v1643
        %v1828 = vadd.f32 %v1827, %v1647
        %v1829 = vadd.f32 %v1828, %v1651
        %v1830 = vadd.f32 %v1829, %v1655
        %v1831 = vadd.f32 %v1830, %v1659
        %v1832 = vadd.f32 %v1831, %v1663
        %v1833 = vadd.f32 %v1832, %v1667
        %v1834 = vadd.f32 %v1833, %v1671
        %v1835 = vadd.f32 %v1834, %v1675
        %v1836 = vadd.f32 %v1835, %v1679
        %v1837 = vadd.f32 %v1836, %v1683
        %v1838 = vadd.f32 %v1837, %v1687
        %v1839 = vadd.f32 %v1838, %v1691
        %v1840 = vadd.f32 %v1839, %v1695
        %v1841 = vadd.f32 %v1840, %v1699
        %v1842 = vadd.f32 %v1841, %v1703
        %v1843 = vadd.f32 %v1842, %v1707
        %v1844 = vadd.f32 %v1843, %v1711
        %v1845 = vadd.f32 %v1844, %v1715
        %v1846 = vadd.f32 %v1845, %v1719
        %v1847 = vadd.f32 %v1846, %v1723
        %v1848 = vadd.f32 %v1847, %v1727
        %v1849 = vadd.f32 %v1848, %v1731
        %v1850 = vadd.f32 %v1849, %v1735
        %v1851 = vadd.f32 %v1850, %v1739
        %v1852 = vadd.f32 %v1851, %v1743
        %v1853 = vadd.f32 %v1852, %v1747
        %v1854 = vrot.slane %v1853, 4
        %v1855 = vadd.f32 %v1853, %v1854
        %v1856 = vrot.slane %v1855, 2
        %v1857 = vadd.f32 %v1855, %v1856
        %v1858 = vrot.slane %v1857, 1
        %v1859 = vadd.f32 %v1857, %v1858
        %v1860 = vadd.f32 %v1624, %v1628
        %v1861 = vadd.f32 %v1860, %v1632
        %v1862 = vadd.f32 %v1861, %v1636
        %v1863 = vadd.f32 %v1862, %v1640
        %v1864 = vadd.f32 %v1863, %v1644
        %v1865 = vadd.f32 %v1864, %v1648
        %v1866 = vadd.f32 %v1865, %v1652
        %v1867 = vadd.f32 %v1866, %v1656
        %v1868 = vadd.f32 %v1867, %v1660
        %v1869 = vadd.f32 %v1868, %v1664
        %v1870 = vadd.f32 %v1869, %v1668
        %v1871 = vadd.f32 %v1870, %v1672
        %v1872 = vadd.f32 %v1871, %v1676
        %v1873 = vadd.f32 %v1872, %v1680
        %v1874 = vadd.f32 %v1873, %v1684
        %v1875 = vadd.f32 %v1874, %v1688
        %v1876 = vadd.f32 %v1875, %v1692
        %v1877 = vadd.f32 %v1876, %v1696
        %v1878 = vadd.f32 %v1877, %v1700
        %v1879 = vadd.f32 %v1878, %v1704
        %v1880 = vadd.f32 %v1879, %v1708
        %v1881 = vadd.f32 %v1880, %v1712
        %v1882 = vadd.f32 %v1881, %v1716
        %v1883 = vadd.f32 %v1882, %v1720
        %v1884 = vadd.f32 %v1883, %v1724
        %v1885 = vadd.f32 %v1884, %v1728
        %v1886 = vadd.f32 %v1885, %v1732
        %v1887 = vadd.f32 %v1886, %v1736
        %v1888 = vadd.f32 %v1887, %v1740
        %v1889 = vadd.f32 %v1888, %v1744
        %v1890 = vadd.f32 %v1889, %v1748
        %v1891 = vrot.slane %v1890, 4
        %v1892 = vadd.f32 %v1890, %v1891
        %v1893 = vrot.slane %v1892, 2
        %v1894 = vadd.f32 %v1892, %v1893
        %v1895 = vrot.slane %v1894, 1
        %v1896 = vadd.f32 %v1894, %v1895
        %v1901 = vcombine.low %v1785, %v1822
        %v1902 = vcombine.low %v1859, %v1896
        %v1904 = vunpack.c.l.s4 1966171168
        %v1905 = vunpack.c.0.s8 %v1904
        %v1906 = vlaneseq
        %v1907 = vshrl.u32 %v1906, 7
        %v1908 = vsub.s32 %v1905, %v1907
        %v1909 = vrot.slane %v1901, %v1908
        %v1911 = vunpack.c.l.s4 1966171168
        %v1912 = vunpack.c.0.s8 %v1911
        %v1913 = vlaneseq
        %v1914 = vshrl.u32 %v1913, 7
        %v1915 = vsub.s32 %v1912, %v1914
        %v1916 = vrot.slane %v1902, %v1915
        %v1917 = vcombine.low %v1909, %v1916
        %v1919 = vunpack.c.l.s4 1966171168
        %v1920 = vunpack.c.0.s8 %v1919
        %v1921 = vlaneseq
        %v1922 = vshrl.u32 %v1921, 7
        %v1923 = vsub.s32 %v1920, %v1922
        %v1924 = vrot.slane %v1917, %v1923
        %v1926 = vadd.f32 %v1620, %v1924
        %1927 = vst.msk [vmem:[%s304] sm:$0xf] %vm1618, %v1926
      $region44: #{sdf_forward.11} parent=35 // pred_fallthru
        _
      %p1928 = scmp.gt.s32.totalorder %s1431, 400
      // Predicated region
      $region45: #{sdf_forward.11} parent=35 // pred_check
        %p1929 = pneg %p1928
      $region46: #{sdf_forward.11} parent=35 // pred_check_branch
        %1931 = sbr.rel (%p1929) target = $region48
      $region47: #{sdf_forward.11} parent=35 // pred_region
        %v1932 = vlaneseq
        %v1933 = vshrl.u32 %v1932, 7
        %v1934 = vadd.s32 %v1933, 8
        %v1935 = vadd.s32 %v1933, 16
        %v1936 = vadd.s32 %v1933, 24
        %v1937 = vadd.s32 %v1933, 32
        %v1938 = vadd.s32 %v1933, 40
        %v1939 = vadd.s32 %v1933, 48
        %v1940 = vadd.s32 %v1933, 56
        %v1941 = vadd.s32 %v1933, 64
        %v1942 = vadd.s32 %v1933, 72
        %v1943 = vadd.s32 %v1933, 80
        %v1944 = vadd.s32 %v1933, 88
        %v1945 = vadd.s32 %v1933, 96
        %v1946 = vadd.s32 %v1933, 104
        %v1947 = vadd.s32 %v1933, 112
        %v1948 = vadd.s32 %v1933, 120
        %v1949 = vadd.s32 %v1933, 128
        %v1950 = vadd.s32 %v1933, 136
        %v1951 = vadd.s32 %v1933, 144
        %v1952 = vadd.s32 %v1933, 152
        %v1953 = vadd.s32 %v1933, 160
        %v1954 = vadd.s32 %v1933, 168
        %v1955 = vadd.s32 %v1933, 176
        %v1956 = vadd.s32 %v1933, 184
        %v1957 = vadd.s32 %v1933, 192
        %v1958 = vadd.s32 %v1933, 200
        %v1959 = vadd.s32 %v1933, 208
        %v1960 = vadd.s32 %v1933, 216
        %v1961 = vadd.s32 %v1933, 224
        %v1962 = vadd.s32 %v1933, 232
        %v1963 = vadd.s32 %v1933, 240
        %v1964 = vadd.s32 %v1933, 248
        %v1965 = vstv %s1430
        %v1966 = vadd.s32 %v1965, %v1933
        %v1967 = vadd.s32 %v1965, %v1934
        %v1968 = vadd.s32 %v1965, %v1935
        %v1969 = vadd.s32 %v1965, %v1936
        %v1970 = vadd.s32 %v1965, %v1937
        %v1971 = vadd.s32 %v1965, %v1938
        %v1972 = vadd.s32 %v1965, %v1939
        %v1973 = vadd.s32 %v1965, %v1940
        %v1974 = vadd.s32 %v1965, %v1941
        %v1975 = vadd.s32 %v1965, %v1942
        %v1976 = vadd.s32 %v1965, %v1943
        %v1977 = vadd.s32 %v1965, %v1944
        %v1978 = vadd.s32 %v1965, %v1945
        %v1979 = vadd.s32 %v1965, %v1946
        %v1980 = vadd.s32 %v1965, %v1947
        %v1981 = vadd.s32 %v1965, %v1948
        %v1982 = vadd.s32 %v1965, %v1949
        %v1983 = vadd.s32 %v1965, %v1950
        %v1984 = vadd.s32 %v1965, %v1951
        %v1985 = vadd.s32 %v1965, %v1952
        %v1986 = vadd.s32 %v1965, %v1953
        %v1987 = vadd.s32 %v1965, %v1954
        %v1988 = vadd.s32 %v1965, %v1955
        %v1989 = vadd.s32 %v1965, %v1956
        %v1990 = vadd.s32 %v1965, %v1957
        %v1991 = vadd.s32 %v1965, %v1958
        %v1992 = vadd.s32 %v1965, %v1959
        %v1993 = vadd.s32 %v1965, %v1960
        %v1994 = vadd.s32 %v1965, %v1961
        %v1995 = vadd.s32 %v1965, %v1962
        %v1996 = vadd.s32 %v1965, %v1963
        %v1997 = vadd.s32 %v1965, %v1964
        %vm1998 = vcmp.lt.s32.totalorder %v1966, 400
        %vm1999 = vcmp.lt.s32.totalorder %v1967, 400
        %vm2000 = vcmp.lt.s32.totalorder %v1968, 400
        %vm2001 = vcmp.lt.s32.totalorder %v1969, 400
        %vm2002 = vcmp.lt.s32.totalorder %v1970, 400
        %vm2003 = vcmp.lt.s32.totalorder %v1971, 400
        %vm2004 = vcmp.lt.s32.totalorder %v1972, 400
        %vm2005 = vcmp.lt.s32.totalorder %v1973, 400
        %vm2006 = vcmp.lt.s32.totalorder %v1974, 400
        %vm2007 = vcmp.lt.s32.totalorder %v1975, 400
        %vm2008 = vcmp.lt.s32.totalorder %v1976, 400
        %vm2009 = vcmp.lt.s32.totalorder %v1977, 400
        %vm2010 = vcmp.lt.s32.totalorder %v1978, 400
        %vm2011 = vcmp.lt.s32.totalorder %v1979, 400
        %vm2012 = vcmp.lt.s32.totalorder %v1980, 400
        %vm2013 = vcmp.lt.s32.totalorder %v1981, 400
        %vm2014 = vcmp.lt.s32.totalorder %v1982, 400
        %vm2015 = vcmp.lt.s32.totalorder %v1983, 400
        %vm2016 = vcmp.lt.s32.totalorder %v1984, 400
        %vm2017 = vcmp.lt.s32.totalorder %v1985, 400
        %vm2018 = vcmp.lt.s32.totalorder %v1986, 400
        %vm2019 = vcmp.lt.s32.totalorder %v1987, 400
        %vm2020 = vcmp.lt.s32.totalorder %v1988, 400
        %vm2021 = vcmp.lt.s32.totalorder %v1989, 400
        %vm2022 = vcmp.lt.s32.totalorder %v1990, 400
        %vm2023 = vcmp.lt.s32.totalorder %v1991, 400
        %vm2024 = vcmp.lt.s32.totalorder %v1992, 400
        %vm2025 = vcmp.lt.s32.totalorder %v1993, 400
        %vm2026 = vcmp.lt.s32.totalorder %v1994, 400
        %vm2027 = vcmp.lt.s32.totalorder %v1995, 400
        %vm2028 = vcmp.lt.s32.totalorder %v1996, 400
        %vm2029 = vcmp.lt.s32.totalorder %v1997, 400
        %v2030 = vsel %vm1998, %v1078, 0.0
        %v2031 = vsel %vm1998, %v1080, 0.0
        %v2032 = vsel %vm1998, %v1271, 0.0
        %v2033 = vsel %vm1998, %v1273, 0.0
        %v2034 = vsel %vm1999, %v1082, 0.0
        %v2035 = vsel %vm1999, %v1084, 0.0
        %v2036 = vsel %vm1999, %v1275, 0.0
        %v2037 = vsel %vm1999, %v1277, 0.0
        %v2038 = vsel %vm2000, %v1088, 0.0
        %v2039 = vsel %vm2000, %v1090, 0.0
        %v2040 = vsel %vm2000, %v1281, 0.0
        %v2041 = vsel %vm2000, %v1283, 0.0
        %v2042 = vsel %vm2001, %v1092, 0.0
        %v2043 = vsel %vm2001, %v1094, 0.0
        %v2044 = vsel %vm2001, %v1285, 0.0
        %v2045 = vsel %vm2001, %v1287, 0.0
        %v2046 = vsel %vm2002, %v1098, 0.0
        %v2047 = vsel %vm2002, %v1100, 0.0
        %v2048 = vsel %vm2002, %v1291, 0.0
        %v2049 = vsel %vm2002, %v1293, 0.0
        %v2050 = vsel %vm2003, %v1102, 0.0
        %v2051 = vsel %vm2003, %v1104, 0.0
        %v2052 = vsel %vm2003, %v1295, 0.0
        %v2053 = vsel %vm2003, %v1297, 0.0
        %v2054 = vsel %vm2004, %v1108, 0.0
        %v2055 = vsel %vm2004, %v1110, 0.0
        %v2056 = vsel %vm2004, %v1301, 0.0
        %v2057 = vsel %vm2004, %v1303, 0.0
        %v2058 = vsel %vm2005, %v1112, 0.0
        %v2059 = vsel %vm2005, %v1114, 0.0
        %v2060 = vsel %vm2005, %v1305, 0.0
        %v2061 = vsel %vm2005, %v1307, 0.0
        %v2062 = vsel %vm2006, %v1118, 0.0
        %v2063 = vsel %vm2006, %v1120, 0.0
        %v2064 = vsel %vm2006, %v1311, 0.0
        %v2065 = vsel %vm2006, %v1313, 0.0
        %v2066 = vsel %vm2007, %v1122, 0.0
        %v2067 = vsel %vm2007, %v1124, 0.0
        %v2068 = vsel %vm2007, %v1315, 0.0
        %v2069 = vsel %vm2007, %v1317, 0.0
        %v2070 = vsel %vm2008, %v1128, 0.0
        %v2071 = vsel %vm2008, %v1130, 0.0
        %v2072 = vsel %vm2008, %v1321, 0.0
        %v2073 = vsel %vm2008, %v1323, 0.0
        %v2074 = vsel %vm2009, %v1132, 0.0
        %v2075 = vsel %vm2009, %v1134, 0.0
        %v2076 = vsel %vm2009, %v1325, 0.0
        %v2077 = vsel %vm2009, %v1327, 0.0
        %v2078 = vsel %vm2010, %v1138, 0.0
        %v2079 = vsel %vm2010, %v1140, 0.0
        %v2080 = vsel %vm2010, %v1331, 0.0
        %v2081 = vsel %vm2010, %v1333, 0.0
        %v2082 = vsel %vm2011, %v1142, 0.0
        %v2083 = vsel %vm2011, %v1144, 0.0
        %v2084 = vsel %vm2011, %v1335, 0.0
        %v2085 = vsel %vm2011, %v1337, 0.0
        %v2086 = vsel %vm2012, %v1148, 0.0
        %v2087 = vsel %vm2012, %v1150, 0.0
        %v2088 = vsel %vm2012, %v1341, 0.0
        %v2089 = vsel %vm2012, %v1343, 0.0
        %v2090 = vsel %vm2013, %v1152, 0.0
        %v2091 = vsel %vm2013, %v1154, 0.0
        %v2092 = vsel %vm2013, %v1345, 0.0
        %v2093 = vsel %vm2013, %v1347, 0.0
        %v2094 = vsel %vm2014, %v1158, 0.0
        %v2095 = vsel %vm2014, %v1160, 0.0
        %v2096 = vsel %vm2014, %v1351, 0.0
        %v2097 = vsel %vm2014, %v1353, 0.0
        %v2098 = vsel %vm2015, %v1162, 0.0
        %v2099 = vsel %vm2015, %v1164, 0.0
        %v2100 = vsel %vm2015, %v1355, 0.0
        %v2101 = vsel %vm2015, %v1357, 0.0
        %v2102 = vsel %vm2016, %v1168, 0.0
        %v2103 = vsel %vm2016, %v1170, 0.0
        %v2104 = vsel %vm2016, %v1361, 0.0
        %v2105 = vsel %vm2016, %v1363, 0.0
        %v2106 = vsel %vm2017, %v1172, 0.0
        %v2107 = vsel %vm2017, %v1174, 0.0
        %v2108 = vsel %vm2017, %v1365, 0.0
        %v2109 = vsel %vm2017, %v1367, 0.0
        %v2110 = vsel %vm2018, %v1178, 0.0
        %v2111 = vsel %vm2018, %v1180, 0.0
        %v2112 = vsel %vm2018, %v1371, 0.0
        %v2113 = vsel %vm2018, %v1373, 0.0
        %v2114 = vsel %vm2019, %v1182, 0.0
        %v2115 = vsel %vm2019, %v1184, 0.0
        %v2116 = vsel %vm2019, %v1375, 0.0
        %v2117 = vsel %vm2019, %v1377, 0.0
        %v2118 = vsel %vm2020, %v1188, 0.0
        %v2119 = vsel %vm2020, %v1190, 0.0
        %v2120 = vsel %vm2020, %v1381, 0.0
        %v2121 = vsel %vm2020, %v1383, 0.0
        %v2122 = vsel %vm2021, %v1192, 0.0
        %v2123 = vsel %vm2021, %v1194, 0.0
        %v2124 = vsel %vm2021, %v1385, 0.0
        %v2125 = vsel %vm2021, %v1387, 0.0
        %v2126 = vsel %vm2022, %v1198, 0.0
        %v2127 = vsel %vm2022, %v1200, 0.0
        %v2128 = vsel %vm2022, %v1391, 0.0
        %v2129 = vsel %vm2022, %v1393, 0.0
        %v2130 = vsel %vm2023, %v1202, 0.0
        %v2131 = vsel %vm2023, %v1204, 0.0
        %v2132 = vsel %vm2023, %v1395, 0.0
        %v2133 = vsel %vm2023, %v1397, 0.0
        %v2134 = vsel %vm2024, %v1208, 0.0
        %v2135 = vsel %vm2024, %v1210, 0.0
        %v2136 = vsel %vm2024, %v1401, 0.0
        %v2137 = vsel %vm2024, %v1403, 0.0
        %v2138 = vsel %vm2025, %v1212, 0.0
        %v2139 = vsel %vm2025, %v1214, 0.0
        %v2140 = vsel %vm2025, %v1405, 0.0
        %v2141 = vsel %vm2025, %v1407, 0.0
        %v2142 = vsel %vm2026, %v1218, 0.0
        %v2143 = vsel %vm2026, %v1220, 0.0
        %v2144 = vsel %vm2026, %v1411, 0.0
        %v2145 = vsel %vm2026, %v1413, 0.0
        %v2146 = vsel %vm2027, %v1222, 0.0
        %v2147 = vsel %vm2027, %v1224, 0.0
        %v2148 = vsel %vm2027, %v1415, 0.0
        %v2149 = vsel %vm2027, %v1417, 0.0
        %v2150 = vsel %vm2028, %v1228, 0.0
        %v2151 = vsel %vm2028, %v1230, 0.0
        %v2152 = vsel %vm2028, %v1421, 0.0
        %v2153 = vsel %vm2028, %v1423, 0.0
        %v2154 = vsel %vm2029, %v1232, 0.0
        %v2155 = vsel %vm2029, %v1234, 0.0
        %v2156 = vsel %vm2029, %v1425, 0.0
        %v2157 = vsel %vm2029, %v1427, 0.0
        %v2158 = vld [vmem:[%s300] sm:$0xf]
        %v2159 = vadd.f32 %v2030, %v2034
        %v2160 = vadd.f32 %v2159, %v2038
        %v2161 = vadd.f32 %v2160, %v2042
        %v2162 = vadd.f32 %v2161, %v2046
        %v2163 = vadd.f32 %v2162, %v2050
        %v2164 = vadd.f32 %v2163, %v2054
        %v2165 = vadd.f32 %v2164, %v2058
        %v2166 = vadd.f32 %v2165, %v2062
        %v2167 = vadd.f32 %v2166, %v2066
        %v2168 = vadd.f32 %v2167, %v2070
        %v2169 = vadd.f32 %v2168, %v2074
        %v2170 = vadd.f32 %v2169, %v2078
        %v2171 = vadd.f32 %v2170, %v2082
        %v2172 = vadd.f32 %v2171, %v2086
        %v2173 = vadd.f32 %v2172, %v2090
        %v2174 = vadd.f32 %v2173, %v2094
        %v2175 = vadd.f32 %v2174, %v2098
        %v2176 = vadd.f32 %v2175, %v2102
        %v2177 = vadd.f32 %v2176, %v2106
        %v2178 = vadd.f32 %v2177, %v2110
        %v2179 = vadd.f32 %v2178, %v2114
        %v2180 = vadd.f32 %v2179, %v2118
        %v2181 = vadd.f32 %v2180, %v2122
        %v2182 = vadd.f32 %v2181, %v2126
        %v2183 = vadd.f32 %v2182, %v2130
        %v2184 = vadd.f32 %v2183, %v2134
        %v2185 = vadd.f32 %v2184, %v2138
        %v2186 = vadd.f32 %v2185, %v2142
        %v2187 = vadd.f32 %v2186, %v2146
        %v2188 = vadd.f32 %v2187, %v2150
        %v2189 = vadd.f32 %v2188, %v2154
        %v2190 = vrot.slane %v2189, 4
        %v2191 = vadd.f32 %v2189, %v2190
        %v2192 = vrot.slane %v2191, 2
        %v2193 = vadd.f32 %v2191, %v2192
        %v2194 = vrot.slane %v2193, 1
        %v2195 = vadd.f32 %v2193, %v2194
        %v2196 = vadd.f32 %v2031, %v2035
        %v2197 = vadd.f32 %v2196, %v2039
        %v2198 = vadd.f32 %v2197, %v2043
        %v2199 = vadd.f32 %v2198, %v2047
        %v2200 = vadd.f32 %v2199, %v2051
        %v2201 = vadd.f32 %v2200, %v2055
        %v2202 = vadd.f32 %v2201, %v2059
        %v2203 = vadd.f32 %v2202, %v2063
        %v2204 = vadd.f32 %v2203, %v2067
        %v2205 = vadd.f32 %v2204, %v2071
        %v2206 = vadd.f32 %v2205, %v2075
        %v2207 = vadd.f32 %v2206, %v2079
        %v2208 = vadd.f32 %v2207, %v2083
        %v2209 = vadd.f32 %v2208, %v2087
        %v2210 = vadd.f32 %v2209, %v2091
        %v2211 = vadd.f32 %v2210, %v2095
        %v2212 = vadd.f32 %v2211, %v2099
        %v2213 = vadd.f32 %v2212, %v2103
        %v2214 = vadd.f32 %v2213, %v2107
        %v2215 = vadd.f32 %v2214, %v2111
        %v2216 = vadd.f32 %v2215, %v2115
        %v2217 = vadd.f32 %v2216, %v2119
        %v2218 = vadd.f32 %v2217, %v2123
        %v2219 = vadd.f32 %v2218, %v2127
        %v2220 = vadd.f32 %v2219, %v2131
        %v2221 = vadd.f32 %v2220, %v2135
        %v2222 = vadd.f32 %v2221, %v2139
        %v2223 = vadd.f32 %v2222, %v2143
        %v2224 = vadd.f32 %v2223, %v2147
        %v2225 = vadd.f32 %v2224, %v2151
        %v2226 = vadd.f32 %v2225, %v2155
        %v2227 = vrot.slane %v2226, 4
        %v2228 = vadd.f32 %v2226, %v2227
        %v2229 = vrot.slane %v2228, 2
        %v2230 = vadd.f32 %v2228, %v2229
        %v2231 = vrot.slane %v2230, 1
        %v2232 = vadd.f32 %v2230, %v2231
        %v2233 = vadd.f32 %v2032, %v2036
        %v2234 = vadd.f32 %v2233, %v2040
        %v2235 = vadd.f32 %v2234, %v2044
        %v2236 = vadd.f32 %v2235, %v2048
        %v2237 = vadd.f32 %v2236, %v2052
        %v2238 = vadd.f32 %v2237, %v2056
        %v2239 = vadd.f32 %v2238, %v2060
        %v2240 = vadd.f32 %v2239, %v2064
        %v2241 = vadd.f32 %v2240, %v2068
        %v2242 = vadd.f32 %v2241, %v2072
        %v2243 = vadd.f32 %v2242, %v2076
        %v2244 = vadd.f32 %v2243, %v2080
        %v2245 = vadd.f32 %v2244, %v2084
        %v2246 = vadd.f32 %v2245, %v2088
        %v2247 = vadd.f32 %v2246, %v2092
        %v2248 = vadd.f32 %v2247, %v2096
        %v2249 = vadd.f32 %v2248, %v2100
        %v2250 = vadd.f32 %v2249, %v2104
        %v2251 = vadd.f32 %v2250, %v2108
        %v2252 = vadd.f32 %v2251, %v2112
        %v2253 = vadd.f32 %v2252, %v2116
        %v2254 = vadd.f32 %v2253, %v2120
        %v2255 = vadd.f32 %v2254, %v2124
        %v2256 = vadd.f32 %v2255, %v2128
        %v2257 = vadd.f32 %v2256, %v2132
        %v2258 = vadd.f32 %v2257, %v2136
        %v2259 = vadd.f32 %v2258, %v2140
        %v2260 = vadd.f32 %v2259, %v2144
        %v2261 = vadd.f32 %v2260, %v2148
        %v2262 = vadd.f32 %v2261, %v2152
        %v2263 = vadd.f32 %v2262, %v2156
        %v2264 = vrot.slane %v2263, 4
        %v2265 = vadd.f32 %v2263, %v2264
        %v2266 = vrot.slane %v2265, 2
        %v2267 = vadd.f32 %v2265, %v2266
        %v2268 = vrot.slane %v2267, 1
        %v2269 = vadd.f32 %v2267, %v2268
        %v2270 = vadd.f32 %v2033, %v2037
        %v2271 = vadd.f32 %v2270, %v2041
        %v2272 = vadd.f32 %v2271, %v2045
        %v2273 = vadd.f32 %v2272, %v2049
        %v2274 = vadd.f32 %v2273, %v2053
        %v2275 = vadd.f32 %v2274, %v2057
        %v2276 = vadd.f32 %v2275, %v2061
        %v2277 = vadd.f32 %v2276, %v2065
        %v2278 = vadd.f32 %v2277, %v2069
        %v2279 = vadd.f32 %v2278, %v2073
        %v2280 = vadd.f32 %v2279, %v2077
        %v2281 = vadd.f32 %v2280, %v2081
        %v2282 = vadd.f32 %v2281, %v2085
        %v2283 = vadd.f32 %v2282, %v2089
        %v2284 = vadd.f32 %v2283, %v2093
        %v2285 = vadd.f32 %v2284, %v2097
        %v2286 = vadd.f32 %v2285, %v2101
        %v2287 = vadd.f32 %v2286, %v2105
        %v2288 = vadd.f32 %v2287, %v2109
        %v2289 = vadd.f32 %v2288, %v2113
        %v2290 = vadd.f32 %v2289, %v2117
        %v2291 = vadd.f32 %v2290, %v2121
        %v2292 = vadd.f32 %v2291, %v2125
        %v2293 = vadd.f32 %v2292, %v2129
        %v2294 = vadd.f32 %v2293, %v2133
        %v2295 = vadd.f32 %v2294, %v2137
        %v2296 = vadd.f32 %v2295, %v2141
        %v2297 = vadd.f32 %v2296, %v2145
        %v2298 = vadd.f32 %v2297, %v2149
        %v2299 = vadd.f32 %v2298, %v2153
        %v2300 = vadd.f32 %v2299, %v2157
        %v2301 = vrot.slane %v2300, 4
        %v2302 = vadd.f32 %v2300, %v2301
        %v2303 = vrot.slane %v2302, 2
        %v2304 = vadd.f32 %v2302, %v2303
        %v2305 = vrot.slane %v2304, 1
        %v2306 = vadd.f32 %v2304, %v2305
        %v2311 = vcombine.low %v2195, %v2232
        %v2312 = vcombine.low %v2269, %v2306
        %v2314 = vunpack.c.l.s4 1966171168
        %v2315 = vunpack.c.0.s8 %v2314
        %v2316 = vlaneseq
        %v2317 = vshrl.u32 %v2316, 7
        %v2318 = vsub.s32 %v2315, %v2317
        %v2319 = vrot.slane %v2311, %v2318
        %v2321 = vunpack.c.l.s4 1966171168
        %v2322 = vunpack.c.0.s8 %v2321
        %v2323 = vlaneseq
        %v2324 = vshrl.u32 %v2323, 7
        %v2325 = vsub.s32 %v2322, %v2324
        %v2326 = vrot.slane %v2312, %v2325
        %v2327 = vcombine.low %v2319, %v2326
        %v2329 = vunpack.c.l.s4 1966171168
        %v2330 = vunpack.c.0.s8 %v2329
        %v2331 = vlaneseq
        %v2332 = vshrl.u32 %v2331, 7
        %v2333 = vsub.s32 %v2330, %v2332
        %v2334 = vrot.slane %v2327, %v2333
        %v2336 = vadd.f32 %v2158, %v2334
        %v2337 = vlaneseq
        %vm2338 = vcmp.ge.s32.totalorder %v2337, 0
        %vm2339 = vcmp.lt.s32.totalorder %v2337, 512
        %vm2340 = vmand %vm2338, %vm2339
        %2341 = vst.msk [vmem:[%s300] sm:$0xf] %vm2340, %v2336
        %v2342 = vld [vmem:[%s304] sm:$0xf]
        %v2343 = vmul.f32 %v2030, %v2030
        %v2344 = vmul.f32 %v2031, %v2031
        %v2345 = vmul.f32 %v2032, %v2032
        %v2346 = vmul.f32 %v2033, %v2033
        %v2347 = vmul.f32 %v2034, %v2034
        %v2348 = vmul.f32 %v2035, %v2035
        %v2349 = vmul.f32 %v2036, %v2036
        %v2350 = vmul.f32 %v2037, %v2037
        %v2351 = vmul.f32 %v2038, %v2038
        %v2352 = vmul.f32 %v2039, %v2039
        %v2353 = vmul.f32 %v2040, %v2040
        %v2354 = vmul.f32 %v2041, %v2041
        %v2355 = vmul.f32 %v2042, %v2042
        %v2356 = vmul.f32 %v2043, %v2043
        %v2357 = vmul.f32 %v2044, %v2044
        %v2358 = vmul.f32 %v2045, %v2045
        %v2359 = vmul.f32 %v2046, %v2046
        %v2360 = vmul.f32 %v2047, %v2047
        %v2361 = vmul.f32 %v2048, %v2048
        %v2362 = vmul.f32 %v2049, %v2049
        %v2363 = vmul.f32 %v2050, %v2050
        %v2364 = vmul.f32 %v2051, %v2051
        %v2365 = vmul.f32 %v2052, %v2052
        %v2366 = vmul.f32 %v2053, %v2053
        %v2367 = vmul.f32 %v2054, %v2054
        %v2368 = vmul.f32 %v2055, %v2055
        %v2369 = vmul.f32 %v2056, %v2056
        %v2370 = vmul.f32 %v2057, %v2057
        %v2371 = vmul.f32 %v2058, %v2058
        %v2372 = vmul.f32 %v2059, %v2059
        %v2373 = vmul.f32 %v2060, %v2060
        %v2374 = vmul.f32 %v2061, %v2061
        %v2375 = vmul.f32 %v2062, %v2062
        %v2376 = vmul.f32 %v2063, %v2063
        %v2377 = vmul.f32 %v2064, %v2064
        %v2378 = vmul.f32 %v2065, %v2065
        %v2379 = vmul.f32 %v2066, %v2066
        %v2380 = vmul.f32 %v2067, %v2067
        %v2381 = vmul.f32 %v2068, %v2068
        %v2382 = vmul.f32 %v2069, %v2069
        %v2383 = vmul.f32 %v2070, %v2070
        %v2384 = vmul.f32 %v2071, %v2071
        %v2385 = vmul.f32 %v2072, %v2072
        %v2386 = vmul.f32 %v2073, %v2073
        %v2387 = vmul.f32 %v2074, %v2074
        %v2388 = vmul.f32 %v2075, %v2075
        %v2389 = vmul.f32 %v2076, %v2076
        %v2390 = vmul.f32 %v2077, %v2077
        %v2391 = vmul.f32 %v2078, %v2078
        %v2392 = vmul.f32 %v2079, %v2079
        %v2393 = vmul.f32 %v2080, %v2080
        %v2394 = vmul.f32 %v2081, %v2081
        %v2395 = vmul.f32 %v2082, %v2082
        %v2396 = vmul.f32 %v2083, %v2083
        %v2397 = vmul.f32 %v2084, %v2084
        %v2398 = vmul.f32 %v2085, %v2085
        %v2399 = vmul.f32 %v2086, %v2086
        %v2400 = vmul.f32 %v2087, %v2087
        %v2401 = vmul.f32 %v2088, %v2088
        %v2402 = vmul.f32 %v2089, %v2089
        %v2403 = vmul.f32 %v2090, %v2090
        %v2404 = vmul.f32 %v2091, %v2091
        %v2405 = vmul.f32 %v2092, %v2092
        %v2406 = vmul.f32 %v2093, %v2093
        %v2407 = vmul.f32 %v2094, %v2094
        %v2408 = vmul.f32 %v2095, %v2095
        %v2409 = vmul.f32 %v2096, %v2096
        %v2410 = vmul.f32 %v2097, %v2097
        %v2411 = vmul.f32 %v2098, %v2098
        %v2412 = vmul.f32 %v2099, %v2099
        %v2413 = vmul.f32 %v2100, %v2100
        %v2414 = vmul.f32 %v2101, %v2101
        %v2415 = vmul.f32 %v2102, %v2102
        %v2416 = vmul.f32 %v2103, %v2103
        %v2417 = vmul.f32 %v2104, %v2104
        %v2418 = vmul.f32 %v2105, %v2105
        %v2419 = vmul.f32 %v2106, %v2106
        %v2420 = vmul.f32 %v2107, %v2107
        %v2421 = vmul.f32 %v2108, %v2108
        %v2422 = vmul.f32 %v2109, %v2109
        %v2423 = vmul.f32 %v2110, %v2110
        %v2424 = vmul.f32 %v2111, %v2111
        %v2425 = vmul.f32 %v2112, %v2112
        %v2426 = vmul.f32 %v2113, %v2113
        %v2427 = vmul.f32 %v2114, %v2114
        %v2428 = vmul.f32 %v2115, %v2115
        %v2429 = vmul.f32 %v2116, %v2116
        %v2430 = vmul.f32 %v2117, %v2117
        %v2431 = vmul.f32 %v2118, %v2118
        %v2432 = vmul.f32 %v2119, %v2119
        %v2433 = vmul.f32 %v2120, %v2120
        %v2434 = vmul.f32 %v2121, %v2121
        %v2435 = vmul.f32 %v2122, %v2122
        %v2436 = vmul.f32 %v2123, %v2123
        %v2437 = vmul.f32 %v2124, %v2124
        %v2438 = vmul.f32 %v2125, %v2125
        %v2439 = vmul.f32 %v2126, %v2126
        %v2440 = vmul.f32 %v2127, %v2127
        %v2441 = vmul.f32 %v2128, %v2128
        %v2442 = vmul.f32 %v2129, %v2129
        %v2443 = vmul.f32 %v2130, %v2130
        %v2444 = vmul.f32 %v2131, %v2131
        %v2445 = vmul.f32 %v2132, %v2132
        %v2446 = vmul.f32 %v2133, %v2133
        %v2447 = vmul.f32 %v2134, %v2134
        %v2448 = vmul.f32 %v2135, %v2135
        %v2449 = vmul.f32 %v2136, %v2136
        %v2450 = vmul.f32 %v2137, %v2137
        %v2451 = vmul.f32 %v2138, %v2138
        %v2452 = vmul.f32 %v2139, %v2139
        %v2453 = vmul.f32 %v2140, %v2140
        %v2454 = vmul.f32 %v2141, %v2141
        %v2455 = vmul.f32 %v2142, %v2142
        %v2456 = vmul.f32 %v2143, %v2143
        %v2457 = vmul.f32 %v2144, %v2144
        %v2458 = vmul.f32 %v2145, %v2145
        %v2459 = vmul.f32 %v2146, %v2146
        %v2460 = vmul.f32 %v2147, %v2147
        %v2461 = vmul.f32 %v2148, %v2148
        %v2462 = vmul.f32 %v2149, %v2149
        %v2463 = vmul.f32 %v2150, %v2150
        %v2464 = vmul.f32 %v2151, %v2151
        %v2465 = vmul.f32 %v2152, %v2152
        %v2466 = vmul.f32 %v2153, %v2153
        %v2467 = vmul.f32 %v2154, %v2154
        %v2468 = vmul.f32 %v2155, %v2155
        %v2469 = vmul.f32 %v2156, %v2156
        %v2470 = vmul.f32 %v2157, %v2157
        %v2471 = vadd.f32 %v2343, %v2347
        %v2472 = vadd.f32 %v2471, %v2351
        %v2473 = vadd.f32 %v2472, %v2355
        %v2474 = vadd.f32 %v2473, %v2359
        %v2475 = vadd.f32 %v2474, %v2363
        %v2476 = vadd.f32 %v2475, %v2367
        %v2477 = vadd.f32 %v2476, %v2371
        %v2478 = vadd.f32 %v2477, %v2375
        %v2479 = vadd.f32 %v2478, %v2379
        %v2480 = vadd.f32 %v2479, %v2383
        %v2481 = vadd.f32 %v2480, %v2387
        %v2482 = vadd.f32 %v2481, %v2391
        %v2483 = vadd.f32 %v2482, %v2395
        %v2484 = vadd.f32 %v2483, %v2399
        %v2485 = vadd.f32 %v2484, %v2403
        %v2486 = vadd.f32 %v2485, %v2407
        %v2487 = vadd.f32 %v2486, %v2411
        %v2488 = vadd.f32 %v2487, %v2415
        %v2489 = vadd.f32 %v2488, %v2419
        %v2490 = vadd.f32 %v2489, %v2423
        %v2491 = vadd.f32 %v2490, %v2427
        %v2492 = vadd.f32 %v2491, %v2431
        %v2493 = vadd.f32 %v2492, %v2435
        %v2494 = vadd.f32 %v2493, %v2439
        %v2495 = vadd.f32 %v2494, %v2443
        %v2496 = vadd.f32 %v2495, %v2447
        %v2497 = vadd.f32 %v2496, %v2451
        %v2498 = vadd.f32 %v2497, %v2455
        %v2499 = vadd.f32 %v2498, %v2459
        %v2500 = vadd.f32 %v2499, %v2463
        %v2501 = vadd.f32 %v2500, %v2467
        %v2502 = vrot.slane %v2501, 4
        %v2503 = vadd.f32 %v2501, %v2502
        %v2504 = vrot.slane %v2503, 2
        %v2505 = vadd.f32 %v2503, %v2504
        %v2506 = vrot.slane %v2505, 1
        %v2507 = vadd.f32 %v2505, %v2506
        %v2508 = vadd.f32 %v2344, %v2348
        %v2509 = vadd.f32 %v2508, %v2352
        %v2510 = vadd.f32 %v2509, %v2356
        %v2511 = vadd.f32 %v2510, %v2360
        %v2512 = vadd.f32 %v2511, %v2364
        %v2513 = vadd.f32 %v2512, %v2368
        %v2514 = vadd.f32 %v2513, %v2372
        %v2515 = vadd.f32 %v2514, %v2376
        %v2516 = vadd.f32 %v2515, %v2380
        %v2517 = vadd.f32 %v2516, %v2384
        %v2518 = vadd.f32 %v2517, %v2388
        %v2519 = vadd.f32 %v2518, %v2392
        %v2520 = vadd.f32 %v2519, %v2396
        %v2521 = vadd.f32 %v2520, %v2400
        %v2522 = vadd.f32 %v2521, %v2404
        %v2523 = vadd.f32 %v2522, %v2408
        %v2524 = vadd.f32 %v2523, %v2412
        %v2525 = vadd.f32 %v2524, %v2416
        %v2526 = vadd.f32 %v2525, %v2420
        %v2527 = vadd.f32 %v2526, %v2424
        %v2528 = vadd.f32 %v2527, %v2428
        %v2529 = vadd.f32 %v2528, %v2432
        %v2530 = vadd.f32 %v2529, %v2436
        %v2531 = vadd.f32 %v2530, %v2440
        %v2532 = vadd.f32 %v2531, %v2444
        %v2533 = vadd.f32 %v2532, %v2448
        %v2534 = vadd.f32 %v2533, %v2452
        %v2535 = vadd.f32 %v2534, %v2456
        %v2536 = vadd.f32 %v2535, %v2460
        %v2537 = vadd.f32 %v2536, %v2464
        %v2538 = vadd.f32 %v2537, %v2468
        %v2539 = vrot.slane %v2538, 4
        %v2540 = vadd.f32 %v2538, %v2539
        %v2541 = vrot.slane %v2540, 2
        %v2542 = vadd.f32 %v2540, %v2541
        %v2543 = vrot.slane %v2542, 1
        %v2544 = vadd.f32 %v2542, %v2543
        %v2545 = vadd.f32 %v2345, %v2349
        %v2546 = vadd.f32 %v2545, %v2353
        %v2547 = vadd.f32 %v2546, %v2357
        %v2548 = vadd.f32 %v2547, %v2361
        %v2549 = vadd.f32 %v2548, %v2365
        %v2550 = vadd.f32 %v2549, %v2369
        %v2551 = vadd.f32 %v2550, %v2373
        %v2552 = vadd.f32 %v2551, %v2377
        %v2553 = vadd.f32 %v2552, %v2381
        %v2554 = vadd.f32 %v2553, %v2385
        %v2555 = vadd.f32 %v2554, %v2389
        %v2556 = vadd.f32 %v2555, %v2393
        %v2557 = vadd.f32 %v2556, %v2397
        %v2558 = vadd.f32 %v2557, %v2401
        %v2559 = vadd.f32 %v2558, %v2405
        %v2560 = vadd.f32 %v2559, %v2409
        %v2561 = vadd.f32 %v2560, %v2413
        %v2562 = vadd.f32 %v2561, %v2417
        %v2563 = vadd.f32 %v2562, %v2421
        %v2564 = vadd.f32 %v2563, %v2425
        %v2565 = vadd.f32 %v2564, %v2429
        %v2566 = vadd.f32 %v2565, %v2433
        %v2567 = vadd.f32 %v2566, %v2437
        %v2568 = vadd.f32 %v2567, %v2441
        %v2569 = vadd.f32 %v2568, %v2445
        %v2570 = vadd.f32 %v2569, %v2449
        %v2571 = vadd.f32 %v2570, %v2453
        %v2572 = vadd.f32 %v2571, %v2457
        %v2573 = vadd.f32 %v2572, %v2461
        %v2574 = vadd.f32 %v2573, %v2465
        %v2575 = vadd.f32 %v2574, %v2469
        %v2576 = vrot.slane %v2575, 4
        %v2577 = vadd.f32 %v2575, %v2576
        %v2578 = vrot.slane %v2577, 2
        %v2579 = vadd.f32 %v2577, %v2578
        %v2580 = vrot.slane %v2579, 1
        %v2581 = vadd.f32 %v2579, %v2580
        %v2582 = vadd.f32 %v2346, %v2350
        %v2583 = vadd.f32 %v2582, %v2354
        %v2584 = vadd.f32 %v2583, %v2358
        %v2585 = vadd.f32 %v2584, %v2362
        %v2586 = vadd.f32 %v2585, %v2366
        %v2587 = vadd.f32 %v2586, %v2370
        %v2588 = vadd.f32 %v2587, %v2374
        %v2589 = vadd.f32 %v2588, %v2378
        %v2590 = vadd.f32 %v2589, %v2382
        %v2591 = vadd.f32 %v2590, %v2386
        %v2592 = vadd.f32 %v2591, %v2390
        %v2593 = vadd.f32 %v2592, %v2394
        %v2594 = vadd.f32 %v2593, %v2398
        %v2595 = vadd.f32 %v2594, %v2402
        %v2596 = vadd.f32 %v2595, %v2406
        %v2597 = vadd.f32 %v2596, %v2410
        %v2598 = vadd.f32 %v2597, %v2414
        %v2599 = vadd.f32 %v2598, %v2418
        %v2600 = vadd.f32 %v2599, %v2422
        %v2601 = vadd.f32 %v2600, %v2426
        %v2602 = vadd.f32 %v2601, %v2430
        %v2603 = vadd.f32 %v2602, %v2434
        %v2604 = vadd.f32 %v2603, %v2438
        %v2605 = vadd.f32 %v2604, %v2442
        %v2606 = vadd.f32 %v2605, %v2446
        %v2607 = vadd.f32 %v2606, %v2450
        %v2608 = vadd.f32 %v2607, %v2454
        %v2609 = vadd.f32 %v2608, %v2458
        %v2610 = vadd.f32 %v2609, %v2462
        %v2611 = vadd.f32 %v2610, %v2466
        %v2612 = vadd.f32 %v2611, %v2470
        %v2613 = vrot.slane %v2612, 4
        %v2614 = vadd.f32 %v2612, %v2613
        %v2615 = vrot.slane %v2614, 2
        %v2616 = vadd.f32 %v2614, %v2615
        %v2617 = vrot.slane %v2616, 1
        %v2618 = vadd.f32 %v2616, %v2617
        %v2623 = vcombine.low %v2507, %v2544
        %v2624 = vcombine.low %v2581, %v2618
        %v2626 = vunpack.c.l.s4 1966171168
        %v2627 = vunpack.c.0.s8 %v2626
        %v2628 = vlaneseq
        %v2629 = vshrl.u32 %v2628, 7
        %v2630 = vsub.s32 %v2627, %v2629
        %v2631 = vrot.slane %v2623, %v2630
        %v2633 = vunpack.c.l.s4 1966171168
        %v2634 = vunpack.c.0.s8 %v2633
        %v2635 = vlaneseq
        %v2636 = vshrl.u32 %v2635, 7
        %v2637 = vsub.s32 %v2634, %v2636
        %v2638 = vrot.slane %v2624, %v2637
        %v2639 = vcombine.low %v2631, %v2638
        %v2641 = vunpack.c.l.s4 1966171168
        %v2642 = vunpack.c.0.s8 %v2641
        %v2643 = vlaneseq
        %v2644 = vshrl.u32 %v2643, 7
        %v2645 = vsub.s32 %v2642, %v2644
        %v2646 = vrot.slane %v2639, %v2645
        %v2648 = vadd.f32 %v2342, %v2646
        %2649 = vst.msk [vmem:[%s304] sm:$0xf] %vm2340, %v2648
      $region48: #{sdf_forward.11} parent=35 // pred_fallthru
        _
      %v2650 = vpack.c.bf16 %v1082, %v1078
      %v2651 = vpack.c.bf16 %v1084, %v1080
      %v2652 = vpack.c.bf16 %v1275, %v1271
      %v2653 = vpack.c.bf16 %v1277, %v1273
      %v2654 = vpack.c.bf16 %v1092, %v1088
      %v2655 = vpack.c.bf16 %v1094, %v1090
      %v2656 = vpack.c.bf16 %v1285, %v1281
      %v2657 = vpack.c.bf16 %v1287, %v1283
      %v2658 = vpack.c.bf16 %v1102, %v1098
      %v2659 = vpack.c.bf16 %v1104, %v1100
      %v2660 = vpack.c.bf16 %v1295, %v1291
      %v2661 = vpack.c.bf16 %v1297, %v1293
      %v2662 = vpack.c.bf16 %v1112, %v1108
      %v2663 = vpack.c.bf16 %v1114, %v1110
      %v2664 = vpack.c.bf16 %v1305, %v1301
      %v2665 = vpack.c.bf16 %v1307, %v1303
      %v2666 = vpack.c.bf16 %v1122, %v1118
      %v2667 = vpack.c.bf16 %v1124, %v1120
      %v2668 = vpack.c.bf16 %v1315, %v1311
      %v2669 = vpack.c.bf16 %v1317, %v1313
      %v2670 = vpack.c.bf16 %v1132, %v1128
      %v2671 = vpack.c.bf16 %v1134, %v1130
      %v2672 = vpack.c.bf16 %v1325, %v1321
      %v2673 = vpack.c.bf16 %v1327, %v1323
      %v2674 = vpack.c.bf16 %v1142, %v1138
      %v2675 = vpack.c.bf16 %v1144, %v1140
      %v2676 = vpack.c.bf16 %v1335, %v1331
      %v2677 = vpack.c.bf16 %v1337, %v1333
      %v2678 = vpack.c.bf16 %v1152, %v1148
      %v2679 = vpack.c.bf16 %v1154, %v1150
      %v2680 = vpack.c.bf16 %v1345, %v1341
      %v2681 = vpack.c.bf16 %v1347, %v1343
      %v2682 = vpack.c.bf16 %v1162, %v1158
      %v2683 = vpack.c.bf16 %v1164, %v1160
      %v2684 = vpack.c.bf16 %v1355, %v1351
      %v2685 = vpack.c.bf16 %v1357, %v1353
      %v2686 = vpack.c.bf16 %v1172, %v1168
      %v2687 = vpack.c.bf16 %v1174, %v1170
      %v2688 = vpack.c.bf16 %v1365, %v1361
      %v2689 = vpack.c.bf16 %v1367, %v1363
      %v2690 = vpack.c.bf16 %v1182, %v1178
      %v2691 = vpack.c.bf16 %v1184, %v1180
      %v2692 = vpack.c.bf16 %v1375, %v1371
      %v2693 = vpack.c.bf16 %v1377, %v1373
      %v2694 = vpack.c.bf16 %v1192, %v1188
      %v2695 = vpack.c.bf16 %v1194, %v1190
      %v2696 = vpack.c.bf16 %v1385, %v1381
      %v2697 = vpack.c.bf16 %v1387, %v1383
      %v2698 = vpack.c.bf16 %v1202, %v1198
      %v2699 = vpack.c.bf16 %v1204, %v1200
      %v2700 = vpack.c.bf16 %v1395, %v1391
      %v2701 = vpack.c.bf16 %v1397, %v1393
      %v2702 = vpack.c.bf16 %v1212, %v1208
      %v2703 = vpack.c.bf16 %v1214, %v1210
      %v2704 = vpack.c.bf16 %v1405, %v1401
      %v2705 = vpack.c.bf16 %v1407, %v1403
      %v2706 = vpack.c.bf16 %v1222, %v1218
      %v2707 = vpack.c.bf16 %v1224, %v1220
      %v2708 = vpack.c.bf16 %v1415, %v1411
      %v2709 = vpack.c.bf16 %v1417, %v1413
      %v2710 = vpack.c.bf16 %v1232, %v1228
      %v2711 = vpack.c.bf16 %v1234, %v1230
      %v2712 = vpack.c.bf16 %v1425, %v1421
      %v2713 = vpack.c.bf16 %v1427, %v1423
      %v2778 = vunpack.c.l.b16 %v2650
      %v2779 = vunpack.c.l.b16 %v2651
      %v2780 = vunpack.c.l.b16 %v2652
      %v2781 = vunpack.c.l.b16 %v2653
      %v2782 = vunpack.c.h.b16 %v2650
      %v2783 = vunpack.c.h.b16 %v2651
      %v2784 = vunpack.c.h.b16 %v2652
      %v2785 = vunpack.c.h.b16 %v2653
      %v2786 = vunpack.c.l.b16 %v2654
      %v2787 = vunpack.c.l.b16 %v2655
      %v2788 = vunpack.c.l.b16 %v2656
      %v2789 = vunpack.c.l.b16 %v2657
      %v2790 = vunpack.c.h.b16 %v2654
      %v2791 = vunpack.c.h.b16 %v2655
      %v2792 = vunpack.c.h.b16 %v2656
      %v2793 = vunpack.c.h.b16 %v2657
      %v2794 = vunpack.c.l.b16 %v2658
      %v2795 = vunpack.c.l.b16 %v2659
      %v2796 = vunpack.c.l.b16 %v2660
      %v2797 = vunpack.c.l.b16 %v2661
      %v2798 = vunpack.c.h.b16 %v2658
      %v2799 = vunpack.c.h.b16 %v2659
      %v2800 = vunpack.c.h.b16 %v2660
      %v2801 = vunpack.c.h.b16 %v2661
      %v2802 = vunpack.c.l.b16 %v2662
      %v2803 = vunpack.c.l.b16 %v2663
      %v2804 = vunpack.c.l.b16 %v2664
      %v2805 = vunpack.c.l.b16 %v2665
      %v2806 = vunpack.c.h.b16 %v2662
      %v2807 = vunpack.c.h.b16 %v2663
      %v2808 = vunpack.c.h.b16 %v2664
      %v2809 = vunpack.c.h.b16 %v2665
      %v2810 = vunpack.c.l.b16 %v2666
      %v2811 = vunpack.c.l.b16 %v2667
      %v2812 = vunpack.c.l.b16 %v2668
      %v2813 = vunpack.c.l.b16 %v2669
      %v2814 = vunpack.c.h.b16 %v2666
      %v2815 = vunpack.c.h.b16 %v2667
      %v2816 = vunpack.c.h.b16 %v2668
      %v2817 = vunpack.c.h.b16 %v2669
      %v2818 = vunpack.c.l.b16 %v2670
      %v2819 = vunpack.c.l.b16 %v2671
      %v2820 = vunpack.c.l.b16 %v2672
      %v2821 = vunpack.c.l.b16 %v2673
      %v2822 = vunpack.c.h.b16 %v2670
      %v2823 = vunpack.c.h.b16 %v2671
      %v2824 = vunpack.c.h.b16 %v2672
      %v2825 = vunpack.c.h.b16 %v2673
      %v2826 = vunpack.c.l.b16 %v2674
      %v2827 = vunpack.c.l.b16 %v2675
      %v2828 = vunpack.c.l.b16 %v2676
      %v2829 = vunpack.c.l.b16 %v2677
      %v2830 = vunpack.c.h.b16 %v2674
      %v2831 = vunpack.c.h.b16 %v2675
      %v2832 = vunpack.c.h.b16 %v2676
      %v2833 = vunpack.c.h.b16 %v2677
      %v2834 = vunpack.c.l.b16 %v2678
      %v2835 = vunpack.c.l.b16 %v2679
      %v2836 = vunpack.c.l.b16 %v2680
      %v2837 = vunpack.c.l.b16 %v2681
      %v2838 = vunpack.c.h.b16 %v2678
      %v2839 = vunpack.c.h.b16 %v2679
      %v2840 = vunpack.c.h.b16 %v2680
      %v2841 = vunpack.c.h.b16 %v2681
      %v2842 = vunpack.c.l.b16 %v2682
      %v2843 = vunpack.c.l.b16 %v2683
      %v2844 = vunpack.c.l.b16 %v2684
      %v2845 = vunpack.c.l.b16 %v2685
      %v2846 = vunpack.c.h.b16 %v2682
      %v2847 = vunpack.c.h.b16 %v2683
      %v2848 = vunpack.c.h.b16 %v2684
      %v2849 = vunpack.c.h.b16 %v2685
      %v2850 = vunpack.c.l.b16 %v2686
      %v2851 = vunpack.c.l.b16 %v2687
      %v2852 = vunpack.c.l.b16 %v2688
      %v2853 = vunpack.c.l.b16 %v2689
      %v2854 = vunpack.c.h.b16 %v2686
      %v2855 = vunpack.c.h.b16 %v2687
      %v2856 = vunpack.c.h.b16 %v2688
      %v2857 = vunpack.c.h.b16 %v2689
      %v2858 = vunpack.c.l.b16 %v2690
      %v2859 = vunpack.c.l.b16 %v2691
      %v2860 = vunpack.c.l.b16 %v2692
      %v2861 = vunpack.c.l.b16 %v2693
      %v2862 = vunpack.c.h.b16 %v2690
      %v2863 = vunpack.c.h.b16 %v2691
      %v2864 = vunpack.c.h.b16 %v2692
      %v2865 = vunpack.c.h.b16 %v2693
      %v2866 = vunpack.c.l.b16 %v2694
      %v2867 = vunpack.c.l.b16 %v2695
      %v2868 = vunpack.c.l.b16 %v2696
      %v2869 = vunpack.c.l.b16 %v2697
      %v2870 = vunpack.c.h.b16 %v2694
      %v2871 = vunpack.c.h.b16 %v2695
      %v2872 = vunpack.c.h.b16 %v2696
      %v2873 = vunpack.c.h.b16 %v2697
      %v2874 = vunpack.c.l.b16 %v2698
      %v2875 = vunpack.c.l.b16 %v2699
      %v2876 = vunpack.c.l.b16 %v2700
      %v2877 = vunpack.c.l.b16 %v2701
      %v2878 = vunpack.c.h.b16 %v2698
      %v2879 = vunpack.c.h.b16 %v2699
      %v2880 = vunpack.c.h.b16 %v2700
      %v2881 = vunpack.c.h.b16 %v2701
      %v2882 = vunpack.c.l.b16 %v2702
      %v2883 = vunpack.c.l.b16 %v2703
      %v2884 = vunpack.c.l.b16 %v2704
      %v2885 = vunpack.c.l.b16 %v2705
      %v2886 = vunpack.c.h.b16 %v2702
      %v2887 = vunpack.c.h.b16 %v2703
      %v2888 = vunpack.c.h.b16 %v2704
      %v2889 = vunpack.c.h.b16 %v2705
      %v2890 = vunpack.c.l.b16 %v2706
      %v2891 = vunpack.c.l.b16 %v2707
      %v2892 = vunpack.c.l.b16 %v2708
      %v2893 = vunpack.c.l.b16 %v2709
      %v2894 = vunpack.c.h.b16 %v2706
      %v2895 = vunpack.c.h.b16 %v2707
      %v2896 = vunpack.c.h.b16 %v2708
      %v2897 = vunpack.c.h.b16 %v2709
      %v2898 = vunpack.c.l.b16 %v2710
      %v2899 = vunpack.c.l.b16 %v2711
      %v2900 = vunpack.c.l.b16 %v2712
      %v2901 = vunpack.c.l.b16 %v2713
      %v2902 = vunpack.c.h.b16 %v2710
      %v2903 = vunpack.c.h.b16 %v2711
      %v2904 = vunpack.c.h.b16 %v2712
      %v2905 = vunpack.c.h.b16 %v2713
      %v2906 = vpack.c.b16 %v2779, %v2778
      %v2907 = vpack.c.b16 %v2781, %v2780
      %v2908 = vpack.c.b16 %v2783, %v2782
      %v2909 = vpack.c.b16 %v2785, %v2784
      %v2910 = vpack.c.b16 %v2787, %v2786
      %v2911 = vpack.c.b16 %v2789, %v2788
      %v2912 = vpack.c.b16 %v2791, %v2790
      %v2913 = vpack.c.b16 %v2793, %v2792
      %v2914 = vpack.c.b16 %v2795, %v2794
      %v2915 = vpack.c.b16 %v2797, %v2796
      %v2916 = vpack.c.b16 %v2799, %v2798
      %v2917 = vpack.c.b16 %v2801, %v2800
      %v2918 = vpack.c.b16 %v2803, %v2802
      %v2919 = vpack.c.b16 %v2805, %v2804
      %v2920 = vpack.c.b16 %v2807, %v2806
      %v2921 = vpack.c.b16 %v2809, %v2808
      %v2922 = vpack.c.b16 %v2811, %v2810
      %v2923 = vpack.c.b16 %v2813, %v2812
      %v2924 = vpack.c.b16 %v2815, %v2814
      %v2925 = vpack.c.b16 %v2817, %v2816
      %v2926 = vpack.c.b16 %v2819, %v2818
      %v2927 = vpack.c.b16 %v2821, %v2820
      %v2928 = vpack.c.b16 %v2823, %v2822
      %v2929 = vpack.c.b16 %v2825, %v2824
      %v2930 = vpack.c.b16 %v2827, %v2826
      %v2931 = vpack.c.b16 %v2829, %v2828
      %v2932 = vpack.c.b16 %v2831, %v2830
      %v2933 = vpack.c.b16 %v2833, %v2832
      %v2934 = vpack.c.b16 %v2835, %v2834
      %v2935 = vpack.c.b16 %v2837, %v2836
      %v2936 = vpack.c.b16 %v2839, %v2838
      %v2937 = vpack.c.b16 %v2841, %v2840
      %v2938 = vpack.c.b16 %v2843, %v2842
      %v2939 = vpack.c.b16 %v2845, %v2844
      %v2940 = vpack.c.b16 %v2847, %v2846
      %v2941 = vpack.c.b16 %v2849, %v2848
      %v2942 = vpack.c.b16 %v2851, %v2850
      %v2943 = vpack.c.b16 %v2853, %v2852
      %v2944 = vpack.c.b16 %v2855, %v2854
      %v2945 = vpack.c.b16 %v2857, %v2856
      %v2946 = vpack.c.b16 %v2859, %v2858
      %v2947 = vpack.c.b16 %v2861, %v2860
      %v2948 = vpack.c.b16 %v2863, %v2862
      %v2949 = vpack.c.b16 %v2865, %v2864
      %v2950 = vpack.c.b16 %v2867, %v2866
      %v2951 = vpack.c.b16 %v2869, %v2868
      %v2952 = vpack.c.b16 %v2871, %v2870
      %v2953 = vpack.c.b16 %v2873, %v2872
      %v2954 = vpack.c.b16 %v2875, %v2874
      %v2955 = vpack.c.b16 %v2877, %v2876
      %v2956 = vpack.c.b16 %v2879, %v2878
      %v2957 = vpack.c.b16 %v2881, %v2880
      %v2958 = vpack.c.b16 %v2883, %v2882
      %v2959 = vpack.c.b16 %v2885, %v2884
      %v2960 = vpack.c.b16 %v2887, %v2886
      %v2961 = vpack.c.b16 %v2889, %v2888
      %v2962 = vpack.c.b16 %v2891, %v2890
      %v2963 = vpack.c.b16 %v2893, %v2892
      %v2964 = vpack.c.b16 %v2895, %v2894
      %v2965 = vpack.c.b16 %v2897, %v2896
      %v2966 = vpack.c.b16 %v2899, %v2898
      %v2967 = vpack.c.b16 %v2901, %v2900
      %v2968 = vpack.c.b16 %v2903, %v2902
      %v2969 = vpack.c.b16 %v2905, %v2904
      %3034 = vst [vmem:[%s294] sm:$0xff] %v2906
      %3035 = vst [vmem:[%s294 + $0x8] sm:$0xff] %v2907
      %3036 = vst [vmem:[%s294 + $0x10] sm:$0xff] %v2908
      %3037 = vst [vmem:[%s294 + $0x18] sm:$0xff] %v2909
      %3038 = vst [vmem:[%s294 + $0x20] sm:$0xff] %v2910
      %3039 = vst [vmem:[%s294 + $0x28] sm:$0xff] %v2911
      %3040 = vst [vmem:[%s294 + $0x30] sm:$0xff] %v2912
      %3041 = vst [vmem:[%s294 + $0x38] sm:$0xff] %v2913
      %3042 = vst [vmem:[%s294 + $0x40] sm:$0xff] %v2914
      %3043 = vst [vmem:[%s294 + $0x48] sm:$0xff] %v2915
      %3044 = vst [vmem:[%s294 + $0x50] sm:$0xff] %v2916
      %3045 = vst [vmem:[%s294 + $0x58] sm:$0xff] %v2917
      %3046 = vst [vmem:[%s294 + $0x60] sm:$0xff] %v2918
      %3047 = vst [vmem:[%s294 + $0x68] sm:$0xff] %v2919
      %3048 = vst [vmem:[%s294 + $0x70] sm:$0xff] %v2920
      %3049 = vst [vmem:[%s294 + $0x78] sm:$0xff] %v2921
      %3050 = vst [vmem:[%s294 + $0x80] sm:$0xff] %v2922
      %3051 = vst [vmem:[%s294 + $0x88] sm:$0xff] %v2923
      %3052 = vst [vmem:[%s294 + $0x90] sm:$0xff] %v2924
      %3053 = vst [vmem:[%s294 + $0x98] sm:$0xff] %v2925
      %3054 = vst [vmem:[%s294 + $0xa0] sm:$0xff] %v2926
      %3055 = vst [vmem:[%s294 + $0xa8] sm:$0xff] %v2927
      %3056 = vst [vmem:[%s294 + $0xb0] sm:$0xff] %v2928
      %3057 = vst [vmem:[%s294 + $0xb8] sm:$0xff] %v2929
      %3058 = vst [vmem:[%s294 + $0xc0] sm:$0xff] %v2930
      %3059 = vst [vmem:[%s294 + $0xc8] sm:$0xff] %v2931
      %3060 = vst [vmem:[%s294 + $0xd0] sm:$0xff] %v2932
      %3061 = vst [vmem:[%s294 + $0xd8] sm:$0xff] %v2933
      %3062 = vst [vmem:[%s294 + $0xe0] sm:$0xff] %v2934
      %3063 = vst [vmem:[%s294 + $0xe8] sm:$0xff] %v2935
      %3064 = vst [vmem:[%s294 + $0xf0] sm:$0xff] %v2936
      %3065 = vst [vmem:[%s294 + $0xf8] sm:$0xff] %v2937
      %3066 = vst [vmem:[%s294 + $0x100] sm:$0xff] %v2938
      %3067 = vst [vmem:[%s294 + $0x108] sm:$0xff] %v2939
      %3068 = vst [vmem:[%s294 + $0x110] sm:$0xff] %v2940
      %3069 = vst [vmem:[%s294 + $0x118] sm:$0xff] %v2941
      %3070 = vst [vmem:[%s294 + $0x120] sm:$0xff] %v2942
      %3071 = vst [vmem:[%s294 + $0x128] sm:$0xff] %v2943
      %3072 = vst [vmem:[%s294 + $0x130] sm:$0xff] %v2944
      %3073 = vst [vmem:[%s294 + $0x138] sm:$0xff] %v2945
      %3074 = vst [vmem:[%s294 + $0x140] sm:$0xff] %v2946
      %3075 = vst [vmem:[%s294 + $0x148] sm:$0xff] %v2947
      %3076 = vst [vmem:[%s294 + $0x150] sm:$0xff] %v2948
      %3077 = vst [vmem:[%s294 + $0x158] sm:$0xff] %v2949
      %3078 = vst [vmem:[%s294 + $0x160] sm:$0xff] %v2950
      %3079 = vst [vmem:[%s294 + $0x168] sm:$0xff] %v2951
      %3080 = vst [vmem:[%s294 + $0x170] sm:$0xff] %v2952
      %3081 = vst [vmem:[%s294 + $0x178] sm:$0xff] %v2953
      %3082 = vst [vmem:[%s294 + $0x180] sm:$0xff] %v2954
      %3083 = vst [vmem:[%s294 + $0x188] sm:$0xff] %v2955
      %3084 = vst [vmem:[%s294 + $0x190] sm:$0xff] %v2956
      %3085 = vst [vmem:[%s294 + $0x198] sm:$0xff] %v2957
      %3086 = vst [vmem:[%s294 + $0x1a0] sm:$0xff] %v2958
      %3087 = vst [vmem:[%s294 + $0x1a8] sm:$0xff] %v2959
      %3088 = vst [vmem:[%s294 + $0x1b0] sm:$0xff] %v2960
      %3089 = vst [vmem:[%s294 + $0x1b8] sm:$0xff] %v2961
      %3090 = vst [vmem:[%s294 + $0x1c0] sm:$0xff] %v2962
      %3091 = vst [vmem:[%s294 + $0x1c8] sm:$0xff] %v2963
      %3092 = vst [vmem:[%s294 + $0x1d0] sm:$0xff] %v2964
      %3093 = vst [vmem:[%s294 + $0x1d8] sm:$0xff] %v2965
      %3094 = vst [vmem:[%s294 + $0x1e0] sm:$0xff] %v2966
      %3095 = vst [vmem:[%s294 + $0x1e8] sm:$0xff] %v2967
      %3096 = vst [vmem:[%s294 + $0x1f0] sm:$0xff] %v2968
      %3097 = vst [vmem:[%s294 + $0x1f8] sm:$0xff] %v2969
      %s3098 = sadd.s32 %s22, %s23
      %s3099 = smul.u32 32, %s3098
      %p3100 = scmp.lt.s32.totalorder %s3099, 63
      %s3101 = scalar_select %p3100, %s3099, 63
      %s3102 = smul.addr %s3101, 4
      %s3103 = smul.addr %s3102, 4
      %s3104 = scalar_lea.vmem %s4, %s3103
      %p3105 = scmp.lt.s32.totalorder %s22, 1
      %s3106 = scalar_select %p3105, %s22, 1
      %s3107 = smul.addr %s3106, 4
      %s3108 = scalar_lea.vmem %s5, %s3107
      %p3109 = scmp.lt.s32.totalorder %s22, 1
      %s3110 = scalar_select %p3109, %s22, 1
      %s3111 = smul.addr %s3110, 4
      %s3112 = scalar_lea.vmem %s6, %s3111
      // Predicated region
      $region49: #{sdf_forward.11} parent=35 // pred_check
        %p3113 = pneg %p141
      $region50: #{sdf_forward.11} parent=35 // pred_check_branch
        %3115 = sbr.rel (%p3113) target = $region52
      $region51: #{sdf_forward.11} parent=35 // pred_region
        %s3116 = sadd.s32 %s22, %s23
        %s3117 = smul.u32 32, %s3116
      $region52: #{sdf_forward.11} parent=35 // pred_fallthru
        _
      // Predicated region
      $region53: #{sdf_forward.11} parent=35 // pred_check
        %p3118 = pneg %p167
      $region54: #{sdf_forward.11} parent=35 // pred_check_branch
        %3120 = sbr.rel (%p3118) target = $region56
      $region55: #{sdf_forward.11} parent=35 // pred_region
        _
      $region56: #{sdf_forward.11} parent=35 // pred_fallthru
        _
      // Predicated region
      $region57: #{sdf_forward.11} parent=35 // pred_check
        %p3121 = pneg %p193
      $region58: #{sdf_forward.11} parent=35 // pred_check_branch
        %3123 = sbr.rel (%p3121) target = $region60
      $region59: #{sdf_forward.11} parent=35 // pred_region
        _
      $region60: #{sdf_forward.11} parent=35 // pred_fallthru
        _
    $region36: #{sdf_forward.11} parent=5 // pred_fallthru
      _
    %p3124 = scmp.le.s32.totalorder 2, %s13
    // Predicated region
    $region61: #{sdf_forward.11} parent=5 // pred_check
      %p3125 = pneg %p3124
    $region62: #{sdf_forward.11} parent=5 // pred_check_branch
      %3127 = sbr.rel (%p3125) target = $region64
    $region63: #{sdf_forward.11} parent=5 // pred_region
      %s3128 = ssub.s32 %s13, 2
      // Predicated region
      $region65: #{sdf_forward.11} parent=63 // pred_check
        %p3129 = pneg %p147
      $region66: #{sdf_forward.11} parent=63 // pred_check_branch
        %3131 = sbr.rel (%p3129) target = $region68
      $region67: #{sdf_forward.11} parent=63 // pred_region
        %s3132 = sadd.s32 %s24, %s25
        %s3133 = smul.u32 32, %s3132
        %p3134 = scmp.lt.s32.totalorder %s3133, 63
        %s3135 = scalar_select %p3134, %s3133, 63
        %s3136 = smul.addr %s3135, 4
        %s3137 = smul.addr %s3136, 4
        %s3138 = scalar_lea.vmem %s4, %s3137
      $region68: #{sdf_forward.11} parent=63 // pred_fallthru
        _
      // Predicated region
      $region69: #{sdf_forward.11} parent=63 // pred_check
        %p3139 = pneg %p173
      $region70: #{sdf_forward.11} parent=63 // pred_check_branch
        %3141 = sbr.rel (%p3139) target = $region72
      $region71: #{sdf_forward.11} parent=63 // pred_region
        %p3142 = scmp.lt.s32.totalorder %s24, 1
        %s3143 = scalar_select %p3142, %s24, 1
        %s3144 = smul.addr %s3143, 4
        %s3145 = scalar_lea.vmem %s5, %s3144
      $region72: #{sdf_forward.11} parent=63 // pred_fallthru
        _
      // Predicated region
      $region73: #{sdf_forward.11} parent=63 // pred_check
        %p3146 = pneg %p199
      $region74: #{sdf_forward.11} parent=63 // pred_check_branch
        %3148 = sbr.rel (%p3146) target = $region76
      $region75: #{sdf_forward.11} parent=63 // pred_region
        %p3149 = scmp.lt.s32.totalorder %s24, 1
        %s3150 = scalar_select %p3149, %s24, 1
        %s3151 = smul.addr %s3150, 4
        %s3152 = scalar_lea.vmem %s6, %s3151
      $region76: #{sdf_forward.11} parent=63 // pred_fallthru
        _
    $region64: #{sdf_forward.11} parent=5 // pred_fallthru
      _
  $region6: #{sdf_forward.11} parent=0 // loop_footer
    %s17 = sadd.s32 1, %s13
  $region7: #{sdf_forward.11} parent=0 // loop_footer_branch
    %12 = sbr.rel target = $region3
  $region8: #{sdf_forward.11} parent=0 // loop_exit
    _

// kernel: sdf_forward.12
$region0: #{sdf_forward.12}
  #allocation0 [shape = 'u32[]', space=smem, size = 0x4, offset = 0x4, fixed_abs, tag = 'smem constant byte address 0x4 - core index']
  #allocation1 [shape = 'u32[144,128]{1,0:T(1,128)}', space=vmem, size = 0x12000, scoped, tag = 'internal scratch']
  %s0 = inlined_call_operand.vmem [shape: bf16[512,512], index: 0, kind: input, shape index: {}]
  %s1 = inlined_call_operand.vmem [shape: bf16[512,128], index: 1, kind: input, shape index: {}]
  %s2 = inlined_call_operand.vmem [shape: f32[1,512], index: 2, kind: input, shape index: {}]
  %s3 = inlined_call_operand.vmem [shape: f32[1,512], index: 3, kind: input, shape index: {}]
  %s4 = inlined_call_operand.vmem [shape: bf16[512,128], index: 4, kind: output, shape index: {0}]
  %s5 = inlined_call_operand.vmem [shape: f32[2,1,128], index: 5, kind: output, shape index: {1}]
  %s6 = inlined_call_operand.vmem [shape: f32[2,1,128], index: 6, kind: output, shape index: {2}]
  %7 = xla_tuple %s4, %s5, %s6
  %s8 = sld [smem:[#allocation0]]
  $region77: #{sdf_forward.12} parent=0
    _
  %s10 = ssub.s32 1, %s8
  %s11 = scalar_select 0, %s10, %s8
  loop: start=0, step=1, limit=4
  $region2: #{sdf_forward.12} parent=0 // loop_pre_header
    _
  $region3: #{sdf_forward.12} parent=0 // loop_header
    %s13 = sphi 0, %s17
    %p14 = scmp.ge.s32.totalorder %s13, 4
    %s20 = sphi 0, %s32
    %s21 = sphi 0, %s28
    %s22 = sphi 0, %s20
    %s23 = sphi 0, %s21
    %s24 = sphi 0, %s22
    %s25 = sphi 0, %s23
    %s37 = sphi 0, %s39
    %s40 = sphi 0, %s37
    %s41 = sphi 0, %s40
    %s57 = sphi 0, %s41
    %s61 = sphi 0, %s61
    %s63 = sphi 0, %s61
    %s64 = sphi 0, %s63
    %s78 = sphi 0, %s64
    %s82 = sphi 0, %s82
    %s84 = sphi 0, %s82
    %s85 = sphi 0, %s84
    %s99 = sphi 0, %s85
    %s103 = sphi 0, %s103
    %s105 = sphi 0, %s103
    %s106 = sphi 0, %s105
    %s120 = sphi 0, %s106
    %s128 = sphi 0, %s130
    %s131 = sphi 0, %s128
    %s132 = sphi 0, %s131
    %s148 = sphi 0, %s132
    %s154 = sphi 0, %s156
    %s157 = sphi 0, %s154
    %s158 = sphi 0, %s157
    %s174 = sphi 0, %s158
    %s180 = sphi 0, %s182
    %s183 = sphi 0, %s180
    %s184 = sphi 0, %s183
    %s200 = sphi 0, %s184
  $region4: #{sdf_forward.12} parent=0 // loop_header_branch
    %16 = sbr.rel (%p14) target = $region8
  $region5: #{sdf_forward.12} parent=0 // loop_body
    %s18 = ssub.s32 %s13, 1
    %s19 = ssub.s32 %s13, 2
    %s26 = sadd.s32 1, %s21
    %p27 = scmp.ge.s32.totalorder %s26, 1
    %s28 = scalar_select %p27, 0, %s26
    %s29 = sadd.s32 1, %s20
    %s30 = scalar_select %p27, %s29, %s20
    %p31 = scmp.ge.s32.totalorder %s30, 2
    %s32 = scalar_select %p31, 0, %s30
    %s33 = sadd.s32 %s20, %s21
    %s34 = sadd.s32 %s32, %s28
    %s35 = ssub.s32 %s33, %s34
    %p36 = scmp.eq.s32.totalorder %s35, 0
    %s38 = sadd.s32 %s37, 1
    %s39 = scalar_select %p36, %s37, %s38
    %p42 = pneg %p36
    %p43 = scmp.eq.s32.totalorder %s13, 1
    %p44 = por %p42, %p43
    %p45 = scmp.ne.s32.totalorder %s37, %s40
    %p46 = scmp.eq.s32.totalorder %s13, 0
    %p47 = por %p45, %p46
    %p48 = scmp.ne.s32.totalorder %s37, %s40
    %p49 = scmp.eq.s32.totalorder %s18, 1
    %p50 = por %p48, %p49
    %p51 = scmp.ne.s32.totalorder %s40, %s41
    %p52 = scmp.eq.s32.totalorder %s18, 0
    %p53 = por %p51, %p52
    %p54 = scmp.ne.s32.totalorder %s40, %s41
    %p55 = scmp.eq.s32.totalorder %s19, 1
    %p56 = por %p54, %p55
    %p58 = scmp.ne.s32.totalorder %s41, %s57
    %p59 = scmp.eq.s32.totalorder %s19, 0
    %p60 = por %p58, %p59
    %s62 = sadd.s32 %s61, 1
    %p65 = scmp.eq.s32.totalorder %s13, 1
    %p66 = scmp.ne.s32.totalorder %s61, %s63
    %p67 = scmp.eq.s32.totalorder %s13, 0
    %p68 = por %p66, %p67
    %p69 = scmp.ne.s32.totalorder %s61, %s63
    %p70 = scmp.eq.s32.totalorder %s18, 1
    %p71 = por %p69, %p70
    %p72 = scmp.ne.s32.totalorder %s63, %s64
    %p73 = scmp.eq.s32.totalorder %s18, 0
    %p74 = por %p72, %p73
    %p75 = scmp.ne.s32.totalorder %s63, %s64
    %p76 = scmp.eq.s32.totalorder %s19, 1
    %p77 = por %p75, %p76
    %p79 = scmp.ne.s32.totalorder %s64, %s78
    %p80 = scmp.eq.s32.totalorder %s19, 0
    %p81 = por %p79, %p80
    %s83 = sadd.s32 %s82, 1
    %p86 = scmp.eq.s32.totalorder %s13, 1
    %p87 = scmp.ne.s32.totalorder %s82, %s84
    %p88 = scmp.eq.s32.totalorder %s13, 0
    %p89 = por %p87, %p88
    %p90 = scmp.ne.s32.totalorder %s82, %s84
    %p91 = scmp.eq.s32.totalorder %s18, 1
    %p92 = por %p90, %p91
    %p93 = scmp.ne.s32.totalorder %s84, %s85
    %p94 = scmp.eq.s32.totalorder %s18, 0
    %p95 = por %p93, %p94
    %p96 = scmp.ne.s32.totalorder %s84, %s85
    %p97 = scmp.eq.s32.totalorder %s19, 1
    %p98 = por %p96, %p97
    %p100 = scmp.ne.s32.totalorder %s85, %s99
    %p101 = scmp.eq.s32.totalorder %s19, 0
    %p102 = por %p100, %p101
    %s104 = sadd.s32 %s103, 1
    %p107 = scmp.eq.s32.totalorder %s13, 1
    %p108 = scmp.ne.s32.totalorder %s103, %s105
    %p109 = scmp.eq.s32.totalorder %s13, 0
    %p110 = por %p108, %p109
    %p111 = scmp.ne.s32.totalorder %s103, %s105
    %p112 = scmp.eq.s32.totalorder %s18, 1
    %p113 = por %p111, %p112
    %p114 = scmp.ne.s32.totalorder %s105, %s106
    %p115 = scmp.eq.s32.totalorder %s18, 0
    %p116 = por %p114, %p115
    %p117 = scmp.ne.s32.totalorder %s105, %s106
    %p118 = scmp.eq.s32.totalorder %s19, 1
    %p119 = por %p117, %p118
    %p121 = scmp.ne.s32.totalorder %s106, %s120
    %p122 = scmp.eq.s32.totalorder %s19, 0
    %p123 = por %p121, %p122
    %s124 = sadd.s32 %s20, %s21
    %s125 = sadd.s32 %s32, %s28
    %s126 = ssub.s32 %s124, %s125
    %p127 = scmp.eq.s32.totalorder %s126, 0
    %s129 = sadd.s32 %s128, 1
    %s130 = scalar_select %p127, %s128, %s129
    %p133 = pneg %p127
    %p134 = scmp.eq.s32.totalorder %s13, 1
    %p135 = por %p133, %p134
    %p136 = scmp.ne.s32.totalorder %s128, %s131
    %p137 = scmp.eq.s32.totalorder %s13, 0
    %p138 = por %p136, %p137
    %p139 = scmp.ne.s32.totalorder %s128, %s131
    %p140 = scmp.eq.s32.totalorder %s18, 1
    %p141 = por %p139, %p140
    %p142 = scmp.ne.s32.totalorder %s131, %s132
    %p143 = scmp.eq.s32.totalorder %s18, 0
    %p144 = por %p142, %p143
    %p145 = scmp.ne.s32.totalorder %s131, %s132
    %p146 = scmp.eq.s32.totalorder %s19, 1
    %p147 = por %p145, %p146
    %p149 = scmp.ne.s32.totalorder %s132, %s148
    %p150 = scmp.eq.s32.totalorder %s19, 0
    %p151 = por %p149, %p150
    %s152 = ssub.s32 %s20, %s32
    %p153 = scmp.eq.s32.totalorder %s152, 0
    %s155 = sadd.s32 %s154, 1
    %s156 = scalar_select %p153, %s154, %s155
    %p159 = pneg %p153
    %p160 = scmp.eq.s32.totalorder %s13, 1
    %p161 = por %p159, %p160
    %p162 = scmp.ne.s32.totalorder %s154, %s157
    %p163 = scmp.eq.s32.totalorder %s13, 0
    %p164 = por %p162, %p163
    %p165 = scmp.ne.s32.totalorder %s154, %s157
    %p166 = scmp.eq.s32.totalorder %s18, 1
    %p167 = por %p165, %p166
    %p168 = scmp.ne.s32.totalorder %s157, %s158
    %p169 = scmp.eq.s32.totalorder %s18, 0
    %p170 = por %p168, %p169
    %p171 = scmp.ne.s32.totalorder %s157, %s158
    %p172 = scmp.eq.s32.totalorder %s19, 1
    %p173 = por %p171, %p172
    %p175 = scmp.ne.s32.totalorder %s158, %s174
    %p176 = scmp.eq.s32.totalorder %s19, 0
    %p177 = por %p175, %p176
    %s178 = ssub.s32 %s20, %s32
    %p179 = scmp.eq.s32.totalorder %s178, 0
    %s181 = sadd.s32 %s180, 1
    %s182 = scalar_select %p179, %s180, %s181
    %p185 = pneg %p179
    %p186 = scmp.eq.s32.totalorder %s13, 1
    %p187 = por %p185, %p186
    %p188 = scmp.ne.s32.totalorder %s180, %s183
    %p189 = scmp.eq.s32.totalorder %s13, 0
    %p190 = por %p188, %p189
    %p191 = scmp.ne.s32.totalorder %s180, %s183
    %p192 = scmp.eq.s32.totalorder %s18, 1
    %p193 = por %p191, %p192
    %p194 = scmp.ne.s32.totalorder %s183, %s184
    %p195 = scmp.eq.s32.totalorder %s18, 0
    %p196 = por %p194, %p195
    %p197 = scmp.ne.s32.totalorder %s183, %s184
    %p198 = scmp.eq.s32.totalorder %s19, 1
    %p199 = por %p197, %p198
    %p201 = scmp.ne.s32.totalorder %s184, %s200
    %p202 = scmp.eq.s32.totalorder %s19, 0
    %p203 = por %p201, %p202
    %p204 = scmp.le.s32.totalorder 1, %s13
    %p205 = scmp.lt.s32.totalorder %s13, 3
    %p206 = pnand %p204, %p205
    %p207 = pneg %p206
    // Predicated region
    $region9: #{sdf_forward.12} parent=5 // pred_check
      _
    $region10: #{sdf_forward.12} parent=5 // pred_check_branch
      %209 = sbr.rel (%p206) target = $region12
    $region11: #{sdf_forward.12} parent=5 // pred_region
      %s210 = ssub.s32 %s13, 1
      // Predicated region
      $region13: #{sdf_forward.12} parent=11 // pred_check
        %p211 = pneg %p74
      $region14: #{sdf_forward.12} parent=11 // pred_check_branch
        %213 = sbr.rel (%p211) target = $region16
      $region15: #{sdf_forward.12} parent=11 // pred_region
        _
      $region16: #{sdf_forward.12} parent=11 // pred_fallthru
        _
      // Predicated region
      $region17: #{sdf_forward.12} parent=11 // pred_check
        %p214 = pneg %p95
      $region18: #{sdf_forward.12} parent=11 // pred_check_branch
        %216 = sbr.rel (%p214) target = $region20
      $region19: #{sdf_forward.12} parent=11 // pred_region
        _
      $region20: #{sdf_forward.12} parent=11 // pred_fallthru
        _
      // Predicated region
      $region21: #{sdf_forward.12} parent=11 // pred_check
        %p217 = pneg %p116
      $region22: #{sdf_forward.12} parent=11 // pred_check_branch
        %219 = sbr.rel (%p217) target = $region24
      $region23: #{sdf_forward.12} parent=11 // pred_region
        _
      $region24: #{sdf_forward.12} parent=11 // pred_fallthru
        _
    $region12: #{sdf_forward.12} parent=5 // pred_fallthru
      _
    %p220 = scmp.lt.s32.totalorder %s13, 2
    // Predicated region
    $region25: #{sdf_forward.12} parent=5 // pred_check
      %p221 = pneg %p220
    $region26: #{sdf_forward.12} parent=5 // pred_check_branch
      %223 = sbr.rel (%p221) target = $region28
    $region27: #{sdf_forward.12} parent=5 // pred_region
      // Predicated region
      $region29: #{sdf_forward.12} parent=27 // pred_check
        %p224 = pneg %p47
      $region30: #{sdf_forward.12} parent=27 // pred_check_branch
        %226 = sbr.rel (%p224) target = $region32
      $region31: #{sdf_forward.12} parent=27 // pred_region
        %s227 = sadd.s32 %s20, %s21
        %s228 = smul.u32 32, %s227
        %p229 = scmp.lt.s32.totalorder %s228, 63
        %s230 = scalar_select %p229, %s228, 63
        %s231 = smul.addr %s230, 4
        %s232 = smul.addr %s231, 4
        %s233 = scalar_lea.vmem %s0, %s232
        %s234 = sadd.s32 %s20, %s21
        %s235 = smul.u32 32, %s234
      $region32: #{sdf_forward.12} parent=27 // pred_fallthru
        _
    $region28: #{sdf_forward.12} parent=5 // pred_fallthru
      _
    %p236 = scmp.le.s32.totalorder 1, %s13
    %p237 = scmp.lt.s32.totalorder %s13, 3
    %p238 = pnand %p236, %p237
    %p239 = pneg %p238
    // Predicated region
    $region33: #{sdf_forward.12} parent=5 // pred_check
      _
    $region34: #{sdf_forward.12} parent=5 // pred_check_branch
      %241 = sbr.rel (%p238) target = $region36
    $region35: #{sdf_forward.12} parent=5 // pred_region
      %s242 = ssub.s32 %s13, 1
      %s243 = sadd.s32 %s22, %s23
      %s244 = smul.u32 32, %s243
      %p245 = scmp.lt.s32.totalorder %s244, 63
      %s246 = scalar_select %p245, %s244, 63
      %s247 = smul.addr %s246, 4
      %s248 = smul.addr %s247, 4
      %s249 = scalar_lea.vmem %s0, %s248
      %p250 = pneg %p53
      %p251 = pneg %p50
      %p252 = pneg %p74
      %p253 = pneg %p71
      %p254 = pneg %p95
      %p255 = pneg %p92
      %p256 = pneg %p116
      %p257 = pneg %p113
      %p258 = pneg %p144
      %p259 = pneg %p141
      %s260 = sadd.s32 %s22, %s23
      %s261 = smul.u32 32, %s260
      %p262 = scmp.lt.s32.totalorder %s261, 63
      %s263 = scalar_select %p262, %s261, 63
      %s264 = smul.addr %s263, 4
      %s265 = scalar_lea.vmem %s4, %s264
      %p266 = pneg %p170
      %p267 = pneg %p167
      %p268 = scmp.lt.s32.totalorder %s22, 1
      %s269 = scalar_select %p268, %s22, 1
      %s270 = scalar_lea.vmem %s5, %s269
      %p271 = pneg %p196
      %p272 = pneg %p193
      %p273 = scmp.lt.s32.totalorder %s22, 1
      %s274 = scalar_select %p273, %s22, 1
      %s275 = scalar_lea.vmem %s6, %s274
      %s276 = sadd.s32 %s22, %s23
      %s277 = smul.u32 32, %s276
      %p278 = scmp.lt.s32.totalorder %s277, 63
      %s279 = scalar_select %p278, %s277, 63
      %s280 = smul.addr %s279, 4
      %s281 = smul.addr %s280, 4
      %s282 = scalar_lea.vmem %s0, %s281
      %s283 = sadd.s32 %s22, %s23
      %s284 = smul.u32 32, %s283
      %s285 = sadd.s32 %s22, %s23
      %s286 = smul.u32 32, %s285
      %p287 = scmp.lt.s32.totalorder %s286, 63
      %s288 = scalar_select %p287, %s286, 63
      %s289 = smul.addr %s288, 4
      %s290 = scalar_lea.vmem %s4, %s289
      %s291 = sadd.s32 %s22, %s23
      %s292 = smul.u32 32, %s291
      %p293 = scmp.lt.s32.totalorder %s22, 1
      %s294 = scalar_select %p293, %s22, 1
      %s295 = scalar_lea.vmem %s5, %s294
      %p296 = scmp.lt.s32.totalorder %s22, 1
      %s297 = scalar_select %p296, %s22, 1
      %s298 = scalar_lea.vmem %s6, %s297
      %p300 = scmp.eq.s32.totalorder %s23, 0
      // Predicated region
      $region37: #{sdf_forward.12} parent=35 // pred_check
        %p301 = pneg %p300
      $region38: #{sdf_forward.12} parent=35 // pred_check_branch
        %303 = sbr.rel (%p301) target = $region40
      $region39: #{sdf_forward.12} parent=35 // pred_region
        %304 = vst [vmem:[%s295] sm:$0x1] 0.0
        %305 = vst [vmem:[%s298] sm:$0x1] 0.0
      $region40: #{sdf_forward.12} parent=35 // pred_fallthru
        _
      %v306 = vld [vmem:[%s282] sm:$0xff]
      %v307 = vld [vmem:[%s282 + $0x8] sm:$0xff]
      %v308 = vld [vmem:[%s282 + $0x10] sm:$0xff]
      %v309 = vld [vmem:[%s282 + $0x18] sm:$0xff]
      %v310 = vld [vmem:[%s282 + $0x20] sm:$0xff]
      %v311 = vld [vmem:[%s282 + $0x28] sm:$0xff]
      %v312 = vld [vmem:[%s282 + $0x30] sm:$0xff]
      %v313 = vld [vmem:[%s282 + $0x38] sm:$0xff]
      %v314 = vld [vmem:[%s282 + $0x40] sm:$0xff]
      %v315 = vld [vmem:[%s282 + $0x48] sm:$0xff]
      %v316 = vld [vmem:[%s282 + $0x50] sm:$0xff]
      %v317 = vld [vmem:[%s282 + $0x58] sm:$0xff]
      %v318 = vld [vmem:[%s282 + $0x60] sm:$0xff]
      %v319 = vld [vmem:[%s282 + $0x68] sm:$0xff]
      %v320 = vld [vmem:[%s282 + $0x70] sm:$0xff]
      %v321 = vld [vmem:[%s282 + $0x78] sm:$0xff]
      %v322 = vld [vmem:[%s282 + $0x80] sm:$0xff]
      %v323 = vld [vmem:[%s282 + $0x88] sm:$0xff]
      %v324 = vld [vmem:[%s282 + $0x90] sm:$0xff]
      %v325 = vld [vmem:[%s282 + $0x98] sm:$0xff]
      %v326 = vld [vmem:[%s282 + $0xa0] sm:$0xff]
      %v327 = vld [vmem:[%s282 + $0xa8] sm:$0xff]
      %v328 = vld [vmem:[%s282 + $0xb0] sm:$0xff]
      %v329 = vld [vmem:[%s282 + $0xb8] sm:$0xff]
      %v330 = vld [vmem:[%s282 + $0xc0] sm:$0xff]
      %v331 = vld [vmem:[%s282 + $0xc8] sm:$0xff]
      %v332 = vld [vmem:[%s282 + $0xd0] sm:$0xff]
      %v333 = vld [vmem:[%s282 + $0xd8] sm:$0xff]
      %v334 = vld [vmem:[%s282 + $0xe0] sm:$0xff]
      %v335 = vld [vmem:[%s282 + $0xe8] sm:$0xff]
      %v336 = vld [vmem:[%s282 + $0xf0] sm:$0xff]
      %v337 = vld [vmem:[%s282 + $0xf8] sm:$0xff]
      %v338 = vld [vmem:[%s282 + $0x100] sm:$0xff]
      %v339 = vld [vmem:[%s282 + $0x108] sm:$0xff]
      %v340 = vld [vmem:[%s282 + $0x110] sm:$0xff]
      %v341 = vld [vmem:[%s282 + $0x118] sm:$0xff]
      %v342 = vld [vmem:[%s282 + $0x120] sm:$0xff]
      %v343 = vld [vmem:[%s282 + $0x128] sm:$0xff]
      %v344 = vld [vmem:[%s282 + $0x130] sm:$0xff]
      %v345 = vld [vmem:[%s282 + $0x138] sm:$0xff]
      %v346 = vld [vmem:[%s282 + $0x140] sm:$0xff]
      %v347 = vld [vmem:[%s282 + $0x148] sm:$0xff]
      %v348 = vld [vmem:[%s282 + $0x150] sm:$0xff]
      %v349 = vld [vmem:[%s282 + $0x158] sm:$0xff]
      %v350 = vld [vmem:[%s282 + $0x160] sm:$0xff]
      %v351 = vld [vmem:[%s282 + $0x168] sm:$0xff]
      %v352 = vld [vmem:[%s282 + $0x170] sm:$0xff]
      %v353 = vld [vmem:[%s282 + $0x178] sm:$0xff]
      %v354 = vld [vmem:[%s282 + $0x180] sm:$0xff]
      %v355 = vld [vmem:[%s282 + $0x188] sm:$0xff]
      %v356 = vld [vmem:[%s282 + $0x190] sm:$0xff]
      %v357 = vld [vmem:[%s282 + $0x198] sm:$0xff]
      %v358 = vld [vmem:[%s282 + $0x1a0] sm:$0xff]
      %v359 = vld [vmem:[%s282 + $0x1a8] sm:$0xff]
      %v360 = vld [vmem:[%s282 + $0x1b0] sm:$0xff]
      %v361 = vld [vmem:[%s282 + $0x1b8] sm:$0xff]
      %v362 = vld [vmem:[%s282 + $0x1c0] sm:$0xff]
      %v363 = vld [vmem:[%s282 + $0x1c8] sm:$0xff]
      %v364 = vld [vmem:[%s282 + $0x1d0] sm:$0xff]
      %v365 = vld [vmem:[%s282 + $0x1d8] sm:$0xff]
      %v366 = vld [vmem:[%s282 + $0x1e0] sm:$0xff]
      %v367 = vld [vmem:[%s282 + $0x1e8] sm:$0xff]
      %v368 = vld [vmem:[%s282 + $0x1f0] sm:$0xff]
      %v369 = vld [vmem:[%s282 + $0x1f8] sm:$0xff]
      %v370 = vunpack.c.l.bf16 %v306
      %v371 = vunpack.c.h.bf16 %v306
      %v372 = vunpack.c.l.bf16 %v307
      %v373 = vunpack.c.h.bf16 %v307
      %v374 = vunpack.c.l.bf16 %v308
      %v375 = vunpack.c.h.bf16 %v308
      %v376 = vunpack.c.l.bf16 %v309
      %v377 = vunpack.c.h.bf16 %v309
      %v378 = vunpack.c.l.bf16 %v310
      %v379 = vunpack.c.h.bf16 %v310
      %v380 = vunpack.c.l.bf16 %v311
      %v381 = vunpack.c.h.bf16 %v311
      %v382 = vunpack.c.l.bf16 %v312
      %v383 = vunpack.c.h.bf16 %v312
      %v384 = vunpack.c.l.bf16 %v313
      %v385 = vunpack.c.h.bf16 %v313
      %v386 = vunpack.c.l.bf16 %v314
      %v387 = vunpack.c.h.bf16 %v314
      %v388 = vunpack.c.l.bf16 %v315
      %v389 = vunpack.c.h.bf16 %v315
      %v390 = vunpack.c.l.bf16 %v316
      %v391 = vunpack.c.h.bf16 %v316
      %v392 = vunpack.c.l.bf16 %v317
      %v393 = vunpack.c.h.bf16 %v317
      %v394 = vunpack.c.l.bf16 %v318
      %v395 = vunpack.c.h.bf16 %v318
      %v396 = vunpack.c.l.bf16 %v319
      %v397 = vunpack.c.h.bf16 %v319
      %v398 = vunpack.c.l.bf16 %v320
      %v399 = vunpack.c.h.bf16 %v320
      %v400 = vunpack.c.l.bf16 %v321
      %v401 = vunpack.c.h.bf16 %v321
      %v402 = vunpack.c.l.bf16 %v322
      %v403 = vunpack.c.h.bf16 %v322
      %v404 = vunpack.c.l.bf16 %v323
      %v405 = vunpack.c.h.bf16 %v323
      %v406 = vunpack.c.l.bf16 %v324
      %v407 = vunpack.c.h.bf16 %v324
      %v408 = vunpack.c.l.bf16 %v325
      %v409 = vunpack.c.h.bf16 %v325
      %v410 = vunpack.c.l.bf16 %v326
      %v411 = vunpack.c.h.bf16 %v326
      %v412 = vunpack.c.l.bf16 %v327
      %v413 = vunpack.c.h.bf16 %v327
      %v414 = vunpack.c.l.bf16 %v328
      %v415 = vunpack.c.h.bf16 %v328
      %v416 = vunpack.c.l.bf16 %v329
      %v417 = vunpack.c.h.bf16 %v329
      %v418 = vunpack.c.l.bf16 %v330
      %v419 = vunpack.c.h.bf16 %v330
      %v420 = vunpack.c.l.bf16 %v331
      %v421 = vunpack.c.h.bf16 %v331
      %v422 = vunpack.c.l.bf16 %v332
      %v423 = vunpack.c.h.bf16 %v332
      %v424 = vunpack.c.l.bf16 %v333
      %v425 = vunpack.c.h.bf16 %v333
      %v426 = vunpack.c.l.bf16 %v334
      %v427 = vunpack.c.h.bf16 %v334
      %v428 = vunpack.c.l.bf16 %v335
      %v429 = vunpack.c.h.bf16 %v335
      %v430 = vunpack.c.l.bf16 %v336
      %v431 = vunpack.c.h.bf16 %v336
      %v432 = vunpack.c.l.bf16 %v337
      %v433 = vunpack.c.h.bf16 %v337
      %v434 = vunpack.c.l.bf16 %v338
      %v435 = vunpack.c.h.bf16 %v338
      %v436 = vunpack.c.l.bf16 %v339
      %v437 = vunpack.c.h.bf16 %v339
      %v438 = vunpack.c.l.bf16 %v340
      %v439 = vunpack.c.h.bf16 %v340
      %v440 = vunpack.c.l.bf16 %v341
      %v441 = vunpack.c.h.bf16 %v341
      %v442 = vunpack.c.l.bf16 %v342
      %v443 = vunpack.c.h.bf16 %v342
      %v444 = vunpack.c.l.bf16 %v343
      %v445 = vunpack.c.h.bf16 %v343
      %v446 = vunpack.c.l.bf16 %v344
      %v447 = vunpack.c.h.bf16 %v344
      %v448 = vunpack.c.l.bf16 %v345
      %v449 = vunpack.c.h.bf16 %v345
      %v450 = vunpack.c.l.bf16 %v346
      %v451 = vunpack.c.h.bf16 %v346
      %v452 = vunpack.c.l.bf16 %v347
      %v453 = vunpack.c.h.bf16 %v347
      %v454 = vunpack.c.l.bf16 %v348
      %v455 = vunpack.c.h.bf16 %v348
      %v456 = vunpack.c.l.bf16 %v349
      %v457 = vunpack.c.h.bf16 %v349
      %v458 = vunpack.c.l.bf16 %v350
      %v459 = vunpack.c.h.bf16 %v350
      %v460 = vunpack.c.l.bf16 %v351
      %v461 = vunpack.c.h.bf16 %v351
      %v462 = vunpack.c.l.bf16 %v352
      %v463 = vunpack.c.h.bf16 %v352
      %v464 = vunpack.c.l.bf16 %v353
      %v465 = vunpack.c.h.bf16 %v353
      %v466 = vunpack.c.l.bf16 %v354
      %v467 = vunpack.c.h.bf16 %v354
      %v468 = vunpack.c.l.bf16 %v355
      %v469 = vunpack.c.h.bf16 %v355
      %v470 = vunpack.c.l.bf16 %v356
      %v471 = vunpack.c.h.bf16 %v356
      %v472 = vunpack.c.l.bf16 %v357
      %v473 = vunpack.c.h.bf16 %v357
      %v474 = vunpack.c.l.bf16 %v358
      %v475 = vunpack.c.h.bf16 %v358
      %v476 = vunpack.c.l.bf16 %v359
      %v477 = vunpack.c.h.bf16 %v359
      %v478 = vunpack.c.l.bf16 %v360
      %v479 = vunpack.c.h.bf16 %v360
      %v480 = vunpack.c.l.bf16 %v361
      %v481 = vunpack.c.h.bf16 %v361
      %v482 = vunpack.c.l.bf16 %v362
      %v483 = vunpack.c.h.bf16 %v362
      %v484 = vunpack.c.l.bf16 %v363
      %v485 = vunpack.c.h.bf16 %v363
      %v486 = vunpack.c.l.bf16 %v364
      %v487 = vunpack.c.h.bf16 %v364
      %v488 = vunpack.c.l.bf16 %v365
      %v489 = vunpack.c.h.bf16 %v365
      %v490 = vunpack.c.l.bf16 %v366
      %v491 = vunpack.c.h.bf16 %v366
      %v492 = vunpack.c.l.bf16 %v367
      %v493 = vunpack.c.h.bf16 %v367
      %v494 = vunpack.c.l.bf16 %v368
      %v495 = vunpack.c.h.bf16 %v368
      %v496 = vunpack.c.l.bf16 %v369
      %v497 = vunpack.c.h.bf16 %v369
      %v498 = vld [vmem:[%s2] sm:$0xf]
      %v500 = vlaneseq
      %v501 = vshrl.u32 %v500, 7
      %v502 = vsub.s32 0, %v501
      %v503 = vrot.slane %v498, %v502
      %v504 = vlaneseq
      %v505 = vshrl.u32 %v504, 7
      %v506 = vsub.s32 1, %v505
      %v507 = vrot.slane %v498, %v506
      %v508 = vlaneseq
      %v509 = vshrl.u32 %v508, 7
      %v510 = vsub.s32 2, %v509
      %v511 = vrot.slane %v498, %v510
      %v512 = vlaneseq
      %v513 = vshrl.u32 %v512, 7
      %v514 = vsub.s32 3, %v513
      %v515 = vrot.slane %v498, %v514
      %v520 = vmul.f32 %v370, %v503
      %v521 = vmul.f32 %v371, %v507
      %v522 = vmul.f32 %v372, %v511
      %v523 = vmul.f32 %v373, %v515
      %v524 = vmul.f32 %v374, %v503
      %v525 = vmul.f32 %v375, %v507
      %v526 = vmul.f32 %v376, %v511
      %v527 = vmul.f32 %v377, %v515
      %v528 = vmul.f32 %v378, %v503
      %v529 = vmul.f32 %v379, %v507
      %v530 = vmul.f32 %v380, %v511
      %v531 = vmul.f32 %v381, %v515
      %v532 = vmul.f32 %v382, %v503
      %v533 = vmul.f32 %v383, %v507
      %v534 = vmul.f32 %v384, %v511
      %v535 = vmul.f32 %v385, %v515
      %v536 = vmul.f32 %v386, %v503
      %v537 = vmul.f32 %v387, %v507
      %v538 = vmul.f32 %v388, %v511
      %v539 = vmul.f32 %v389, %v515
      %v540 = vmul.f32 %v390, %v503
      %v541 = vmul.f32 %v391, %v507
      %v542 = vmul.f32 %v392, %v511
      %v543 = vmul.f32 %v393, %v515
      %v544 = vmul.f32 %v394, %v503
      %v545 = vmul.f32 %v395, %v507
      %v546 = vmul.f32 %v396, %v511
      %v547 = vmul.f32 %v397, %v515
      %v548 = vmul.f32 %v398, %v503
      %v549 = vmul.f32 %v399, %v507
      %v550 = vmul.f32 %v400, %v511
      %v551 = vmul.f32 %v401, %v515
      %v552 = vmul.f32 %v402, %v503
      %v553 = vmul.f32 %v403, %v507
      %v554 = vmul.f32 %v404, %v511
      %v555 = vmul.f32 %v405, %v515
      %v556 = vmul.f32 %v406, %v503
      %v557 = vmul.f32 %v407, %v507
      %v558 = vmul.f32 %v408, %v511
      %v559 = vmul.f32 %v409, %v515
      %v560 = vmul.f32 %v410, %v503
      %v561 = vmul.f32 %v411, %v507
      %v562 = vmul.f32 %v412, %v511
      %v563 = vmul.f32 %v413, %v515
      %v564 = vmul.f32 %v414, %v503
      %v565 = vmul.f32 %v415, %v507
      %v566 = vmul.f32 %v416, %v511
      %v567 = vmul.f32 %v417, %v515
      %v568 = vmul.f32 %v418, %v503
      %v569 = vmul.f32 %v419, %v507
      %v570 = vmul.f32 %v420, %v511
      %v571 = vmul.f32 %v421, %v515
      %v572 = vmul.f32 %v422, %v503
      %v573 = vmul.f32 %v423, %v507
      %v574 = vmul.f32 %v424, %v511
      %v575 = vmul.f32 %v425, %v515
      %v576 = vmul.f32 %v426, %v503
      %v577 = vmul.f32 %v427, %v507
      %v578 = vmul.f32 %v428, %v511
      %v579 = vmul.f32 %v429, %v515
      %v580 = vmul.f32 %v430, %v503
      %v581 = vmul.f32 %v431, %v507
      %v582 = vmul.f32 %v432, %v511
      %v583 = vmul.f32 %v433, %v515
      %v584 = vmul.f32 %v434, %v503
      %v585 = vmul.f32 %v435, %v507
      %v586 = vmul.f32 %v436, %v511
      %v587 = vmul.f32 %v437, %v515
      %v588 = vmul.f32 %v438, %v503
      %v589 = vmul.f32 %v439, %v507
      %v590 = vmul.f32 %v440, %v511
      %v591 = vmul.f32 %v441, %v515
      %v592 = vmul.f32 %v442, %v503
      %v593 = vmul.f32 %v443, %v507
      %v594 = vmul.f32 %v444, %v511
      %v595 = vmul.f32 %v445, %v515
      %v596 = vmul.f32 %v446, %v503
      %v597 = vmul.f32 %v447, %v507
      %v598 = vmul.f32 %v448, %v511
      %v599 = vmul.f32 %v449, %v515
      %v600 = vmul.f32 %v450, %v503
      %v601 = vmul.f32 %v451, %v507
      %v602 = vmul.f32 %v452, %v511
      %v603 = vmul.f32 %v453, %v515
      %v604 = vmul.f32 %v454, %v503
      %v605 = vmul.f32 %v455, %v507
      %v606 = vmul.f32 %v456, %v511
      %v607 = vmul.f32 %v457, %v515
      %v608 = vmul.f32 %v458, %v503
      %v609 = vmul.f32 %v459, %v507
      %v610 = vmul.f32 %v460, %v511
      %v611 = vmul.f32 %v461, %v515
      %v612 = vmul.f32 %v462, %v503
      %v613 = vmul.f32 %v463, %v507
      %v614 = vmul.f32 %v464, %v511
      %v615 = vmul.f32 %v465, %v515
      %v616 = vmul.f32 %v466, %v503
      %v617 = vmul.f32 %v467, %v507
      %v618 = vmul.f32 %v468, %v511
      %v619 = vmul.f32 %v469, %v515
      %v620 = vmul.f32 %v470, %v503
      %v621 = vmul.f32 %v471, %v507
      %v622 = vmul.f32 %v472, %v511
      %v623 = vmul.f32 %v473, %v515
      %v624 = vmul.f32 %v474, %v503
      %v625 = vmul.f32 %v475, %v507
      %v626 = vmul.f32 %v476, %v511
      %v627 = vmul.f32 %v477, %v515
      %v628 = vmul.f32 %v478, %v503
      %v629 = vmul.f32 %v479, %v507
      %v630 = vmul.f32 %v480, %v511
      %v631 = vmul.f32 %v481, %v515
      %v632 = vmul.f32 %v482, %v503
      %v633 = vmul.f32 %v483, %v507
      %v634 = vmul.f32 %v484, %v511
      %v635 = vmul.f32 %v485, %v515
      %v636 = vmul.f32 %v486, %v503
      %v637 = vmul.f32 %v487, %v507
      %v638 = vmul.f32 %v488, %v511
      %v639 = vmul.f32 %v489, %v515
      %v640 = vmul.f32 %v490, %v503
      %v641 = vmul.f32 %v491, %v507
      %v642 = vmul.f32 %v492, %v511
      %v643 = vmul.f32 %v493, %v515
      %v644 = vmul.f32 %v494, %v503
      %v645 = vmul.f32 %v495, %v507
      %v646 = vmul.f32 %v496, %v511
      %v647 = vmul.f32 %v497, %v515
      %v648 = vld [vmem:[%s3] sm:$0xf]
      %v650 = vlaneseq
      %v651 = vshrl.u32 %v650, 7
      %v652 = vsub.s32 0, %v651
      %v653 = vrot.slane %v648, %v652
      %v654 = vlaneseq
      %v655 = vshrl.u32 %v654, 7
      %v656 = vsub.s32 1, %v655
      %v657 = vrot.slane %v648, %v656
      %v658 = vlaneseq
      %v659 = vshrl.u32 %v658, 7
      %v660 = vsub.s32 2, %v659
      %v661 = vrot.slane %v648, %v660
      %v662 = vlaneseq
      %v663 = vshrl.u32 %v662, 7
      %v664 = vsub.s32 3, %v663
      %v665 = vrot.slane %v648, %v664
      %v670 = vadd.f32 %v520, %v653
      %v671 = vadd.f32 %v521, %v657
      %v672 = vadd.f32 %v522, %v661
      %v673 = vadd.f32 %v523, %v665
      %v674 = vadd.f32 %v524, %v653
      %v675 = vadd.f32 %v525, %v657
      %v676 = vadd.f32 %v526, %v661
      %v677 = vadd.f32 %v527, %v665
      %v678 = vadd.f32 %v528, %v653
      %v679 = vadd.f32 %v529, %v657
      %v680 = vadd.f32 %v530, %v661
      %v681 = vadd.f32 %v531, %v665
      %v682 = vadd.f32 %v532, %v653
      %v683 = vadd.f32 %v533, %v657
      %v684 = vadd.f32 %v534, %v661
      %v685 = vadd.f32 %v535, %v665
      %v686 = vadd.f32 %v536, %v653
      %v687 = vadd.f32 %v537, %v657
      %v688 = vadd.f32 %v538, %v661
      %v689 = vadd.f32 %v539, %v665
      %v690 = vadd.f32 %v540, %v653
      %v691 = vadd.f32 %v541, %v657
      %v692 = vadd.f32 %v542, %v661
      %v693 = vadd.f32 %v543, %v665
      %v694 = vadd.f32 %v544, %v653
      %v695 = vadd.f32 %v545, %v657
      %v696 = vadd.f32 %v546, %v661
      %v697 = vadd.f32 %v547, %v665
      %v698 = vadd.f32 %v548, %v653
      %v699 = vadd.f32 %v549, %v657
      %v700 = vadd.f32 %v550, %v661
      %v701 = vadd.f32 %v551, %v665
      %v702 = vadd.f32 %v552, %v653
      %v703 = vadd.f32 %v553, %v657
      %v704 = vadd.f32 %v554, %v661
      %v705 = vadd.f32 %v555, %v665
      %v706 = vadd.f32 %v556, %v653
      %v707 = vadd.f32 %v557, %v657
      %v708 = vadd.f32 %v558, %v661
      %v709 = vadd.f32 %v559, %v665
      %v710 = vadd.f32 %v560, %v653
      %v711 = vadd.f32 %v561, %v657
      %v712 = vadd.f32 %v562, %v661
      %v713 = vadd.f32 %v563, %v665
      %v714 = vadd.f32 %v564, %v653
      %v715 = vadd.f32 %v565, %v657
      %v716 = vadd.f32 %v566, %v661
      %v717 = vadd.f32 %v567, %v665
      %v718 = vadd.f32 %v568, %v653
      %v719 = vadd.f32 %v569, %v657
      %v720 = vadd.f32 %v570, %v661
      %v721 = vadd.f32 %v571, %v665
      %v722 = vadd.f32 %v572, %v653
      %v723 = vadd.f32 %v573, %v657
      %v724 = vadd.f32 %v574, %v661
      %v725 = vadd.f32 %v575, %v665
      %v726 = vadd.f32 %v576, %v653
      %v727 = vadd.f32 %v577, %v657
      %v728 = vadd.f32 %v578, %v661
      %v729 = vadd.f32 %v579, %v665
      %v730 = vadd.f32 %v580, %v653
      %v731 = vadd.f32 %v581, %v657
      %v732 = vadd.f32 %v582, %v661
      %v733 = vadd.f32 %v583, %v665
      %v734 = vadd.f32 %v584, %v653
      %v735 = vadd.f32 %v585, %v657
      %v736 = vadd.f32 %v586, %v661
      %v737 = vadd.f32 %v587, %v665
      %v738 = vadd.f32 %v588, %v653
      %v739 = vadd.f32 %v589, %v657
      %v740 = vadd.f32 %v590, %v661
      %v741 = vadd.f32 %v591, %v665
      %v742 = vadd.f32 %v592, %v653
      %v743 = vadd.f32 %v593, %v657
      %v744 = vadd.f32 %v594, %v661
      %v745 = vadd.f32 %v595, %v665
      %v746 = vadd.f32 %v596, %v653
      %v747 = vadd.f32 %v597, %v657
      %v748 = vadd.f32 %v598, %v661
      %v749 = vadd.f32 %v599, %v665
      %v750 = vadd.f32 %v600, %v653
      %v751 = vadd.f32 %v601, %v657
      %v752 = vadd.f32 %v602, %v661
      %v753 = vadd.f32 %v603, %v665
      %v754 = vadd.f32 %v604, %v653
      %v755 = vadd.f32 %v605, %v657
      %v756 = vadd.f32 %v606, %v661
      %v757 = vadd.f32 %v607, %v665
      %v758 = vadd.f32 %v608, %v653
      %v759 = vadd.f32 %v609, %v657
      %v760 = vadd.f32 %v610, %v661
      %v761 = vadd.f32 %v611, %v665
      %v762 = vadd.f32 %v612, %v653
      %v763 = vadd.f32 %v613, %v657
      %v764 = vadd.f32 %v614, %v661
      %v765 = vadd.f32 %v615, %v665
      %v766 = vadd.f32 %v616, %v653
      %v767 = vadd.f32 %v617, %v657
      %v768 = vadd.f32 %v618, %v661
      %v769 = vadd.f32 %v619, %v665
      %v770 = vadd.f32 %v620, %v653
      %v771 = vadd.f32 %v621, %v657
      %v772 = vadd.f32 %v622, %v661
      %v773 = vadd.f32 %v623, %v665
      %v774 = vadd.f32 %v624, %v653
      %v775 = vadd.f32 %v625, %v657
      %v776 = vadd.f32 %v626, %v661
      %v777 = vadd.f32 %v627, %v665
      %v778 = vadd.f32 %v628, %v653
      %v779 = vadd.f32 %v629, %v657
      %v780 = vadd.f32 %v630, %v661
      %v781 = vadd.f32 %v631, %v665
      %v782 = vadd.f32 %v632, %v653
      %v783 = vadd.f32 %v633, %v657
      %v784 = vadd.f32 %v634, %v661
      %v785 = vadd.f32 %v635, %v665
      %v786 = vadd.f32 %v636, %v653
      %v787 = vadd.f32 %v637, %v657
      %v788 = vadd.f32 %v638, %v661
      %v789 = vadd.f32 %v639, %v665
      %v790 = vadd.f32 %v640, %v653
      %v791 = vadd.f32 %v641, %v657
      %v792 = vadd.f32 %v642, %v661
      %v793 = vadd.f32 %v643, %v665
      %v794 = vadd.f32 %v644, %v653
      %v795 = vadd.f32 %v645, %v657
      %v796 = vadd.f32 %v646, %v661
      %v797 = vadd.f32 %v647, %v665
      %v798 = vmax.f32 %v670, 0.0
      %v799 = vmax.f32 %v671, 0.0
      %v800 = vmax.f32 %v672, 0.0
      %v801 = vmax.f32 %v673, 0.0
      %v802 = vmax.f32 %v674, 0.0
      %v803 = vmax.f32 %v675, 0.0
      %v804 = vmax.f32 %v676, 0.0
      %v805 = vmax.f32 %v677, 0.0
      %v806 = vmax.f32 %v678, 0.0
      %v807 = vmax.f32 %v679, 0.0
      %v808 = vmax.f32 %v680, 0.0
      %v809 = vmax.f32 %v681, 0.0
      %v810 = vmax.f32 %v682, 0.0
      %v811 = vmax.f32 %v683, 0.0
      %v812 = vmax.f32 %v684, 0.0
      %v813 = vmax.f32 %v685, 0.0
      %v814 = vmax.f32 %v686, 0.0
      %v815 = vmax.f32 %v687, 0.0
      %v816 = vmax.f32 %v688, 0.0
      %v817 = vmax.f32 %v689, 0.0
      %v818 = vmax.f32 %v690, 0.0
      %v819 = vmax.f32 %v691, 0.0
      %v820 = vmax.f32 %v692, 0.0
      %v821 = vmax.f32 %v693, 0.0
      %v822 = vmax.f32 %v694, 0.0
      %v823 = vmax.f32 %v695, 0.0
      %v824 = vmax.f32 %v696, 0.0
      %v825 = vmax.f32 %v697, 0.0
      %v826 = vmax.f32 %v698, 0.0
      %v827 = vmax.f32 %v699, 0.0
      %v828 = vmax.f32 %v700, 0.0
      %v829 = vmax.f32 %v701, 0.0
      %v830 = vmax.f32 %v702, 0.0
      %v831 = vmax.f32 %v703, 0.0
      %v832 = vmax.f32 %v704, 0.0
      %v833 = vmax.f32 %v705, 0.0
      %v834 = vmax.f32 %v706, 0.0
      %v835 = vmax.f32 %v707, 0.0
      %v836 = vmax.f32 %v708, 0.0
      %v837 = vmax.f32 %v709, 0.0
      %v838 = vmax.f32 %v710, 0.0
      %v839 = vmax.f32 %v711, 0.0
      %v840 = vmax.f32 %v712, 0.0
      %v841 = vmax.f32 %v713, 0.0
      %v842 = vmax.f32 %v714, 0.0
      %v843 = vmax.f32 %v715, 0.0
      %v844 = vmax.f32 %v716, 0.0
      %v845 = vmax.f32 %v717, 0.0
      %v846 = vmax.f32 %v718, 0.0
      %v847 = vmax.f32 %v719, 0.0
      %v848 = vmax.f32 %v720, 0.0
      %v849 = vmax.f32 %v721, 0.0
      %v850 = vmax.f32 %v722, 0.0
      %v851 = vmax.f32 %v723, 0.0
      %v852 = vmax.f32 %v724, 0.0
      %v853 = vmax.f32 %v725, 0.0
      %v854 = vmax.f32 %v726, 0.0
      %v855 = vmax.f32 %v727, 0.0
      %v856 = vmax.f32 %v728, 0.0
      %v857 = vmax.f32 %v729, 0.0
      %v858 = vmax.f32 %v730, 0.0
      %v859 = vmax.f32 %v731, 0.0
      %v860 = vmax.f32 %v732, 0.0
      %v861 = vmax.f32 %v733, 0.0
      %v862 = vmax.f32 %v734, 0.0
      %v863 = vmax.f32 %v735, 0.0
      %v864 = vmax.f32 %v736, 0.0
      %v865 = vmax.f32 %v737, 0.0
      %v866 = vmax.f32 %v738, 0.0
      %v867 = vmax.f32 %v739, 0.0
      %v868 = vmax.f32 %v740, 0.0
      %v869 = vmax.f32 %v741, 0.0
      %v870 = vmax.f32 %v742, 0.0
      %v871 = vmax.f32 %v743, 0.0
      %v872 = vmax.f32 %v744, 0.0
      %v873 = vmax.f32 %v745, 0.0
      %v874 = vmax.f32 %v746, 0.0
      %v875 = vmax.f32 %v747, 0.0
      %v876 = vmax.f32 %v748, 0.0
      %v877 = vmax.f32 %v749, 0.0
      %v878 = vmax.f32 %v750, 0.0
      %v879 = vmax.f32 %v751, 0.0
      %v880 = vmax.f32 %v752, 0.0
      %v881 = vmax.f32 %v753, 0.0
      %v882 = vmax.f32 %v754, 0.0
      %v883 = vmax.f32 %v755, 0.0
      %v884 = vmax.f32 %v756, 0.0
      %v885 = vmax.f32 %v757, 0.0
      %v886 = vmax.f32 %v758, 0.0
      %v887 = vmax.f32 %v759, 0.0
      %v888 = vmax.f32 %v760, 0.0
      %v889 = vmax.f32 %v761, 0.0
      %v890 = vmax.f32 %v762, 0.0
      %v891 = vmax.f32 %v763, 0.0
      %v892 = vmax.f32 %v764, 0.0
      %v893 = vmax.f32 %v765, 0.0
      %v894 = vmax.f32 %v766, 0.0
      %v895 = vmax.f32 %v767, 0.0
      %v896 = vmax.f32 %v768, 0.0
      %v897 = vmax.f32 %v769, 0.0
      %v898 = vmax.f32 %v770, 0.0
      %v899 = vmax.f32 %v771, 0.0
      %v900 = vmax.f32 %v772, 0.0
      %v901 = vmax.f32 %v773, 0.0
      %v902 = vmax.f32 %v774, 0.0
      %v903 = vmax.f32 %v775, 0.0
      %v904 = vmax.f32 %v776, 0.0
      %v905 = vmax.f32 %v777, 0.0
      %v906 = vmax.f32 %v778, 0.0
      %v907 = vmax.f32 %v779, 0.0
      %v908 = vmax.f32 %v780, 0.0
      %v909 = vmax.f32 %v781, 0.0
      %v910 = vmax.f32 %v782, 0.0
      %v911 = vmax.f32 %v783, 0.0
      %v912 = vmax.f32 %v784, 0.0
      %v913 = vmax.f32 %v785, 0.0
      %v914 = vmax.f32 %v786, 0.0
      %v915 = vmax.f32 %v787, 0.0
      %v916 = vmax.f32 %v788, 0.0
      %v917 = vmax.f32 %v789, 0.0
      %v918 = vmax.f32 %v790, 0.0
      %v919 = vmax.f32 %v791, 0.0
      %v920 = vmax.f32 %v792, 0.0
      %v921 = vmax.f32 %v793, 0.0
      %v922 = vmax.f32 %v794, 0.0
      %v923 = vmax.f32 %v795, 0.0
      %v924 = vmax.f32 %v796, 0.0
      %v925 = vmax.f32 %v797, 0.0
      %v926 = vpack.c.bf16 %v802, %v798
      %v927 = vpack.c.bf16 %v803, %v799
      %v928 = vpack.c.bf16 %v804, %v800
      %v929 = vpack.c.bf16 %v805, %v801
      %v930 = vpack.c.bf16 %v810, %v806
      %v931 = vpack.c.bf16 %v811, %v807
      %v932 = vpack.c.bf16 %v812, %v808
      %v933 = vpack.c.bf16 %v813, %v809
      %v934 = vpack.c.bf16 %v818, %v814
      %v935 = vpack.c.bf16 %v819, %v815
      %v936 = vpack.c.bf16 %v820, %v816
      %v937 = vpack.c.bf16 %v821, %v817
      %v938 = vpack.c.bf16 %v826, %v822
      %v939 = vpack.c.bf16 %v827, %v823
      %v940 = vpack.c.bf16 %v828, %v824
      %v941 = vpack.c.bf16 %v829, %v825
      %v942 = vpack.c.bf16 %v834, %v830
      %v943 = vpack.c.bf16 %v835, %v831
      %v944 = vpack.c.bf16 %v836, %v832
      %v945 = vpack.c.bf16 %v837, %v833
      %v946 = vpack.c.bf16 %v842, %v838
      %v947 = vpack.c.bf16 %v843, %v839
      %v948 = vpack.c.bf16 %v844, %v840
      %v949 = vpack.c.bf16 %v845, %v841
      %v950 = vpack.c.bf16 %v850, %v846
      %v951 = vpack.c.bf16 %v851, %v847
      %v952 = vpack.c.bf16 %v852, %v848
      %v953 = vpack.c.bf16 %v853, %v849
      %v954 = vpack.c.bf16 %v858, %v854
      %v955 = vpack.c.bf16 %v859, %v855
      %v956 = vpack.c.bf16 %v860, %v856
      %v957 = vpack.c.bf16 %v861, %v857
      %v958 = vpack.c.bf16 %v866, %v862
      %v959 = vpack.c.bf16 %v867, %v863
      %v960 = vpack.c.bf16 %v868, %v864
      %v961 = vpack.c.bf16 %v869, %v865
      %v962 = vpack.c.bf16 %v874, %v870
      %v963 = vpack.c.bf16 %v875, %v871
      %v964 = vpack.c.bf16 %v876, %v872
      %v965 = vpack.c.bf16 %v877, %v873
      %v966 = vpack.c.bf16 %v882, %v878
      %v967 = vpack.c.bf16 %v883, %v879
      %v968 = vpack.c.bf16 %v884, %v880
      %v969 = vpack.c.bf16 %v885, %v881
      %v970 = vpack.c.bf16 %v890, %v886
      %v971 = vpack.c.bf16 %v891, %v887
      %v972 = vpack.c.bf16 %v892, %v888
      %v973 = vpack.c.bf16 %v893, %v889
      %v974 = vpack.c.bf16 %v898, %v894
      %v975 = vpack.c.bf16 %v899, %v895
      %v976 = vpack.c.bf16 %v900, %v896
      %v977 = vpack.c.bf16 %v901, %v897
      %v978 = vpack.c.bf16 %v906, %v902
      %v979 = vpack.c.bf16 %v907, %v903
      %v980 = vpack.c.bf16 %v908, %v904
      %v981 = vpack.c.bf16 %v909, %v905
      %v982 = vpack.c.bf16 %v914, %v910
      %v983 = vpack.c.bf16 %v915, %v911
      %v984 = vpack.c.bf16 %v916, %v912
      %v985 = vpack.c.bf16 %v917, %v913
      %v986 = vpack.c.bf16 %v922, %v918
      %v987 = vpack.c.bf16 %v923, %v919
      %v988 = vpack.c.bf16 %v924, %v920
      %v989 = vpack.c.bf16 %v925, %v921
      %v990 = vld [vmem:[%s1] sm:$0xf]
      %v991 = vld [vmem:[%s1 + $0x4] sm:$0xf]
      %v992 = vld [vmem:[%s1 + $0x8] sm:$0xf]
      %v993 = vld [vmem:[%s1 + $0xc] sm:$0xf]
      %v994 = vld [vmem:[%s1 + $0x10] sm:$0xf]
      %v995 = vld [vmem:[%s1 + $0x14] sm:$0xf]
      %v996 = vld [vmem:[%s1 + $0x18] sm:$0xf]
      %v997 = vld [vmem:[%s1 + $0x1c] sm:$0xf]
      %v998 = vld [vmem:[%s1 + $0x20] sm:$0xf]
      %v999 = vld [vmem:[%s1 + $0x24] sm:$0xf]
      %v1000 = vld [vmem:[%s1 + $0x28] sm:$0xf]
      %v1001 = vld [vmem:[%s1 + $0x2c] sm:$0xf]
      %v1002 = vld [vmem:[%s1 + $0x30] sm:$0xf]
      %v1003 = vld [vmem:[%s1 + $0x34] sm:$0xf]
      %v1004 = vld [vmem:[%s1 + $0x38] sm:$0xf]
      %v1005 = vld [vmem:[%s1 + $0x3c] sm:$0xf]
      %v1006 = vld [vmem:[%s1 + $0x40] sm:$0xf]
      %v1007 = vld [vmem:[%s1 + $0x44] sm:$0xf]
      %v1008 = vld [vmem:[%s1 + $0x48] sm:$0xf]
      %v1009 = vld [vmem:[%s1 + $0x4c] sm:$0xf]
      %v1010 = vld [vmem:[%s1 + $0x50] sm:$0xf]
      %v1011 = vld [vmem:[%s1 + $0x54] sm:$0xf]
      %v1012 = vld [vmem:[%s1 + $0x58] sm:$0xf]
      %v1013 = vld [vmem:[%s1 + $0x5c] sm:$0xf]
      %v1014 = vld [vmem:[%s1 + $0x60] sm:$0xf]
      %v1015 = vld [vmem:[%s1 + $0x64] sm:$0xf]
      %v1016 = vld [vmem:[%s1 + $0x68] sm:$0xf]
      %v1017 = vld [vmem:[%s1 + $0x6c] sm:$0xf]
      %v1018 = vld [vmem:[%s1 + $0x70] sm:$0xf]
      %v1019 = vld [vmem:[%s1 + $0x74] sm:$0xf]
      %v1020 = vld [vmem:[%s1 + $0x78] sm:$0xf]
      %v1021 = vld [vmem:[%s1 + $0x7c] sm:$0xf]
      %v1022 = vld [vmem:[%s1 + $0x80] sm:$0xf]
      %v1023 = vld [vmem:[%s1 + $0x84] sm:$0xf]
      %v1024 = vld [vmem:[%s1 + $0x88] sm:$0xf]
      %v1025 = vld [vmem:[%s1 + $0x8c] sm:$0xf]
      %v1026 = vld [vmem:[%s1 + $0x90] sm:$0xf]
      %v1027 = vld [vmem:[%s1 + $0x94] sm:$0xf]
      %v1028 = vld [vmem:[%s1 + $0x98] sm:$0xf]
      %v1029 = vld [vmem:[%s1 + $0x9c] sm:$0xf]
      %v1030 = vld [vmem:[%s1 + $0xa0] sm:$0xf]
      %v1031 = vld [vmem:[%s1 + $0xa4] sm:$0xf]
      %v1032 = vld [vmem:[%s1 + $0xa8] sm:$0xf]
      %v1033 = vld [vmem:[%s1 + $0xac] sm:$0xf]
      %v1034 = vld [vmem:[%s1 + $0xb0] sm:$0xf]
      %v1035 = vld [vmem:[%s1 + $0xb4] sm:$0xf]
      %v1036 = vld [vmem:[%s1 + $0xb8] sm:$0xf]
      %v1037 = vld [vmem:[%s1 + $0xbc] sm:$0xf]
      %v1038 = vld [vmem:[%s1 + $0xc0] sm:$0xf]
      %v1039 = vld [vmem:[%s1 + $0xc4] sm:$0xf]
      %v1040 = vld [vmem:[%s1 + $0xc8] sm:$0xf]
      %v1041 = vld [vmem:[%s1 + $0xcc] sm:$0xf]
      %v1042 = vld [vmem:[%s1 + $0xd0] sm:$0xf]
      %v1043 = vld [vmem:[%s1 + $0xd4] sm:$0xf]
      %v1044 = vld [vmem:[%s1 + $0xd8] sm:$0xf]
      %v1045 = vld [vmem:[%s1 + $0xdc] sm:$0xf]
      %v1046 = vld [vmem:[%s1 + $0xe0] sm:$0xf]
      %v1047 = vld [vmem:[%s1 + $0xe4] sm:$0xf]
      %v1048 = vld [vmem:[%s1 + $0xe8] sm:$0xf]
      %v1049 = vld [vmem:[%s1 + $0xec] sm:$0xf]
      %v1050 = vld [vmem:[%s1 + $0xf0] sm:$0xf]
      %v1051 = vld [vmem:[%s1 + $0xf4] sm:$0xf]
      %v1052 = vld [vmem:[%s1 + $0xf8] sm:$0xf]
      %v1053 = vld [vmem:[%s1 + $0xfc] sm:$0xf]
      %v1118 = vunpack.c.l.b16 %v990
      %v1119 = vunpack.c.l.b16 %v991
      %v1120 = vunpack.c.l.b16 %v992
      %v1121 = vunpack.c.l.b16 %v993
      %v1122 = vunpack.c.l.b16 %v994
      %v1123 = vunpack.c.l.b16 %v995
      %v1124 = vunpack.c.l.b16 %v996
      %v1125 = vunpack.c.l.b16 %v997
      %v1126 = vunpack.c.l.b16 %v998
      %v1127 = vunpack.c.l.b16 %v999
      %v1128 = vunpack.c.l.b16 %v1000
      %v1129 = vunpack.c.l.b16 %v1001
      %v1130 = vunpack.c.l.b16 %v1002
      %v1131 = vunpack.c.l.b16 %v1003
      %v1132 = vunpack.c.l.b16 %v1004
      %v1133 = vunpack.c.l.b16 %v1005
      %v1134 = vunpack.c.l.b16 %v1006
      %v1135 = vunpack.c.l.b16 %v1007
      %v1136 = vunpack.c.l.b16 %v1008
      %v1137 = vunpack.c.l.b16 %v1009
      %v1138 = vunpack.c.l.b16 %v1010
      %v1139 = vunpack.c.l.b16 %v1011
      %v1140 = vunpack.c.l.b16 %v1012
      %v1141 = vunpack.c.l.b16 %v1013
      %v1142 = vunpack.c.l.b16 %v1014
      %v1143 = vunpack.c.l.b16 %v1015
      %v1144 = vunpack.c.l.b16 %v1016
      %v1145 = vunpack.c.l.b16 %v1017
      %v1146 = vunpack.c.l.b16 %v1018
      %v1147 = vunpack.c.l.b16 %v1019
      %v1148 = vunpack.c.l.b16 %v1020
      %v1149 = vunpack.c.l.b16 %v1021
      %v1150 = vunpack.c.l.b16 %v1022
      %v1151 = vunpack.c.l.b16 %v1023
      %v1152 = vunpack.c.l.b16 %v1024
      %v1153 = vunpack.c.l.b16 %v1025
      %v1154 = vunpack.c.l.b16 %v1026
      %v1155 = vunpack.c.l.b16 %v1027
      %v1156 = vunpack.c.l.b16 %v1028
      %v1157 = vunpack.c.l.b16 %v1029
      %v1158 = vunpack.c.l.b16 %v1030
      %v1159 = vunpack.c.l.b16 %v1031
      %v1160 = vunpack.c.l.b16 %v1032
      %v1161 = vunpack.c.l.b16 %v1033
      %v1162 = vunpack.c.l.b16 %v1034
      %v1163 = vunpack.c.l.b16 %v1035
      %v1164 = vunpack.c.l.b16 %v1036
      %v1165 = vunpack.c.l.b16 %v1037
      %v1166 = vunpack.c.l.b16 %v1038
      %v1167 = vunpack.c.l.b16 %v1039
      %v1168 = vunpack.c.l.b16 %v1040
      %v1169 = vunpack.c.l.b16 %v1041
      %v1170 = vunpack.c.l.b16 %v1042
      %v1171 = vunpack.c.l.b16 %v1043
      %v1172 = vunpack.c.l.b16 %v1044
      %v1173 = vunpack.c.l.b16 %v1045
      %v1174 = vunpack.c.l.b16 %v1046
      %v1175 = vunpack.c.l.b16 %v1047
      %v1176 = vunpack.c.l.b16 %v1048
      %v1177 = vunpack.c.l.b16 %v1049
      %v1178 = vunpack.c.l.b16 %v1050
      %v1179 = vunpack.c.l.b16 %v1051
      %v1180 = vunpack.c.l.b16 %v1052
      %v1181 = vunpack.c.l.b16 %v1053
      %v1182 = vpack.c.b16 %v1119, %v1118
      %v1183 = vpack.c.b16 %v1121, %v1120
      %v1184 = vpack.c.b16 %v1123, %v1122
      %v1185 = vpack.c.b16 %v1125, %v1124
      %v1186 = vpack.c.b16 %v1127, %v1126
      %v1187 = vpack.c.b16 %v1129, %v1128
      %v1188 = vpack.c.b16 %v1131, %v1130
      %v1189 = vpack.c.b16 %v1133, %v1132
      %v1190 = vpack.c.b16 %v1135, %v1134
      %v1191 = vpack.c.b16 %v1137, %v1136
      %v1192 = vpack.c.b16 %v1139, %v1138
      %v1193 = vpack.c.b16 %v1141, %v1140
      %v1194 = vpack.c.b16 %v1143, %v1142
      %v1195 = vpack.c.b16 %v1145, %v1144
      %v1196 = vpack.c.b16 %v1147, %v1146
      %v1197 = vpack.c.b16 %v1149, %v1148
      %v1198 = vpack.c.b16 %v1151, %v1150
      %v1199 = vpack.c.b16 %v1153, %v1152
      %v1200 = vpack.c.b16 %v1155, %v1154
      %v1201 = vpack.c.b16 %v1157, %v1156
      %v1202 = vpack.c.b16 %v1159, %v1158
      %v1203 = vpack.c.b16 %v1161, %v1160
      %v1204 = vpack.c.b16 %v1163, %v1162
      %v1205 = vpack.c.b16 %v1165, %v1164
      %v1206 = vpack.c.b16 %v1167, %v1166
      %v1207 = vpack.c.b16 %v1169, %v1168
      %v1208 = vpack.c.b16 %v1171, %v1170
      %v1209 = vpack.c.b16 %v1173, %v1172
      %v1210 = vpack.c.b16 %v1175, %v1174
      %v1211 = vpack.c.b16 %v1177, %v1176
      %v1212 = vpack.c.b16 %v1179, %v1178
      %v1213 = vpack.c.b16 %v1181, %v1180
      %1246 = vmatprep.subr.bf16.mxu0 0
      %1247 = vmatpush1.bf16.msra.mxu0 %v1182
      %1248 = vmatprep.subr.bf16.mxu0 0
      %1249 = vmatpush1.bf16.msra.mxu0 %v1183
      %1250 = vmatprep.subr.bf16.mxu0 0
      %1251 = vmatpush1.bf16.msra.mxu0 %v1184
      %1252 = vmatprep.subr.bf16.mxu0 0
      %1253 = vmatpush1.bf16.msra.mxu0 %v1185
      %1254 = vmatprep.subr.bf16.mxu0 0
      %1255 = vmatpush1.bf16.msra.mxu0 %v1186
      %1256 = vmatprep.subr.bf16.mxu0 0
      %1257 = vmatpush1.bf16.msra.mxu0 %v1187
      %1258 = vmatprep.subr.bf16.mxu0 0
      %1259 = vmatpush1.bf16.msra.mxu0 %v1188
      %1260 = vmatprep.subr.bf16.mxu0 0
      %1261 = vmatpush1.bf16.msra.mxu0 %v1189
      %1262 = vmatprep.subr.bf16.mxu0 0
      %1263 = vmatpush1.bf16.msra.mxu0 %v1190
      %1264 = vmatprep.subr.bf16.mxu0 0
      %1265 = vmatpush1.bf16.msra.mxu0 %v1191
      %1266 = vmatprep.subr.bf16.mxu0 0
      %1267 = vmatpush1.bf16.msra.mxu0 %v1192
      %1268 = vmatprep.subr.bf16.mxu0 0
      %1269 = vmatpush1.bf16.msra.mxu0 %v1193
      %1270 = vmatprep.subr.bf16.mxu0 0
      %1271 = vmatpush1.bf16.msra.mxu0 %v1194
      %1272 = vmatprep.subr.bf16.mxu0 0
      %1273 = vmatpush1.bf16.msra.mxu0 %v1195
      %1274 = vmatprep.subr.bf16.mxu0 0
      %1275 = vmatpush1.bf16.msra.mxu0 %v1196
      %1276 = vmatprep.subr.bf16.mxu0 0
      %1277 = vmatpush1.bf16.msra.mxu0 %v1197
      %1278 = vmatprep.mubr.bf16.mxu0 %v927
      %1279 = vmatmul.mubr.bf16.gmra.mrb[0].mxu0 %v926
      %v1280 = vpop.f32.mrb[0].mxu0
      %v1281 = vadd.f32 0.0, %v1280
      %v1282 = vpop.f32.mrb[0].mxu0
      %v1283 = vpop.f32.mrb[0].mxu0
      %v1284 = vadd.f32 0.0, %v1283
      %v1285 = vpop.f32.mrb[0].mxu0
      %1286 = vmatprep.mubr.bf16.mxu0 %v931
      %1287 = vmatmul.mubr.bf16.gmra.mrb[0].mxu0 %v930
      %v1288 = vpop.f32.mrb[0].mxu0
      %v1289 = vadd.f32 0.0, %v1288
      %v1290 = vpop.f32.mrb[0].mxu0
      %v1291 = vpop.f32.mrb[0].mxu0
      %v1292 = vadd.f32 0.0, %v1291
      %v1293 = vpop.f32.mrb[0].mxu0
      %1294 = vmatprep.mubr.bf16.mxu0 %v935
      %1295 = vmatmul.mubr.bf16.gmra.mrb[0].mxu0 %v934
      %v1296 = vpop.f32.mrb[0].mxu0
      %v1297 = vadd.f32 0.0, %v1296
      %v1298 = vpop.f32.mrb[0].mxu0
      %v1299 = vpop.f32.mrb[0].mxu0
      %v1300 = vadd.f32 0.0, %v1299
      %v1301 = vpop.f32.mrb[0].mxu0
      %1302 = vmatprep.mubr.bf16.mxu0 %v939
      %1303 = vmatmul.mubr.bf16.gmra.mrb[0].mxu0 %v938
      %v1304 = vpop.f32.mrb[0].mxu0
      %v1305 = vadd.f32 0.0, %v1304
      %v1306 = vpop.f32.mrb[0].mxu0
      %v1307 = vpop.f32.mrb[0].mxu0
      %v1308 = vadd.f32 0.0, %v1307
      %v1309 = vpop.f32.mrb[0].mxu0
      %1310 = vmatprep.mubr.bf16.mxu0 %v943
      %1311 = vmatmul.mubr.bf16.gmra.mrb[0].mxu0 %v942
      %v1312 = vpop.f32.mrb[0].mxu0
      %v1313 = vadd.f32 0.0, %v1312
      %v1314 = vpop.f32.mrb[0].mxu0
      %v1315 = vpop.f32.mrb[0].mxu0
      %v1316 = vadd.f32 0.0, %v1315
      %v1317 = vpop.f32.mrb[0].mxu0
      %1318 = vmatprep.mubr.bf16.mxu0 %v947
      %1319 = vmatmul.mubr.bf16.gmra.mrb[0].mxu0 %v946
      %v1320 = vpop.f32.mrb[0].mxu0
      %v1321 = vadd.f32 0.0, %v1320
      %v1322 = vpop.f32.mrb[0].mxu0
      %v1323 = vpop.f32.mrb[0].mxu0
      %v1324 = vadd.f32 0.0, %v1323
      %v1325 = vpop.f32.mrb[0].mxu0
      %1326 = vmatprep.mubr.bf16.mxu0 %v951
      %1327 = vmatmul.mubr.bf16.gmra.mrb[0].mxu0 %v950
      %v1328 = vpop.f32.mrb[0].mxu0
      %v1329 = vadd.f32 0.0, %v1328
      %v1330 = vpop.f32.mrb[0].mxu0
      %v1331 = vpop.f32.mrb[0].mxu0
      %v1332 = vadd.f32 0.0, %v1331
      %v1333 = vpop.f32.mrb[0].mxu0
      %1334 = vmatprep.mubr.bf16.mxu0 %v955
      %1335 = vmatmul.mubr.bf16.gmra.mrb[0].mxu0 %v954
      %v1336 = vpop.f32.mrb[0].mxu0
      %v1337 = vadd.f32 0.0, %v1336
      %v1338 = vpop.f32.mrb[0].mxu0
      %v1339 = vpop.f32.mrb[0].mxu0
      %v1340 = vadd.f32 0.0, %v1339
      %v1341 = vpop.f32.mrb[0].mxu0
      %1342 = vmatprep.mubr.bf16.mxu0 %v959
      %1343 = vmatmul.mubr.bf16.gmra.mrb[0].mxu0 %v958
      %v1344 = vpop.f32.mrb[0].mxu0
      %v1345 = vadd.f32 0.0, %v1344
      %v1346 = vpop.f32.mrb[0].mxu0
      %v1347 = vpop.f32.mrb[0].mxu0
      %v1348 = vadd.f32 0.0, %v1347
      %v1349 = vpop.f32.mrb[0].mxu0
      %1350 = vmatprep.mubr.bf16.mxu0 %v963
      %1351 = vmatmul.mubr.bf16.gmra.mrb[0].mxu0 %v962
      %v1352 = vpop.f32.mrb[0].mxu0
      %v1353 = vadd.f32 0.0, %v1352
      %v1354 = vpop.f32.mrb[0].mxu0
      %v1355 = vpop.f32.mrb[0].mxu0
      %v1356 = vadd.f32 0.0, %v1355
      %v1357 = vpop.f32.mrb[0].mxu0
      %1358 = vmatprep.mubr.bf16.mxu0 %v967
      %1359 = vmatmul.mubr.bf16.gmra.mrb[0].mxu0 %v966
      %v1360 = vpop.f32.mrb[0].mxu0
      %v1361 = vadd.f32 0.0, %v1360
      %v1362 = vpop.f32.mrb[0].mxu0
      %v1363 = vpop.f32.mrb[0].mxu0
      %v1364 = vadd.f32 0.0, %v1363
      %v1365 = vpop.f32.mrb[0].mxu0
      %1366 = vmatprep.mubr.bf16.mxu0 %v971
      %1367 = vmatmul.mubr.bf16.gmra.mrb[0].mxu0 %v970
      %v1368 = vpop.f32.mrb[0].mxu0
      %v1369 = vadd.f32 0.0, %v1368
      %v1370 = vpop.f32.mrb[0].mxu0
      %v1371 = vpop.f32.mrb[0].mxu0
      %v1372 = vadd.f32 0.0, %v1371
      %v1373 = vpop.f32.mrb[0].mxu0
      %1374 = vmatprep.mubr.bf16.mxu0 %v975
      %1375 = vmatmul.mubr.bf16.gmra.mrb[0].mxu0 %v974
      %v1376 = vpop.f32.mrb[0].mxu0
      %v1377 = vadd.f32 0.0, %v1376
      %v1378 = vpop.f32.mrb[0].mxu0
      %v1379 = vpop.f32.mrb[0].mxu0
      %v1380 = vadd.f32 0.0, %v1379
      %v1381 = vpop.f32.mrb[0].mxu0
      %1382 = vmatprep.mubr.bf16.mxu0 %v979
      %1383 = vmatmul.mubr.bf16.gmra.mrb[0].mxu0 %v978
      %v1384 = vpop.f32.mrb[0].mxu0
      %v1385 = vadd.f32 0.0, %v1384
      %v1386 = vpop.f32.mrb[0].mxu0
      %v1387 = vpop.f32.mrb[0].mxu0
      %v1388 = vadd.f32 0.0, %v1387
      %v1389 = vpop.f32.mrb[0].mxu0
      %1390 = vmatprep.mubr.bf16.mxu0 %v983
      %1391 = vmatmul.mubr.bf16.gmra.mrb[0].mxu0 %v982
      %v1392 = vpop.f32.mrb[0].mxu0
      %v1393 = vadd.f32 0.0, %v1392
      %v1394 = vpop.f32.mrb[0].mxu0
      %v1395 = vpop.f32.mrb[0].mxu0
      %v1396 = vadd.f32 0.0, %v1395
      %v1397 = vpop.f32.mrb[0].mxu0
      %1398 = vmatprep.mubr.bf16.mxu0 %v987
      %1399 = vmatmul.mubr.bf16.gmra.mrb[0].mxu0 %v986
      %v1400 = vpop.f32.mrb[0].mxu0
      %v1401 = vadd.f32 0.0, %v1400
      %v1402 = vpop.f32.mrb[0].mxu0
      %v1403 = vpop.f32.mrb[0].mxu0
      %v1404 = vadd.f32 0.0, %v1403
      %v1405 = vpop.f32.mrb[0].mxu0
      %1406 = vdwg.mxu0
      %1407 = vmatprep.subr.bf16.mxu0 0
      %1408 = vmatpush1.bf16.msra.mxu0 %v1198
      %1409 = vmatprep.subr.bf16.mxu0 0
      %1410 = vmatpush1.bf16.msra.mxu0 %v1199
      %1411 = vmatprep.subr.bf16.mxu0 0
      %1412 = vmatpush1.bf16.msra.mxu0 %v1200
      %1413 = vmatprep.subr.bf16.mxu0 0
      %1414 = vmatpush1.bf16.msra.mxu0 %v1201
      %1415 = vmatprep.subr.bf16.mxu0 0
      %1416 = vmatpush1.bf16.msra.mxu0 %v1202
      %1417 = vmatprep.subr.bf16.mxu0 0
      %1418 = vmatpush1.bf16.msra.mxu0 %v1203
      %1419 = vmatprep.subr.bf16.mxu0 0
      %1420 = vmatpush1.bf16.msra.mxu0 %v1204
      %1421 = vmatprep.subr.bf16.mxu0 0
      %1422 = vmatpush1.bf16.msra.mxu0 %v1205
      %1423 = vmatprep.subr.bf16.mxu0 0
      %1424 = vmatpush1.bf16.msra.mxu0 %v1206
      %1425 = vmatprep.subr.bf16.mxu0 0
      %1426 = vmatpush1.bf16.msra.mxu0 %v1207
      %1427 = vmatprep.subr.bf16.mxu0 0
      %1428 = vmatpush1.bf16.msra.mxu0 %v1208
      %1429 = vmatprep.subr.bf16.mxu0 0
      %1430 = vmatpush1.bf16.msra.mxu0 %v1209
      %1431 = vmatprep.subr.bf16.mxu0 0
      %1432 = vmatpush1.bf16.msra.mxu0 %v1210
      %1433 = vmatprep.subr.bf16.mxu0 0
      %1434 = vmatpush1.bf16.msra.mxu0 %v1211
      %1435 = vmatprep.subr.bf16.mxu0 0
      %1436 = vmatpush1.bf16.msra.mxu0 %v1212
      %1437 = vmatprep.subr.bf16.mxu0 0
      %1438 = vmatpush1.bf16.msra.mxu0 %v1213
      %1439 = vmatprep.mubr.bf16.mxu0 %v929
      %1440 = vmatmul.mubr.bf16.gmra.mrb[0].mxu0 %v928
      %v1441 = vpop.f32.mrb[0].mxu0
      %v1442 = vadd.f32 %v1281, %v1441
      %v1443 = vpop.f32.mrb[0].mxu0
      %v1444 = vpop.f32.mrb[0].mxu0
      %v1445 = vadd.f32 %v1284, %v1444
      %v1446 = vpop.f32.mrb[0].mxu0
      %1447 = vmatprep.mubr.bf16.mxu0 %v933
      %1448 = vmatmul.mubr.bf16.gmra.mrb[0].mxu0 %v932
      %v1449 = vpop.f32.mrb[0].mxu0
      %v1450 = vadd.f32 %v1289, %v1449
      %v1451 = vpop.f32.mrb[0].mxu0
      %v1452 = vpop.f32.mrb[0].mxu0
      %v1453 = vadd.f32 %v1292, %v1452
      %v1454 = vpop.f32.mrb[0].mxu0
      %1455 = vmatprep.mubr.bf16.mxu0 %v937
      %1456 = vmatmul.mubr.bf16.gmra.mrb[0].mxu0 %v936
      %v1457 = vpop.f32.mrb[0].mxu0
      %v1458 = vadd.f32 %v1297, %v1457
      %v1459 = vpop.f32.mrb[0].mxu0
      %v1460 = vpop.f32.mrb[0].mxu0
      %v1461 = vadd.f32 %v1300, %v1460
      %v1462 = vpop.f32.mrb[0].mxu0
      %1463 = vmatprep.mubr.bf16.mxu0 %v941
      %1464 = vmatmul.mubr.bf16.gmra.mrb[0].mxu0 %v940
      %v1465 = vpop.f32.mrb[0].mxu0
      %v1466 = vadd.f32 %v1305, %v1465
      %v1467 = vpop.f32.mrb[0].mxu0
      %v1468 = vpop.f32.mrb[0].mxu0
      %v1469 = vadd.f32 %v1308, %v1468
      %v1470 = vpop.f32.mrb[0].mxu0
      %1471 = vmatprep.mubr.bf16.mxu0 %v945
      %1472 = vmatmul.mubr.bf16.gmra.mrb[0].mxu0 %v944
      %v1473 = vpop.f32.mrb[0].mxu0
      %v1474 = vadd.f32 %v1313, %v1473
      %v1475 = vpop.f32.mrb[0].mxu0
      %v1476 = vpop.f32.mrb[0].mxu0
      %v1477 = vadd.f32 %v1316, %v1476
      %v1478 = vpop.f32.mrb[0].mxu0
      %1479 = vmatprep.mubr.bf16.mxu0 %v949
      %1480 = vmatmul.mubr.bf16.gmra.mrb[0].mxu0 %v948
      %v1481 = vpop.f32.mrb[0].mxu0
      %v1482 = vadd.f32 %v1321, %v1481
      %v1483 = vpop.f32.mrb[0].mxu0
      %v1484 = vpop.f32.mrb[0].mxu0
      %v1485 = vadd.f32 %v1324, %v1484
      %v1486 = vpop.f32.mrb[0].mxu0
      %1487 = vmatprep.mubr.bf16.mxu0 %v953
      %1488 = vmatmul.mubr.bf16.gmra.mrb[0].mxu0 %v952
      %v1489 = vpop.f32.mrb[0].mxu0
      %v1490 = vadd.f32 %v1329, %v1489
      %v1491 = vpop.f32.mrb[0].mxu0
      %v1492 = vpop.f32.mrb[0].mxu0
      %v1493 = vadd.f32 %v1332, %v1492
      %v1494 = vpop.f32.mrb[0].mxu0
      %1495 = vmatprep.mubr.bf16.mxu0 %v957
      %1496 = vmatmul.mubr.bf16.gmra.mrb[0].mxu0 %v956
      %v1497 = vpop.f32.mrb[0].mxu0
      %v1498 = vadd.f32 %v1337, %v1497
      %v1499 = vpop.f32.mrb[0].mxu0
      %v1500 = vpop.f32.mrb[0].mxu0
      %v1501 = vadd.f32 %v1340, %v1500
      %v1502 = vpop.f32.mrb[0].mxu0
      %1503 = vmatprep.mubr.bf16.mxu0 %v961
      %1504 = vmatmul.mubr.bf16.gmra.mrb[0].mxu0 %v960
      %v1505 = vpop.f32.mrb[0].mxu0
      %v1506 = vadd.f32 %v1345, %v1505
      %v1507 = vpop.f32.mrb[0].mxu0
      %v1508 = vpop.f32.mrb[0].mxu0
      %v1509 = vadd.f32 %v1348, %v1508
      %v1510 = vpop.f32.mrb[0].mxu0
      %1511 = vmatprep.mubr.bf16.mxu0 %v965
      %1512 = vmatmul.mubr.bf16.gmra.mrb[0].mxu0 %v964
      %v1513 = vpop.f32.mrb[0].mxu0
      %v1514 = vadd.f32 %v1353, %v1513
      %v1515 = vpop.f32.mrb[0].mxu0
      %v1516 = vpop.f32.mrb[0].mxu0
      %v1517 = vadd.f32 %v1356, %v1516
      %v1518 = vpop.f32.mrb[0].mxu0
      %1519 = vmatprep.mubr.bf16.mxu0 %v969
      %1520 = vmatmul.mubr.bf16.gmra.mrb[0].mxu0 %v968
      %v1521 = vpop.f32.mrb[0].mxu0
      %v1522 = vadd.f32 %v1361, %v1521
      %v1523 = vpop.f32.mrb[0].mxu0
      %v1524 = vpop.f32.mrb[0].mxu0
      %v1525 = vadd.f32 %v1364, %v1524
      %v1526 = vpop.f32.mrb[0].mxu0
      %1527 = vmatprep.mubr.bf16.mxu0 %v973
      %1528 = vmatmul.mubr.bf16.gmra.mrb[0].mxu0 %v972
      %v1529 = vpop.f32.mrb[0].mxu0
      %v1530 = vadd.f32 %v1369, %v1529
      %v1531 = vpop.f32.mrb[0].mxu0
      %v1532 = vpop.f32.mrb[0].mxu0
      %v1533 = vadd.f32 %v1372, %v1532
      %v1534 = vpop.f32.mrb[0].mxu0
      %1535 = vmatprep.mubr.bf16.mxu0 %v977
      %1536 = vmatmul.mubr.bf16.gmra.mrb[0].mxu0 %v976
      %v1537 = vpop.f32.mrb[0].mxu0
      %v1538 = vadd.f32 %v1377, %v1537
      %v1539 = vpop.f32.mrb[0].mxu0
      %v1540 = vpop.f32.mrb[0].mxu0
      %v1541 = vadd.f32 %v1380, %v1540
      %v1542 = vpop.f32.mrb[0].mxu0
      %1543 = vmatprep.mubr.bf16.mxu0 %v981
      %1544 = vmatmul.mubr.bf16.gmra.mrb[0].mxu0 %v980
      %v1545 = vpop.f32.mrb[0].mxu0
      %v1546 = vadd.f32 %v1385, %v1545
      %v1547 = vpop.f32.mrb[0].mxu0
      %v1548 = vpop.f32.mrb[0].mxu0
      %v1549 = vadd.f32 %v1388, %v1548
      %v1550 = vpop.f32.mrb[0].mxu0
      %1551 = vmatprep.mubr.bf16.mxu0 %v985
      %1552 = vmatmul.mubr.bf16.gmra.mrb[0].mxu0 %v984
      %v1553 = vpop.f32.mrb[0].mxu0
      %v1554 = vadd.f32 %v1393, %v1553
      %v1555 = vpop.f32.mrb[0].mxu0
      %v1556 = vpop.f32.mrb[0].mxu0
      %v1557 = vadd.f32 %v1396, %v1556
      %v1558 = vpop.f32.mrb[0].mxu0
      %1559 = vmatprep.mubr.bf16.mxu0 %v989
      %1560 = vmatmul.mubr.bf16.gmra.mrb[0].mxu0 %v988
      %v1561 = vpop.f32.mrb[0].mxu0
      %v1562 = vadd.f32 %v1401, %v1561
      %v1563 = vpop.f32.mrb[0].mxu0
      %v1564 = vpop.f32.mrb[0].mxu0
      %v1565 = vadd.f32 %v1404, %v1564
      %v1566 = vpop.f32.mrb[0].mxu0
      %1567 = vdwg.mxu0
      %s1568 = sadd.s32 %s22, %s23
      %s1569 = smul.u32 %s1568, 256
      %s1570 = sadd.s32 %s1569, 256
      %p1571 = scmp.le.s32.totalorder %s1570, 400
      // Predicated region
      $region41: #{sdf_forward.12} parent=35 // pred_check
        %p1572 = pneg %p1571
      $region42: #{sdf_forward.12} parent=35 // pred_check_branch
        %1574 = sbr.rel (%p1572) target = $region44
      $region43: #{sdf_forward.12} parent=35 // pred_region
        %v1575 = vld [vmem:[%s295] sm:$0x1]
        %v1576 = vadd.f32 %v1442, %v1445
        %v1577 = vadd.f32 %v1576, %v1450
        %v1578 = vadd.f32 %v1577, %v1453
        %v1579 = vadd.f32 %v1578, %v1458
        %v1580 = vadd.f32 %v1579, %v1461
        %v1581 = vadd.f32 %v1580, %v1466
        %v1582 = vadd.f32 %v1581, %v1469
        %v1583 = vadd.f32 %v1582, %v1474
        %v1584 = vadd.f32 %v1583, %v1477
        %v1585 = vadd.f32 %v1584, %v1482
        %v1586 = vadd.f32 %v1585, %v1485
        %v1587 = vadd.f32 %v1586, %v1490
        %v1588 = vadd.f32 %v1587, %v1493
        %v1589 = vadd.f32 %v1588, %v1498
        %v1590 = vadd.f32 %v1589, %v1501
        %v1591 = vadd.f32 %v1590, %v1506
        %v1592 = vadd.f32 %v1591, %v1509
        %v1593 = vadd.f32 %v1592, %v1514
        %v1594 = vadd.f32 %v1593, %v1517
        %v1595 = vadd.f32 %v1594, %v1522
        %v1596 = vadd.f32 %v1595, %v1525
        %v1597 = vadd.f32 %v1596, %v1530
        %v1598 = vadd.f32 %v1597, %v1533
        %v1599 = vadd.f32 %v1598, %v1538
        %v1600 = vadd.f32 %v1599, %v1541
        %v1601 = vadd.f32 %v1600, %v1546
        %v1602 = vadd.f32 %v1601, %v1549
        %v1603 = vadd.f32 %v1602, %v1554
        %v1604 = vadd.f32 %v1603, %v1557
        %v1605 = vadd.f32 %v1604, %v1562
        %v1606 = vadd.f32 %v1605, %v1565
        %v1607 = vrot.slane %v1606, 4
        %v1608 = vadd.f32 %v1606, %v1607
        %v1609 = vrot.slane %v1608, 2
        %v1610 = vadd.f32 %v1608, %v1609
        %v1611 = vrot.slane %v1610, 1
        %v1612 = vadd.f32 %v1610, %v1611
        %v1613 = vadd.f32 %v1575, %v1612
        %1614 = vst [vmem:[%s295] sm:$0x1] %v1613
        %v1615 = vld [vmem:[%s298] sm:$0x1]
        %v1616 = vmul.f32 %v1442, %v1442
        %v1617 = vmul.f32 %v1445, %v1445
        %v1618 = vmul.f32 %v1450, %v1450
        %v1619 = vmul.f32 %v1453, %v1453
        %v1620 = vmul.f32 %v1458, %v1458
        %v1621 = vmul.f32 %v1461, %v1461
        %v1622 = vmul.f32 %v1466, %v1466
        %v1623 = vmul.f32 %v1469, %v1469
        %v1624 = vmul.f32 %v1474, %v1474
        %v1625 = vmul.f32 %v1477, %v1477
        %v1626 = vmul.f32 %v1482, %v1482
        %v1627 = vmul.f32 %v1485, %v1485
        %v1628 = vmul.f32 %v1490, %v1490
        %v1629 = vmul.f32 %v1493, %v1493
        %v1630 = vmul.f32 %v1498, %v1498
        %v1631 = vmul.f32 %v1501, %v1501
        %v1632 = vmul.f32 %v1506, %v1506
        %v1633 = vmul.f32 %v1509, %v1509
        %v1634 = vmul.f32 %v1514, %v1514
        %v1635 = vmul.f32 %v1517, %v1517
        %v1636 = vmul.f32 %v1522, %v1522
        %v1637 = vmul.f32 %v1525, %v1525
        %v1638 = vmul.f32 %v1530, %v1530
        %v1639 = vmul.f32 %v1533, %v1533
        %v1640 = vmul.f32 %v1538, %v1538
        %v1641 = vmul.f32 %v1541, %v1541
        %v1642 = vmul.f32 %v1546, %v1546
        %v1643 = vmul.f32 %v1549, %v1549
        %v1644 = vmul.f32 %v1554, %v1554
        %v1645 = vmul.f32 %v1557, %v1557
        %v1646 = vmul.f32 %v1562, %v1562
        %v1647 = vmul.f32 %v1565, %v1565
        %v1648 = vadd.f32 %v1616, %v1617
        %v1649 = vadd.f32 %v1648, %v1618
        %v1650 = vadd.f32 %v1649, %v1619
        %v1651 = vadd.f32 %v1650, %v1620
        %v1652 = vadd.f32 %v1651, %v1621
        %v1653 = vadd.f32 %v1652, %v1622
        %v1654 = vadd.f32 %v1653, %v1623
        %v1655 = vadd.f32 %v1654, %v1624
        %v1656 = vadd.f32 %v1655, %v1625
        %v1657 = vadd.f32 %v1656, %v1626
        %v1658 = vadd.f32 %v1657, %v1627
        %v1659 = vadd.f32 %v1658, %v1628
        %v1660 = vadd.f32 %v1659, %v1629
        %v1661 = vadd.f32 %v1660, %v1630
        %v1662 = vadd.f32 %v1661, %v1631
        %v1663 = vadd.f32 %v1662, %v1632
        %v1664 = vadd.f32 %v1663, %v1633
        %v1665 = vadd.f32 %v1664, %v1634
        %v1666 = vadd.f32 %v1665, %v1635
        %v1667 = vadd.f32 %v1666, %v1636
        %v1668 = vadd.f32 %v1667, %v1637
        %v1669 = vadd.f32 %v1668, %v1638
        %v1670 = vadd.f32 %v1669, %v1639
        %v1671 = vadd.f32 %v1670, %v1640
        %v1672 = vadd.f32 %v1671, %v1641
        %v1673 = vadd.f32 %v1672, %v1642
        %v1674 = vadd.f32 %v1673, %v1643
        %v1675 = vadd.f32 %v1674, %v1644
        %v1676 = vadd.f32 %v1675, %v1645
        %v1677 = vadd.f32 %v1676, %v1646
        %v1678 = vadd.f32 %v1677, %v1647
        %v1679 = vrot.slane %v1678, 4
        %v1680 = vadd.f32 %v1678, %v1679
        %v1681 = vrot.slane %v1680, 2
        %v1682 = vadd.f32 %v1680, %v1681
        %v1683 = vrot.slane %v1682, 1
        %v1684 = vadd.f32 %v1682, %v1683
        %v1685 = vadd.f32 %v1615, %v1684
        %1686 = vst [vmem:[%s298] sm:$0x1] %v1685
      $region44: #{sdf_forward.12} parent=35 // pred_fallthru
        _
      %p1687 = scmp.gt.s32.totalorder %s1570, 400
      // Predicated region
      $region45: #{sdf_forward.12} parent=35 // pred_check
        %p1688 = pneg %p1687
      $region46: #{sdf_forward.12} parent=35 // pred_check_branch
        %1690 = sbr.rel (%p1688) target = $region48
      $region47: #{sdf_forward.12} parent=35 // pred_region
        %v1691 = vlaneseq
        %v1692 = vshrl.u32 %v1691, 7
        %v1693 = vadd.s32 %v1692, 8
        %v1694 = vadd.s32 %v1692, 16
        %v1695 = vadd.s32 %v1692, 24
        %v1696 = vadd.s32 %v1692, 32
        %v1697 = vadd.s32 %v1692, 40
        %v1698 = vadd.s32 %v1692, 48
        %v1699 = vadd.s32 %v1692, 56
        %v1700 = vadd.s32 %v1692, 64
        %v1701 = vadd.s32 %v1692, 72
        %v1702 = vadd.s32 %v1692, 80
        %v1703 = vadd.s32 %v1692, 88
        %v1704 = vadd.s32 %v1692, 96
        %v1705 = vadd.s32 %v1692, 104
        %v1706 = vadd.s32 %v1692, 112
        %v1707 = vadd.s32 %v1692, 120
        %v1708 = vadd.s32 %v1692, 128
        %v1709 = vadd.s32 %v1692, 136
        %v1710 = vadd.s32 %v1692, 144
        %v1711 = vadd.s32 %v1692, 152
        %v1712 = vadd.s32 %v1692, 160
        %v1713 = vadd.s32 %v1692, 168
        %v1714 = vadd.s32 %v1692, 176
        %v1715 = vadd.s32 %v1692, 184
        %v1716 = vadd.s32 %v1692, 192
        %v1717 = vadd.s32 %v1692, 200
        %v1718 = vadd.s32 %v1692, 208
        %v1719 = vadd.s32 %v1692, 216
        %v1720 = vadd.s32 %v1692, 224
        %v1721 = vadd.s32 %v1692, 232
        %v1722 = vadd.s32 %v1692, 240
        %v1723 = vadd.s32 %v1692, 248
        %v1724 = vstv %s1569
        %v1725 = vadd.s32 %v1724, %v1692
        %v1726 = vadd.s32 %v1724, %v1693
        %v1727 = vadd.s32 %v1724, %v1694
        %v1728 = vadd.s32 %v1724, %v1695
        %v1729 = vadd.s32 %v1724, %v1696
        %v1730 = vadd.s32 %v1724, %v1697
        %v1731 = vadd.s32 %v1724, %v1698
        %v1732 = vadd.s32 %v1724, %v1699
        %v1733 = vadd.s32 %v1724, %v1700
        %v1734 = vadd.s32 %v1724, %v1701
        %v1735 = vadd.s32 %v1724, %v1702
        %v1736 = vadd.s32 %v1724, %v1703
        %v1737 = vadd.s32 %v1724, %v1704
        %v1738 = vadd.s32 %v1724, %v1705
        %v1739 = vadd.s32 %v1724, %v1706
        %v1740 = vadd.s32 %v1724, %v1707
        %v1741 = vadd.s32 %v1724, %v1708
        %v1742 = vadd.s32 %v1724, %v1709
        %v1743 = vadd.s32 %v1724, %v1710
        %v1744 = vadd.s32 %v1724, %v1711
        %v1745 = vadd.s32 %v1724, %v1712
        %v1746 = vadd.s32 %v1724, %v1713
        %v1747 = vadd.s32 %v1724, %v1714
        %v1748 = vadd.s32 %v1724, %v1715
        %v1749 = vadd.s32 %v1724, %v1716
        %v1750 = vadd.s32 %v1724, %v1717
        %v1751 = vadd.s32 %v1724, %v1718
        %v1752 = vadd.s32 %v1724, %v1719
        %v1753 = vadd.s32 %v1724, %v1720
        %v1754 = vadd.s32 %v1724, %v1721
        %v1755 = vadd.s32 %v1724, %v1722
        %v1756 = vadd.s32 %v1724, %v1723
        %vm1757 = vcmp.lt.s32.totalorder %v1725, 400
        %vm1758 = vcmp.lt.s32.totalorder %v1726, 400
        %vm1759 = vcmp.lt.s32.totalorder %v1727, 400
        %vm1760 = vcmp.lt.s32.totalorder %v1728, 400
        %vm1761 = vcmp.lt.s32.totalorder %v1729, 400
        %vm1762 = vcmp.lt.s32.totalorder %v1730, 400
        %vm1763 = vcmp.lt.s32.totalorder %v1731, 400
        %vm1764 = vcmp.lt.s32.totalorder %v1732, 400
        %vm1765 = vcmp.lt.s32.totalorder %v1733, 400
        %vm1766 = vcmp.lt.s32.totalorder %v1734, 400
        %vm1767 = vcmp.lt.s32.totalorder %v1735, 400
        %vm1768 = vcmp.lt.s32.totalorder %v1736, 400
        %vm1769 = vcmp.lt.s32.totalorder %v1737, 400
        %vm1770 = vcmp.lt.s32.totalorder %v1738, 400
        %vm1771 = vcmp.lt.s32.totalorder %v1739, 400
        %vm1772 = vcmp.lt.s32.totalorder %v1740, 400
        %vm1773 = vcmp.lt.s32.totalorder %v1741, 400
        %vm1774 = vcmp.lt.s32.totalorder %v1742, 400
        %vm1775 = vcmp.lt.s32.totalorder %v1743, 400
        %vm1776 = vcmp.lt.s32.totalorder %v1744, 400
        %vm1777 = vcmp.lt.s32.totalorder %v1745, 400
        %vm1778 = vcmp.lt.s32.totalorder %v1746, 400
        %vm1779 = vcmp.lt.s32.totalorder %v1747, 400
        %vm1780 = vcmp.lt.s32.totalorder %v1748, 400
        %vm1781 = vcmp.lt.s32.totalorder %v1749, 400
        %vm1782 = vcmp.lt.s32.totalorder %v1750, 400
        %vm1783 = vcmp.lt.s32.totalorder %v1751, 400
        %vm1784 = vcmp.lt.s32.totalorder %v1752, 400
        %vm1785 = vcmp.lt.s32.totalorder %v1753, 400
        %vm1786 = vcmp.lt.s32.totalorder %v1754, 400
        %vm1787 = vcmp.lt.s32.totalorder %v1755, 400
        %vm1788 = vcmp.lt.s32.totalorder %v1756, 400
        %v1789 = vsel %vm1757, %v1442, 0.0
        %v1790 = vsel %vm1758, %v1445, 0.0
        %v1791 = vsel %vm1759, %v1450, 0.0
        %v1792 = vsel %vm1760, %v1453, 0.0
        %v1793 = vsel %vm1761, %v1458, 0.0
        %v1794 = vsel %vm1762, %v1461, 0.0
        %v1795 = vsel %vm1763, %v1466, 0.0
        %v1796 = vsel %vm1764, %v1469, 0.0
        %v1797 = vsel %vm1765, %v1474, 0.0
        %v1798 = vsel %vm1766, %v1477, 0.0
        %v1799 = vsel %vm1767, %v1482, 0.0
        %v1800 = vsel %vm1768, %v1485, 0.0
        %v1801 = vsel %vm1769, %v1490, 0.0
        %v1802 = vsel %vm1770, %v1493, 0.0
        %v1803 = vsel %vm1771, %v1498, 0.0
        %v1804 = vsel %vm1772, %v1501, 0.0
        %v1805 = vsel %vm1773, %v1506, 0.0
        %v1806 = vsel %vm1774, %v1509, 0.0
        %v1807 = vsel %vm1775, %v1514, 0.0
        %v1808 = vsel %vm1776, %v1517, 0.0
        %v1809 = vsel %vm1777, %v1522, 0.0
        %v1810 = vsel %vm1778, %v1525, 0.0
        %v1811 = vsel %vm1779, %v1530, 0.0
        %v1812 = vsel %vm1780, %v1533, 0.0
        %v1813 = vsel %vm1781, %v1538, 0.0
        %v1814 = vsel %vm1782, %v1541, 0.0
        %v1815 = vsel %vm1783, %v1546, 0.0
        %v1816 = vsel %vm1784, %v1549, 0.0
        %v1817 = vsel %vm1785, %v1554, 0.0
        %v1818 = vsel %vm1786, %v1557, 0.0
        %v1819 = vsel %vm1787, %v1562, 0.0
        %v1820 = vsel %vm1788, %v1565, 0.0
        %v1821 = vld [vmem:[%s295] sm:$0x1]
        %v1822 = vadd.f32 %v1789, %v1790
        %v1823 = vadd.f32 %v1822, %v1791
        %v1824 = vadd.f32 %v1823, %v1792
        %v1825 = vadd.f32 %v1824, %v1793
        %v1826 = vadd.f32 %v1825, %v1794
        %v1827 = vadd.f32 %v1826, %v1795
        %v1828 = vadd.f32 %v1827, %v1796
        %v1829 = vadd.f32 %v1828, %v1797
        %v1830 = vadd.f32 %v1829, %v1798
        %v1831 = vadd.f32 %v1830, %v1799
        %v1832 = vadd.f32 %v1831, %v1800
        %v1833 = vadd.f32 %v1832, %v1801
        %v1834 = vadd.f32 %v1833, %v1802
        %v1835 = vadd.f32 %v1834, %v1803
        %v1836 = vadd.f32 %v1835, %v1804
        %v1837 = vadd.f32 %v1836, %v1805
        %v1838 = vadd.f32 %v1837, %v1806
        %v1839 = vadd.f32 %v1838, %v1807
        %v1840 = vadd.f32 %v1839, %v1808
        %v1841 = vadd.f32 %v1840, %v1809
        %v1842 = vadd.f32 %v1841, %v1810
        %v1843 = vadd.f32 %v1842, %v1811
        %v1844 = vadd.f32 %v1843, %v1812
        %v1845 = vadd.f32 %v1844, %v1813
        %v1846 = vadd.f32 %v1845, %v1814
        %v1847 = vadd.f32 %v1846, %v1815
        %v1848 = vadd.f32 %v1847, %v1816
        %v1849 = vadd.f32 %v1848, %v1817
        %v1850 = vadd.f32 %v1849, %v1818
        %v1851 = vadd.f32 %v1850, %v1819
        %v1852 = vadd.f32 %v1851, %v1820
        %v1853 = vrot.slane %v1852, 4
        %v1854 = vadd.f32 %v1852, %v1853
        %v1855 = vrot.slane %v1854, 2
        %v1856 = vadd.f32 %v1854, %v1855
        %v1857 = vrot.slane %v1856, 1
        %v1858 = vadd.f32 %v1856, %v1857
        %v1859 = vadd.f32 %v1821, %v1858
        %1860 = vst [vmem:[%s295] sm:$0x1] %v1859
        %v1861 = vld [vmem:[%s298] sm:$0x1]
        %v1862 = vmul.f32 %v1789, %v1789
        %v1863 = vmul.f32 %v1790, %v1790
        %v1864 = vmul.f32 %v1791, %v1791
        %v1865 = vmul.f32 %v1792, %v1792
        %v1866 = vmul.f32 %v1793, %v1793
        %v1867 = vmul.f32 %v1794, %v1794
        %v1868 = vmul.f32 %v1795, %v1795
        %v1869 = vmul.f32 %v1796, %v1796
        %v1870 = vmul.f32 %v1797, %v1797
        %v1871 = vmul.f32 %v1798, %v1798
        %v1872 = vmul.f32 %v1799, %v1799
        %v1873 = vmul.f32 %v1800, %v1800
        %v1874 = vmul.f32 %v1801, %v1801
        %v1875 = vmul.f32 %v1802, %v1802
        %v1876 = vmul.f32 %v1803, %v1803
        %v1877 = vmul.f32 %v1804, %v1804
        %v1878 = vmul.f32 %v1805, %v1805
        %v1879 = vmul.f32 %v1806, %v1806
        %v1880 = vmul.f32 %v1807, %v1807
        %v1881 = vmul.f32 %v1808, %v1808
        %v1882 = vmul.f32 %v1809, %v1809
        %v1883 = vmul.f32 %v1810, %v1810
        %v1884 = vmul.f32 %v1811, %v1811
        %v1885 = vmul.f32 %v1812, %v1812
        %v1886 = vmul.f32 %v1813, %v1813
        %v1887 = vmul.f32 %v1814, %v1814
        %v1888 = vmul.f32 %v1815, %v1815
        %v1889 = vmul.f32 %v1816, %v1816
        %v1890 = vmul.f32 %v1817, %v1817
        %v1891 = vmul.f32 %v1818, %v1818
        %v1892 = vmul.f32 %v1819, %v1819
        %v1893 = vmul.f32 %v1820, %v1820
        %v1894 = vadd.f32 %v1862, %v1863
        %v1895 = vadd.f32 %v1894, %v1864
        %v1896 = vadd.f32 %v1895, %v1865
        %v1897 = vadd.f32 %v1896, %v1866
        %v1898 = vadd.f32 %v1897, %v1867
        %v1899 = vadd.f32 %v1898, %v1868
        %v1900 = vadd.f32 %v1899, %v1869
        %v1901 = vadd.f32 %v1900, %v1870
        %v1902 = vadd.f32 %v1901, %v1871
        %v1903 = vadd.f32 %v1902, %v1872
        %v1904 = vadd.f32 %v1903, %v1873
        %v1905 = vadd.f32 %v1904, %v1874
        %v1906 = vadd.f32 %v1905, %v1875
        %v1907 = vadd.f32 %v1906, %v1876
        %v1908 = vadd.f32 %v1907, %v1877
        %v1909 = vadd.f32 %v1908, %v1878
        %v1910 = vadd.f32 %v1909, %v1879
        %v1911 = vadd.f32 %v1910, %v1880
        %v1912 = vadd.f32 %v1911, %v1881
        %v1913 = vadd.f32 %v1912, %v1882
        %v1914 = vadd.f32 %v1913, %v1883
        %v1915 = vadd.f32 %v1914, %v1884
        %v1916 = vadd.f32 %v1915, %v1885
        %v1917 = vadd.f32 %v1916, %v1886
        %v1918 = vadd.f32 %v1917, %v1887
        %v1919 = vadd.f32 %v1918, %v1888
        %v1920 = vadd.f32 %v1919, %v1889
        %v1921 = vadd.f32 %v1920, %v1890
        %v1922 = vadd.f32 %v1921, %v1891
        %v1923 = vadd.f32 %v1922, %v1892
        %v1924 = vadd.f32 %v1923, %v1893
        %v1925 = vrot.slane %v1924, 4
        %v1926 = vadd.f32 %v1924, %v1925
        %v1927 = vrot.slane %v1926, 2
        %v1928 = vadd.f32 %v1926, %v1927
        %v1929 = vrot.slane %v1928, 1
        %v1930 = vadd.f32 %v1928, %v1929
        %v1931 = vadd.f32 %v1861, %v1930
        %1932 = vst [vmem:[%s298] sm:$0x1] %v1931
      $region48: #{sdf_forward.12} parent=35 // pred_fallthru
        _
      %v1933 = vpack.c.bf16 %v1445, %v1442
      %v1934 = vpack.c.bf16 %v1453, %v1450
      %v1935 = vpack.c.bf16 %v1461, %v1458
      %v1936 = vpack.c.bf16 %v1469, %v1466
      %v1937 = vpack.c.bf16 %v1477, %v1474
      %v1938 = vpack.c.bf16 %v1485, %v1482
      %v1939 = vpack.c.bf16 %v1493, %v1490
      %v1940 = vpack.c.bf16 %v1501, %v1498
      %v1941 = vpack.c.bf16 %v1509, %v1506
      %v1942 = vpack.c.bf16 %v1517, %v1514
      %v1943 = vpack.c.bf16 %v1525, %v1522
      %v1944 = vpack.c.bf16 %v1533, %v1530
      %v1945 = vpack.c.bf16 %v1541, %v1538
      %v1946 = vpack.c.bf16 %v1549, %v1546
      %v1947 = vpack.c.bf16 %v1557, %v1554
      %v1948 = vpack.c.bf16 %v1565, %v1562
      %v1965 = vunpack.c.l.b16 %v1933
      %v1966 = vunpack.c.h.b16 %v1933
      %v1967 = vunpack.c.l.b16 %v1934
      %v1968 = vunpack.c.h.b16 %v1934
      %v1969 = vunpack.c.l.b16 %v1935
      %v1970 = vunpack.c.h.b16 %v1935
      %v1971 = vunpack.c.l.b16 %v1936
      %v1972 = vunpack.c.h.b16 %v1936
      %v1973 = vunpack.c.l.b16 %v1937
      %v1974 = vunpack.c.h.b16 %v1937
      %v1975 = vunpack.c.l.b16 %v1938
      %v1976 = vunpack.c.h.b16 %v1938
      %v1977 = vunpack.c.l.b16 %v1939
      %v1978 = vunpack.c.h.b16 %v1939
      %v1979 = vunpack.c.l.b16 %v1940
      %v1980 = vunpack.c.h.b16 %v1940
      %v1981 = vunpack.c.l.b16 %v1941
      %v1982 = vunpack.c.h.b16 %v1941
      %v1983 = vunpack.c.l.b16 %v1942
      %v1984 = vunpack.c.h.b16 %v1942
      %v1985 = vunpack.c.l.b16 %v1943
      %v1986 = vunpack.c.h.b16 %v1943
      %v1987 = vunpack.c.l.b16 %v1944
      %v1988 = vunpack.c.h.b16 %v1944
      %v1989 = vunpack.c.l.b16 %v1945
      %v1990 = vunpack.c.h.b16 %v1945
      %v1991 = vunpack.c.l.b16 %v1946
      %v1992 = vunpack.c.h.b16 %v1946
      %v1993 = vunpack.c.l.b16 %v1947
      %v1994 = vunpack.c.h.b16 %v1947
      %v1995 = vunpack.c.l.b16 %v1948
      %v1996 = vunpack.c.h.b16 %v1948
      %v1997 = vpack.c.b16 %v1965, %v1965
      %v1998 = vpack.c.b16 %v1966, %v1966
      %v1999 = vpack.c.b16 %v1967, %v1967
      %v2000 = vpack.c.b16 %v1968, %v1968
      %v2001 = vpack.c.b16 %v1969, %v1969
      %v2002 = vpack.c.b16 %v1970, %v1970
      %v2003 = vpack.c.b16 %v1971, %v1971
      %v2004 = vpack.c.b16 %v1972, %v1972
      %v2005 = vpack.c.b16 %v1973, %v1973
      %v2006 = vpack.c.b16 %v1974, %v1974
      %v2007 = vpack.c.b16 %v1975, %v1975
      %v2008 = vpack.c.b16 %v1976, %v1976
      %v2009 = vpack.c.b16 %v1977, %v1977
      %v2010 = vpack.c.b16 %v1978, %v1978
      %v2011 = vpack.c.b16 %v1979, %v1979
      %v2012 = vpack.c.b16 %v1980, %v1980
      %v2013 = vpack.c.b16 %v1981, %v1981
      %v2014 = vpack.c.b16 %v1982, %v1982
      %v2015 = vpack.c.b16 %v1983, %v1983
      %v2016 = vpack.c.b16 %v1984, %v1984
      %v2017 = vpack.c.b16 %v1985, %v1985
      %v2018 = vpack.c.b16 %v1986, %v1986
      %v2019 = vpack.c.b16 %v1987, %v1987
      %v2020 = vpack.c.b16 %v1988, %v1988
      %v2021 = vpack.c.b16 %v1989, %v1989
      %v2022 = vpack.c.b16 %v1990, %v1990
      %v2023 = vpack.c.b16 %v1991, %v1991
      %v2024 = vpack.c.b16 %v1992, %v1992
      %v2025 = vpack.c.b16 %v1993, %v1993
      %v2026 = vpack.c.b16 %v1994, %v1994
      %v2027 = vpack.c.b16 %v1995, %v1995
      %v2028 = vpack.c.b16 %v1996, %v1996
      %2061 = vst [vmem:[%s290] sm:$0xf] %v1997
      %2062 = vst [vmem:[%s290 + $0x4] sm:$0xf] %v1998
      %2063 = vst [vmem:[%s290 + $0x8] sm:$0xf] %v1999
      %2064 = vst [vmem:[%s290 + $0xc] sm:$0xf] %v2000
      %2065 = vst [vmem:[%s290 + $0x10] sm:$0xf] %v2001
      %2066 = vst [vmem:[%s290 + $0x14] sm:$0xf] %v2002
      %2067 = vst [vmem:[%s290 + $0x18] sm:$0xf] %v2003
      %2068 = vst [vmem:[%s290 + $0x1c] sm:$0xf] %v2004
      %2069 = vst [vmem:[%s290 + $0x20] sm:$0xf] %v2005
      %2070 = vst [vmem:[%s290 + $0x24] sm:$0xf] %v2006
      %2071 = vst [vmem:[%s290 + $0x28] sm:$0xf] %v2007
      %2072 = vst [vmem:[%s290 + $0x2c] sm:$0xf] %v2008
      %2073 = vst [vmem:[%s290 + $0x30] sm:$0xf] %v2009
      %2074 = vst [vmem:[%s290 + $0x34] sm:$0xf] %v2010
      %2075 = vst [vmem:[%s290 + $0x38] sm:$0xf] %v2011
      %2076 = vst [vmem:[%s290 + $0x3c] sm:$0xf] %v2012
      %2077 = vst [vmem:[%s290 + $0x40] sm:$0xf] %v2013
      %2078 = vst [vmem:[%s290 + $0x44] sm:$0xf] %v2014
      %2079 = vst [vmem:[%s290 + $0x48] sm:$0xf] %v2015
      %2080 = vst [vmem:[%s290 + $0x4c] sm:$0xf] %v2016
      %2081 = vst [vmem:[%s290 + $0x50] sm:$0xf] %v2017
      %2082 = vst [vmem:[%s290 + $0x54] sm:$0xf] %v2018
      %2083 = vst [vmem:[%s290 + $0x58] sm:$0xf] %v2019
      %2084 = vst [vmem:[%s290 + $0x5c] sm:$0xf] %v2020
      %2085 = vst [vmem:[%s290 + $0x60] sm:$0xf] %v2021
      %2086 = vst [vmem:[%s290 + $0x64] sm:$0xf] %v2022
      %2087 = vst [vmem:[%s290 + $0x68] sm:$0xf] %v2023
      %2088 = vst [vmem:[%s290 + $0x6c] sm:$0xf] %v2024
      %2089 = vst [vmem:[%s290 + $0x70] sm:$0xf] %v2025
      %2090 = vst [vmem:[%s290 + $0x74] sm:$0xf] %v2026
      %2091 = vst [vmem:[%s290 + $0x78] sm:$0xf] %v2027
      %2092 = vst [vmem:[%s290 + $0x7c] sm:$0xf] %v2028
      %s2093 = sadd.s32 %s22, %s23
      %s2094 = smul.u32 32, %s2093
      %p2095 = scmp.lt.s32.totalorder %s2094, 63
      %s2096 = scalar_select %p2095, %s2094, 63
      %s2097 = smul.addr %s2096, 4
      %s2098 = scalar_lea.vmem %s4, %s2097
      %p2099 = scmp.lt.s32.totalorder %s22, 1
      %s2100 = scalar_select %p2099, %s22, 1
      %s2101 = scalar_lea.vmem %s5, %s2100
      %p2102 = scmp.lt.s32.totalorder %s22, 1
      %s2103 = scalar_select %p2102, %s22, 1
      %s2104 = scalar_lea.vmem %s6, %s2103
      // Predicated region
      $region49: #{sdf_forward.12} parent=35 // pred_check
        %p2105 = pneg %p141
      $region50: #{sdf_forward.12} parent=35 // pred_check_branch
        %2107 = sbr.rel (%p2105) target = $region52
      $region51: #{sdf_forward.12} parent=35 // pred_region
        %s2108 = sadd.s32 %s22, %s23
        %s2109 = smul.u32 32, %s2108
      $region52: #{sdf_forward.12} parent=35 // pred_fallthru
        _
      // Predicated region
      $region53: #{sdf_forward.12} parent=35 // pred_check
        %p2110 = pneg %p167
      $region54: #{sdf_forward.12} parent=35 // pred_check_branch
        %2112 = sbr.rel (%p2110) target = $region56
      $region55: #{sdf_forward.12} parent=35 // pred_region
        _
      $region56: #{sdf_forward.12} parent=35 // pred_fallthru
        _
      // Predicated region
      $region57: #{sdf_forward.12} parent=35 // pred_check
        %p2113 = pneg %p193
      $region58: #{sdf_forward.12} parent=35 // pred_check_branch
        %2115 = sbr.rel (%p2113) target = $region60
      $region59: #{sdf_forward.12} parent=35 // pred_region
        _
      $region60: #{sdf_forward.12} parent=35 // pred_fallthru
        _
    $region36: #{sdf_forward.12} parent=5 // pred_fallthru
      _
    %p2116 = scmp.le.s32.totalorder 2, %s13
    // Predicated region
    $region61: #{sdf_forward.12} parent=5 // pred_check
      %p2117 = pneg %p2116
    $region62: #{sdf_forward.12} parent=5 // pred_check_branch
      %2119 = sbr.rel (%p2117) target = $region64
    $region63: #{sdf_forward.12} parent=5 // pred_region
      %s2120 = ssub.s32 %s13, 2
      // Predicated region
      $region65: #{sdf_forward.12} parent=63 // pred_check
        %p2121 = pneg %p147
      $region66: #{sdf_forward.12} parent=63 // pred_check_branch
        %2123 = sbr.rel (%p2121) target = $region68
      $region67: #{sdf_forward.12} parent=63 // pred_region
        %s2124 = sadd.s32 %s24, %s25
        %s2125 = smul.u32 32, %s2124
        %p2126 = scmp.lt.s32.totalorder %s2125, 63
        %s2127 = scalar_select %p2126, %s2125, 63
        %s2128 = smul.addr %s2127, 4
        %s2129 = scalar_lea.vmem %s4, %s2128
      $region68: #{sdf_forward.12} parent=63 // pred_fallthru
        _
      // Predicated region
      $region69: #{sdf_forward.12} parent=63 // pred_check
        %p2130 = pneg %p173
      $region70: #{sdf_forward.12} parent=63 // pred_check_branch
        %2132 = sbr.rel (%p2130) target = $region72
      $region71: #{sdf_forward.12} parent=63 // pred_region
        %p2133 = scmp.lt.s32.totalorder %s24, 1
        %s2134 = scalar_select %p2133, %s24, 1
        %s2135 = scalar_lea.vmem %s5, %s2134
      $region72: #{sdf_forward.12} parent=63 // pred_fallthru
        _
      // Predicated region
      $region73: #{sdf_forward.12} parent=63 // pred_check
        %p2136 = pneg %p199
      $region74: #{sdf_forward.12} parent=63 // pred_check_branch
        %2138 = sbr.rel (%p2136) target = $region76
      $region75: #{sdf_forward.12} parent=63 // pred_region
        %p2139 = scmp.lt.s32.totalorder %s24, 1
        %s2140 = scalar_select %p2139, %s24, 1
        %s2141 = scalar_lea.vmem %s6, %s2140
      $region76: #{sdf_forward.12} parent=63 // pred_fallthru
        _
    $region64: #{sdf_forward.12} parent=5 // pred_fallthru
      _
  $region6: #{sdf_forward.12} parent=0 // loop_footer
    %s17 = sadd.s32 1, %s13
  $region7: #{sdf_forward.12} parent=0 // loop_footer_branch
    %12 = sbr.rel target = $region3
  $region8: #{sdf_forward.12} parent=0 // loop_exit
    _

</llo_original>
